<compile_context>
chip_gen: v5e
topology: v5e:2x2
jax: 0.10.0
libtpu: 0.0.40
codegen_flags: <defaults>
</compile_context>

<pallas_src>
import jax
import jax.numpy as jnp
from jax import lax
from jax.experimental import pallas as pl
from jax.experimental.pallas import tpu as pltpu

BN_EPS = 1e-5


# --------------------------------------------------------------------------
# Fused DoubleConv Pallas kernel (spatial-on-lanes, VPU conv):
#   conv3x3(w1 @ [x1;x2]) -> BN -> ReLU -> conv3x3(w2) -> BN -> ReLU
# All intermediates stay in vregs / VMEM.
# --------------------------------------------------------------------------
def _make_double_conv_kernel(N, H, W, C1, C2, Cmid, Cout, has_skip):
    HW = H * W
    PAD = W + 1  # flattened 1-px halo: covers every (dy, dx) in {-1,0,1}^2

    def kernel(*refs):
        if has_skip:
            (x1_ref, x2_ref, w1_ref, g1_ref, b1_ref,
             w2_ref, g2_ref, b2_ref, out_ref) = refs
        else:
            (x1_ref, w1_ref, g1_ref, b1_ref,
             w2_ref, g2_ref, b2_ref, out_ref) = refs
            x2_ref = None

        # Column masks for horizontal taps.  Row out-of-bounds is handled by the
        # zero halo strips concatenated below; only (w +/- 1) wrap needs masking.
        col = lax.broadcasted_iota(jnp.int32, (1, HW), 1) % W
        col_mask = {
            -1: (col >= 1).astype(jnp.float32),
            0: None,
            1: (col < W - 1).astype(jnp.float32),
        }
        halo = jnp.zeros((N, PAD), jnp.float32)

        def pad_flat(xc):                       # (N, HW) -> (N, HW + 2*PAD)
            # Only the (N, W+1) halo strips are zero-filled -- no full-buffer
            # zeroing, no interior double-write.
            return jnp.concatenate([halo, xc, halo], axis=1)

        def taps(xp):
            """The 9 shifted+masked windows of a 3x3 stencil (static lane slices)."""
            for t in range(9):
                ky, kx = divmod(t, 3)
                s = (ky - 1) * W + (kx - 1)
                win = xp[:, PAD + s:PAD + s + HW]   # (N, HW)
                m = col_mask[kx - 1]
                yield t, (win if m is None else win * m)

        def conv3x3(channels, w_ref, c_out):
            """channels: list of (N, HW) input-channel rows (the channel concat,
            never materialized).  VPU scalar-broadcast MAC, no MXU.  Returns
            c_out accumulators, each (N, HW) f32, initialized from the first
            tap's product (no zeros + add)."""
            acc = [None] * c_out
            for ci, xc in enumerate(channels):
                xp = pad_flat(xc)                   # only this channel's pad is live
                for t, v in taps(xp):               # only this tap is live
                    for co in range(c_out):
                        term = v * w_ref[co, ci * 9 + t]   # SMEM scalar broadcast
                        acc[co] = term if acc[co] is None else acc[co] + term
            return acc

        def bn_relu(a, g_ref, b_ref, co):
            # PyTorch training-mode BN: biased batch stats over (N, H, W).
            mu = jnp.mean(a, keepdims=True)
            var = jnp.mean((a - mu) ** 2, keepdims=True)   # two-pass (no cancellation)
            y = (a - mu) * lax.rsqrt(var + BN_EPS) * g_ref[co] + b_ref[co]
            return jnp.maximum(y, 0.0)

        # ---- stage 1 -----------------------------------------------------
        x1 = x1_ref[...]                                    # (N, C1, HW)
        chans = [x1[:, c, :] for c in range(C1)]
        if has_skip:
            x2 = x2_ref[...]                                # (N, C2, HW)
            chans += [x2[:, c, :] for c in range(C2)]
        acc1 = conv3x3(chans, w1_ref, Cmid)
        h = [bn_relu(acc1[co], g1_ref, b1_ref, co) for co in range(Cmid)]

        # ---- stage 2 (intermediate h never leaves vregs / VMEM) -----------
        acc2 = conv3x3(h, w2_ref, Cout)
        y = [bn_relu(acc2[co], g2_ref, b2_ref, co) for co in range(Cout)]

        # Single lane-dense store: (N, Cout, HW) with HW = 256 lanes.
        out_ref[...] = jnp.stack(y, axis=1)

    return kernel


def double_conv_fused(x1_nchw, x2_nchw, w1, g1, b1, w2, g2, b2):
    """Fused (conv3x3->BN->ReLU)*2 on NCHW inputs.  x2_nchw may be None.

    w1: (Cmid, C1+C2, 3, 3), w2: (Cout, Cmid, 3, 3) -- PyTorch OIHW,
    cross-correlation.  g*/b*: (C,) BatchNorm affine params.
    """
    N, C1, H, W = x1_nchw.shape
    has_skip = x2_nchw is not None
    C2 = x2_nchw.shape[1] if has_skip else 0
    Cmid, Cin = w1.shape[0], w1.shape[1]
    assert Cin == C1 + C2, (w1.shape, C1, C2)
    Cout = w2.shape[0]
    HW = H * W

    # Free row-major reshapes: spatial goes on the lane axis.
    x1f = x1_nchw.reshape(N, C1, HW)
    w1f = w1.reshape(Cmid, Cin * 9)     # index = ci*9 + ky*3 + kx
    w2f = w2.reshape(Cout, Cmid * 9)

    vmem = pl.BlockSpec(memory_space=pltpu.MemorySpace.VMEM)
    smem = pl.BlockSpec(memory_space=pltpu.MemorySpace.SMEM)

    if has_skip:
        x2f = x2_nchw.reshape(N, C2, HW)
        inputs = (x1f, x2f, w1f, g1, b1, w2f, g2, b2)
        in_specs = [vmem, vmem, smem, smem, smem, smem, smem, smem]
    else:
        inputs = (x1f, w1f, g1, b1, w2f, g2, b2)
        in_specs = [vmem, smem, smem, smem, smem, smem, smem]

    out = pl.pallas_call(
        _make_double_conv_kernel(N, H, W, C1, C2, Cmid, Cout, has_skip),
        out_shape=jax.ShapeDtypeStruct((N, Cout, HW), jnp.float32),
        in_specs=in_specs,
        out_specs=vmem,
    )(*inputs)
    return out.reshape(N, Cout, H, W)


# --------------------------------------------------------------------------
# Plain-JAX glue: upsampling (gathers) and params.  No layout transposes.
# --------------------------------------------------------------------------
def bilinear_up2x_align_corners(x):  # x: NCHW
    """nn.Upsample(scale_factor=2, mode='bilinear', align_corners=True)."""
    N, C, H, W = x.shape
    Ho, Wo = 2 * H, 2 * W
    ys = jnp.arange(Ho, dtype=jnp.float32) * (H - 1) / (Ho - 1)
    xs = jnp.arange(Wo, dtype=jnp.float32) * (W - 1) / (Wo - 1)
    y0 = jnp.floor(ys).astype(jnp.int32)
    y1 = jnp.minimum(y0 + 1, H - 1)
    wy = (ys - y0.astype(jnp.float32))[None, None, :, None]
    x0 = jnp.floor(xs).astype(jnp.int32)
    x1 = jnp.minimum(x0 + 1, W - 1)
    wx = (xs - x0.astype(jnp.float32))[None, None, None, :]
    top = x[:, :, y0, :]
    bot = x[:, :, y1, :]
    v = top * (1.0 - wy) + bot * wy
    left = v[:, :, :, x0]
    right = v[:, :, :, x1]
    return left * (1.0 - wx) + right * wx


def nearest_resize(x, Ho, Wo):  # x: NCHW, PyTorch F.interpolate(mode='nearest')
    N, C, H, W = x.shape
    yi = jnp.floor(jnp.arange(Ho) * (H / Ho)).astype(jnp.int32)
    xi = jnp.floor(jnp.arange(Wo) * (W / Wo)).astype(jnp.int32)
    return x[:, :, yi, :][:, :, :, xi]


def init_up_params(key, in_channels, out_channels):
    """Deterministic parameter init for Up(in_channels, out_channels, bilinear=True)."""
    mid = in_channels // 2
    k1, k2 = jax.random.split(key)
    w1 = jax.random.normal(k1, (mid, in_channels, 3, 3), jnp.float32) * (2.0 / (9 * in_channels)) ** 0.5
    w2 = jax.random.normal(k2, (out_channels, mid, 3, 3), jnp.float32) * (2.0 / (9 * mid)) ** 0.5
    return {
        "w1": w1, "g1": jnp.ones((mid,), jnp.float32), "b1": jnp.zeros((mid,), jnp.float32),
        "w2": w2, "g2": jnp.ones((out_channels,), jnp.float32),
        "b2": jnp.zeros((out_channels,), jnp.float32),
    }


def up_forward(params, x1, x2=None):
    """Up.forward(x1, x2): NCHW in, NCHW out."""
    x1 = bilinear_up2x_align_corners(x1)
    if x2 is not None:
        H, W = x1.shape[2], x1.shape[3]
        x2 = nearest_resize(x2, H, W)
    # No channel concat is materialized: the fused kernel iterates over the
    # split (x1 channels, x2 channels) with the matching weight columns.
    return double_conv_fused(x1, x2,
                             params["w1"], params["g1"], params["b1"],
                             params["w2"], params["g2"], params["b2"])


# --------------------------------------------------------------------------
# Pure-JAX reference (sanity check of the Pallas path).
# --------------------------------------------------------------------------
def _reference_double_conv(x_nchw, params):
    def conv(x, w):  # w: OIHW
        return lax.conv_general_dilated(
            x, w, (1, 1), "SAME",
            dimension_numbers=("NCHW", "OIHW", "NCHW"))

    def bn_relu(x, g, b):
        mu = jnp.mean(x, axis=(0, 2, 3), keepdims=True)
        var = jnp.mean((x - mu) ** 2, axis=(0, 2, 3), keepdims=True)
        y = (x - mu) * lax.rsqrt(var + BN_EPS) * g.reshape(1, -1, 1, 1) + b.reshape(1, -1, 1, 1)
        return jnp.maximum(y, 0.0)

    h = bn_relu(conv(x_nchw, params["w1"]), params["g1"], params["b1"])
    return bn_relu(conv(h, params["w2"]), params["g2"], params["b2"])


if __name__ == "__main__":
    key = jax.random.PRNGKey(0)
    kx1, kx2, kp, kp2, kx3 = jax.random.split(key, 5)

    up_fn = jax.jit(up_forward)

    # --- with skip connection: Up(8, 4, bilinear=True), mid = 4 ---
    in_channels, out_channels = 8, 4
    x1 = jax.random.normal(kx1, (2, 4, 8, 8), jnp.float32)   # NCHW decoder feature
    x2 = jax.random.normal(kx2, (2, 4, 4, 4), jnp.float32)   # NCHW skip feature
    params = init_up_params(kp, in_channels, out_channels)

    out = jax.block_until_ready(up_fn(params, x1, x2))
    assert out.shape == (2, out_channels, 16, 16), out.shape

    x1u = bilinear_up2x_align_corners(x1)
    x2r = nearest_resize(x2, x1u.shape[2], x1u.shape[3])
    ref = _reference_double_conv(jnp.concatenate([x1u, x2r], axis=1), params)
    err = float(jnp.max(jnp.abs(out - ref)))
    assert jnp.allclose(out, ref, atol=1e-3, rtol=1e-3), err

    # --- without skip connection: Up(4, 4) used as upsample + DoubleConv ---
    params_ns = init_up_params(kp2, 4, 4)                    # mid = 2
    x3 = jax.random.normal(kx3, (2, 4, 8, 8), jnp.float32)
    out_ns = jax.block_until_ready(up_fn(params_ns, x3))
    assert out_ns.shape == (2, 4, 16, 16), out_ns.shape
    ref_ns = _reference_double_conv(bilinear_up2x_align_corners(x3), params_ns)
    err_ns = float(jnp.max(jnp.abs(out_ns - ref_ns)))
    assert jnp.allclose(out_ns, ref_ns, atol=1e-3, rtol=1e-3), err_ns

    print("KERNEL_OK")
</pallas_src>

<mosaic_0001>
module attributes {stable_mosaic.version = 11 : i64} {
  func.func @kernel(%arg0: memref<2x4x256xf32, #tpu.memory_space<vmem>>, %arg1: memref<2x4x256xf32, #tpu.memory_space<vmem>>, %arg2: memref<4x72xf32, #tpu.memory_space<smem>>, %arg3: memref<4xf32, #tpu.memory_space<smem>>, %arg4: memref<4xf32, #tpu.memory_space<smem>>, %arg5: memref<4x36xf32, #tpu.memory_space<smem>>, %arg6: memref<4xf32, #tpu.memory_space<smem>>, %arg7: memref<4xf32, #tpu.memory_space<smem>>, %arg8: memref<2x4x256xf32, #tpu.memory_space<vmem>>) attributes {dimension_semantics = [], scalar_prefetch = 0 : i64, scratch_operands = 0 : i64, tpu.core_type = #tpu.core_type<tc>} {
    %0 = tpu.iota {dimensions = array<i32: 1>} : vector<1x256xi32>
    %c16_i32 = arith.constant 16 : i32
    %c0_i32 = arith.constant 0 : i32
    %1 = arith.cmpi eq, %c16_i32, %c0_i32 : i32
    %c1_i32 = arith.constant 1 : i32
    %2 = arith.select %1, %c1_i32, %c16_i32 : i32
    %3 = vector.broadcast %2 : i32 to vector<1x256xi32>
    %4 = arith.remsi %0, %3 : vector<1x256xi32>
    %c0_i32_0 = arith.constant 0 : i32
    %5 = vector.broadcast %c0_i32_0 : i32 to vector<1x256xi32>
    %6 = arith.cmpi ne, %4, %5 : vector<1x256xi32>
    %c0_i32_1 = arith.constant 0 : i32
    %7 = vector.broadcast %c0_i32_1 : i32 to vector<1x256xi32>
    %8 = arith.cmpi slt, %4, %7 : vector<1x256xi32>
    %c0_i32_2 = arith.constant 0 : i32
    %9 = arith.cmpi slt, %2, %c0_i32_2 : i32
    %10 = vector.broadcast %9 : i1 to vector<1x256xi1>
    %11 = vector.broadcast %10 : vector<1x256xi1> to vector<1x256xi1>
    %12 = arith.xori %8, %11 : vector<1x256xi1>
    %13 = arith.andi %12, %6 : vector<1x256xi1>
    %14 = vector.broadcast %2 : i32 to vector<1x256xi32>
    %15 = arith.addi %4, %14 : vector<1x256xi32>
    %16 = arith.select %13, %15, %4 : vector<1x256xi1>, vector<1x256xi32>
    %c1_i32_3 = arith.constant 1 : i32
    %17 = vector.broadcast %c1_i32_3 : i32 to vector<1x256xi32>
    %18 = arith.cmpi sge, %16, %17 : vector<1x256xi32>
    %19 = arith.extui %18 : vector<1x256xi1> to vector<1x256xi32>
    %20 = arith.sitofp %19 : vector<1x256xi32> to vector<1x256xf32>
    %c15_i32 = arith.constant 15 : i32
    %21 = vector.broadcast %c15_i32 : i32 to vector<1x256xi32>
    %22 = arith.cmpi slt, %16, %21 : vector<1x256xi32>
    %23 = arith.extui %22 : vector<1x256xi1> to vector<1x256xi32>
    %24 = arith.sitofp %23 : vector<1x256xi32> to vector<1x256xf32>
    %cst = arith.constant 0.000000e+00 : f32
    %25 = vector.broadcast %cst : f32 to vector<2x17xf32>
    %c0 = arith.constant 0 : index
    %c0_4 = arith.constant 0 : index
    %c0_5 = arith.constant 0 : index
    %26 = vector.load %arg0[%c0, %c0_4, %c0_5] : memref<2x4x256xf32, #tpu.memory_space<vmem>>, vector<2x4x256xf32>
    %27 = vector.extract_strided_slice %26 {offsets = [0, 0, 0], sizes = [2, 1, 256], strides = [1, 1, 1]} : vector<2x4x256xf32> to vector<2x1x256xf32>
    %28 = vector.shape_cast %27 : vector<2x1x256xf32> to vector<2x256xf32>
    %29 = vector.extract_strided_slice %26 {offsets = [0, 1, 0], sizes = [2, 1, 256], strides = [1, 1, 1]} : vector<2x4x256xf32> to vector<2x1x256xf32>
    %30 = vector.shape_cast %29 : vector<2x1x256xf32> to vector<2x256xf32>
    %31 = vector.extract_strided_slice %26 {offsets = [0, 2, 0], sizes = [2, 1, 256], strides = [1, 1, 1]} : vector<2x4x256xf32> to vector<2x1x256xf32>
    %32 = vector.shape_cast %31 : vector<2x1x256xf32> to vector<2x256xf32>
    %33 = vector.extract_strided_slice %26 {offsets = [0, 3, 0], sizes = [2, 1, 256], strides = [1, 1, 1]} : vector<2x4x256xf32> to vector<2x1x256xf32>
    %34 = vector.shape_cast %33 : vector<2x1x256xf32> to vector<2x256xf32>
    %c0_6 = arith.constant 0 : index
    %c0_7 = arith.constant 0 : index
    %c0_8 = arith.constant 0 : index
    %35 = vector.load %arg1[%c0_6, %c0_7, %c0_8] : memref<2x4x256xf32, #tpu.memory_space<vmem>>, vector<2x4x256xf32>
    %36 = vector.extract_strided_slice %35 {offsets = [0, 0, 0], sizes = [2, 1, 256], strides = [1, 1, 1]} : vector<2x4x256xf32> to vector<2x1x256xf32>
    %37 = vector.shape_cast %36 : vector<2x1x256xf32> to vector<2x256xf32>
    %38 = vector.extract_strided_slice %35 {offsets = [0, 1, 0], sizes = [2, 1, 256], strides = [1, 1, 1]} : vector<2x4x256xf32> to vector<2x1x256xf32>
    %39 = vector.shape_cast %38 : vector<2x1x256xf32> to vector<2x256xf32>
    %40 = vector.extract_strided_slice %35 {offsets = [0, 2, 0], sizes = [2, 1, 256], strides = [1, 1, 1]} : vector<2x4x256xf32> to vector<2x1x256xf32>
    %41 = vector.shape_cast %40 : vector<2x1x256xf32> to vector<2x256xf32>
    %42 = vector.extract_strided_slice %35 {offsets = [0, 3, 0], sizes = [2, 1, 256], strides = [1, 1, 1]} : vector<2x4x256xf32> to vector<2x1x256xf32>
    %43 = vector.shape_cast %42 : vector<2x1x256xf32> to vector<2x256xf32>
    %44 = tpu.concatenate %25, %28, %25 in 1 : vector<2x17xf32>, vector<2x256xf32>, vector<2x17xf32> -> vector<2x290xf32>
    %45 = vector.extract_strided_slice %44 {offsets = [0, 0], sizes = [2, 256], strides = [1, 1]} : vector<2x290xf32> to vector<2x256xf32>
    %46 = vector.broadcast %20 : vector<1x256xf32> to vector<2x256xf32>
    %47 = arith.mulf %45, %46 : vector<2x256xf32>
    %c0_9 = arith.constant 0 : index
    %c0_10 = arith.constant 0 : index
    %48 = memref.load %arg2[%c0_9, %c0_10] : memref<4x72xf32, #tpu.memory_space<smem>>
    %49 = vector.broadcast %48 : f32 to vector<2x256xf32>
    %50 = arith.mulf %47, %49 : vector<2x256xf32>
    %c1 = arith.constant 1 : index
    %c0_11 = arith.constant 0 : index
    %51 = memref.load %arg2[%c1, %c0_11] : memref<4x72xf32, #tpu.memory_space<smem>>
    %52 = vector.broadcast %51 : f32 to vector<2x256xf32>
    %53 = arith.mulf %47, %52 : vector<2x256xf32>
    %c2 = arith.constant 2 : index
    %c0_12 = arith.constant 0 : index
    %54 = memref.load %arg2[%c2, %c0_12] : memref<4x72xf32, #tpu.memory_space<smem>>
    %55 = vector.broadcast %54 : f32 to vector<2x256xf32>
    %56 = arith.mulf %47, %55 : vector<2x256xf32>
    %c3 = arith.constant 3 : index
    %c0_13 = arith.constant 0 : index
    %57 = memref.load %arg2[%c3, %c0_13] : memref<4x72xf32, #tpu.memory_space<smem>>
    %58 = vector.broadcast %57 : f32 to vector<2x256xf32>
    %59 = arith.mulf %47, %58 : vector<2x256xf32>
    %60 = vector.extract_strided_slice %44 {offsets = [0, 1], sizes = [2, 256], strides = [1, 1]} : vector<2x290xf32> to vector<2x256xf32>
    %c0_14 = arith.constant 0 : index
    %c1_15 = arith.constant 1 : index
    %61 = memref.load %arg2[%c0_14, %c1_15] : memref<4x72xf32, #tpu.memory_space<smem>>
    %62 = vector.broadcast %61 : f32 to vector<2x256xf32>
    %63 = arith.mulf %60, %62 : vector<2x256xf32>
    %64 = arith.addf %50, %63 : vector<2x256xf32>
    %c1_16 = arith.constant 1 : index
    %c1_17 = arith.constant 1 : index
    %65 = memref.load %arg2[%c1_16, %c1_17] : memref<4x72xf32, #tpu.memory_space<smem>>
    %66 = vector.broadcast %65 : f32 to vector<2x256xf32>
    %67 = arith.mulf %60, %66 : vector<2x256xf32>
    %68 = arith.addf %53, %67 : vector<2x256xf32>
    %c2_18 = arith.constant 2 : index
    %c1_19 = arith.constant 1 : index
    %69 = memref.load %arg2[%c2_18, %c1_19] : memref<4x72xf32, #tpu.memory_space<smem>>
    %70 = vector.broadcast %69 : f32 to vector<2x256xf32>
    %71 = arith.mulf %60, %70 : vector<2x256xf32>
    %72 = arith.addf %56, %71 : vector<2x256xf32>
    %c3_20 = arith.constant 3 : index
    %c1_21 = arith.constant 1 : index
    %73 = memref.load %arg2[%c3_20, %c1_21] : memref<4x72xf32, #tpu.memory_space<smem>>
    %74 = vector.broadcast %73 : f32 to vector<2x256xf32>
    %75 = arith.mulf %60, %74 : vector<2x256xf32>
    %76 = arith.addf %59, %75 : vector<2x256xf32>
    %77 = vector.extract_strided_slice %44 {offsets = [0, 2], sizes = [2, 256], strides = [1, 1]} : vector<2x290xf32> to vector<2x256xf32>
    %78 = vector.broadcast %24 : vector<1x256xf32> to vector<2x256xf32>
    %79 = arith.mulf %77, %78 : vector<2x256xf32>
    %c0_22 = arith.constant 0 : index
    %c2_23 = arith.constant 2 : index
    %80 = memref.load %arg2[%c0_22, %c2_23] : memref<4x72xf32, #tpu.memory_space<smem>>
    %81 = vector.broadcast %80 : f32 to vector<2x256xf32>
    %82 = arith.mulf %79, %81 : vector<2x256xf32>
    %83 = arith.addf %64, %82 : vector<2x256xf32>
    %c1_24 = arith.constant 1 : index
    %c2_25 = arith.constant 2 : index
    %84 = memref.load %arg2[%c1_24, %c2_25] : memref<4x72xf32, #tpu.memory_space<smem>>
    %85 = vector.broadcast %84 : f32 to vector<2x256xf32>
    %86 = arith.mulf %79, %85 : vector<2x256xf32>
    %87 = arith.addf %68, %86 : vector<2x256xf32>
    %c2_26 = arith.constant 2 : index
    %c2_27 = arith.constant 2 : index
    %88 = memref.load %arg2[%c2_26, %c2_27] : memref<4x72xf32, #tpu.memory_space<smem>>
    %89 = vector.broadcast %88 : f32 to vector<2x256xf32>
    %90 = arith.mulf %79, %89 : vector<2x256xf32>
    %91 = arith.addf %72, %90 : vector<2x256xf32>
    %c3_28 = arith.constant 3 : index
    %c2_29 = arith.constant 2 : index
    %92 = memref.load %arg2[%c3_28, %c2_29] : memref<4x72xf32, #tpu.memory_space<smem>>
    %93 = vector.broadcast %92 : f32 to vector<2x256xf32>
    %94 = arith.mulf %79, %93 : vector<2x256xf32>
    %95 = arith.addf %76, %94 : vector<2x256xf32>
    %96 = vector.extract_strided_slice %44 {offsets = [0, 16], sizes = [2, 256], strides = [1, 1]} : vector<2x290xf32> to vector<2x256xf32>
    %97 = vector.broadcast %20 : vector<1x256xf32> to vector<2x256xf32>
    %98 = arith.mulf %96, %97 : vector<2x256xf32>
    %c0_30 = arith.constant 0 : index
    %c3_31 = arith.constant 3 : index
    %99 = memref.load %arg2[%c0_30, %c3_31] : memref<4x72xf32, #tpu.memory_space<smem>>
    %100 = vector.broadcast %99 : f32 to vector<2x256xf32>
    %101 = arith.mulf %98, %100 : vector<2x256xf32>
    %102 = arith.addf %83, %101 : vector<2x256xf32>
    %c1_32 = arith.constant 1 : index
    %c3_33 = arith.constant 3 : index
    %103 = memref.load %arg2[%c1_32, %c3_33] : memref<4x72xf32, #tpu.memory_space<smem>>
    %104 = vector.broadcast %103 : f32 to vector<2x256xf32>
    %105 = arith.mulf %98, %104 : vector<2x256xf32>
    %106 = arith.addf %87, %105 : vector<2x256xf32>
    %c2_34 = arith.constant 2 : index
    %c3_35 = arith.constant 3 : index
    %107 = memref.load %arg2[%c2_34, %c3_35] : memref<4x72xf32, #tpu.memory_space<smem>>
    %108 = vector.broadcast %107 : f32 to vector<2x256xf32>
    %109 = arith.mulf %98, %108 : vector<2x256xf32>
    %110 = arith.addf %91, %109 : vector<2x256xf32>
    %c3_36 = arith.constant 3 : index
    %c3_37 = arith.constant 3 : index
    %111 = memref.load %arg2[%c3_36, %c3_37] : memref<4x72xf32, #tpu.memory_space<smem>>
    %112 = vector.broadcast %111 : f32 to vector<2x256xf32>
    %113 = arith.mulf %98, %112 : vector<2x256xf32>
    %114 = arith.addf %95, %113 : vector<2x256xf32>
    %115 = vector.extract_strided_slice %44 {offsets = [0, 17], sizes = [2, 256], strides = [1, 1]} : vector<2x290xf32> to vector<2x256xf32>
    %c0_38 = arith.constant 0 : index
    %c4 = arith.constant 4 : index
    %116 = memref.load %arg2[%c0_38, %c4] : memref<4x72xf32, #tpu.memory_space<smem>>
    %117 = vector.broadcast %116 : f32 to vector<2x256xf32>
    %118 = arith.mulf %115, %117 : vector<2x256xf32>
    %119 = arith.addf %102, %118 : vector<2x256xf32>
    %c1_39 = arith.constant 1 : index
    %c4_40 = arith.constant 4 : index
    %120 = memref.load %arg2[%c1_39, %c4_40] : memref<4x72xf32, #tpu.memory_space<smem>>
    %121 = vector.broadcast %120 : f32 to vector<2x256xf32>
    %122 = arith.mulf %115, %121 : vector<2x256xf32>
    %123 = arith.addf %106, %122 : vector<2x256xf32>
    %c2_41 = arith.constant 2 : index
    %c4_42 = arith.constant 4 : index
    %124 = memref.load %arg2[%c2_41, %c4_42] : memref<4x72xf32, #tpu.memory_space<smem>>
    %125 = vector.broadcast %124 : f32 to vector<2x256xf32>
    %126 = arith.mulf %115, %125 : vector<2x256xf32>
    %127 = arith.addf %110, %126 : vector<2x256xf32>
    %c3_43 = arith.constant 3 : index
    %c4_44 = arith.constant 4 : index
    %128 = memref.load %arg2[%c3_43, %c4_44] : memref<4x72xf32, #tpu.memory_space<smem>>
    %129 = vector.broadcast %128 : f32 to vector<2x256xf32>
    %130 = arith.mulf %115, %129 : vector<2x256xf32>
    %131 = arith.addf %114, %130 : vector<2x256xf32>
    %132 = vector.extract_strided_slice %44 {offsets = [0, 18], sizes = [2, 256], strides = [1, 1]} : vector<2x290xf32> to vector<2x256xf32>
    %133 = vector.broadcast %24 : vector<1x256xf32> to vector<2x256xf32>
    %134 = arith.mulf %132, %133 : vector<2x256xf32>
    %c0_45 = arith.constant 0 : index
    %c5 = arith.constant 5 : index
    %135 = memref.load %arg2[%c0_45, %c5] : memref<4x72xf32, #tpu.memory_space<smem>>
    %136 = vector.broadcast %135 : f32 to vector<2x256xf32>
    %137 = arith.mulf %134, %136 : vector<2x256xf32>
    %138 = arith.addf %119, %137 : vector<2x256xf32>
    %c1_46 = arith.constant 1 : index
    %c5_47 = arith.constant 5 : index
    %139 = memref.load %arg2[%c1_46, %c5_47] : memref<4x72xf32, #tpu.memory_space<smem>>
    %140 = vector.broadcast %139 : f32 to vector<2x256xf32>
    %141 = arith.mulf %134, %140 : vector<2x256xf32>
    %142 = arith.addf %123, %141 : vector<2x256xf32>
    %c2_48 = arith.constant 2 : index
    %c5_49 = arith.constant 5 : index
    %143 = memref.load %arg2[%c2_48, %c5_49] : memref<4x72xf32, #tpu.memory_space<smem>>
    %144 = vector.broadcast %143 : f32 to vector<2x256xf32>
    %145 = arith.mulf %134, %144 : vector<2x256xf32>
    %146 = arith.addf %127, %145 : vector<2x256xf32>
    %c3_50 = arith.constant 3 : index
    %c5_51 = arith.constant 5 : index
    %147 = memref.load %arg2[%c3_50, %c5_51] : memref<4x72xf32, #tpu.memory_space<smem>>
    %148 = vector.broadcast %147 : f32 to vector<2x256xf32>
    %149 = arith.mulf %134, %148 : vector<2x256xf32>
    %150 = arith.addf %131, %149 : vector<2x256xf32>
    %151 = vector.extract_strided_slice %44 {offsets = [0, 32], sizes = [2, 256], strides = [1, 1]} : vector<2x290xf32> to vector<2x256xf32>
    %152 = vector.broadcast %20 : vector<1x256xf32> to vector<2x256xf32>
    %153 = arith.mulf %151, %152 : vector<2x256xf32>
    %c0_52 = arith.constant 0 : index
    %c6 = arith.constant 6 : index
    %154 = memref.load %arg2[%c0_52, %c6] : memref<4x72xf32, #tpu.memory_space<smem>>
    %155 = vector.broadcast %154 : f32 to vector<2x256xf32>
    %156 = arith.mulf %153, %155 : vector<2x256xf32>
    %157 = arith.addf %138, %156 : vector<2x256xf32>
    %c1_53 = arith.constant 1 : index
    %c6_54 = arith.constant 6 : index
    %158 = memref.load %arg2[%c1_53, %c6_54] : memref<4x72xf32, #tpu.memory_space<smem>>
    %159 = vector.broadcast %158 : f32 to vector<2x256xf32>
    %160 = arith.mulf %153, %159 : vector<2x256xf32>
    %161 = arith.addf %142, %160 : vector<2x256xf32>
    %c2_55 = arith.constant 2 : index
    %c6_56 = arith.constant 6 : index
    %162 = memref.load %arg2[%c2_55, %c6_56] : memref<4x72xf32, #tpu.memory_space<smem>>
    %163 = vector.broadcast %162 : f32 to vector<2x256xf32>
    %164 = arith.mulf %153, %163 : vector<2x256xf32>
    %165 = arith.addf %146, %164 : vector<2x256xf32>
    %c3_57 = arith.constant 3 : index
    %c6_58 = arith.constant 6 : index
    %166 = memref.load %arg2[%c3_57, %c6_58] : memref<4x72xf32, #tpu.memory_space<smem>>
    %167 = vector.broadcast %166 : f32 to vector<2x256xf32>
    %168 = arith.mulf %153, %167 : vector<2x256xf32>
    %169 = arith.addf %150, %168 : vector<2x256xf32>
    %170 = vector.extract_strided_slice %44 {offsets = [0, 33], sizes = [2, 256], strides = [1, 1]} : vector<2x290xf32> to vector<2x256xf32>
    %c0_59 = arith.constant 0 : index
    %c7 = arith.constant 7 : index
    %171 = memref.load %arg2[%c0_59, %c7] : memref<4x72xf32, #tpu.memory_space<smem>>
    %172 = vector.broadcast %171 : f32 to vector<2x256xf32>
    %173 = arith.mulf %170, %172 : vector<2x256xf32>
    %174 = arith.addf %157, %173 : vector<2x256xf32>
    %c1_60 = arith.constant 1 : index
    %c7_61 = arith.constant 7 : index
    %175 = memref.load %arg2[%c1_60, %c7_61] : memref<4x72xf32, #tpu.memory_space<smem>>
    %176 = vector.broadcast %175 : f32 to vector<2x256xf32>
    %177 = arith.mulf %170, %176 : vector<2x256xf32>
    %178 = arith.addf %161, %177 : vector<2x256xf32>
    %c2_62 = arith.constant 2 : index
    %c7_63 = arith.constant 7 : index
    %179 = memref.load %arg2[%c2_62, %c7_63] : memref<4x72xf32, #tpu.memory_space<smem>>
    %180 = vector.broadcast %179 : f32 to vector<2x256xf32>
    %181 = arith.mulf %170, %180 : vector<2x256xf32>
    %182 = arith.addf %165, %181 : vector<2x256xf32>
    %c3_64 = arith.constant 3 : index
    %c7_65 = arith.constant 7 : index
    %183 = memref.load %arg2[%c3_64, %c7_65] : memref<4x72xf32, #tpu.memory_space<smem>>
    %184 = vector.broadcast %183 : f32 to vector<2x256xf32>
    %185 = arith.mulf %170, %184 : vector<2x256xf32>
    %186 = arith.addf %169, %185 : vector<2x256xf32>
    %187 = vector.extract_strided_slice %44 {offsets = [0, 34], sizes = [2, 256], strides = [1, 1]} : vector<2x290xf32> to vector<2x256xf32>
    %188 = vector.broadcast %24 : vector<1x256xf32> to vector<2x256xf32>
    %189 = arith.mulf %187, %188 : vector<2x256xf32>
    %c0_66 = arith.constant 0 : index
    %c8 = arith.constant 8 : index
    %190 = memref.load %arg2[%c0_66, %c8] : memref<4x72xf32, #tpu.memory_space<smem>>
    %191 = vector.broadcast %190 : f32 to vector<2x256xf32>
    %192 = arith.mulf %189, %191 : vector<2x256xf32>
    %193 = arith.addf %174, %192 : vector<2x256xf32>
    %c1_67 = arith.constant 1 : index
    %c8_68 = arith.constant 8 : index
    %194 = memref.load %arg2[%c1_67, %c8_68] : memref<4x72xf32, #tpu.memory_space<smem>>
    %195 = vector.broadcast %194 : f32 to vector<2x256xf32>
    %196 = arith.mulf %189, %195 : vector<2x256xf32>
    %197 = arith.addf %178, %196 : vector<2x256xf32>
    %c2_69 = arith.constant 2 : index
    %c8_70 = arith.constant 8 : index
    %198 = memref.load %arg2[%c2_69, %c8_70] : memref<4x72xf32, #tpu.memory_space<smem>>
    %199 = vector.broadcast %198 : f32 to vector<2x256xf32>
    %200 = arith.mulf %189, %199 : vector<2x256xf32>
    %201 = arith.addf %182, %200 : vector<2x256xf32>
    %c3_71 = arith.constant 3 : index
    %c8_72 = arith.constant 8 : index
    %202 = memref.load %arg2[%c3_71, %c8_72] : memref<4x72xf32, #tpu.memory_space<smem>>
    %203 = vector.broadcast %202 : f32 to vector<2x256xf32>
    %204 = arith.mulf %189, %203 : vector<2x256xf32>
    %205 = arith.addf %186, %204 : vector<2x256xf32>
    %206 = tpu.concatenate %25, %30, %25 in 1 : vector<2x17xf32>, vector<2x256xf32>, vector<2x17xf32> -> vector<2x290xf32>
    %207 = vector.extract_strided_slice %206 {offsets = [0, 0], sizes = [2, 256], strides = [1, 1]} : vector<2x290xf32> to vector<2x256xf32>
    %208 = vector.broadcast %20 : vector<1x256xf32> to vector<2x256xf32>
    %209 = arith.mulf %207, %208 : vector<2x256xf32>
    %c0_73 = arith.constant 0 : index
    %c9 = arith.constant 9 : index
    %210 = memref.load %arg2[%c0_73, %c9] : memref<4x72xf32, #tpu.memory_space<smem>>
    %211 = vector.broadcast %210 : f32 to vector<2x256xf32>
    %212 = arith.mulf %209, %211 : vector<2x256xf32>
    %213 = arith.addf %193, %212 : vector<2x256xf32>
    %c1_74 = arith.constant 1 : index
    %c9_75 = arith.constant 9 : index
    %214 = memref.load %arg2[%c1_74, %c9_75] : memref<4x72xf32, #tpu.memory_space<smem>>
    %215 = vector.broadcast %214 : f32 to vector<2x256xf32>
    %216 = arith.mulf %209, %215 : vector<2x256xf32>
    %217 = arith.addf %197, %216 : vector<2x256xf32>
    %c2_76 = arith.constant 2 : index
    %c9_77 = arith.constant 9 : index
    %218 = memref.load %arg2[%c2_76, %c9_77] : memref<4x72xf32, #tpu.memory_space<smem>>
    %219 = vector.broadcast %218 : f32 to vector<2x256xf32>
    %220 = arith.mulf %209, %219 : vector<2x256xf32>
    %221 = arith.addf %201, %220 : vector<2x256xf32>
    %c3_78 = arith.constant 3 : index
    %c9_79 = arith.constant 9 : index
    %222 = memref.load %arg2[%c3_78, %c9_79] : memref<4x72xf32, #tpu.memory_space<smem>>
    %223 = vector.broadcast %222 : f32 to vector<2x256xf32>
    %224 = arith.mulf %209, %223 : vector<2x256xf32>
    %225 = arith.addf %205, %224 : vector<2x256xf32>
    %226 = vector.extract_strided_slice %206 {offsets = [0, 1], sizes = [2, 256], strides = [1, 1]} : vector<2x290xf32> to vector<2x256xf32>
    %c0_80 = arith.constant 0 : index
    %c10 = arith.constant 10 : index
    %227 = memref.load %arg2[%c0_80, %c10] : memref<4x72xf32, #tpu.memory_space<smem>>
    %228 = vector.broadcast %227 : f32 to vector<2x256xf32>
    %229 = arith.mulf %226, %228 : vector<2x256xf32>
    %230 = arith.addf %213, %229 : vector<2x256xf32>
    %c1_81 = arith.constant 1 : index
    %c10_82 = arith.constant 10 : index
    %231 = memref.load %arg2[%c1_81, %c10_82] : memref<4x72xf32, #tpu.memory_space<smem>>
    %232 = vector.broadcast %231 : f32 to vector<2x256xf32>
    %233 = arith.mulf %226, %232 : vector<2x256xf32>
    %234 = arith.addf %217, %233 : vector<2x256xf32>
    %c2_83 = arith.constant 2 : index
    %c10_84 = arith.constant 10 : index
    %235 = memref.load %arg2[%c2_83, %c10_84] : memref<4x72xf32, #tpu.memory_space<smem>>
    %236 = vector.broadcast %235 : f32 to vector<2x256xf32>
    %237 = arith.mulf %226, %236 : vector<2x256xf32>
    %238 = arith.addf %221, %237 : vector<2x256xf32>
    %c3_85 = arith.constant 3 : index
    %c10_86 = arith.constant 10 : index
    %239 = memref.load %arg2[%c3_85, %c10_86] : memref<4x72xf32, #tpu.memory_space<smem>>
    %240 = vector.broadcast %239 : f32 to vector<2x256xf32>
    %241 = arith.mulf %226, %240 : vector<2x256xf32>
    %242 = arith.addf %225, %241 : vector<2x256xf32>
    %243 = vector.extract_strided_slice %206 {offsets = [0, 2], sizes = [2, 256], strides = [1, 1]} : vector<2x290xf32> to vector<2x256xf32>
    %244 = vector.broadcast %24 : vector<1x256xf32> to vector<2x256xf32>
    %245 = arith.mulf %243, %244 : vector<2x256xf32>
    %c0_87 = arith.constant 0 : index
    %c11 = arith.constant 11 : index
    %246 = memref.load %arg2[%c0_87, %c11] : memref<4x72xf32, #tpu.memory_space<smem>>
    %247 = vector.broadcast %246 : f32 to vector<2x256xf32>
    %248 = arith.mulf %245, %247 : vector<2x256xf32>
    %249 = arith.addf %230, %248 : vector<2x256xf32>
    %c1_88 = arith.constant 1 : index
    %c11_89 = arith.constant 11 : index
    %250 = memref.load %arg2[%c1_88, %c11_89] : memref<4x72xf32, #tpu.memory_space<smem>>
    %251 = vector.broadcast %250 : f32 to vector<2x256xf32>
    %252 = arith.mulf %245, %251 : vector<2x256xf32>
    %253 = arith.addf %234, %252 : vector<2x256xf32>
    %c2_90 = arith.constant 2 : index
    %c11_91 = arith.constant 11 : index
    %254 = memref.load %arg2[%c2_90, %c11_91] : memref<4x72xf32, #tpu.memory_space<smem>>
    %255 = vector.broadcast %254 : f32 to vector<2x256xf32>
    %256 = arith.mulf %245, %255 : vector<2x256xf32>
    %257 = arith.addf %238, %256 : vector<2x256xf32>
    %c3_92 = arith.constant 3 : index
    %c11_93 = arith.constant 11 : index
    %258 = memref.load %arg2[%c3_92, %c11_93] : memref<4x72xf32, #tpu.memory_space<smem>>
    %259 = vector.broadcast %258 : f32 to vector<2x256xf32>
    %260 = arith.mulf %245, %259 : vector<2x256xf32>
    %261 = arith.addf %242, %260 : vector<2x256xf32>
    %262 = vector.extract_strided_slice %206 {offsets = [0, 16], sizes = [2, 256], strides = [1, 1]} : vector<2x290xf32> to vector<2x256xf32>
    %263 = vector.broadcast %20 : vector<1x256xf32> to vector<2x256xf32>
    %264 = arith.mulf %262, %263 : vector<2x256xf32>
    %c0_94 = arith.constant 0 : index
    %c12 = arith.constant 12 : index
    %265 = memref.load %arg2[%c0_94, %c12] : memref<4x72xf32, #tpu.memory_space<smem>>
    %266 = vector.broadcast %265 : f32 to vector<2x256xf32>
    %267 = arith.mulf %264, %266 : vector<2x256xf32>
    %268 = arith.addf %249, %267 : vector<2x256xf32>
    %c1_95 = arith.constant 1 : index
    %c12_96 = arith.constant 12 : index
    %269 = memref.load %arg2[%c1_95, %c12_96] : memref<4x72xf32, #tpu.memory_space<smem>>
    %270 = vector.broadcast %269 : f32 to vector<2x256xf32>
    %271 = arith.mulf %264, %270 : vector<2x256xf32>
    %272 = arith.addf %253, %271 : vector<2x256xf32>
    %c2_97 = arith.constant 2 : index
    %c12_98 = arith.constant 12 : index
    %273 = memref.load %arg2[%c2_97, %c12_98] : memref<4x72xf32, #tpu.memory_space<smem>>
    %274 = vector.broadcast %273 : f32 to vector<2x256xf32>
    %275 = arith.mulf %264, %274 : vector<2x256xf32>
    %276 = arith.addf %257, %275 : vector<2x256xf32>
    %c3_99 = arith.constant 3 : index
    %c12_100 = arith.constant 12 : index
    %277 = memref.load %arg2[%c3_99, %c12_100] : memref<4x72xf32, #tpu.memory_space<smem>>
    %278 = vector.broadcast %277 : f32 to vector<2x256xf32>
    %279 = arith.mulf %264, %278 : vector<2x256xf32>
    %280 = arith.addf %261, %279 : vector<2x256xf32>
    %281 = vector.extract_strided_slice %206 {offsets = [0, 17], sizes = [2, 256], strides = [1, 1]} : vector<2x290xf32> to vector<2x256xf32>
    %c0_101 = arith.constant 0 : index
    %c13 = arith.constant 13 : index
    %282 = memref.load %arg2[%c0_101, %c13] : memref<4x72xf32, #tpu.memory_space<smem>>
    %283 = vector.broadcast %282 : f32 to vector<2x256xf32>
    %284 = arith.mulf %281, %283 : vector<2x256xf32>
    %285 = arith.addf %268, %284 : vector<2x256xf32>
    %c1_102 = arith.constant 1 : index
    %c13_103 = arith.constant 13 : index
    %286 = memref.load %arg2[%c1_102, %c13_103] : memref<4x72xf32, #tpu.memory_space<smem>>
    %287 = vector.broadcast %286 : f32 to vector<2x256xf32>
    %288 = arith.mulf %281, %287 : vector<2x256xf32>
    %289 = arith.addf %272, %288 : vector<2x256xf32>
    %c2_104 = arith.constant 2 : index
    %c13_105 = arith.constant 13 : index
    %290 = memref.load %arg2[%c2_104, %c13_105] : memref<4x72xf32, #tpu.memory_space<smem>>
    %291 = vector.broadcast %290 : f32 to vector<2x256xf32>
    %292 = arith.mulf %281, %291 : vector<2x256xf32>
    %293 = arith.addf %276, %292 : vector<2x256xf32>
    %c3_106 = arith.constant 3 : index
    %c13_107 = arith.constant 13 : index
    %294 = memref.load %arg2[%c3_106, %c13_107] : memref<4x72xf32, #tpu.memory_space<smem>>
    %295 = vector.broadcast %294 : f32 to vector<2x256xf32>
    %296 = arith.mulf %281, %295 : vector<2x256xf32>
    %297 = arith.addf %280, %296 : vector<2x256xf32>
    %298 = vector.extract_strided_slice %206 {offsets = [0, 18], sizes = [2, 256], strides = [1, 1]} : vector<2x290xf32> to vector<2x256xf32>
    %299 = vector.broadcast %24 : vector<1x256xf32> to vector<2x256xf32>
    %300 = arith.mulf %298, %299 : vector<2x256xf32>
    %c0_108 = arith.constant 0 : index
    %c14 = arith.constant 14 : index
    %301 = memref.load %arg2[%c0_108, %c14] : memref<4x72xf32, #tpu.memory_space<smem>>
    %302 = vector.broadcast %301 : f32 to vector<2x256xf32>
    %303 = arith.mulf %300, %302 : vector<2x256xf32>
    %304 = arith.addf %285, %303 : vector<2x256xf32>
    %c1_109 = arith.constant 1 : index
    %c14_110 = arith.constant 14 : index
    %305 = memref.load %arg2[%c1_109, %c14_110] : memref<4x72xf32, #tpu.memory_space<smem>>
    %306 = vector.broadcast %305 : f32 to vector<2x256xf32>
    %307 = arith.mulf %300, %306 : vector<2x256xf32>
    %308 = arith.addf %289, %307 : vector<2x256xf32>
    %c2_111 = arith.constant 2 : index
    %c14_112 = arith.constant 14 : index
    %309 = memref.load %arg2[%c2_111, %c14_112] : memref<4x72xf32, #tpu.memory_space<smem>>
    %310 = vector.broadcast %309 : f32 to vector<2x256xf32>
    %311 = arith.mulf %300, %310 : vector<2x256xf32>
    %312 = arith.addf %293, %311 : vector<2x256xf32>
    %c3_113 = arith.constant 3 : index
    %c14_114 = arith.constant 14 : index
    %313 = memref.load %arg2[%c3_113, %c14_114] : memref<4x72xf32, #tpu.memory_space<smem>>
    %314 = vector.broadcast %313 : f32 to vector<2x256xf32>
    %315 = arith.mulf %300, %314 : vector<2x256xf32>
    %316 = arith.addf %297, %315 : vector<2x256xf32>
    %317 = vector.extract_strided_slice %206 {offsets = [0, 32], sizes = [2, 256], strides = [1, 1]} : vector<2x290xf32> to vector<2x256xf32>
    %318 = vector.broadcast %20 : vector<1x256xf32> to vector<2x256xf32>
    %319 = arith.mulf %317, %318 : vector<2x256xf32>
    %c0_115 = arith.constant 0 : index
    %c15 = arith.constant 15 : index
    %320 = memref.load %arg2[%c0_115, %c15] : memref<4x72xf32, #tpu.memory_space<smem>>
    %321 = vector.broadcast %320 : f32 to vector<2x256xf32>
    %322 = arith.mulf %319, %321 : vector<2x256xf32>
    %323 = arith.addf %304, %322 : vector<2x256xf32>
    %c1_116 = arith.constant 1 : index
    %c15_117 = arith.constant 15 : index
    %324 = memref.load %arg2[%c1_116, %c15_117] : memref<4x72xf32, #tpu.memory_space<smem>>
    %325 = vector.broadcast %324 : f32 to vector<2x256xf32>
    %326 = arith.mulf %319, %325 : vector<2x256xf32>
    %327 = arith.addf %308, %326 : vector<2x256xf32>
    %c2_118 = arith.constant 2 : index
    %c15_119 = arith.constant 15 : index
    %328 = memref.load %arg2[%c2_118, %c15_119] : memref<4x72xf32, #tpu.memory_space<smem>>
    %329 = vector.broadcast %328 : f32 to vector<2x256xf32>
    %330 = arith.mulf %319, %329 : vector<2x256xf32>
    %331 = arith.addf %312, %330 : vector<2x256xf32>
    %c3_120 = arith.constant 3 : index
    %c15_121 = arith.constant 15 : index
    %332 = memref.load %arg2[%c3_120, %c15_121] : memref<4x72xf32, #tpu.memory_space<smem>>
    %333 = vector.broadcast %332 : f32 to vector<2x256xf32>
    %334 = arith.mulf %319, %333 : vector<2x256xf32>
    %335 = arith.addf %316, %334 : vector<2x256xf32>
    %336 = vector.extract_strided_slice %206 {offsets = [0, 33], sizes = [2, 256], strides = [1, 1]} : vector<2x290xf32> to vector<2x256xf32>
    %c0_122 = arith.constant 0 : index
    %c16 = arith.constant 16 : index
    %337 = memref.load %arg2[%c0_122, %c16] : memref<4x72xf32, #tpu.memory_space<smem>>
    %338 = vector.broadcast %337 : f32 to vector<2x256xf32>
    %339 = arith.mulf %336, %338 : vector<2x256xf32>
    %340 = arith.addf %323, %339 : vector<2x256xf32>
    %c1_123 = arith.constant 1 : index
    %c16_124 = arith.constant 16 : index
    %341 = memref.load %arg2[%c1_123, %c16_124] : memref<4x72xf32, #tpu.memory_space<smem>>
    %342 = vector.broadcast %341 : f32 to vector<2x256xf32>
    %343 = arith.mulf %336, %342 : vector<2x256xf32>
    %344 = arith.addf %327, %343 : vector<2x256xf32>
    %c2_125 = arith.constant 2 : index
    %c16_126 = arith.constant 16 : index
    %345 = memref.load %arg2[%c2_125, %c16_126] : memref<4x72xf32, #tpu.memory_space<smem>>
    %346 = vector.broadcast %345 : f32 to vector<2x256xf32>
    %347 = arith.mulf %336, %346 : vector<2x256xf32>
    %348 = arith.addf %331, %347 : vector<2x256xf32>
    %c3_127 = arith.constant 3 : index
    %c16_128 = arith.constant 16 : index
    %349 = memref.load %arg2[%c3_127, %c16_128] : memref<4x72xf32, #tpu.memory_space<smem>>
    %350 = vector.broadcast %349 : f32 to vector<2x256xf32>
    %351 = arith.mulf %336, %350 : vector<2x256xf32>
    %352 = arith.addf %335, %351 : vector<2x256xf32>
    %353 = vector.extract_strided_slice %206 {offsets = [0, 34], sizes = [2, 256], strides = [1, 1]} : vector<2x290xf32> to vector<2x256xf32>
    %354 = vector.broadcast %24 : vector<1x256xf32> to vector<2x256xf32>
    %355 = arith.mulf %353, %354 : vector<2x256xf32>
    %c0_129 = arith.constant 0 : index
    %c17 = arith.constant 17 : index
    %356 = memref.load %arg2[%c0_129, %c17] : memref<4x72xf32, #tpu.memory_space<smem>>
    %357 = vector.broadcast %356 : f32 to vector<2x256xf32>
    %358 = arith.mulf %355, %357 : vector<2x256xf32>
    %359 = arith.addf %340, %358 : vector<2x256xf32>
    %c1_130 = arith.constant 1 : index
    %c17_131 = arith.constant 17 : index
    %360 = memref.load %arg2[%c1_130, %c17_131] : memref<4x72xf32, #tpu.memory_space<smem>>
    %361 = vector.broadcast %360 : f32 to vector<2x256xf32>
    %362 = arith.mulf %355, %361 : vector<2x256xf32>
    %363 = arith.addf %344, %362 : vector<2x256xf32>
    %c2_132 = arith.constant 2 : index
    %c17_133 = arith.constant 17 : index
    %364 = memref.load %arg2[%c2_132, %c17_133] : memref<4x72xf32, #tpu.memory_space<smem>>
    %365 = vector.broadcast %364 : f32 to vector<2x256xf32>
    %366 = arith.mulf %355, %365 : vector<2x256xf32>
    %367 = arith.addf %348, %366 : vector<2x256xf32>
    %c3_134 = arith.constant 3 : index
    %c17_135 = arith.constant 17 : index
    %368 = memref.load %arg2[%c3_134, %c17_135] : memref<4x72xf32, #tpu.memory_space<smem>>
    %369 = vector.broadcast %368 : f32 to vector<2x256xf32>
    %370 = arith.mulf %355, %369 : vector<2x256xf32>
    %371 = arith.addf %352, %370 : vector<2x256xf32>
    %372 = tpu.concatenate %25, %32, %25 in 1 : vector<2x17xf32>, vector<2x256xf32>, vector<2x17xf32> -> vector<2x290xf32>
    %373 = vector.extract_strided_slice %372 {offsets = [0, 0], sizes = [2, 256], strides = [1, 1]} : vector<2x290xf32> to vector<2x256xf32>
    %374 = vector.broadcast %20 : vector<1x256xf32> to vector<2x256xf32>
    %375 = arith.mulf %373, %374 : vector<2x256xf32>
    %c0_136 = arith.constant 0 : index
    %c18 = arith.constant 18 : index
    %376 = memref.load %arg2[%c0_136, %c18] : memref<4x72xf32, #tpu.memory_space<smem>>
    %377 = vector.broadcast %376 : f32 to vector<2x256xf32>
    %378 = arith.mulf %375, %377 : vector<2x256xf32>
    %379 = arith.addf %359, %378 : vector<2x256xf32>
    %c1_137 = arith.constant 1 : index
    %c18_138 = arith.constant 18 : index
    %380 = memref.load %arg2[%c1_137, %c18_138] : memref<4x72xf32, #tpu.memory_space<smem>>
    %381 = vector.broadcast %380 : f32 to vector<2x256xf32>
    %382 = arith.mulf %375, %381 : vector<2x256xf32>
    %383 = arith.addf %363, %382 : vector<2x256xf32>
    %c2_139 = arith.constant 2 : index
    %c18_140 = arith.constant 18 : index
    %384 = memref.load %arg2[%c2_139, %c18_140] : memref<4x72xf32, #tpu.memory_space<smem>>
    %385 = vector.broadcast %384 : f32 to vector<2x256xf32>
    %386 = arith.mulf %375, %385 : vector<2x256xf32>
    %387 = arith.addf %367, %386 : vector<2x256xf32>
    %c3_141 = arith.constant 3 : index
    %c18_142 = arith.constant 18 : index
    %388 = memref.load %arg2[%c3_141, %c18_142] : memref<4x72xf32, #tpu.memory_space<smem>>
    %389 = vector.broadcast %388 : f32 to vector<2x256xf32>
    %390 = arith.mulf %375, %389 : vector<2x256xf32>
    %391 = arith.addf %371, %390 : vector<2x256xf32>
    %392 = vector.extract_strided_slice %372 {offsets = [0, 1], sizes = [2, 256], strides = [1, 1]} : vector<2x290xf32> to vector<2x256xf32>
    %c0_143 = arith.constant 0 : index
    %c19 = arith.constant 19 : index
    %393 = memref.load %arg2[%c0_143, %c19] : memref<4x72xf32, #tpu.memory_space<smem>>
    %394 = vector.broadcast %393 : f32 to vector<2x256xf32>
    %395 = arith.mulf %392, %394 : vector<2x256xf32>
    %396 = arith.addf %379, %395 : vector<2x256xf32>
    %c1_144 = arith.constant 1 : index
    %c19_145 = arith.constant 19 : index
    %397 = memref.load %arg2[%c1_144, %c19_145] : memref<4x72xf32, #tpu.memory_space<smem>>
    %398 = vector.broadcast %397 : f32 to vector<2x256xf32>
    %399 = arith.mulf %392, %398 : vector<2x256xf32>
    %400 = arith.addf %383, %399 : vector<2x256xf32>
    %c2_146 = arith.constant 2 : index
    %c19_147 = arith.constant 19 : index
    %401 = memref.load %arg2[%c2_146, %c19_147] : memref<4x72xf32, #tpu.memory_space<smem>>
    %402 = vector.broadcast %401 : f32 to vector<2x256xf32>
    %403 = arith.mulf %392, %402 : vector<2x256xf32>
    %404 = arith.addf %387, %403 : vector<2x256xf32>
    %c3_148 = arith.constant 3 : index
    %c19_149 = arith.constant 19 : index
    %405 = memref.load %arg2[%c3_148, %c19_149] : memref<4x72xf32, #tpu.memory_space<smem>>
    %406 = vector.broadcast %405 : f32 to vector<2x256xf32>
    %407 = arith.mulf %392, %406 : vector<2x256xf32>
    %408 = arith.addf %391, %407 : vector<2x256xf32>
    %409 = vector.extract_strided_slice %372 {offsets = [0, 2], sizes = [2, 256], strides = [1, 1]} : vector<2x290xf32> to vector<2x256xf32>
    %410 = vector.broadcast %24 : vector<1x256xf32> to vector<2x256xf32>
    %411 = arith.mulf %409, %410 : vector<2x256xf32>
    %c0_150 = arith.constant 0 : index
    %c20 = arith.constant 20 : index
    %412 = memref.load %arg2[%c0_150, %c20] : memref<4x72xf32, #tpu.memory_space<smem>>
    %413 = vector.broadcast %412 : f32 to vector<2x256xf32>
    %414 = arith.mulf %411, %413 : vector<2x256xf32>
    %415 = arith.addf %396, %414 : vector<2x256xf32>
    %c1_151 = arith.constant 1 : index
    %c20_152 = arith.constant 20 : index
    %416 = memref.load %arg2[%c1_151, %c20_152] : memref<4x72xf32, #tpu.memory_space<smem>>
    %417 = vector.broadcast %416 : f32 to vector<2x256xf32>
    %418 = arith.mulf %411, %417 : vector<2x256xf32>
    %419 = arith.addf %400, %418 : vector<2x256xf32>
    %c2_153 = arith.constant 2 : index
    %c20_154 = arith.constant 20 : index
    %420 = memref.load %arg2[%c2_153, %c20_154] : memref<4x72xf32, #tpu.memory_space<smem>>
    %421 = vector.broadcast %420 : f32 to vector<2x256xf32>
    %422 = arith.mulf %411, %421 : vector<2x256xf32>
    %423 = arith.addf %404, %422 : vector<2x256xf32>
    %c3_155 = arith.constant 3 : index
    %c20_156 = arith.constant 20 : index
    %424 = memref.load %arg2[%c3_155, %c20_156] : memref<4x72xf32, #tpu.memory_space<smem>>
    %425 = vector.broadcast %424 : f32 to vector<2x256xf32>
    %426 = arith.mulf %411, %425 : vector<2x256xf32>
    %427 = arith.addf %408, %426 : vector<2x256xf32>
    %428 = vector.extract_strided_slice %372 {offsets = [0, 16], sizes = [2, 256], strides = [1, 1]} : vector<2x290xf32> to vector<2x256xf32>
    %429 = vector.broadcast %20 : vector<1x256xf32> to vector<2x256xf32>
    %430 = arith.mulf %428, %429 : vector<2x256xf32>
    %c0_157 = arith.constant 0 : index
    %c21 = arith.constant 21 : index
    %431 = memref.load %arg2[%c0_157, %c21] : memref<4x72xf32, #tpu.memory_space<smem>>
    %432 = vector.broadcast %431 : f32 to vector<2x256xf32>
    %433 = arith.mulf %430, %432 : vector<2x256xf32>
    %434 = arith.addf %415, %433 : vector<2x256xf32>
    %c1_158 = arith.constant 1 : index
    %c21_159 = arith.constant 21 : index
    %435 = memref.load %arg2[%c1_158, %c21_159] : memref<4x72xf32, #tpu.memory_space<smem>>
    %436 = vector.broadcast %435 : f32 to vector<2x256xf32>
    %437 = arith.mulf %430, %436 : vector<2x256xf32>
    %438 = arith.addf %419, %437 : vector<2x256xf32>
    %c2_160 = arith.constant 2 : index
    %c21_161 = arith.constant 21 : index
    %439 = memref.load %arg2[%c2_160, %c21_161] : memref<4x72xf32, #tpu.memory_space<smem>>
    %440 = vector.broadcast %439 : f32 to vector<2x256xf32>
    %441 = arith.mulf %430, %440 : vector<2x256xf32>
    %442 = arith.addf %423, %441 : vector<2x256xf32>
    %c3_162 = arith.constant 3 : index
    %c21_163 = arith.constant 21 : index
    %443 = memref.load %arg2[%c3_162, %c21_163] : memref<4x72xf32, #tpu.memory_space<smem>>
    %444 = vector.broadcast %443 : f32 to vector<2x256xf32>
    %445 = arith.mulf %430, %444 : vector<2x256xf32>
    %446 = arith.addf %427, %445 : vector<2x256xf32>
    %447 = vector.extract_strided_slice %372 {offsets = [0, 17], sizes = [2, 256], strides = [1, 1]} : vector<2x290xf32> to vector<2x256xf32>
    %c0_164 = arith.constant 0 : index
    %c22 = arith.constant 22 : index
    %448 = memref.load %arg2[%c0_164, %c22] : memref<4x72xf32, #tpu.memory_space<smem>>
    %449 = vector.broadcast %448 : f32 to vector<2x256xf32>
    %450 = arith.mulf %447, %449 : vector<2x256xf32>
    %451 = arith.addf %434, %450 : vector<2x256xf32>
    %c1_165 = arith.constant 1 : index
    %c22_166 = arith.constant 22 : index
    %452 = memref.load %arg2[%c1_165, %c22_166] : memref<4x72xf32, #tpu.memory_space<smem>>
    %453 = vector.broadcast %452 : f32 to vector<2x256xf32>
    %454 = arith.mulf %447, %453 : vector<2x256xf32>
    %455 = arith.addf %438, %454 : vector<2x256xf32>
    %c2_167 = arith.constant 2 : index
    %c22_168 = arith.constant 22 : index
    %456 = memref.load %arg2[%c2_167, %c22_168] : memref<4x72xf32, #tpu.memory_space<smem>>
    %457 = vector.broadcast %456 : f32 to vector<2x256xf32>
    %458 = arith.mulf %447, %457 : vector<2x256xf32>
    %459 = arith.addf %442, %458 : vector<2x256xf32>
    %c3_169 = arith.constant 3 : index
    %c22_170 = arith.constant 22 : index
    %460 = memref.load %arg2[%c3_169, %c22_170] : memref<4x72xf32, #tpu.memory_space<smem>>
    %461 = vector.broadcast %460 : f32 to vector<2x256xf32>
    %462 = arith.mulf %447, %461 : vector<2x256xf32>
    %463 = arith.addf %446, %462 : vector<2x256xf32>
    %464 = vector.extract_strided_slice %372 {offsets = [0, 18], sizes = [2, 256], strides = [1, 1]} : vector<2x290xf32> to vector<2x256xf32>
    %465 = vector.broadcast %24 : vector<1x256xf32> to vector<2x256xf32>
    %466 = arith.mulf %464, %465 : vector<2x256xf32>
    %c0_171 = arith.constant 0 : index
    %c23 = arith.constant 23 : index
    %467 = memref.load %arg2[%c0_171, %c23] : memref<4x72xf32, #tpu.memory_space<smem>>
    %468 = vector.broadcast %467 : f32 to vector<2x256xf32>
    %469 = arith.mulf %466, %468 : vector<2x256xf32>
    %470 = arith.addf %451, %469 : vector<2x256xf32>
    %c1_172 = arith.constant 1 : index
    %c23_173 = arith.constant 23 : index
    %471 = memref.load %arg2[%c1_172, %c23_173] : memref<4x72xf32, #tpu.memory_space<smem>>
    %472 = vector.broadcast %471 : f32 to vector<2x256xf32>
    %473 = arith.mulf %466, %472 : vector<2x256xf32>
    %474 = arith.addf %455, %473 : vector<2x256xf32>
    %c2_174 = arith.constant 2 : index
    %c23_175 = arith.constant 23 : index
    %475 = memref.load %arg2[%c2_174, %c23_175] : memref<4x72xf32, #tpu.memory_space<smem>>
    %476 = vector.broadcast %475 : f32 to vector<2x256xf32>
    %477 = arith.mulf %466, %476 : vector<2x256xf32>
    %478 = arith.addf %459, %477 : vector<2x256xf32>
    %c3_176 = arith.constant 3 : index
    %c23_177 = arith.constant 23 : index
    %479 = memref.load %arg2[%c3_176, %c23_177] : memref<4x72xf32, #tpu.memory_space<smem>>
    %480 = vector.broadcast %479 : f32 to vector<2x256xf32>
    %481 = arith.mulf %466, %480 : vector<2x256xf32>
    %482 = arith.addf %463, %481 : vector<2x256xf32>
    %483 = vector.extract_strided_slice %372 {offsets = [0, 32], sizes = [2, 256], strides = [1, 1]} : vector<2x290xf32> to vector<2x256xf32>
    %484 = vector.broadcast %20 : vector<1x256xf32> to vector<2x256xf32>
    %485 = arith.mulf %483, %484 : vector<2x256xf32>
    %c0_178 = arith.constant 0 : index
    %c24 = arith.constant 24 : index
    %486 = memref.load %arg2[%c0_178, %c24] : memref<4x72xf32, #tpu.memory_space<smem>>
    %487 = vector.broadcast %486 : f32 to vector<2x256xf32>
    %488 = arith.mulf %485, %487 : vector<2x256xf32>
    %489 = arith.addf %470, %488 : vector<2x256xf32>
    %c1_179 = arith.constant 1 : index
    %c24_180 = arith.constant 24 : index
    %490 = memref.load %arg2[%c1_179, %c24_180] : memref<4x72xf32, #tpu.memory_space<smem>>
    %491 = vector.broadcast %490 : f32 to vector<2x256xf32>
    %492 = arith.mulf %485, %491 : vector<2x256xf32>
    %493 = arith.addf %474, %492 : vector<2x256xf32>
    %c2_181 = arith.constant 2 : index
    %c24_182 = arith.constant 24 : index
    %494 = memref.load %arg2[%c2_181, %c24_182] : memref<4x72xf32, #tpu.memory_space<smem>>
    %495 = vector.broadcast %494 : f32 to vector<2x256xf32>
    %496 = arith.mulf %485, %495 : vector<2x256xf32>
    %497 = arith.addf %478, %496 : vector<2x256xf32>
    %c3_183 = arith.constant 3 : index
    %c24_184 = arith.constant 24 : index
    %498 = memref.load %arg2[%c3_183, %c24_184] : memref<4x72xf32, #tpu.memory_space<smem>>
    %499 = vector.broadcast %498 : f32 to vector<2x256xf32>
    %500 = arith.mulf %485, %499 : vector<2x256xf32>
    %501 = arith.addf %482, %500 : vector<2x256xf32>
    %502 = vector.extract_strided_slice %372 {offsets = [0, 33], sizes = [2, 256], strides = [1, 1]} : vector<2x290xf32> to vector<2x256xf32>
    %c0_185 = arith.constant 0 : index
    %c25 = arith.constant 25 : index
    %503 = memref.load %arg2[%c0_185, %c25] : memref<4x72xf32, #tpu.memory_space<smem>>
    %504 = vector.broadcast %503 : f32 to vector<2x256xf32>
    %505 = arith.mulf %502, %504 : vector<2x256xf32>
    %506 = arith.addf %489, %505 : vector<2x256xf32>
    %c1_186 = arith.constant 1 : index
    %c25_187 = arith.constant 25 : index
    %507 = memref.load %arg2[%c1_186, %c25_187] : memref<4x72xf32, #tpu.memory_space<smem>>
    %508 = vector.broadcast %507 : f32 to vector<2x256xf32>
    %509 = arith.mulf %502, %508 : vector<2x256xf32>
    %510 = arith.addf %493, %509 : vector<2x256xf32>
    %c2_188 = arith.constant 2 : index
    %c25_189 = arith.constant 25 : index
    %511 = memref.load %arg2[%c2_188, %c25_189] : memref<4x72xf32, #tpu.memory_space<smem>>
    %512 = vector.broadcast %511 : f32 to vector<2x256xf32>
    %513 = arith.mulf %502, %512 : vector<2x256xf32>
    %514 = arith.addf %497, %513 : vector<2x256xf32>
    %c3_190 = arith.constant 3 : index
    %c25_191 = arith.constant 25 : index
    %515 = memref.load %arg2[%c3_190, %c25_191] : memref<4x72xf32, #tpu.memory_space<smem>>
    %516 = vector.broadcast %515 : f32 to vector<2x256xf32>
    %517 = arith.mulf %502, %516 : vector<2x256xf32>
    %518 = arith.addf %501, %517 : vector<2x256xf32>
    %519 = vector.extract_strided_slice %372 {offsets = [0, 34], sizes = [2, 256], strides = [1, 1]} : vector<2x290xf32> to vector<2x256xf32>
    %520 = vector.broadcast %24 : vector<1x256xf32> to vector<2x256xf32>
    %521 = arith.mulf %519, %520 : vector<2x256xf32>
    %c0_192 = arith.constant 0 : index
    %c26 = arith.constant 26 : index
    %522 = memref.load %arg2[%c0_192, %c26] : memref<4x72xf32, #tpu.memory_space<smem>>
    %523 = vector.broadcast %522 : f32 to vector<2x256xf32>
    %524 = arith.mulf %521, %523 : vector<2x256xf32>
    %525 = arith.addf %506, %524 : vector<2x256xf32>
    %c1_193 = arith.constant 1 : index
    %c26_194 = arith.constant 26 : index
    %526 = memref.load %arg2[%c1_193, %c26_194] : memref<4x72xf32, #tpu.memory_space<smem>>
    %527 = vector.broadcast %526 : f32 to vector<2x256xf32>
    %528 = arith.mulf %521, %527 : vector<2x256xf32>
    %529 = arith.addf %510, %528 : vector<2x256xf32>
    %c2_195 = arith.constant 2 : index
    %c26_196 = arith.constant 26 : index
    %530 = memref.load %arg2[%c2_195, %c26_196] : memref<4x72xf32, #tpu.memory_space<smem>>
    %531 = vector.broadcast %530 : f32 to vector<2x256xf32>
    %532 = arith.mulf %521, %531 : vector<2x256xf32>
    %533 = arith.addf %514, %532 : vector<2x256xf32>
    %c3_197 = arith.constant 3 : index
    %c26_198 = arith.constant 26 : index
    %534 = memref.load %arg2[%c3_197, %c26_198] : memref<4x72xf32, #tpu.memory_space<smem>>
    %535 = vector.broadcast %534 : f32 to vector<2x256xf32>
    %536 = arith.mulf %521, %535 : vector<2x256xf32>
    %537 = arith.addf %518, %536 : vector<2x256xf32>
    %538 = tpu.concatenate %25, %34, %25 in 1 : vector<2x17xf32>, vector<2x256xf32>, vector<2x17xf32> -> vector<2x290xf32>
    %539 = vector.extract_strided_slice %538 {offsets = [0, 0], sizes = [2, 256], strides = [1, 1]} : vector<2x290xf32> to vector<2x256xf32>
    %540 = vector.broadcast %20 : vector<1x256xf32> to vector<2x256xf32>
    %541 = arith.mulf %539, %540 : vector<2x256xf32>
    %c0_199 = arith.constant 0 : index
    %c27 = arith.constant 27 : index
    %542 = memref.load %arg2[%c0_199, %c27] : memref<4x72xf32, #tpu.memory_space<smem>>
    %543 = vector.broadcast %542 : f32 to vector<2x256xf32>
    %544 = arith.mulf %541, %543 : vector<2x256xf32>
    %545 = arith.addf %525, %544 : vector<2x256xf32>
    %c1_200 = arith.constant 1 : index
    %c27_201 = arith.constant 27 : index
    %546 = memref.load %arg2[%c1_200, %c27_201] : memref<4x72xf32, #tpu.memory_space<smem>>
    %547 = vector.broadcast %546 : f32 to vector<2x256xf32>
    %548 = arith.mulf %541, %547 : vector<2x256xf32>
    %549 = arith.addf %529, %548 : vector<2x256xf32>
    %c2_202 = arith.constant 2 : index
    %c27_203 = arith.constant 27 : index
    %550 = memref.load %arg2[%c2_202, %c27_203] : memref<4x72xf32, #tpu.memory_space<smem>>
    %551 = vector.broadcast %550 : f32 to vector<2x256xf32>
    %552 = arith.mulf %541, %551 : vector<2x256xf32>
    %553 = arith.addf %533, %552 : vector<2x256xf32>
    %c3_204 = arith.constant 3 : index
    %c27_205 = arith.constant 27 : index
    %554 = memref.load %arg2[%c3_204, %c27_205] : memref<4x72xf32, #tpu.memory_space<smem>>
    %555 = vector.broadcast %554 : f32 to vector<2x256xf32>
    %556 = arith.mulf %541, %555 : vector<2x256xf32>
    %557 = arith.addf %537, %556 : vector<2x256xf32>
    %558 = vector.extract_strided_slice %538 {offsets = [0, 1], sizes = [2, 256], strides = [1, 1]} : vector<2x290xf32> to vector<2x256xf32>
    %c0_206 = arith.constant 0 : index
    %c28 = arith.constant 28 : index
    %559 = memref.load %arg2[%c0_206, %c28] : memref<4x72xf32, #tpu.memory_space<smem>>
    %560 = vector.broadcast %559 : f32 to vector<2x256xf32>
    %561 = arith.mulf %558, %560 : vector<2x256xf32>
    %562 = arith.addf %545, %561 : vector<2x256xf32>
    %c1_207 = arith.constant 1 : index
    %c28_208 = arith.constant 28 : index
    %563 = memref.load %arg2[%c1_207, %c28_208] : memref<4x72xf32, #tpu.memory_space<smem>>
    %564 = vector.broadcast %563 : f32 to vector<2x256xf32>
    %565 = arith.mulf %558, %564 : vector<2x256xf32>
    %566 = arith.addf %549, %565 : vector<2x256xf32>
    %c2_209 = arith.constant 2 : index
    %c28_210 = arith.constant 28 : index
    %567 = memref.load %arg2[%c2_209, %c28_210] : memref<4x72xf32, #tpu.memory_space<smem>>
    %568 = vector.broadcast %567 : f32 to vector<2x256xf32>
    %569 = arith.mulf %558, %568 : vector<2x256xf32>
    %570 = arith.addf %553, %569 : vector<2x256xf32>
    %c3_211 = arith.constant 3 : index
    %c28_212 = arith.constant 28 : index
    %571 = memref.load %arg2[%c3_211, %c28_212] : memref<4x72xf32, #tpu.memory_space<smem>>
    %572 = vector.broadcast %571 : f32 to vector<2x256xf32>
    %573 = arith.mulf %558, %572 : vector<2x256xf32>
    %574 = arith.addf %557, %573 : vector<2x256xf32>
    %575 = vector.extract_strided_slice %538 {offsets = [0, 2], sizes = [2, 256], strides = [1, 1]} : vector<2x290xf32> to vector<2x256xf32>
    %576 = vector.broadcast %24 : vector<1x256xf32> to vector<2x256xf32>
    %577 = arith.mulf %575, %576 : vector<2x256xf32>
    %c0_213 = arith.constant 0 : index
    %c29 = arith.constant 29 : index
    %578 = memref.load %arg2[%c0_213, %c29] : memref<4x72xf32, #tpu.memory_space<smem>>
    %579 = vector.broadcast %578 : f32 to vector<2x256xf32>
    %580 = arith.mulf %577, %579 : vector<2x256xf32>
    %581 = arith.addf %562, %580 : vector<2x256xf32>
    %c1_214 = arith.constant 1 : index
    %c29_215 = arith.constant 29 : index
    %582 = memref.load %arg2[%c1_214, %c29_215] : memref<4x72xf32, #tpu.memory_space<smem>>
    %583 = vector.broadcast %582 : f32 to vector<2x256xf32>
    %584 = arith.mulf %577, %583 : vector<2x256xf32>
    %585 = arith.addf %566, %584 : vector<2x256xf32>
    %c2_216 = arith.constant 2 : index
    %c29_217 = arith.constant 29 : index
    %586 = memref.load %arg2[%c2_216, %c29_217] : memref<4x72xf32, #tpu.memory_space<smem>>
    %587 = vector.broadcast %586 : f32 to vector<2x256xf32>
    %588 = arith.mulf %577, %587 : vector<2x256xf32>
    %589 = arith.addf %570, %588 : vector<2x256xf32>
    %c3_218 = arith.constant 3 : index
    %c29_219 = arith.constant 29 : index
    %590 = memref.load %arg2[%c3_218, %c29_219] : memref<4x72xf32, #tpu.memory_space<smem>>
    %591 = vector.broadcast %590 : f32 to vector<2x256xf32>
    %592 = arith.mulf %577, %591 : vector<2x256xf32>
    %593 = arith.addf %574, %592 : vector<2x256xf32>
    %594 = vector.extract_strided_slice %538 {offsets = [0, 16], sizes = [2, 256], strides = [1, 1]} : vector<2x290xf32> to vector<2x256xf32>
    %595 = vector.broadcast %20 : vector<1x256xf32> to vector<2x256xf32>
    %596 = arith.mulf %594, %595 : vector<2x256xf32>
    %c0_220 = arith.constant 0 : index
    %c30 = arith.constant 30 : index
    %597 = memref.load %arg2[%c0_220, %c30] : memref<4x72xf32, #tpu.memory_space<smem>>
    %598 = vector.broadcast %597 : f32 to vector<2x256xf32>
    %599 = arith.mulf %596, %598 : vector<2x256xf32>
    %600 = arith.addf %581, %599 : vector<2x256xf32>
    %c1_221 = arith.constant 1 : index
    %c30_222 = arith.constant 30 : index
    %601 = memref.load %arg2[%c1_221, %c30_222] : memref<4x72xf32, #tpu.memory_space<smem>>
    %602 = vector.broadcast %601 : f32 to vector<2x256xf32>
    %603 = arith.mulf %596, %602 : vector<2x256xf32>
    %604 = arith.addf %585, %603 : vector<2x256xf32>
    %c2_223 = arith.constant 2 : index
    %c30_224 = arith.constant 30 : index
    %605 = memref.load %arg2[%c2_223, %c30_224] : memref<4x72xf32, #tpu.memory_space<smem>>
    %606 = vector.broadcast %605 : f32 to vector<2x256xf32>
    %607 = arith.mulf %596, %606 : vector<2x256xf32>
    %608 = arith.addf %589, %607 : vector<2x256xf32>
    %c3_225 = arith.constant 3 : index
    %c30_226 = arith.constant 30 : index
    %609 = memref.load %arg2[%c3_225, %c30_226] : memref<4x72xf32, #tpu.memory_space<smem>>
    %610 = vector.broadcast %609 : f32 to vector<2x256xf32>
    %611 = arith.mulf %596, %610 : vector<2x256xf32>
    %612 = arith.addf %593, %611 : vector<2x256xf32>
    %613 = vector.extract_strided_slice %538 {offsets = [0, 17], sizes = [2, 256], strides = [1, 1]} : vector<2x290xf32> to vector<2x256xf32>
    %c0_227 = arith.constant 0 : index
    %c31 = arith.constant 31 : index
    %614 = memref.load %arg2[%c0_227, %c31] : memref<4x72xf32, #tpu.memory_space<smem>>
    %615 = vector.broadcast %614 : f32 to vector<2x256xf32>
    %616 = arith.mulf %613, %615 : vector<2x256xf32>
    %617 = arith.addf %600, %616 : vector<2x256xf32>
    %c1_228 = arith.constant 1 : index
    %c31_229 = arith.constant 31 : index
    %618 = memref.load %arg2[%c1_228, %c31_229] : memref<4x72xf32, #tpu.memory_space<smem>>
    %619 = vector.broadcast %618 : f32 to vector<2x256xf32>
    %620 = arith.mulf %613, %619 : vector<2x256xf32>
    %621 = arith.addf %604, %620 : vector<2x256xf32>
    %c2_230 = arith.constant 2 : index
    %c31_231 = arith.constant 31 : index
    %622 = memref.load %arg2[%c2_230, %c31_231] : memref<4x72xf32, #tpu.memory_space<smem>>
    %623 = vector.broadcast %622 : f32 to vector<2x256xf32>
    %624 = arith.mulf %613, %623 : vector<2x256xf32>
    %625 = arith.addf %608, %624 : vector<2x256xf32>
    %c3_232 = arith.constant 3 : index
    %c31_233 = arith.constant 31 : index
    %626 = memref.load %arg2[%c3_232, %c31_233] : memref<4x72xf32, #tpu.memory_space<smem>>
    %627 = vector.broadcast %626 : f32 to vector<2x256xf32>
    %628 = arith.mulf %613, %627 : vector<2x256xf32>
    %629 = arith.addf %612, %628 : vector<2x256xf32>
    %630 = vector.extract_strided_slice %538 {offsets = [0, 18], sizes = [2, 256], strides = [1, 1]} : vector<2x290xf32> to vector<2x256xf32>
    %631 = vector.broadcast %24 : vector<1x256xf32> to vector<2x256xf32>
    %632 = arith.mulf %630, %631 : vector<2x256xf32>
    %c0_234 = arith.constant 0 : index
    %c32 = arith.constant 32 : index
    %633 = memref.load %arg2[%c0_234, %c32] : memref<4x72xf32, #tpu.memory_space<smem>>
    %634 = vector.broadcast %633 : f32 to vector<2x256xf32>
    %635 = arith.mulf %632, %634 : vector<2x256xf32>
    %636 = arith.addf %617, %635 : vector<2x256xf32>
    %c1_235 = arith.constant 1 : index
    %c32_236 = arith.constant 32 : index
    %637 = memref.load %arg2[%c1_235, %c32_236] : memref<4x72xf32, #tpu.memory_space<smem>>
    %638 = vector.broadcast %637 : f32 to vector<2x256xf32>
    %639 = arith.mulf %632, %638 : vector<2x256xf32>
    %640 = arith.addf %621, %639 : vector<2x256xf32>
    %c2_237 = arith.constant 2 : index
    %c32_238 = arith.constant 32 : index
    %641 = memref.load %arg2[%c2_237, %c32_238] : memref<4x72xf32, #tpu.memory_space<smem>>
    %642 = vector.broadcast %641 : f32 to vector<2x256xf32>
    %643 = arith.mulf %632, %642 : vector<2x256xf32>
    %644 = arith.addf %625, %643 : vector<2x256xf32>
    %c3_239 = arith.constant 3 : index
    %c32_240 = arith.constant 32 : index
    %645 = memref.load %arg2[%c3_239, %c32_240] : memref<4x72xf32, #tpu.memory_space<smem>>
    %646 = vector.broadcast %645 : f32 to vector<2x256xf32>
    %647 = arith.mulf %632, %646 : vector<2x256xf32>
    %648 = arith.addf %629, %647 : vector<2x256xf32>
    %649 = vector.extract_strided_slice %538 {offsets = [0, 32], sizes = [2, 256], strides = [1, 1]} : vector<2x290xf32> to vector<2x256xf32>
    %650 = vector.broadcast %20 : vector<1x256xf32> to vector<2x256xf32>
    %651 = arith.mulf %649, %650 : vector<2x256xf32>
    %c0_241 = arith.constant 0 : index
    %c33 = arith.constant 33 : index
    %652 = memref.load %arg2[%c0_241, %c33] : memref<4x72xf32, #tpu.memory_space<smem>>
    %653 = vector.broadcast %652 : f32 to vector<2x256xf32>
    %654 = arith.mulf %651, %653 : vector<2x256xf32>
    %655 = arith.addf %636, %654 : vector<2x256xf32>
    %c1_242 = arith.constant 1 : index
    %c33_243 = arith.constant 33 : index
    %656 = memref.load %arg2[%c1_242, %c33_243] : memref<4x72xf32, #tpu.memory_space<smem>>
    %657 = vector.broadcast %656 : f32 to vector<2x256xf32>
    %658 = arith.mulf %651, %657 : vector<2x256xf32>
    %659 = arith.addf %640, %658 : vector<2x256xf32>
    %c2_244 = arith.constant 2 : index
    %c33_245 = arith.constant 33 : index
    %660 = memref.load %arg2[%c2_244, %c33_245] : memref<4x72xf32, #tpu.memory_space<smem>>
    %661 = vector.broadcast %660 : f32 to vector<2x256xf32>
    %662 = arith.mulf %651, %661 : vector<2x256xf32>
    %663 = arith.addf %644, %662 : vector<2x256xf32>
    %c3_246 = arith.constant 3 : index
    %c33_247 = arith.constant 33 : index
    %664 = memref.load %arg2[%c3_246, %c33_247] : memref<4x72xf32, #tpu.memory_space<smem>>
    %665 = vector.broadcast %664 : f32 to vector<2x256xf32>
    %666 = arith.mulf %651, %665 : vector<2x256xf32>
    %667 = arith.addf %648, %666 : vector<2x256xf32>
    %668 = vector.extract_strided_slice %538 {offsets = [0, 33], sizes = [2, 256], strides = [1, 1]} : vector<2x290xf32> to vector<2x256xf32>
    %c0_248 = arith.constant 0 : index
    %c34 = arith.constant 34 : index
    %669 = memref.load %arg2[%c0_248, %c34] : memref<4x72xf32, #tpu.memory_space<smem>>
    %670 = vector.broadcast %669 : f32 to vector<2x256xf32>
    %671 = arith.mulf %668, %670 : vector<2x256xf32>
    %672 = arith.addf %655, %671 : vector<2x256xf32>
    %c1_249 = arith.constant 1 : index
    %c34_250 = arith.constant 34 : index
    %673 = memref.load %arg2[%c1_249, %c34_250] : memref<4x72xf32, #tpu.memory_space<smem>>
    %674 = vector.broadcast %673 : f32 to vector<2x256xf32>
    %675 = arith.mulf %668, %674 : vector<2x256xf32>
    %676 = arith.addf %659, %675 : vector<2x256xf32>
    %c2_251 = arith.constant 2 : index
    %c34_252 = arith.constant 34 : index
    %677 = memref.load %arg2[%c2_251, %c34_252] : memref<4x72xf32, #tpu.memory_space<smem>>
    %678 = vector.broadcast %677 : f32 to vector<2x256xf32>
    %679 = arith.mulf %668, %678 : vector<2x256xf32>
    %680 = arith.addf %663, %679 : vector<2x256xf32>
    %c3_253 = arith.constant 3 : index
    %c34_254 = arith.constant 34 : index
    %681 = memref.load %arg2[%c3_253, %c34_254] : memref<4x72xf32, #tpu.memory_space<smem>>
    %682 = vector.broadcast %681 : f32 to vector<2x256xf32>
    %683 = arith.mulf %668, %682 : vector<2x256xf32>
    %684 = arith.addf %667, %683 : vector<2x256xf32>
    %685 = vector.extract_strided_slice %538 {offsets = [0, 34], sizes = [2, 256], strides = [1, 1]} : vector<2x290xf32> to vector<2x256xf32>
    %686 = vector.broadcast %24 : vector<1x256xf32> to vector<2x256xf32>
    %687 = arith.mulf %685, %686 : vector<2x256xf32>
    %c0_255 = arith.constant 0 : index
    %c35 = arith.constant 35 : index
    %688 = memref.load %arg2[%c0_255, %c35] : memref<4x72xf32, #tpu.memory_space<smem>>
    %689 = vector.broadcast %688 : f32 to vector<2x256xf32>
    %690 = arith.mulf %687, %689 : vector<2x256xf32>
    %691 = arith.addf %672, %690 : vector<2x256xf32>
    %c1_256 = arith.constant 1 : index
    %c35_257 = arith.constant 35 : index
    %692 = memref.load %arg2[%c1_256, %c35_257] : memref<4x72xf32, #tpu.memory_space<smem>>
    %693 = vector.broadcast %692 : f32 to vector<2x256xf32>
    %694 = arith.mulf %687, %693 : vector<2x256xf32>
    %695 = arith.addf %676, %694 : vector<2x256xf32>
    %c2_258 = arith.constant 2 : index
    %c35_259 = arith.constant 35 : index
    %696 = memref.load %arg2[%c2_258, %c35_259] : memref<4x72xf32, #tpu.memory_space<smem>>
    %697 = vector.broadcast %696 : f32 to vector<2x256xf32>
    %698 = arith.mulf %687, %697 : vector<2x256xf32>
    %699 = arith.addf %680, %698 : vector<2x256xf32>
    %c3_260 = arith.constant 3 : index
    %c35_261 = arith.constant 35 : index
    %700 = memref.load %arg2[%c3_260, %c35_261] : memref<4x72xf32, #tpu.memory_space<smem>>
    %701 = vector.broadcast %700 : f32 to vector<2x256xf32>
    %702 = arith.mulf %687, %701 : vector<2x256xf32>
    %703 = arith.addf %684, %702 : vector<2x256xf32>
    %704 = tpu.concatenate %25, %37, %25 in 1 : vector<2x17xf32>, vector<2x256xf32>, vector<2x17xf32> -> vector<2x290xf32>
    %705 = vector.extract_strided_slice %704 {offsets = [0, 0], sizes = [2, 256], strides = [1, 1]} : vector<2x290xf32> to vector<2x256xf32>
    %706 = vector.broadcast %20 : vector<1x256xf32> to vector<2x256xf32>
    %707 = arith.mulf %705, %706 : vector<2x256xf32>
    %c0_262 = arith.constant 0 : index
    %c36 = arith.constant 36 : index
    %708 = memref.load %arg2[%c0_262, %c36] : memref<4x72xf32, #tpu.memory_space<smem>>
    %709 = vector.broadcast %708 : f32 to vector<2x256xf32>
    %710 = arith.mulf %707, %709 : vector<2x256xf32>
    %711 = arith.addf %691, %710 : vector<2x256xf32>
    %c1_263 = arith.constant 1 : index
    %c36_264 = arith.constant 36 : index
    %712 = memref.load %arg2[%c1_263, %c36_264] : memref<4x72xf32, #tpu.memory_space<smem>>
    %713 = vector.broadcast %712 : f32 to vector<2x256xf32>
    %714 = arith.mulf %707, %713 : vector<2x256xf32>
    %715 = arith.addf %695, %714 : vector<2x256xf32>
    %c2_265 = arith.constant 2 : index
    %c36_266 = arith.constant 36 : index
    %716 = memref.load %arg2[%c2_265, %c36_266] : memref<4x72xf32, #tpu.memory_space<smem>>
    %717 = vector.broadcast %716 : f32 to vector<2x256xf32>
    %718 = arith.mulf %707, %717 : vector<2x256xf32>
    %719 = arith.addf %699, %718 : vector<2x256xf32>
    %c3_267 = arith.constant 3 : index
    %c36_268 = arith.constant 36 : index
    %720 = memref.load %arg2[%c3_267, %c36_268] : memref<4x72xf32, #tpu.memory_space<smem>>
    %721 = vector.broadcast %720 : f32 to vector<2x256xf32>
    %722 = arith.mulf %707, %721 : vector<2x256xf32>
    %723 = arith.addf %703, %722 : vector<2x256xf32>
    %724 = vector.extract_strided_slice %704 {offsets = [0, 1], sizes = [2, 256], strides = [1, 1]} : vector<2x290xf32> to vector<2x256xf32>
    %c0_269 = arith.constant 0 : index
    %c37 = arith.constant 37 : index
    %725 = memref.load %arg2[%c0_269, %c37] : memref<4x72xf32, #tpu.memory_space<smem>>
    %726 = vector.broadcast %725 : f32 to vector<2x256xf32>
    %727 = arith.mulf %724, %726 : vector<2x256xf32>
    %728 = arith.addf %711, %727 : vector<2x256xf32>
    %c1_270 = arith.constant 1 : index
    %c37_271 = arith.constant 37 : index
    %729 = memref.load %arg2[%c1_270, %c37_271] : memref<4x72xf32, #tpu.memory_space<smem>>
    %730 = vector.broadcast %729 : f32 to vector<2x256xf32>
    %731 = arith.mulf %724, %730 : vector<2x256xf32>
    %732 = arith.addf %715, %731 : vector<2x256xf32>
    %c2_272 = arith.constant 2 : index
    %c37_273 = arith.constant 37 : index
    %733 = memref.load %arg2[%c2_272, %c37_273] : memref<4x72xf32, #tpu.memory_space<smem>>
    %734 = vector.broadcast %733 : f32 to vector<2x256xf32>
    %735 = arith.mulf %724, %734 : vector<2x256xf32>
    %736 = arith.addf %719, %735 : vector<2x256xf32>
    %c3_274 = arith.constant 3 : index
    %c37_275 = arith.constant 37 : index
    %737 = memref.load %arg2[%c3_274, %c37_275] : memref<4x72xf32, #tpu.memory_space<smem>>
    %738 = vector.broadcast %737 : f32 to vector<2x256xf32>
    %739 = arith.mulf %724, %738 : vector<2x256xf32>
    %740 = arith.addf %723, %739 : vector<2x256xf32>
    %741 = vector.extract_strided_slice %704 {offsets = [0, 2], sizes = [2, 256], strides = [1, 1]} : vector<2x290xf32> to vector<2x256xf32>
    %742 = vector.broadcast %24 : vector<1x256xf32> to vector<2x256xf32>
    %743 = arith.mulf %741, %742 : vector<2x256xf32>
    %c0_276 = arith.constant 0 : index
    %c38 = arith.constant 38 : index
    %744 = memref.load %arg2[%c0_276, %c38] : memref<4x72xf32, #tpu.memory_space<smem>>
    %745 = vector.broadcast %744 : f32 to vector<2x256xf32>
    %746 = arith.mulf %743, %745 : vector<2x256xf32>
    %747 = arith.addf %728, %746 : vector<2x256xf32>
    %c1_277 = arith.constant 1 : index
    %c38_278 = arith.constant 38 : index
    %748 = memref.load %arg2[%c1_277, %c38_278] : memref<4x72xf32, #tpu.memory_space<smem>>
    %749 = vector.broadcast %748 : f32 to vector<2x256xf32>
    %750 = arith.mulf %743, %749 : vector<2x256xf32>
    %751 = arith.addf %732, %750 : vector<2x256xf32>
    %c2_279 = arith.constant 2 : index
    %c38_280 = arith.constant 38 : index
    %752 = memref.load %arg2[%c2_279, %c38_280] : memref<4x72xf32, #tpu.memory_space<smem>>
    %753 = vector.broadcast %752 : f32 to vector<2x256xf32>
    %754 = arith.mulf %743, %753 : vector<2x256xf32>
    %755 = arith.addf %736, %754 : vector<2x256xf32>
    %c3_281 = arith.constant 3 : index
    %c38_282 = arith.constant 38 : index
    %756 = memref.load %arg2[%c3_281, %c38_282] : memref<4x72xf32, #tpu.memory_space<smem>>
    %757 = vector.broadcast %756 : f32 to vector<2x256xf32>
    %758 = arith.mulf %743, %757 : vector<2x256xf32>
    %759 = arith.addf %740, %758 : vector<2x256xf32>
    %760 = vector.extract_strided_slice %704 {offsets = [0, 16], sizes = [2, 256], strides = [1, 1]} : vector<2x290xf32> to vector<2x256xf32>
    %761 = vector.broadcast %20 : vector<1x256xf32> to vector<2x256xf32>
    %762 = arith.mulf %760, %761 : vector<2x256xf32>
    %c0_283 = arith.constant 0 : index
    %c39 = arith.constant 39 : index
    %763 = memref.load %arg2[%c0_283, %c39] : memref<4x72xf32, #tpu.memory_space<smem>>
    %764 = vector.broadcast %763 : f32 to vector<2x256xf32>
    %765 = arith.mulf %762, %764 : vector<2x256xf32>
    %766 = arith.addf %747, %765 : vector<2x256xf32>
    %c1_284 = arith.constant 1 : index
    %c39_285 = arith.constant 39 : index
    %767 = memref.load %arg2[%c1_284, %c39_285] : memref<4x72xf32, #tpu.memory_space<smem>>
    %768 = vector.broadcast %767 : f32 to vector<2x256xf32>
    %769 = arith.mulf %762, %768 : vector<2x256xf32>
    %770 = arith.addf %751, %769 : vector<2x256xf32>
    %c2_286 = arith.constant 2 : index
    %c39_287 = arith.constant 39 : index
    %771 = memref.load %arg2[%c2_286, %c39_287] : memref<4x72xf32, #tpu.memory_space<smem>>
    %772 = vector.broadcast %771 : f32 to vector<2x256xf32>
    %773 = arith.mulf %762, %772 : vector<2x256xf32>
    %774 = arith.addf %755, %773 : vector<2x256xf32>
    %c3_288 = arith.constant 3 : index
    %c39_289 = arith.constant 39 : index
    %775 = memref.load %arg2[%c3_288, %c39_289] : memref<4x72xf32, #tpu.memory_space<smem>>
    %776 = vector.broadcast %775 : f32 to vector<2x256xf32>
    %777 = arith.mulf %762, %776 : vector<2x256xf32>
    %778 = arith.addf %759, %777 : vector<2x256xf32>
    %779 = vector.extract_strided_slice %704 {offsets = [0, 17], sizes = [2, 256], strides = [1, 1]} : vector<2x290xf32> to vector<2x256xf32>
    %c0_290 = arith.constant 0 : index
    %c40 = arith.constant 40 : index
    %780 = memref.load %arg2[%c0_290, %c40] : memref<4x72xf32, #tpu.memory_space<smem>>
    %781 = vector.broadcast %780 : f32 to vector<2x256xf32>
    %782 = arith.mulf %779, %781 : vector<2x256xf32>
    %783 = arith.addf %766, %782 : vector<2x256xf32>
    %c1_291 = arith.constant 1 : index
    %c40_292 = arith.constant 40 : index
    %784 = memref.load %arg2[%c1_291, %c40_292] : memref<4x72xf32, #tpu.memory_space<smem>>
    %785 = vector.broadcast %784 : f32 to vector<2x256xf32>
    %786 = arith.mulf %779, %785 : vector<2x256xf32>
    %787 = arith.addf %770, %786 : vector<2x256xf32>
    %c2_293 = arith.constant 2 : index
    %c40_294 = arith.constant 40 : index
    %788 = memref.load %arg2[%c2_293, %c40_294] : memref<4x72xf32, #tpu.memory_space<smem>>
    %789 = vector.broadcast %788 : f32 to vector<2x256xf32>
    %790 = arith.mulf %779, %789 : vector<2x256xf32>
    %791 = arith.addf %774, %790 : vector<2x256xf32>
    %c3_295 = arith.constant 3 : index
    %c40_296 = arith.constant 40 : index
    %792 = memref.load %arg2[%c3_295, %c40_296] : memref<4x72xf32, #tpu.memory_space<smem>>
    %793 = vector.broadcast %792 : f32 to vector<2x256xf32>
    %794 = arith.mulf %779, %793 : vector<2x256xf32>
    %795 = arith.addf %778, %794 : vector<2x256xf32>
    %796 = vector.extract_strided_slice %704 {offsets = [0, 18], sizes = [2, 256], strides = [1, 1]} : vector<2x290xf32> to vector<2x256xf32>
    %797 = vector.broadcast %24 : vector<1x256xf32> to vector<2x256xf32>
    %798 = arith.mulf %796, %797 : vector<2x256xf32>
    %c0_297 = arith.constant 0 : index
    %c41 = arith.constant 41 : index
    %799 = memref.load %arg2[%c0_297, %c41] : memref<4x72xf32, #tpu.memory_space<smem>>
    %800 = vector.broadcast %799 : f32 to vector<2x256xf32>
    %801 = arith.mulf %798, %800 : vector<2x256xf32>
    %802 = arith.addf %783, %801 : vector<2x256xf32>
    %c1_298 = arith.constant 1 : index
    %c41_299 = arith.constant 41 : index
    %803 = memref.load %arg2[%c1_298, %c41_299] : memref<4x72xf32, #tpu.memory_space<smem>>
    %804 = vector.broadcast %803 : f32 to vector<2x256xf32>
    %805 = arith.mulf %798, %804 : vector<2x256xf32>
    %806 = arith.addf %787, %805 : vector<2x256xf32>
    %c2_300 = arith.constant 2 : index
    %c41_301 = arith.constant 41 : index
    %807 = memref.load %arg2[%c2_300, %c41_301] : memref<4x72xf32, #tpu.memory_space<smem>>
    %808 = vector.broadcast %807 : f32 to vector<2x256xf32>
    %809 = arith.mulf %798, %808 : vector<2x256xf32>
    %810 = arith.addf %791, %809 : vector<2x256xf32>
    %c3_302 = arith.constant 3 : index
    %c41_303 = arith.constant 41 : index
    %811 = memref.load %arg2[%c3_302, %c41_303] : memref<4x72xf32, #tpu.memory_space<smem>>
    %812 = vector.broadcast %811 : f32 to vector<2x256xf32>
    %813 = arith.mulf %798, %812 : vector<2x256xf32>
    %814 = arith.addf %795, %813 : vector<2x256xf32>
    %815 = vector.extract_strided_slice %704 {offsets = [0, 32], sizes = [2, 256], strides = [1, 1]} : vector<2x290xf32> to vector<2x256xf32>
    %816 = vector.broadcast %20 : vector<1x256xf32> to vector<2x256xf32>
    %817 = arith.mulf %815, %816 : vector<2x256xf32>
    %c0_304 = arith.constant 0 : index
    %c42 = arith.constant 42 : index
    %818 = memref.load %arg2[%c0_304, %c42] : memref<4x72xf32, #tpu.memory_space<smem>>
    %819 = vector.broadcast %818 : f32 to vector<2x256xf32>
    %820 = arith.mulf %817, %819 : vector<2x256xf32>
    %821 = arith.addf %802, %820 : vector<2x256xf32>
    %c1_305 = arith.constant 1 : index
    %c42_306 = arith.constant 42 : index
    %822 = memref.load %arg2[%c1_305, %c42_306] : memref<4x72xf32, #tpu.memory_space<smem>>
    %823 = vector.broadcast %822 : f32 to vector<2x256xf32>
    %824 = arith.mulf %817, %823 : vector<2x256xf32>
    %825 = arith.addf %806, %824 : vector<2x256xf32>
    %c2_307 = arith.constant 2 : index
    %c42_308 = arith.constant 42 : index
    %826 = memref.load %arg2[%c2_307, %c42_308] : memref<4x72xf32, #tpu.memory_space<smem>>
    %827 = vector.broadcast %826 : f32 to vector<2x256xf32>
    %828 = arith.mulf %817, %827 : vector<2x256xf32>
    %829 = arith.addf %810, %828 : vector<2x256xf32>
    %c3_309 = arith.constant 3 : index
    %c42_310 = arith.constant 42 : index
    %830 = memref.load %arg2[%c3_309, %c42_310] : memref<4x72xf32, #tpu.memory_space<smem>>
    %831 = vector.broadcast %830 : f32 to vector<2x256xf32>
    %832 = arith.mulf %817, %831 : vector<2x256xf32>
    %833 = arith.addf %814, %832 : vector<2x256xf32>
    %834 = vector.extract_strided_slice %704 {offsets = [0, 33], sizes = [2, 256], strides = [1, 1]} : vector<2x290xf32> to vector<2x256xf32>
    %c0_311 = arith.constant 0 : index
    %c43 = arith.constant 43 : index
    %835 = memref.load %arg2[%c0_311, %c43] : memref<4x72xf32, #tpu.memory_space<smem>>
    %836 = vector.broadcast %835 : f32 to vector<2x256xf32>
    %837 = arith.mulf %834, %836 : vector<2x256xf32>
    %838 = arith.addf %821, %837 : vector<2x256xf32>
    %c1_312 = arith.constant 1 : index
    %c43_313 = arith.constant 43 : index
    %839 = memref.load %arg2[%c1_312, %c43_313] : memref<4x72xf32, #tpu.memory_space<smem>>
    %840 = vector.broadcast %839 : f32 to vector<2x256xf32>
    %841 = arith.mulf %834, %840 : vector<2x256xf32>
    %842 = arith.addf %825, %841 : vector<2x256xf32>
    %c2_314 = arith.constant 2 : index
    %c43_315 = arith.constant 43 : index
    %843 = memref.load %arg2[%c2_314, %c43_315] : memref<4x72xf32, #tpu.memory_space<smem>>
    %844 = vector.broadcast %843 : f32 to vector<2x256xf32>
    %845 = arith.mulf %834, %844 : vector<2x256xf32>
    %846 = arith.addf %829, %845 : vector<2x256xf32>
    %c3_316 = arith.constant 3 : index
    %c43_317 = arith.constant 43 : index
    %847 = memref.load %arg2[%c3_316, %c43_317] : memref<4x72xf32, #tpu.memory_space<smem>>
    %848 = vector.broadcast %847 : f32 to vector<2x256xf32>
    %849 = arith.mulf %834, %848 : vector<2x256xf32>
    %850 = arith.addf %833, %849 : vector<2x256xf32>
    %851 = vector.extract_strided_slice %704 {offsets = [0, 34], sizes = [2, 256], strides = [1, 1]} : vector<2x290xf32> to vector<2x256xf32>
    %852 = vector.broadcast %24 : vector<1x256xf32> to vector<2x256xf32>
    %853 = arith.mulf %851, %852 : vector<2x256xf32>
    %c0_318 = arith.constant 0 : index
    %c44 = arith.constant 44 : index
    %854 = memref.load %arg2[%c0_318, %c44] : memref<4x72xf32, #tpu.memory_space<smem>>
    %855 = vector.broadcast %854 : f32 to vector<2x256xf32>
    %856 = arith.mulf %853, %855 : vector<2x256xf32>
    %857 = arith.addf %838, %856 : vector<2x256xf32>
    %c1_319 = arith.constant 1 : index
    %c44_320 = arith.constant 44 : index
    %858 = memref.load %arg2[%c1_319, %c44_320] : memref<4x72xf32, #tpu.memory_space<smem>>
    %859 = vector.broadcast %858 : f32 to vector<2x256xf32>
    %860 = arith.mulf %853, %859 : vector<2x256xf32>
    %861 = arith.addf %842, %860 : vector<2x256xf32>
    %c2_321 = arith.constant 2 : index
    %c44_322 = arith.constant 44 : index
    %862 = memref.load %arg2[%c2_321, %c44_322] : memref<4x72xf32, #tpu.memory_space<smem>>
    %863 = vector.broadcast %862 : f32 to vector<2x256xf32>
    %864 = arith.mulf %853, %863 : vector<2x256xf32>
    %865 = arith.addf %846, %864 : vector<2x256xf32>
    %c3_323 = arith.constant 3 : index
    %c44_324 = arith.constant 44 : index
    %866 = memref.load %arg2[%c3_323, %c44_324] : memref<4x72xf32, #tpu.memory_space<smem>>
    %867 = vector.broadcast %866 : f32 to vector<2x256xf32>
    %868 = arith.mulf %853, %867 : vector<2x256xf32>
    %869 = arith.addf %850, %868 : vector<2x256xf32>
    %870 = tpu.concatenate %25, %39, %25 in 1 : vector<2x17xf32>, vector<2x256xf32>, vector<2x17xf32> -> vector<2x290xf32>
    %871 = vector.extract_strided_slice %870 {offsets = [0, 0], sizes = [2, 256], strides = [1, 1]} : vector<2x290xf32> to vector<2x256xf32>
    %872 = vector.broadcast %20 : vector<1x256xf32> to vector<2x256xf32>
    %873 = arith.mulf %871, %872 : vector<2x256xf32>
    %c0_325 = arith.constant 0 : index
    %c45 = arith.constant 45 : index
    %874 = memref.load %arg2[%c0_325, %c45] : memref<4x72xf32, #tpu.memory_space<smem>>
    %875 = vector.broadcast %874 : f32 to vector<2x256xf32>
    %876 = arith.mulf %873, %875 : vector<2x256xf32>
    %877 = arith.addf %857, %876 : vector<2x256xf32>
    %c1_326 = arith.constant 1 : index
    %c45_327 = arith.constant 45 : index
    %878 = memref.load %arg2[%c1_326, %c45_327] : memref<4x72xf32, #tpu.memory_space<smem>>
    %879 = vector.broadcast %878 : f32 to vector<2x256xf32>
    %880 = arith.mulf %873, %879 : vector<2x256xf32>
    %881 = arith.addf %861, %880 : vector<2x256xf32>
    %c2_328 = arith.constant 2 : index
    %c45_329 = arith.constant 45 : index
    %882 = memref.load %arg2[%c2_328, %c45_329] : memref<4x72xf32, #tpu.memory_space<smem>>
    %883 = vector.broadcast %882 : f32 to vector<2x256xf32>
    %884 = arith.mulf %873, %883 : vector<2x256xf32>
    %885 = arith.addf %865, %884 : vector<2x256xf32>
    %c3_330 = arith.constant 3 : index
    %c45_331 = arith.constant 45 : index
    %886 = memref.load %arg2[%c3_330, %c45_331] : memref<4x72xf32, #tpu.memory_space<smem>>
    %887 = vector.broadcast %886 : f32 to vector<2x256xf32>
    %888 = arith.mulf %873, %887 : vector<2x256xf32>
    %889 = arith.addf %869, %888 : vector<2x256xf32>
    %890 = vector.extract_strided_slice %870 {offsets = [0, 1], sizes = [2, 256], strides = [1, 1]} : vector<2x290xf32> to vector<2x256xf32>
    %c0_332 = arith.constant 0 : index
    %c46 = arith.constant 46 : index
    %891 = memref.load %arg2[%c0_332, %c46] : memref<4x72xf32, #tpu.memory_space<smem>>
    %892 = vector.broadcast %891 : f32 to vector<2x256xf32>
    %893 = arith.mulf %890, %892 : vector<2x256xf32>
    %894 = arith.addf %877, %893 : vector<2x256xf32>
    %c1_333 = arith.constant 1 : index
    %c46_334 = arith.constant 46 : index
    %895 = memref.load %arg2[%c1_333, %c46_334] : memref<4x72xf32, #tpu.memory_space<smem>>
    %896 = vector.broadcast %895 : f32 to vector<2x256xf32>
    %897 = arith.mulf %890, %896 : vector<2x256xf32>
    %898 = arith.addf %881, %897 : vector<2x256xf32>
    %c2_335 = arith.constant 2 : index
    %c46_336 = arith.constant 46 : index
    %899 = memref.load %arg2[%c2_335, %c46_336] : memref<4x72xf32, #tpu.memory_space<smem>>
    %900 = vector.broadcast %899 : f32 to vector<2x256xf32>
    %901 = arith.mulf %890, %900 : vector<2x256xf32>
    %902 = arith.addf %885, %901 : vector<2x256xf32>
    %c3_337 = arith.constant 3 : index
    %c46_338 = arith.constant 46 : index
    %903 = memref.load %arg2[%c3_337, %c46_338] : memref<4x72xf32, #tpu.memory_space<smem>>
    %904 = vector.broadcast %903 : f32 to vector<2x256xf32>
    %905 = arith.mulf %890, %904 : vector<2x256xf32>
    %906 = arith.addf %889, %905 : vector<2x256xf32>
    %907 = vector.extract_strided_slice %870 {offsets = [0, 2], sizes = [2, 256], strides = [1, 1]} : vector<2x290xf32> to vector<2x256xf32>
    %908 = vector.broadcast %24 : vector<1x256xf32> to vector<2x256xf32>
    %909 = arith.mulf %907, %908 : vector<2x256xf32>
    %c0_339 = arith.constant 0 : index
    %c47 = arith.constant 47 : index
    %910 = memref.load %arg2[%c0_339, %c47] : memref<4x72xf32, #tpu.memory_space<smem>>
    %911 = vector.broadcast %910 : f32 to vector<2x256xf32>
    %912 = arith.mulf %909, %911 : vector<2x256xf32>
    %913 = arith.addf %894, %912 : vector<2x256xf32>
    %c1_340 = arith.constant 1 : index
    %c47_341 = arith.constant 47 : index
    %914 = memref.load %arg2[%c1_340, %c47_341] : memref<4x72xf32, #tpu.memory_space<smem>>
    %915 = vector.broadcast %914 : f32 to vector<2x256xf32>
    %916 = arith.mulf %909, %915 : vector<2x256xf32>
    %917 = arith.addf %898, %916 : vector<2x256xf32>
    %c2_342 = arith.constant 2 : index
    %c47_343 = arith.constant 47 : index
    %918 = memref.load %arg2[%c2_342, %c47_343] : memref<4x72xf32, #tpu.memory_space<smem>>
    %919 = vector.broadcast %918 : f32 to vector<2x256xf32>
    %920 = arith.mulf %909, %919 : vector<2x256xf32>
    %921 = arith.addf %902, %920 : vector<2x256xf32>
    %c3_344 = arith.constant 3 : index
    %c47_345 = arith.constant 47 : index
    %922 = memref.load %arg2[%c3_344, %c47_345] : memref<4x72xf32, #tpu.memory_space<smem>>
    %923 = vector.broadcast %922 : f32 to vector<2x256xf32>
    %924 = arith.mulf %909, %923 : vector<2x256xf32>
    %925 = arith.addf %906, %924 : vector<2x256xf32>
    %926 = vector.extract_strided_slice %870 {offsets = [0, 16], sizes = [2, 256], strides = [1, 1]} : vector<2x290xf32> to vector<2x256xf32>
    %927 = vector.broadcast %20 : vector<1x256xf32> to vector<2x256xf32>
    %928 = arith.mulf %926, %927 : vector<2x256xf32>
    %c0_346 = arith.constant 0 : index
    %c48 = arith.constant 48 : index
    %929 = memref.load %arg2[%c0_346, %c48] : memref<4x72xf32, #tpu.memory_space<smem>>
    %930 = vector.broadcast %929 : f32 to vector<2x256xf32>
    %931 = arith.mulf %928, %930 : vector<2x256xf32>
    %932 = arith.addf %913, %931 : vector<2x256xf32>
    %c1_347 = arith.constant 1 : index
    %c48_348 = arith.constant 48 : index
    %933 = memref.load %arg2[%c1_347, %c48_348] : memref<4x72xf32, #tpu.memory_space<smem>>
    %934 = vector.broadcast %933 : f32 to vector<2x256xf32>
    %935 = arith.mulf %928, %934 : vector<2x256xf32>
    %936 = arith.addf %917, %935 : vector<2x256xf32>
    %c2_349 = arith.constant 2 : index
    %c48_350 = arith.constant 48 : index
    %937 = memref.load %arg2[%c2_349, %c48_350] : memref<4x72xf32, #tpu.memory_space<smem>>
    %938 = vector.broadcast %937 : f32 to vector<2x256xf32>
    %939 = arith.mulf %928, %938 : vector<2x256xf32>
    %940 = arith.addf %921, %939 : vector<2x256xf32>
    %c3_351 = arith.constant 3 : index
    %c48_352 = arith.constant 48 : index
    %941 = memref.load %arg2[%c3_351, %c48_352] : memref<4x72xf32, #tpu.memory_space<smem>>
    %942 = vector.broadcast %941 : f32 to vector<2x256xf32>
    %943 = arith.mulf %928, %942 : vector<2x256xf32>
    %944 = arith.addf %925, %943 : vector<2x256xf32>
    %945 = vector.extract_strided_slice %870 {offsets = [0, 17], sizes = [2, 256], strides = [1, 1]} : vector<2x290xf32> to vector<2x256xf32>
    %c0_353 = arith.constant 0 : index
    %c49 = arith.constant 49 : index
    %946 = memref.load %arg2[%c0_353, %c49] : memref<4x72xf32, #tpu.memory_space<smem>>
    %947 = vector.broadcast %946 : f32 to vector<2x256xf32>
    %948 = arith.mulf %945, %947 : vector<2x256xf32>
    %949 = arith.addf %932, %948 : vector<2x256xf32>
    %c1_354 = arith.constant 1 : index
    %c49_355 = arith.constant 49 : index
    %950 = memref.load %arg2[%c1_354, %c49_355] : memref<4x72xf32, #tpu.memory_space<smem>>
    %951 = vector.broadcast %950 : f32 to vector<2x256xf32>
    %952 = arith.mulf %945, %951 : vector<2x256xf32>
    %953 = arith.addf %936, %952 : vector<2x256xf32>
    %c2_356 = arith.constant 2 : index
    %c49_357 = arith.constant 49 : index
    %954 = memref.load %arg2[%c2_356, %c49_357] : memref<4x72xf32, #tpu.memory_space<smem>>
    %955 = vector.broadcast %954 : f32 to vector<2x256xf32>
    %956 = arith.mulf %945, %955 : vector<2x256xf32>
    %957 = arith.addf %940, %956 : vector<2x256xf32>
    %c3_358 = arith.constant 3 : index
    %c49_359 = arith.constant 49 : index
    %958 = memref.load %arg2[%c3_358, %c49_359] : memref<4x72xf32, #tpu.memory_space<smem>>
    %959 = vector.broadcast %958 : f32 to vector<2x256xf32>
    %960 = arith.mulf %945, %959 : vector<2x256xf32>
    %961 = arith.addf %944, %960 : vector<2x256xf32>
    %962 = vector.extract_strided_slice %870 {offsets = [0, 18], sizes = [2, 256], strides = [1, 1]} : vector<2x290xf32> to vector<2x256xf32>
    %963 = vector.broadcast %24 : vector<1x256xf32> to vector<2x256xf32>
    %964 = arith.mulf %962, %963 : vector<2x256xf32>
    %c0_360 = arith.constant 0 : index
    %c50 = arith.constant 50 : index
    %965 = memref.load %arg2[%c0_360, %c50] : memref<4x72xf32, #tpu.memory_space<smem>>
    %966 = vector.broadcast %965 : f32 to vector<2x256xf32>
    %967 = arith.mulf %964, %966 : vector<2x256xf32>
    %968 = arith.addf %949, %967 : vector<2x256xf32>
    %c1_361 = arith.constant 1 : index
    %c50_362 = arith.constant 50 : index
    %969 = memref.load %arg2[%c1_361, %c50_362] : memref<4x72xf32, #tpu.memory_space<smem>>
    %970 = vector.broadcast %969 : f32 to vector<2x256xf32>
    %971 = arith.mulf %964, %970 : vector<2x256xf32>
    %972 = arith.addf %953, %971 : vector<2x256xf32>
    %c2_363 = arith.constant 2 : index
    %c50_364 = arith.constant 50 : index
    %973 = memref.load %arg2[%c2_363, %c50_364] : memref<4x72xf32, #tpu.memory_space<smem>>
    %974 = vector.broadcast %973 : f32 to vector<2x256xf32>
    %975 = arith.mulf %964, %974 : vector<2x256xf32>
    %976 = arith.addf %957, %975 : vector<2x256xf32>
    %c3_365 = arith.constant 3 : index
    %c50_366 = arith.constant 50 : index
    %977 = memref.load %arg2[%c3_365, %c50_366] : memref<4x72xf32, #tpu.memory_space<smem>>
    %978 = vector.broadcast %977 : f32 to vector<2x256xf32>
    %979 = arith.mulf %964, %978 : vector<2x256xf32>
    %980 = arith.addf %961, %979 : vector<2x256xf32>
    %981 = vector.extract_strided_slice %870 {offsets = [0, 32], sizes = [2, 256], strides = [1, 1]} : vector<2x290xf32> to vector<2x256xf32>
    %982 = vector.broadcast %20 : vector<1x256xf32> to vector<2x256xf32>
    %983 = arith.mulf %981, %982 : vector<2x256xf32>
    %c0_367 = arith.constant 0 : index
    %c51 = arith.constant 51 : index
    %984 = memref.load %arg2[%c0_367, %c51] : memref<4x72xf32, #tpu.memory_space<smem>>
    %985 = vector.broadcast %984 : f32 to vector<2x256xf32>
    %986 = arith.mulf %983, %985 : vector<2x256xf32>
    %987 = arith.addf %968, %986 : vector<2x256xf32>
    %c1_368 = arith.constant 1 : index
    %c51_369 = arith.constant 51 : index
    %988 = memref.load %arg2[%c1_368, %c51_369] : memref<4x72xf32, #tpu.memory_space<smem>>
    %989 = vector.broadcast %988 : f32 to vector<2x256xf32>
    %990 = arith.mulf %983, %989 : vector<2x256xf32>
    %991 = arith.addf %972, %990 : vector<2x256xf32>
    %c2_370 = arith.constant 2 : index
    %c51_371 = arith.constant 51 : index
    %992 = memref.load %arg2[%c2_370, %c51_371] : memref<4x72xf32, #tpu.memory_space<smem>>
    %993 = vector.broadcast %992 : f32 to vector<2x256xf32>
    %994 = arith.mulf %983, %993 : vector<2x256xf32>
    %995 = arith.addf %976, %994 : vector<2x256xf32>
    %c3_372 = arith.constant 3 : index
    %c51_373 = arith.constant 51 : index
    %996 = memref.load %arg2[%c3_372, %c51_373] : memref<4x72xf32, #tpu.memory_space<smem>>
    %997 = vector.broadcast %996 : f32 to vector<2x256xf32>
    %998 = arith.mulf %983, %997 : vector<2x256xf32>
    %999 = arith.addf %980, %998 : vector<2x256xf32>
    %1000 = vector.extract_strided_slice %870 {offsets = [0, 33], sizes = [2, 256], strides = [1, 1]} : vector<2x290xf32> to vector<2x256xf32>
    %c0_374 = arith.constant 0 : index
    %c52 = arith.constant 52 : index
    %1001 = memref.load %arg2[%c0_374, %c52] : memref<4x72xf32, #tpu.memory_space<smem>>
    %1002 = vector.broadcast %1001 : f32 to vector<2x256xf32>
    %1003 = arith.mulf %1000, %1002 : vector<2x256xf32>
    %1004 = arith.addf %987, %1003 : vector<2x256xf32>
    %c1_375 = arith.constant 1 : index
    %c52_376 = arith.constant 52 : index
    %1005 = memref.load %arg2[%c1_375, %c52_376] : memref<4x72xf32, #tpu.memory_space<smem>>
    %1006 = vector.broadcast %1005 : f32 to vector<2x256xf32>
    %1007 = arith.mulf %1000, %1006 : vector<2x256xf32>
    %1008 = arith.addf %991, %1007 : vector<2x256xf32>
    %c2_377 = arith.constant 2 : index
    %c52_378 = arith.constant 52 : index
    %1009 = memref.load %arg2[%c2_377, %c52_378] : memref<4x72xf32, #tpu.memory_space<smem>>
    %1010 = vector.broadcast %1009 : f32 to vector<2x256xf32>
    %1011 = arith.mulf %1000, %1010 : vector<2x256xf32>
    %1012 = arith.addf %995, %1011 : vector<2x256xf32>
    %c3_379 = arith.constant 3 : index
    %c52_380 = arith.constant 52 : index
    %1013 = memref.load %arg2[%c3_379, %c52_380] : memref<4x72xf32, #tpu.memory_space<smem>>
    %1014 = vector.broadcast %1013 : f32 to vector<2x256xf32>
    %1015 = arith.mulf %1000, %1014 : vector<2x256xf32>
    %1016 = arith.addf %999, %1015 : vector<2x256xf32>
    %1017 = vector.extract_strided_slice %870 {offsets = [0, 34], sizes = [2, 256], strides = [1, 1]} : vector<2x290xf32> to vector<2x256xf32>
    %1018 = vector.broadcast %24 : vector<1x256xf32> to vector<2x256xf32>
    %1019 = arith.mulf %1017, %1018 : vector<2x256xf32>
    %c0_381 = arith.constant 0 : index
    %c53 = arith.constant 53 : index
    %1020 = memref.load %arg2[%c0_381, %c53] : memref<4x72xf32, #tpu.memory_space<smem>>
    %1021 = vector.broadcast %1020 : f32 to vector<2x256xf32>
    %1022 = arith.mulf %1019, %1021 : vector<2x256xf32>
    %1023 = arith.addf %1004, %1022 : vector<2x256xf32>
    %c1_382 = arith.constant 1 : index
    %c53_383 = arith.constant 53 : index
    %1024 = memref.load %arg2[%c1_382, %c53_383] : memref<4x72xf32, #tpu.memory_space<smem>>
    %1025 = vector.broadcast %1024 : f32 to vector<2x256xf32>
    %1026 = arith.mulf %1019, %1025 : vector<2x256xf32>
    %1027 = arith.addf %1008, %1026 : vector<2x256xf32>
    %c2_384 = arith.constant 2 : index
    %c53_385 = arith.constant 53 : index
    %1028 = memref.load %arg2[%c2_384, %c53_385] : memref<4x72xf32, #tpu.memory_space<smem>>
    %1029 = vector.broadcast %1028 : f32 to vector<2x256xf32>
    %1030 = arith.mulf %1019, %1029 : vector<2x256xf32>
    %1031 = arith.addf %1012, %1030 : vector<2x256xf32>
    %c3_386 = arith.constant 3 : index
    %c53_387 = arith.constant 53 : index
    %1032 = memref.load %arg2[%c3_386, %c53_387] : memref<4x72xf32, #tpu.memory_space<smem>>
    %1033 = vector.broadcast %1032 : f32 to vector<2x256xf32>
    %1034 = arith.mulf %1019, %1033 : vector<2x256xf32>
    %1035 = arith.addf %1016, %1034 : vector<2x256xf32>
    %1036 = tpu.concatenate %25, %41, %25 in 1 : vector<2x17xf32>, vector<2x256xf32>, vector<2x17xf32> -> vector<2x290xf32>
    %1037 = vector.extract_strided_slice %1036 {offsets = [0, 0], sizes = [2, 256], strides = [1, 1]} : vector<2x290xf32> to vector<2x256xf32>
    %1038 = vector.broadcast %20 : vector<1x256xf32> to vector<2x256xf32>
    %1039 = arith.mulf %1037, %1038 : vector<2x256xf32>
    %c0_388 = arith.constant 0 : index
    %c54 = arith.constant 54 : index
    %1040 = memref.load %arg2[%c0_388, %c54] : memref<4x72xf32, #tpu.memory_space<smem>>
    %1041 = vector.broadcast %1040 : f32 to vector<2x256xf32>
    %1042 = arith.mulf %1039, %1041 : vector<2x256xf32>
    %1043 = arith.addf %1023, %1042 : vector<2x256xf32>
    %c1_389 = arith.constant 1 : index
    %c54_390 = arith.constant 54 : index
    %1044 = memref.load %arg2[%c1_389, %c54_390] : memref<4x72xf32, #tpu.memory_space<smem>>
    %1045 = vector.broadcast %1044 : f32 to vector<2x256xf32>
    %1046 = arith.mulf %1039, %1045 : vector<2x256xf32>
    %1047 = arith.addf %1027, %1046 : vector<2x256xf32>
    %c2_391 = arith.constant 2 : index
    %c54_392 = arith.constant 54 : index
    %1048 = memref.load %arg2[%c2_391, %c54_392] : memref<4x72xf32, #tpu.memory_space<smem>>
    %1049 = vector.broadcast %1048 : f32 to vector<2x256xf32>
    %1050 = arith.mulf %1039, %1049 : vector<2x256xf32>
    %1051 = arith.addf %1031, %1050 : vector<2x256xf32>
    %c3_393 = arith.constant 3 : index
    %c54_394 = arith.constant 54 : index
    %1052 = memref.load %arg2[%c3_393, %c54_394] : memref<4x72xf32, #tpu.memory_space<smem>>
    %1053 = vector.broadcast %1052 : f32 to vector<2x256xf32>
    %1054 = arith.mulf %1039, %1053 : vector<2x256xf32>
    %1055 = arith.addf %1035, %1054 : vector<2x256xf32>
    %1056 = vector.extract_strided_slice %1036 {offsets = [0, 1], sizes = [2, 256], strides = [1, 1]} : vector<2x290xf32> to vector<2x256xf32>
    %c0_395 = arith.constant 0 : index
    %c55 = arith.constant 55 : index
    %1057 = memref.load %arg2[%c0_395, %c55] : memref<4x72xf32, #tpu.memory_space<smem>>
    %1058 = vector.broadcast %1057 : f32 to vector<2x256xf32>
    %1059 = arith.mulf %1056, %1058 : vector<2x256xf32>
    %1060 = arith.addf %1043, %1059 : vector<2x256xf32>
    %c1_396 = arith.constant 1 : index
    %c55_397 = arith.constant 55 : index
    %1061 = memref.load %arg2[%c1_396, %c55_397] : memref<4x72xf32, #tpu.memory_space<smem>>
    %1062 = vector.broadcast %1061 : f32 to vector<2x256xf32>
    %1063 = arith.mulf %1056, %1062 : vector<2x256xf32>
    %1064 = arith.addf %1047, %1063 : vector<2x256xf32>
    %c2_398 = arith.constant 2 : index
    %c55_399 = arith.constant 55 : index
    %1065 = memref.load %arg2[%c2_398, %c55_399] : memref<4x72xf32, #tpu.memory_space<smem>>
    %1066 = vector.broadcast %1065 : f32 to vector<2x256xf32>
    %1067 = arith.mulf %1056, %1066 : vector<2x256xf32>
    %1068 = arith.addf %1051, %1067 : vector<2x256xf32>
    %c3_400 = arith.constant 3 : index
    %c55_401 = arith.constant 55 : index
    %1069 = memref.load %arg2[%c3_400, %c55_401] : memref<4x72xf32, #tpu.memory_space<smem>>
    %1070 = vector.broadcast %1069 : f32 to vector<2x256xf32>
    %1071 = arith.mulf %1056, %1070 : vector<2x256xf32>
    %1072 = arith.addf %1055, %1071 : vector<2x256xf32>
    %1073 = vector.extract_strided_slice %1036 {offsets = [0, 2], sizes = [2, 256], strides = [1, 1]} : vector<2x290xf32> to vector<2x256xf32>
    %1074 = vector.broadcast %24 : vector<1x256xf32> to vector<2x256xf32>
    %1075 = arith.mulf %1073, %1074 : vector<2x256xf32>
    %c0_402 = arith.constant 0 : index
    %c56 = arith.constant 56 : index
    %1076 = memref.load %arg2[%c0_402, %c56] : memref<4x72xf32, #tpu.memory_space<smem>>
    %1077 = vector.broadcast %1076 : f32 to vector<2x256xf32>
    %1078 = arith.mulf %1075, %1077 : vector<2x256xf32>
    %1079 = arith.addf %1060, %1078 : vector<2x256xf32>
    %c1_403 = arith.constant 1 : index
    %c56_404 = arith.constant 56 : index
    %1080 = memref.load %arg2[%c1_403, %c56_404] : memref<4x72xf32, #tpu.memory_space<smem>>
    %1081 = vector.broadcast %1080 : f32 to vector<2x256xf32>
    %1082 = arith.mulf %1075, %1081 : vector<2x256xf32>
    %1083 = arith.addf %1064, %1082 : vector<2x256xf32>
    %c2_405 = arith.constant 2 : index
    %c56_406 = arith.constant 56 : index
    %1084 = memref.load %arg2[%c2_405, %c56_406] : memref<4x72xf32, #tpu.memory_space<smem>>
    %1085 = vector.broadcast %1084 : f32 to vector<2x256xf32>
    %1086 = arith.mulf %1075, %1085 : vector<2x256xf32>
    %1087 = arith.addf %1068, %1086 : vector<2x256xf32>
    %c3_407 = arith.constant 3 : index
    %c56_408 = arith.constant 56 : index
    %1088 = memref.load %arg2[%c3_407, %c56_408] : memref<4x72xf32, #tpu.memory_space<smem>>
    %1089 = vector.broadcast %1088 : f32 to vector<2x256xf32>
    %1090 = arith.mulf %1075, %1089 : vector<2x256xf32>
    %1091 = arith.addf %1072, %1090 : vector<2x256xf32>
    %1092 = vector.extract_strided_slice %1036 {offsets = [0, 16], sizes = [2, 256], strides = [1, 1]} : vector<2x290xf32> to vector<2x256xf32>
    %1093 = vector.broadcast %20 : vector<1x256xf32> to vector<2x256xf32>
    %1094 = arith.mulf %1092, %1093 : vector<2x256xf32>
    %c0_409 = arith.constant 0 : index
    %c57 = arith.constant 57 : index
    %1095 = memref.load %arg2[%c0_409, %c57] : memref<4x72xf32, #tpu.memory_space<smem>>
    %1096 = vector.broadcast %1095 : f32 to vector<2x256xf32>
    %1097 = arith.mulf %1094, %1096 : vector<2x256xf32>
    %1098 = arith.addf %1079, %1097 : vector<2x256xf32>
    %c1_410 = arith.constant 1 : index
    %c57_411 = arith.constant 57 : index
    %1099 = memref.load %arg2[%c1_410, %c57_411] : memref<4x72xf32, #tpu.memory_space<smem>>
    %1100 = vector.broadcast %1099 : f32 to vector<2x256xf32>
    %1101 = arith.mulf %1094, %1100 : vector<2x256xf32>
    %1102 = arith.addf %1083, %1101 : vector<2x256xf32>
    %c2_412 = arith.constant 2 : index
    %c57_413 = arith.constant 57 : index
    %1103 = memref.load %arg2[%c2_412, %c57_413] : memref<4x72xf32, #tpu.memory_space<smem>>
    %1104 = vector.broadcast %1103 : f32 to vector<2x256xf32>
    %1105 = arith.mulf %1094, %1104 : vector<2x256xf32>
    %1106 = arith.addf %1087, %1105 : vector<2x256xf32>
    %c3_414 = arith.constant 3 : index
    %c57_415 = arith.constant 57 : index
    %1107 = memref.load %arg2[%c3_414, %c57_415] : memref<4x72xf32, #tpu.memory_space<smem>>
    %1108 = vector.broadcast %1107 : f32 to vector<2x256xf32>
    %1109 = arith.mulf %1094, %1108 : vector<2x256xf32>
    %1110 = arith.addf %1091, %1109 : vector<2x256xf32>
    %1111 = vector.extract_strided_slice %1036 {offsets = [0, 17], sizes = [2, 256], strides = [1, 1]} : vector<2x290xf32> to vector<2x256xf32>
    %c0_416 = arith.constant 0 : index
    %c58 = arith.constant 58 : index
    %1112 = memref.load %arg2[%c0_416, %c58] : memref<4x72xf32, #tpu.memory_space<smem>>
    %1113 = vector.broadcast %1112 : f32 to vector<2x256xf32>
    %1114 = arith.mulf %1111, %1113 : vector<2x256xf32>
    %1115 = arith.addf %1098, %1114 : vector<2x256xf32>
    %c1_417 = arith.constant 1 : index
    %c58_418 = arith.constant 58 : index
    %1116 = memref.load %arg2[%c1_417, %c58_418] : memref<4x72xf32, #tpu.memory_space<smem>>
    %1117 = vector.broadcast %1116 : f32 to vector<2x256xf32>
    %1118 = arith.mulf %1111, %1117 : vector<2x256xf32>
    %1119 = arith.addf %1102, %1118 : vector<2x256xf32>
    %c2_419 = arith.constant 2 : index
    %c58_420 = arith.constant 58 : index
    %1120 = memref.load %arg2[%c2_419, %c58_420] : memref<4x72xf32, #tpu.memory_space<smem>>
    %1121 = vector.broadcast %1120 : f32 to vector<2x256xf32>
    %1122 = arith.mulf %1111, %1121 : vector<2x256xf32>
    %1123 = arith.addf %1106, %1122 : vector<2x256xf32>
    %c3_421 = arith.constant 3 : index
    %c58_422 = arith.constant 58 : index
    %1124 = memref.load %arg2[%c3_421, %c58_422] : memref<4x72xf32, #tpu.memory_space<smem>>
    %1125 = vector.broadcast %1124 : f32 to vector<2x256xf32>
    %1126 = arith.mulf %1111, %1125 : vector<2x256xf32>
    %1127 = arith.addf %1110, %1126 : vector<2x256xf32>
    %1128 = vector.extract_strided_slice %1036 {offsets = [0, 18], sizes = [2, 256], strides = [1, 1]} : vector<2x290xf32> to vector<2x256xf32>
    %1129 = vector.broadcast %24 : vector<1x256xf32> to vector<2x256xf32>
    %1130 = arith.mulf %1128, %1129 : vector<2x256xf32>
    %c0_423 = arith.constant 0 : index
    %c59 = arith.constant 59 : index
    %1131 = memref.load %arg2[%c0_423, %c59] : memref<4x72xf32, #tpu.memory_space<smem>>
    %1132 = vector.broadcast %1131 : f32 to vector<2x256xf32>
    %1133 = arith.mulf %1130, %1132 : vector<2x256xf32>
    %1134 = arith.addf %1115, %1133 : vector<2x256xf32>
    %c1_424 = arith.constant 1 : index
    %c59_425 = arith.constant 59 : index
    %1135 = memref.load %arg2[%c1_424, %c59_425] : memref<4x72xf32, #tpu.memory_space<smem>>
    %1136 = vector.broadcast %1135 : f32 to vector<2x256xf32>
    %1137 = arith.mulf %1130, %1136 : vector<2x256xf32>
    %1138 = arith.addf %1119, %1137 : vector<2x256xf32>
    %c2_426 = arith.constant 2 : index
    %c59_427 = arith.constant 59 : index
    %1139 = memref.load %arg2[%c2_426, %c59_427] : memref<4x72xf32, #tpu.memory_space<smem>>
    %1140 = vector.broadcast %1139 : f32 to vector<2x256xf32>
    %1141 = arith.mulf %1130, %1140 : vector<2x256xf32>
    %1142 = arith.addf %1123, %1141 : vector<2x256xf32>
    %c3_428 = arith.constant 3 : index
    %c59_429 = arith.constant 59 : index
    %1143 = memref.load %arg2[%c3_428, %c59_429] : memref<4x72xf32, #tpu.memory_space<smem>>
    %1144 = vector.broadcast %1143 : f32 to vector<2x256xf32>
    %1145 = arith.mulf %1130, %1144 : vector<2x256xf32>
    %1146 = arith.addf %1127, %1145 : vector<2x256xf32>
    %1147 = vector.extract_strided_slice %1036 {offsets = [0, 32], sizes = [2, 256], strides = [1, 1]} : vector<2x290xf32> to vector<2x256xf32>
    %1148 = vector.broadcast %20 : vector<1x256xf32> to vector<2x256xf32>
    %1149 = arith.mulf %1147, %1148 : vector<2x256xf32>
    %c0_430 = arith.constant 0 : index
    %c60 = arith.constant 60 : index
    %1150 = memref.load %arg2[%c0_430, %c60] : memref<4x72xf32, #tpu.memory_space<smem>>
    %1151 = vector.broadcast %1150 : f32 to vector<2x256xf32>
    %1152 = arith.mulf %1149, %1151 : vector<2x256xf32>
    %1153 = arith.addf %1134, %1152 : vector<2x256xf32>
    %c1_431 = arith.constant 1 : index
    %c60_432 = arith.constant 60 : index
    %1154 = memref.load %arg2[%c1_431, %c60_432] : memref<4x72xf32, #tpu.memory_space<smem>>
    %1155 = vector.broadcast %1154 : f32 to vector<2x256xf32>
    %1156 = arith.mulf %1149, %1155 : vector<2x256xf32>
    %1157 = arith.addf %1138, %1156 : vector<2x256xf32>
    %c2_433 = arith.constant 2 : index
    %c60_434 = arith.constant 60 : index
    %1158 = memref.load %arg2[%c2_433, %c60_434] : memref<4x72xf32, #tpu.memory_space<smem>>
    %1159 = vector.broadcast %1158 : f32 to vector<2x256xf32>
    %1160 = arith.mulf %1149, %1159 : vector<2x256xf32>
    %1161 = arith.addf %1142, %1160 : vector<2x256xf32>
    %c3_435 = arith.constant 3 : index
    %c60_436 = arith.constant 60 : index
    %1162 = memref.load %arg2[%c3_435, %c60_436] : memref<4x72xf32, #tpu.memory_space<smem>>
    %1163 = vector.broadcast %1162 : f32 to vector<2x256xf32>
    %1164 = arith.mulf %1149, %1163 : vector<2x256xf32>
    %1165 = arith.addf %1146, %1164 : vector<2x256xf32>
    %1166 = vector.extract_strided_slice %1036 {offsets = [0, 33], sizes = [2, 256], strides = [1, 1]} : vector<2x290xf32> to vector<2x256xf32>
    %c0_437 = arith.constant 0 : index
    %c61 = arith.constant 61 : index
    %1167 = memref.load %arg2[%c0_437, %c61] : memref<4x72xf32, #tpu.memory_space<smem>>
    %1168 = vector.broadcast %1167 : f32 to vector<2x256xf32>
    %1169 = arith.mulf %1166, %1168 : vector<2x256xf32>
    %1170 = arith.addf %1153, %1169 : vector<2x256xf32>
    %c1_438 = arith.constant 1 : index
    %c61_439 = arith.constant 61 : index
    %1171 = memref.load %arg2[%c1_438, %c61_439] : memref<4x72xf32, #tpu.memory_space<smem>>
    %1172 = vector.broadcast %1171 : f32 to vector<2x256xf32>
    %1173 = arith.mulf %1166, %1172 : vector<2x256xf32>
    %1174 = arith.addf %1157, %1173 : vector<2x256xf32>
    %c2_440 = arith.constant 2 : index
    %c61_441 = arith.constant 61 : index
    %1175 = memref.load %arg2[%c2_440, %c61_441] : memref<4x72xf32, #tpu.memory_space<smem>>
    %1176 = vector.broadcast %1175 : f32 to vector<2x256xf32>
    %1177 = arith.mulf %1166, %1176 : vector<2x256xf32>
    %1178 = arith.addf %1161, %1177 : vector<2x256xf32>
    %c3_442 = arith.constant 3 : index
    %c61_443 = arith.constant 61 : index
    %1179 = memref.load %arg2[%c3_442, %c61_443] : memref<4x72xf32, #tpu.memory_space<smem>>
    %1180 = vector.broadcast %1179 : f32 to vector<2x256xf32>
    %1181 = arith.mulf %1166, %1180 : vector<2x256xf32>
    %1182 = arith.addf %1165, %1181 : vector<2x256xf32>
    %1183 = vector.extract_strided_slice %1036 {offsets = [0, 34], sizes = [2, 256], strides = [1, 1]} : vector<2x290xf32> to vector<2x256xf32>
    %1184 = vector.broadcast %24 : vector<1x256xf32> to vector<2x256xf32>
    %1185 = arith.mulf %1183, %1184 : vector<2x256xf32>
    %c0_444 = arith.constant 0 : index
    %c62 = arith.constant 62 : index
    %1186 = memref.load %arg2[%c0_444, %c62] : memref<4x72xf32, #tpu.memory_space<smem>>
    %1187 = vector.broadcast %1186 : f32 to vector<2x256xf32>
    %1188 = arith.mulf %1185, %1187 : vector<2x256xf32>
    %1189 = arith.addf %1170, %1188 : vector<2x256xf32>
    %c1_445 = arith.constant 1 : index
    %c62_446 = arith.constant 62 : index
    %1190 = memref.load %arg2[%c1_445, %c62_446] : memref<4x72xf32, #tpu.memory_space<smem>>
    %1191 = vector.broadcast %1190 : f32 to vector<2x256xf32>
    %1192 = arith.mulf %1185, %1191 : vector<2x256xf32>
    %1193 = arith.addf %1174, %1192 : vector<2x256xf32>
    %c2_447 = arith.constant 2 : index
    %c62_448 = arith.constant 62 : index
    %1194 = memref.load %arg2[%c2_447, %c62_448] : memref<4x72xf32, #tpu.memory_space<smem>>
    %1195 = vector.broadcast %1194 : f32 to vector<2x256xf32>
    %1196 = arith.mulf %1185, %1195 : vector<2x256xf32>
    %1197 = arith.addf %1178, %1196 : vector<2x256xf32>
    %c3_449 = arith.constant 3 : index
    %c62_450 = arith.constant 62 : index
    %1198 = memref.load %arg2[%c3_449, %c62_450] : memref<4x72xf32, #tpu.memory_space<smem>>
    %1199 = vector.broadcast %1198 : f32 to vector<2x256xf32>
    %1200 = arith.mulf %1185, %1199 : vector<2x256xf32>
    %1201 = arith.addf %1182, %1200 : vector<2x256xf32>
    %1202 = tpu.concatenate %25, %43, %25 in 1 : vector<2x17xf32>, vector<2x256xf32>, vector<2x17xf32> -> vector<2x290xf32>
    %1203 = vector.extract_strided_slice %1202 {offsets = [0, 0], sizes = [2, 256], strides = [1, 1]} : vector<2x290xf32> to vector<2x256xf32>
    %1204 = vector.broadcast %20 : vector<1x256xf32> to vector<2x256xf32>
    %1205 = arith.mulf %1203, %1204 : vector<2x256xf32>
    %c0_451 = arith.constant 0 : index
    %c63 = arith.constant 63 : index
    %1206 = memref.load %arg2[%c0_451, %c63] : memref<4x72xf32, #tpu.memory_space<smem>>
    %1207 = vector.broadcast %1206 : f32 to vector<2x256xf32>
    %1208 = arith.mulf %1205, %1207 : vector<2x256xf32>
    %1209 = arith.addf %1189, %1208 : vector<2x256xf32>
    %c1_452 = arith.constant 1 : index
    %c63_453 = arith.constant 63 : index
    %1210 = memref.load %arg2[%c1_452, %c63_453] : memref<4x72xf32, #tpu.memory_space<smem>>
    %1211 = vector.broadcast %1210 : f32 to vector<2x256xf32>
    %1212 = arith.mulf %1205, %1211 : vector<2x256xf32>
    %1213 = arith.addf %1193, %1212 : vector<2x256xf32>
    %c2_454 = arith.constant 2 : index
    %c63_455 = arith.constant 63 : index
    %1214 = memref.load %arg2[%c2_454, %c63_455] : memref<4x72xf32, #tpu.memory_space<smem>>
    %1215 = vector.broadcast %1214 : f32 to vector<2x256xf32>
    %1216 = arith.mulf %1205, %1215 : vector<2x256xf32>
    %1217 = arith.addf %1197, %1216 : vector<2x256xf32>
    %c3_456 = arith.constant 3 : index
    %c63_457 = arith.constant 63 : index
    %1218 = memref.load %arg2[%c3_456, %c63_457] : memref<4x72xf32, #tpu.memory_space<smem>>
    %1219 = vector.broadcast %1218 : f32 to vector<2x256xf32>
    %1220 = arith.mulf %1205, %1219 : vector<2x256xf32>
    %1221 = arith.addf %1201, %1220 : vector<2x256xf32>
    %1222 = vector.extract_strided_slice %1202 {offsets = [0, 1], sizes = [2, 256], strides = [1, 1]} : vector<2x290xf32> to vector<2x256xf32>
    %c0_458 = arith.constant 0 : index
    %c64 = arith.constant 64 : index
    %1223 = memref.load %arg2[%c0_458, %c64] : memref<4x72xf32, #tpu.memory_space<smem>>
    %1224 = vector.broadcast %1223 : f32 to vector<2x256xf32>
    %1225 = arith.mulf %1222, %1224 : vector<2x256xf32>
    %1226 = arith.addf %1209, %1225 : vector<2x256xf32>
    %c1_459 = arith.constant 1 : index
    %c64_460 = arith.constant 64 : index
    %1227 = memref.load %arg2[%c1_459, %c64_460] : memref<4x72xf32, #tpu.memory_space<smem>>
    %1228 = vector.broadcast %1227 : f32 to vector<2x256xf32>
    %1229 = arith.mulf %1222, %1228 : vector<2x256xf32>
    %1230 = arith.addf %1213, %1229 : vector<2x256xf32>
    %c2_461 = arith.constant 2 : index
    %c64_462 = arith.constant 64 : index
    %1231 = memref.load %arg2[%c2_461, %c64_462] : memref<4x72xf32, #tpu.memory_space<smem>>
    %1232 = vector.broadcast %1231 : f32 to vector<2x256xf32>
    %1233 = arith.mulf %1222, %1232 : vector<2x256xf32>
    %1234 = arith.addf %1217, %1233 : vector<2x256xf32>
    %c3_463 = arith.constant 3 : index
    %c64_464 = arith.constant 64 : index
    %1235 = memref.load %arg2[%c3_463, %c64_464] : memref<4x72xf32, #tpu.memory_space<smem>>
    %1236 = vector.broadcast %1235 : f32 to vector<2x256xf32>
    %1237 = arith.mulf %1222, %1236 : vector<2x256xf32>
    %1238 = arith.addf %1221, %1237 : vector<2x256xf32>
    %1239 = vector.extract_strided_slice %1202 {offsets = [0, 2], sizes = [2, 256], strides = [1, 1]} : vector<2x290xf32> to vector<2x256xf32>
    %1240 = vector.broadcast %24 : vector<1x256xf32> to vector<2x256xf32>
    %1241 = arith.mulf %1239, %1240 : vector<2x256xf32>
    %c0_465 = arith.constant 0 : index
    %c65 = arith.constant 65 : index
    %1242 = memref.load %arg2[%c0_465, %c65] : memref<4x72xf32, #tpu.memory_space<smem>>
    %1243 = vector.broadcast %1242 : f32 to vector<2x256xf32>
    %1244 = arith.mulf %1241, %1243 : vector<2x256xf32>
    %1245 = arith.addf %1226, %1244 : vector<2x256xf32>
    %c1_466 = arith.constant 1 : index
    %c65_467 = arith.constant 65 : index
    %1246 = memref.load %arg2[%c1_466, %c65_467] : memref<4x72xf32, #tpu.memory_space<smem>>
    %1247 = vector.broadcast %1246 : f32 to vector<2x256xf32>
    %1248 = arith.mulf %1241, %1247 : vector<2x256xf32>
    %1249 = arith.addf %1230, %1248 : vector<2x256xf32>
    %c2_468 = arith.constant 2 : index
    %c65_469 = arith.constant 65 : index
    %1250 = memref.load %arg2[%c2_468, %c65_469] : memref<4x72xf32, #tpu.memory_space<smem>>
    %1251 = vector.broadcast %1250 : f32 to vector<2x256xf32>
    %1252 = arith.mulf %1241, %1251 : vector<2x256xf32>
    %1253 = arith.addf %1234, %1252 : vector<2x256xf32>
    %c3_470 = arith.constant 3 : index
    %c65_471 = arith.constant 65 : index
    %1254 = memref.load %arg2[%c3_470, %c65_471] : memref<4x72xf32, #tpu.memory_space<smem>>
    %1255 = vector.broadcast %1254 : f32 to vector<2x256xf32>
    %1256 = arith.mulf %1241, %1255 : vector<2x256xf32>
    %1257 = arith.addf %1238, %1256 : vector<2x256xf32>
    %1258 = vector.extract_strided_slice %1202 {offsets = [0, 16], sizes = [2, 256], strides = [1, 1]} : vector<2x290xf32> to vector<2x256xf32>
    %1259 = vector.broadcast %20 : vector<1x256xf32> to vector<2x256xf32>
    %1260 = arith.mulf %1258, %1259 : vector<2x256xf32>
    %c0_472 = arith.constant 0 : index
    %c66 = arith.constant 66 : index
    %1261 = memref.load %arg2[%c0_472, %c66] : memref<4x72xf32, #tpu.memory_space<smem>>
    %1262 = vector.broadcast %1261 : f32 to vector<2x256xf32>
    %1263 = arith.mulf %1260, %1262 : vector<2x256xf32>
    %1264 = arith.addf %1245, %1263 : vector<2x256xf32>
    %c1_473 = arith.constant 1 : index
    %c66_474 = arith.constant 66 : index
    %1265 = memref.load %arg2[%c1_473, %c66_474] : memref<4x72xf32, #tpu.memory_space<smem>>
    %1266 = vector.broadcast %1265 : f32 to vector<2x256xf32>
    %1267 = arith.mulf %1260, %1266 : vector<2x256xf32>
    %1268 = arith.addf %1249, %1267 : vector<2x256xf32>
    %c2_475 = arith.constant 2 : index
    %c66_476 = arith.constant 66 : index
    %1269 = memref.load %arg2[%c2_475, %c66_476] : memref<4x72xf32, #tpu.memory_space<smem>>
    %1270 = vector.broadcast %1269 : f32 to vector<2x256xf32>
    %1271 = arith.mulf %1260, %1270 : vector<2x256xf32>
    %1272 = arith.addf %1253, %1271 : vector<2x256xf32>
    %c3_477 = arith.constant 3 : index
    %c66_478 = arith.constant 66 : index
    %1273 = memref.load %arg2[%c3_477, %c66_478] : memref<4x72xf32, #tpu.memory_space<smem>>
    %1274 = vector.broadcast %1273 : f32 to vector<2x256xf32>
    %1275 = arith.mulf %1260, %1274 : vector<2x256xf32>
    %1276 = arith.addf %1257, %1275 : vector<2x256xf32>
    %1277 = vector.extract_strided_slice %1202 {offsets = [0, 17], sizes = [2, 256], strides = [1, 1]} : vector<2x290xf32> to vector<2x256xf32>
    %c0_479 = arith.constant 0 : index
    %c67 = arith.constant 67 : index
    %1278 = memref.load %arg2[%c0_479, %c67] : memref<4x72xf32, #tpu.memory_space<smem>>
    %1279 = vector.broadcast %1278 : f32 to vector<2x256xf32>
    %1280 = arith.mulf %1277, %1279 : vector<2x256xf32>
    %1281 = arith.addf %1264, %1280 : vector<2x256xf32>
    %c1_480 = arith.constant 1 : index
    %c67_481 = arith.constant 67 : index
    %1282 = memref.load %arg2[%c1_480, %c67_481] : memref<4x72xf32, #tpu.memory_space<smem>>
    %1283 = vector.broadcast %1282 : f32 to vector<2x256xf32>
    %1284 = arith.mulf %1277, %1283 : vector<2x256xf32>
    %1285 = arith.addf %1268, %1284 : vector<2x256xf32>
    %c2_482 = arith.constant 2 : index
    %c67_483 = arith.constant 67 : index
    %1286 = memref.load %arg2[%c2_482, %c67_483] : memref<4x72xf32, #tpu.memory_space<smem>>
    %1287 = vector.broadcast %1286 : f32 to vector<2x256xf32>
    %1288 = arith.mulf %1277, %1287 : vector<2x256xf32>
    %1289 = arith.addf %1272, %1288 : vector<2x256xf32>
    %c3_484 = arith.constant 3 : index
    %c67_485 = arith.constant 67 : index
    %1290 = memref.load %arg2[%c3_484, %c67_485] : memref<4x72xf32, #tpu.memory_space<smem>>
    %1291 = vector.broadcast %1290 : f32 to vector<2x256xf32>
    %1292 = arith.mulf %1277, %1291 : vector<2x256xf32>
    %1293 = arith.addf %1276, %1292 : vector<2x256xf32>
    %1294 = vector.extract_strided_slice %1202 {offsets = [0, 18], sizes = [2, 256], strides = [1, 1]} : vector<2x290xf32> to vector<2x256xf32>
    %1295 = vector.broadcast %24 : vector<1x256xf32> to vector<2x256xf32>
    %1296 = arith.mulf %1294, %1295 : vector<2x256xf32>
    %c0_486 = arith.constant 0 : index
    %c68 = arith.constant 68 : index
    %1297 = memref.load %arg2[%c0_486, %c68] : memref<4x72xf32, #tpu.memory_space<smem>>
    %1298 = vector.broadcast %1297 : f32 to vector<2x256xf32>
    %1299 = arith.mulf %1296, %1298 : vector<2x256xf32>
    %1300 = arith.addf %1281, %1299 : vector<2x256xf32>
    %c1_487 = arith.constant 1 : index
    %c68_488 = arith.constant 68 : index
    %1301 = memref.load %arg2[%c1_487, %c68_488] : memref<4x72xf32, #tpu.memory_space<smem>>
    %1302 = vector.broadcast %1301 : f32 to vector<2x256xf32>
    %1303 = arith.mulf %1296, %1302 : vector<2x256xf32>
    %1304 = arith.addf %1285, %1303 : vector<2x256xf32>
    %c2_489 = arith.constant 2 : index
    %c68_490 = arith.constant 68 : index
    %1305 = memref.load %arg2[%c2_489, %c68_490] : memref<4x72xf32, #tpu.memory_space<smem>>
    %1306 = vector.broadcast %1305 : f32 to vector<2x256xf32>
    %1307 = arith.mulf %1296, %1306 : vector<2x256xf32>
    %1308 = arith.addf %1289, %1307 : vector<2x256xf32>
    %c3_491 = arith.constant 3 : index
    %c68_492 = arith.constant 68 : index
    %1309 = memref.load %arg2[%c3_491, %c68_492] : memref<4x72xf32, #tpu.memory_space<smem>>
    %1310 = vector.broadcast %1309 : f32 to vector<2x256xf32>
    %1311 = arith.mulf %1296, %1310 : vector<2x256xf32>
    %1312 = arith.addf %1293, %1311 : vector<2x256xf32>
    %1313 = vector.extract_strided_slice %1202 {offsets = [0, 32], sizes = [2, 256], strides = [1, 1]} : vector<2x290xf32> to vector<2x256xf32>
    %1314 = vector.broadcast %20 : vector<1x256xf32> to vector<2x256xf32>
    %1315 = arith.mulf %1313, %1314 : vector<2x256xf32>
    %c0_493 = arith.constant 0 : index
    %c69 = arith.constant 69 : index
    %1316 = memref.load %arg2[%c0_493, %c69] : memref<4x72xf32, #tpu.memory_space<smem>>
    %1317 = vector.broadcast %1316 : f32 to vector<2x256xf32>
    %1318 = arith.mulf %1315, %1317 : vector<2x256xf32>
    %1319 = arith.addf %1300, %1318 : vector<2x256xf32>
    %c1_494 = arith.constant 1 : index
    %c69_495 = arith.constant 69 : index
    %1320 = memref.load %arg2[%c1_494, %c69_495] : memref<4x72xf32, #tpu.memory_space<smem>>
    %1321 = vector.broadcast %1320 : f32 to vector<2x256xf32>
    %1322 = arith.mulf %1315, %1321 : vector<2x256xf32>
    %1323 = arith.addf %1304, %1322 : vector<2x256xf32>
    %c2_496 = arith.constant 2 : index
    %c69_497 = arith.constant 69 : index
    %1324 = memref.load %arg2[%c2_496, %c69_497] : memref<4x72xf32, #tpu.memory_space<smem>>
    %1325 = vector.broadcast %1324 : f32 to vector<2x256xf32>
    %1326 = arith.mulf %1315, %1325 : vector<2x256xf32>
    %1327 = arith.addf %1308, %1326 : vector<2x256xf32>
    %c3_498 = arith.constant 3 : index
    %c69_499 = arith.constant 69 : index
    %1328 = memref.load %arg2[%c3_498, %c69_499] : memref<4x72xf32, #tpu.memory_space<smem>>
    %1329 = vector.broadcast %1328 : f32 to vector<2x256xf32>
    %1330 = arith.mulf %1315, %1329 : vector<2x256xf32>
    %1331 = arith.addf %1312, %1330 : vector<2x256xf32>
    %1332 = vector.extract_strided_slice %1202 {offsets = [0, 33], sizes = [2, 256], strides = [1, 1]} : vector<2x290xf32> to vector<2x256xf32>
    %c0_500 = arith.constant 0 : index
    %c70 = arith.constant 70 : index
    %1333 = memref.load %arg2[%c0_500, %c70] : memref<4x72xf32, #tpu.memory_space<smem>>
    %1334 = vector.broadcast %1333 : f32 to vector<2x256xf32>
    %1335 = arith.mulf %1332, %1334 : vector<2x256xf32>
    %1336 = arith.addf %1319, %1335 : vector<2x256xf32>
    %c1_501 = arith.constant 1 : index
    %c70_502 = arith.constant 70 : index
    %1337 = memref.load %arg2[%c1_501, %c70_502] : memref<4x72xf32, #tpu.memory_space<smem>>
    %1338 = vector.broadcast %1337 : f32 to vector<2x256xf32>
    %1339 = arith.mulf %1332, %1338 : vector<2x256xf32>
    %1340 = arith.addf %1323, %1339 : vector<2x256xf32>
    %c2_503 = arith.constant 2 : index
    %c70_504 = arith.constant 70 : index
    %1341 = memref.load %arg2[%c2_503, %c70_504] : memref<4x72xf32, #tpu.memory_space<smem>>
    %1342 = vector.broadcast %1341 : f32 to vector<2x256xf32>
    %1343 = arith.mulf %1332, %1342 : vector<2x256xf32>
    %1344 = arith.addf %1327, %1343 : vector<2x256xf32>
    %c3_505 = arith.constant 3 : index
    %c70_506 = arith.constant 70 : index
    %1345 = memref.load %arg2[%c3_505, %c70_506] : memref<4x72xf32, #tpu.memory_space<smem>>
    %1346 = vector.broadcast %1345 : f32 to vector<2x256xf32>
    %1347 = arith.mulf %1332, %1346 : vector<2x256xf32>
    %1348 = arith.addf %1331, %1347 : vector<2x256xf32>
    %1349 = vector.extract_strided_slice %1202 {offsets = [0, 34], sizes = [2, 256], strides = [1, 1]} : vector<2x290xf32> to vector<2x256xf32>
    %1350 = vector.broadcast %24 : vector<1x256xf32> to vector<2x256xf32>
    %1351 = arith.mulf %1349, %1350 : vector<2x256xf32>
    %c0_507 = arith.constant 0 : index
    %c71 = arith.constant 71 : index
    %1352 = memref.load %arg2[%c0_507, %c71] : memref<4x72xf32, #tpu.memory_space<smem>>
    %1353 = vector.broadcast %1352 : f32 to vector<2x256xf32>
    %1354 = arith.mulf %1351, %1353 : vector<2x256xf32>
    %1355 = arith.addf %1336, %1354 : vector<2x256xf32>
    %c1_508 = arith.constant 1 : index
    %c71_509 = arith.constant 71 : index
    %1356 = memref.load %arg2[%c1_508, %c71_509] : memref<4x72xf32, #tpu.memory_space<smem>>
    %1357 = vector.broadcast %1356 : f32 to vector<2x256xf32>
    %1358 = arith.mulf %1351, %1357 : vector<2x256xf32>
    %1359 = arith.addf %1340, %1358 : vector<2x256xf32>
    %c2_510 = arith.constant 2 : index
    %c71_511 = arith.constant 71 : index
    %1360 = memref.load %arg2[%c2_510, %c71_511] : memref<4x72xf32, #tpu.memory_space<smem>>
    %1361 = vector.broadcast %1360 : f32 to vector<2x256xf32>
    %1362 = arith.mulf %1351, %1361 : vector<2x256xf32>
    %1363 = arith.addf %1344, %1362 : vector<2x256xf32>
    %c3_512 = arith.constant 3 : index
    %c71_513 = arith.constant 71 : index
    %1364 = memref.load %arg2[%c3_512, %c71_513] : memref<4x72xf32, #tpu.memory_space<smem>>
    %1365 = vector.broadcast %1364 : f32 to vector<2x256xf32>
    %1366 = arith.mulf %1351, %1365 : vector<2x256xf32>
    %1367 = arith.addf %1348, %1366 : vector<2x256xf32>
    %1368 = vector.shape_cast %1355 : vector<2x256xf32> to vector<1x2x256xf32>
    %cst_514 = arith.constant dense<0.000000e+00> : vector<1xf32>
    %1369 = vector.multi_reduction <add>, %1368, %cst_514 [1, 2] : vector<1x2x256xf32> to vector<1xf32>
    %1370 = vector.shape_cast %1369 : vector<1xf32> to vector<1x1x1xf32>
    %1371 = vector.extract %1370[0, 0, 0] : f32 from vector<1x1x1xf32>
    %1372 = vector.broadcast %1371 : f32 to vector<1x1xf32>
    %cst_515 = arith.constant 5.120000e+02 : f32
    %1373 = vector.broadcast %cst_515 : f32 to vector<1x1xf32>
    %1374 = arith.divf %1372, %1373 : vector<1x1xf32>
    %1375 = vector.broadcast %1374 : vector<1x1xf32> to vector<2x256xf32>
    %1376 = arith.subf %1355, %1375 : vector<2x256xf32>
    %1377 = arith.mulf %1376, %1376 : vector<2x256xf32>
    %1378 = vector.shape_cast %1377 : vector<2x256xf32> to vector<1x2x256xf32>
    %cst_516 = arith.constant dense<0.000000e+00> : vector<1xf32>
    %1379 = vector.multi_reduction <add>, %1378, %cst_516 [1, 2] : vector<1x2x256xf32> to vector<1xf32>
    %1380 = vector.shape_cast %1379 : vector<1xf32> to vector<1x1x1xf32>
    %1381 = vector.extract %1380[0, 0, 0] : f32 from vector<1x1x1xf32>
    %1382 = vector.broadcast %1381 : f32 to vector<1x1xf32>
    %cst_517 = arith.constant 5.120000e+02 : f32
    %1383 = vector.broadcast %cst_517 : f32 to vector<1x1xf32>
    %1384 = arith.divf %1382, %1383 : vector<1x1xf32>
    %1385 = vector.broadcast %1374 : vector<1x1xf32> to vector<2x256xf32>
    %1386 = arith.subf %1355, %1385 : vector<2x256xf32>
    %cst_518 = arith.constant 9.99999974E-6 : f32
    %1387 = vector.broadcast %cst_518 : f32 to vector<1x1xf32>
    %1388 = arith.addf %1384, %1387 : vector<1x1xf32>
    %1389 = math.rsqrt %1388 : vector<1x1xf32>
    %1390 = vector.broadcast %1389 : vector<1x1xf32> to vector<2x256xf32>
    %1391 = arith.mulf %1386, %1390 : vector<2x256xf32>
    %c0_519 = arith.constant 0 : index
    %1392 = memref.load %arg3[%c0_519] : memref<4xf32, #tpu.memory_space<smem>>
    %1393 = vector.broadcast %1392 : f32 to vector<2x256xf32>
    %1394 = arith.mulf %1391, %1393 : vector<2x256xf32>
    %c0_520 = arith.constant 0 : index
    %1395 = memref.load %arg4[%c0_520] : memref<4xf32, #tpu.memory_space<smem>>
    %1396 = vector.broadcast %1395 : f32 to vector<2x256xf32>
    %1397 = arith.addf %1394, %1396 : vector<2x256xf32>
    %cst_521 = arith.constant 0.000000e+00 : f32
    %1398 = vector.broadcast %cst_521 : f32 to vector<2x256xf32>
    %1399 = arith.maximumf %1397, %1398 : vector<2x256xf32>
    %1400 = vector.shape_cast %1359 : vector<2x256xf32> to vector<1x2x256xf32>
    %cst_522 = arith.constant dense<0.000000e+00> : vector<1xf32>
    %1401 = vector.multi_reduction <add>, %1400, %cst_522 [1, 2] : vector<1x2x256xf32> to vector<1xf32>
    %1402 = vector.shape_cast %1401 : vector<1xf32> to vector<1x1x1xf32>
    %1403 = vector.extract %1402[0, 0, 0] : f32 from vector<1x1x1xf32>
    %1404 = vector.broadcast %1403 : f32 to vector<1x1xf32>
    %cst_523 = arith.constant 5.120000e+02 : f32
    %1405 = vector.broadcast %cst_523 : f32 to vector<1x1xf32>
    %1406 = arith.divf %1404, %1405 : vector<1x1xf32>
    %1407 = vector.broadcast %1406 : vector<1x1xf32> to vector<2x256xf32>
    %1408 = arith.subf %1359, %1407 : vector<2x256xf32>
    %1409 = arith.mulf %1408, %1408 : vector<2x256xf32>
    %1410 = vector.shape_cast %1409 : vector<2x256xf32> to vector<1x2x256xf32>
    %cst_524 = arith.constant dense<0.000000e+00> : vector<1xf32>
    %1411 = vector.multi_reduction <add>, %1410, %cst_524 [1, 2] : vector<1x2x256xf32> to vector<1xf32>
    %1412 = vector.shape_cast %1411 : vector<1xf32> to vector<1x1x1xf32>
    %1413 = vector.extract %1412[0, 0, 0] : f32 from vector<1x1x1xf32>
    %1414 = vector.broadcast %1413 : f32 to vector<1x1xf32>
    %cst_525 = arith.constant 5.120000e+02 : f32
    %1415 = vector.broadcast %cst_525 : f32 to vector<1x1xf32>
    %1416 = arith.divf %1414, %1415 : vector<1x1xf32>
    %1417 = vector.broadcast %1406 : vector<1x1xf32> to vector<2x256xf32>
    %1418 = arith.subf %1359, %1417 : vector<2x256xf32>
    %cst_526 = arith.constant 9.99999974E-6 : f32
    %1419 = vector.broadcast %cst_526 : f32 to vector<1x1xf32>
    %1420 = arith.addf %1416, %1419 : vector<1x1xf32>
    %1421 = math.rsqrt %1420 : vector<1x1xf32>
    %1422 = vector.broadcast %1421 : vector<1x1xf32> to vector<2x256xf32>
    %1423 = arith.mulf %1418, %1422 : vector<2x256xf32>
    %c1_527 = arith.constant 1 : index
    %1424 = memref.load %arg3[%c1_527] : memref<4xf32, #tpu.memory_space<smem>>
    %1425 = vector.broadcast %1424 : f32 to vector<2x256xf32>
    %1426 = arith.mulf %1423, %1425 : vector<2x256xf32>
    %c1_528 = arith.constant 1 : index
    %1427 = memref.load %arg4[%c1_528] : memref<4xf32, #tpu.memory_space<smem>>
    %1428 = vector.broadcast %1427 : f32 to vector<2x256xf32>
    %1429 = arith.addf %1426, %1428 : vector<2x256xf32>
    %cst_529 = arith.constant 0.000000e+00 : f32
    %1430 = vector.broadcast %cst_529 : f32 to vector<2x256xf32>
    %1431 = arith.maximumf %1429, %1430 : vector<2x256xf32>
    %1432 = vector.shape_cast %1363 : vector<2x256xf32> to vector<1x2x256xf32>
    %cst_530 = arith.constant dense<0.000000e+00> : vector<1xf32>
    %1433 = vector.multi_reduction <add>, %1432, %cst_530 [1, 2] : vector<1x2x256xf32> to vector<1xf32>
    %1434 = vector.shape_cast %1433 : vector<1xf32> to vector<1x1x1xf32>
    %1435 = vector.extract %1434[0, 0, 0] : f32 from vector<1x1x1xf32>
    %1436 = vector.broadcast %1435 : f32 to vector<1x1xf32>
    %cst_531 = arith.constant 5.120000e+02 : f32
    %1437 = vector.broadcast %cst_531 : f32 to vector<1x1xf32>
    %1438 = arith.divf %1436, %1437 : vector<1x1xf32>
    %1439 = vector.broadcast %1438 : vector<1x1xf32> to vector<2x256xf32>
    %1440 = arith.subf %1363, %1439 : vector<2x256xf32>
    %1441 = arith.mulf %1440, %1440 : vector<2x256xf32>
    %1442 = vector.shape_cast %1441 : vector<2x256xf32> to vector<1x2x256xf32>
    %cst_532 = arith.constant dense<0.000000e+00> : vector<1xf32>
    %1443 = vector.multi_reduction <add>, %1442, %cst_532 [1, 2] : vector<1x2x256xf32> to vector<1xf32>
    %1444 = vector.shape_cast %1443 : vector<1xf32> to vector<1x1x1xf32>
    %1445 = vector.extract %1444[0, 0, 0] : f32 from vector<1x1x1xf32>
    %1446 = vector.broadcast %1445 : f32 to vector<1x1xf32>
    %cst_533 = arith.constant 5.120000e+02 : f32
    %1447 = vector.broadcast %cst_533 : f32 to vector<1x1xf32>
    %1448 = arith.divf %1446, %1447 : vector<1x1xf32>
    %1449 = vector.broadcast %1438 : vector<1x1xf32> to vector<2x256xf32>
    %1450 = arith.subf %1363, %1449 : vector<2x256xf32>
    %cst_534 = arith.constant 9.99999974E-6 : f32
    %1451 = vector.broadcast %cst_534 : f32 to vector<1x1xf32>
    %1452 = arith.addf %1448, %1451 : vector<1x1xf32>
    %1453 = math.rsqrt %1452 : vector<1x1xf32>
    %1454 = vector.broadcast %1453 : vector<1x1xf32> to vector<2x256xf32>
    %1455 = arith.mulf %1450, %1454 : vector<2x256xf32>
    %c2_535 = arith.constant 2 : index
    %1456 = memref.load %arg3[%c2_535] : memref<4xf32, #tpu.memory_space<smem>>
    %1457 = vector.broadcast %1456 : f32 to vector<2x256xf32>
    %1458 = arith.mulf %1455, %1457 : vector<2x256xf32>
    %c2_536 = arith.constant 2 : index
    %1459 = memref.load %arg4[%c2_536] : memref<4xf32, #tpu.memory_space<smem>>
    %1460 = vector.broadcast %1459 : f32 to vector<2x256xf32>
    %1461 = arith.addf %1458, %1460 : vector<2x256xf32>
    %cst_537 = arith.constant 0.000000e+00 : f32
    %1462 = vector.broadcast %cst_537 : f32 to vector<2x256xf32>
    %1463 = arith.maximumf %1461, %1462 : vector<2x256xf32>
    %1464 = vector.shape_cast %1367 : vector<2x256xf32> to vector<1x2x256xf32>
    %cst_538 = arith.constant dense<0.000000e+00> : vector<1xf32>
    %1465 = vector.multi_reduction <add>, %1464, %cst_538 [1, 2] : vector<1x2x256xf32> to vector<1xf32>
    %1466 = vector.shape_cast %1465 : vector<1xf32> to vector<1x1x1xf32>
    %1467 = vector.extract %1466[0, 0, 0] : f32 from vector<1x1x1xf32>
    %1468 = vector.broadcast %1467 : f32 to vector<1x1xf32>
    %cst_539 = arith.constant 5.120000e+02 : f32
    %1469 = vector.broadcast %cst_539 : f32 to vector<1x1xf32>
    %1470 = arith.divf %1468, %1469 : vector<1x1xf32>
    %1471 = vector.broadcast %1470 : vector<1x1xf32> to vector<2x256xf32>
    %1472 = arith.subf %1367, %1471 : vector<2x256xf32>
    %1473 = arith.mulf %1472, %1472 : vector<2x256xf32>
    %1474 = vector.shape_cast %1473 : vector<2x256xf32> to vector<1x2x256xf32>
    %cst_540 = arith.constant dense<0.000000e+00> : vector<1xf32>
    %1475 = vector.multi_reduction <add>, %1474, %cst_540 [1, 2] : vector<1x2x256xf32> to vector<1xf32>
    %1476 = vector.shape_cast %1475 : vector<1xf32> to vector<1x1x1xf32>
    %1477 = vector.extract %1476[0, 0, 0] : f32 from vector<1x1x1xf32>
    %1478 = vector.broadcast %1477 : f32 to vector<1x1xf32>
    %cst_541 = arith.constant 5.120000e+02 : f32
    %1479 = vector.broadcast %cst_541 : f32 to vector<1x1xf32>
    %1480 = arith.divf %1478, %1479 : vector<1x1xf32>
    %1481 = vector.broadcast %1470 : vector<1x1xf32> to vector<2x256xf32>
    %1482 = arith.subf %1367, %1481 : vector<2x256xf32>
    %cst_542 = arith.constant 9.99999974E-6 : f32
    %1483 = vector.broadcast %cst_542 : f32 to vector<1x1xf32>
    %1484 = arith.addf %1480, %1483 : vector<1x1xf32>
    %1485 = math.rsqrt %1484 : vector<1x1xf32>
    %1486 = vector.broadcast %1485 : vector<1x1xf32> to vector<2x256xf32>
    %1487 = arith.mulf %1482, %1486 : vector<2x256xf32>
    %c3_543 = arith.constant 3 : index
    %1488 = memref.load %arg3[%c3_543] : memref<4xf32, #tpu.memory_space<smem>>
    %1489 = vector.broadcast %1488 : f32 to vector<2x256xf32>
    %1490 = arith.mulf %1487, %1489 : vector<2x256xf32>
    %c3_544 = arith.constant 3 : index
    %1491 = memref.load %arg4[%c3_544] : memref<4xf32, #tpu.memory_space<smem>>
    %1492 = vector.broadcast %1491 : f32 to vector<2x256xf32>
    %1493 = arith.addf %1490, %1492 : vector<2x256xf32>
    %cst_545 = arith.constant 0.000000e+00 : f32
    %1494 = vector.broadcast %cst_545 : f32 to vector<2x256xf32>
    %1495 = arith.maximumf %1493, %1494 : vector<2x256xf32>
    %1496 = tpu.concatenate %25, %1399, %25 in 1 : vector<2x17xf32>, vector<2x256xf32>, vector<2x17xf32> -> vector<2x290xf32>
    %1497 = vector.extract_strided_slice %1496 {offsets = [0, 0], sizes = [2, 256], strides = [1, 1]} : vector<2x290xf32> to vector<2x256xf32>
    %1498 = vector.broadcast %20 : vector<1x256xf32> to vector<2x256xf32>
    %1499 = arith.mulf %1497, %1498 : vector<2x256xf32>
    %c0_546 = arith.constant 0 : index
    %c0_547 = arith.constant 0 : index
    %1500 = memref.load %arg5[%c0_546, %c0_547] : memref<4x36xf32, #tpu.memory_space<smem>>
    %1501 = vector.broadcast %1500 : f32 to vector<2x256xf32>
    %1502 = arith.mulf %1499, %1501 : vector<2x256xf32>
    %c1_548 = arith.constant 1 : index
    %c0_549 = arith.constant 0 : index
    %1503 = memref.load %arg5[%c1_548, %c0_549] : memref<4x36xf32, #tpu.memory_space<smem>>
    %1504 = vector.broadcast %1503 : f32 to vector<2x256xf32>
    %1505 = arith.mulf %1499, %1504 : vector<2x256xf32>
    %c2_550 = arith.constant 2 : index
    %c0_551 = arith.constant 0 : index
    %1506 = memref.load %arg5[%c2_550, %c0_551] : memref<4x36xf32, #tpu.memory_space<smem>>
    %1507 = vector.broadcast %1506 : f32 to vector<2x256xf32>
    %1508 = arith.mulf %1499, %1507 : vector<2x256xf32>
    %c3_552 = arith.constant 3 : index
    %c0_553 = arith.constant 0 : index
    %1509 = memref.load %arg5[%c3_552, %c0_553] : memref<4x36xf32, #tpu.memory_space<smem>>
    %1510 = vector.broadcast %1509 : f32 to vector<2x256xf32>
    %1511 = arith.mulf %1499, %1510 : vector<2x256xf32>
    %1512 = vector.extract_strided_slice %1496 {offsets = [0, 1], sizes = [2, 256], strides = [1, 1]} : vector<2x290xf32> to vector<2x256xf32>
    %c0_554 = arith.constant 0 : index
    %c1_555 = arith.constant 1 : index
    %1513 = memref.load %arg5[%c0_554, %c1_555] : memref<4x36xf32, #tpu.memory_space<smem>>
    %1514 = vector.broadcast %1513 : f32 to vector<2x256xf32>
    %1515 = arith.mulf %1512, %1514 : vector<2x256xf32>
    %1516 = arith.addf %1502, %1515 : vector<2x256xf32>
    %c1_556 = arith.constant 1 : index
    %c1_557 = arith.constant 1 : index
    %1517 = memref.load %arg5[%c1_556, %c1_557] : memref<4x36xf32, #tpu.memory_space<smem>>
    %1518 = vector.broadcast %1517 : f32 to vector<2x256xf32>
    %1519 = arith.mulf %1512, %1518 : vector<2x256xf32>
    %1520 = arith.addf %1505, %1519 : vector<2x256xf32>
    %c2_558 = arith.constant 2 : index
    %c1_559 = arith.constant 1 : index
    %1521 = memref.load %arg5[%c2_558, %c1_559] : memref<4x36xf32, #tpu.memory_space<smem>>
    %1522 = vector.broadcast %1521 : f32 to vector<2x256xf32>
    %1523 = arith.mulf %1512, %1522 : vector<2x256xf32>
    %1524 = arith.addf %1508, %1523 : vector<2x256xf32>
    %c3_560 = arith.constant 3 : index
    %c1_561 = arith.constant 1 : index
    %1525 = memref.load %arg5[%c3_560, %c1_561] : memref<4x36xf32, #tpu.memory_space<smem>>
    %1526 = vector.broadcast %1525 : f32 to vector<2x256xf32>
    %1527 = arith.mulf %1512, %1526 : vector<2x256xf32>
    %1528 = arith.addf %1511, %1527 : vector<2x256xf32>
    %1529 = vector.extract_strided_slice %1496 {offsets = [0, 2], sizes = [2, 256], strides = [1, 1]} : vector<2x290xf32> to vector<2x256xf32>
    %1530 = vector.broadcast %24 : vector<1x256xf32> to vector<2x256xf32>
    %1531 = arith.mulf %1529, %1530 : vector<2x256xf32>
    %c0_562 = arith.constant 0 : index
    %c2_563 = arith.constant 2 : index
    %1532 = memref.load %arg5[%c0_562, %c2_563] : memref<4x36xf32, #tpu.memory_space<smem>>
    %1533 = vector.broadcast %1532 : f32 to vector<2x256xf32>
    %1534 = arith.mulf %1531, %1533 : vector<2x256xf32>
    %1535 = arith.addf %1516, %1534 : vector<2x256xf32>
    %c1_564 = arith.constant 1 : index
    %c2_565 = arith.constant 2 : index
    %1536 = memref.load %arg5[%c1_564, %c2_565] : memref<4x36xf32, #tpu.memory_space<smem>>
    %1537 = vector.broadcast %1536 : f32 to vector<2x256xf32>
    %1538 = arith.mulf %1531, %1537 : vector<2x256xf32>
    %1539 = arith.addf %1520, %1538 : vector<2x256xf32>
    %c2_566 = arith.constant 2 : index
    %c2_567 = arith.constant 2 : index
    %1540 = memref.load %arg5[%c2_566, %c2_567] : memref<4x36xf32, #tpu.memory_space<smem>>
    %1541 = vector.broadcast %1540 : f32 to vector<2x256xf32>
    %1542 = arith.mulf %1531, %1541 : vector<2x256xf32>
    %1543 = arith.addf %1524, %1542 : vector<2x256xf32>
    %c3_568 = arith.constant 3 : index
    %c2_569 = arith.constant 2 : index
    %1544 = memref.load %arg5[%c3_568, %c2_569] : memref<4x36xf32, #tpu.memory_space<smem>>
    %1545 = vector.broadcast %1544 : f32 to vector<2x256xf32>
    %1546 = arith.mulf %1531, %1545 : vector<2x256xf32>
    %1547 = arith.addf %1528, %1546 : vector<2x256xf32>
    %1548 = vector.extract_strided_slice %1496 {offsets = [0, 16], sizes = [2, 256], strides = [1, 1]} : vector<2x290xf32> to vector<2x256xf32>
    %1549 = vector.broadcast %20 : vector<1x256xf32> to vector<2x256xf32>
    %1550 = arith.mulf %1548, %1549 : vector<2x256xf32>
    %c0_570 = arith.constant 0 : index
    %c3_571 = arith.constant 3 : index
    %1551 = memref.load %arg5[%c0_570, %c3_571] : memref<4x36xf32, #tpu.memory_space<smem>>
    %1552 = vector.broadcast %1551 : f32 to vector<2x256xf32>
    %1553 = arith.mulf %1550, %1552 : vector<2x256xf32>
    %1554 = arith.addf %1535, %1553 : vector<2x256xf32>
    %c1_572 = arith.constant 1 : index
    %c3_573 = arith.constant 3 : index
    %1555 = memref.load %arg5[%c1_572, %c3_573] : memref<4x36xf32, #tpu.memory_space<smem>>
    %1556 = vector.broadcast %1555 : f32 to vector<2x256xf32>
    %1557 = arith.mulf %1550, %1556 : vector<2x256xf32>
    %1558 = arith.addf %1539, %1557 : vector<2x256xf32>
    %c2_574 = arith.constant 2 : index
    %c3_575 = arith.constant 3 : index
    %1559 = memref.load %arg5[%c2_574, %c3_575] : memref<4x36xf32, #tpu.memory_space<smem>>
    %1560 = vector.broadcast %1559 : f32 to vector<2x256xf32>
    %1561 = arith.mulf %1550, %1560 : vector<2x256xf32>
    %1562 = arith.addf %1543, %1561 : vector<2x256xf32>
    %c3_576 = arith.constant 3 : index
    %c3_577 = arith.constant 3 : index
    %1563 = memref.load %arg5[%c3_576, %c3_577] : memref<4x36xf32, #tpu.memory_space<smem>>
    %1564 = vector.broadcast %1563 : f32 to vector<2x256xf32>
    %1565 = arith.mulf %1550, %1564 : vector<2x256xf32>
    %1566 = arith.addf %1547, %1565 : vector<2x256xf32>
    %1567 = vector.extract_strided_slice %1496 {offsets = [0, 17], sizes = [2, 256], strides = [1, 1]} : vector<2x290xf32> to vector<2x256xf32>
    %c0_578 = arith.constant 0 : index
    %c4_579 = arith.constant 4 : index
    %1568 = memref.load %arg5[%c0_578, %c4_579] : memref<4x36xf32, #tpu.memory_space<smem>>
    %1569 = vector.broadcast %1568 : f32 to vector<2x256xf32>
    %1570 = arith.mulf %1567, %1569 : vector<2x256xf32>
    %1571 = arith.addf %1554, %1570 : vector<2x256xf32>
    %c1_580 = arith.constant 1 : index
    %c4_581 = arith.constant 4 : index
    %1572 = memref.load %arg5[%c1_580, %c4_581] : memref<4x36xf32, #tpu.memory_space<smem>>
    %1573 = vector.broadcast %1572 : f32 to vector<2x256xf32>
    %1574 = arith.mulf %1567, %1573 : vector<2x256xf32>
    %1575 = arith.addf %1558, %1574 : vector<2x256xf32>
    %c2_582 = arith.constant 2 : index
    %c4_583 = arith.constant 4 : index
    %1576 = memref.load %arg5[%c2_582, %c4_583] : memref<4x36xf32, #tpu.memory_space<smem>>
    %1577 = vector.broadcast %1576 : f32 to vector<2x256xf32>
    %1578 = arith.mulf %1567, %1577 : vector<2x256xf32>
    %1579 = arith.addf %1562, %1578 : vector<2x256xf32>
    %c3_584 = arith.constant 3 : index
    %c4_585 = arith.constant 4 : index
    %1580 = memref.load %arg5[%c3_584, %c4_585] : memref<4x36xf32, #tpu.memory_space<smem>>
    %1581 = vector.broadcast %1580 : f32 to vector<2x256xf32>
    %1582 = arith.mulf %1567, %1581 : vector<2x256xf32>
    %1583 = arith.addf %1566, %1582 : vector<2x256xf32>
    %1584 = vector.extract_strided_slice %1496 {offsets = [0, 18], sizes = [2, 256], strides = [1, 1]} : vector<2x290xf32> to vector<2x256xf32>
    %1585 = vector.broadcast %24 : vector<1x256xf32> to vector<2x256xf32>
    %1586 = arith.mulf %1584, %1585 : vector<2x256xf32>
    %c0_586 = arith.constant 0 : index
    %c5_587 = arith.constant 5 : index
    %1587 = memref.load %arg5[%c0_586, %c5_587] : memref<4x36xf32, #tpu.memory_space<smem>>
    %1588 = vector.broadcast %1587 : f32 to vector<2x256xf32>
    %1589 = arith.mulf %1586, %1588 : vector<2x256xf32>
    %1590 = arith.addf %1571, %1589 : vector<2x256xf32>
    %c1_588 = arith.constant 1 : index
    %c5_589 = arith.constant 5 : index
    %1591 = memref.load %arg5[%c1_588, %c5_589] : memref<4x36xf32, #tpu.memory_space<smem>>
    %1592 = vector.broadcast %1591 : f32 to vector<2x256xf32>
    %1593 = arith.mulf %1586, %1592 : vector<2x256xf32>
    %1594 = arith.addf %1575, %1593 : vector<2x256xf32>
    %c2_590 = arith.constant 2 : index
    %c5_591 = arith.constant 5 : index
    %1595 = memref.load %arg5[%c2_590, %c5_591] : memref<4x36xf32, #tpu.memory_space<smem>>
    %1596 = vector.broadcast %1595 : f32 to vector<2x256xf32>
    %1597 = arith.mulf %1586, %1596 : vector<2x256xf32>
    %1598 = arith.addf %1579, %1597 : vector<2x256xf32>
    %c3_592 = arith.constant 3 : index
    %c5_593 = arith.constant 5 : index
    %1599 = memref.load %arg5[%c3_592, %c5_593] : memref<4x36xf32, #tpu.memory_space<smem>>
    %1600 = vector.broadcast %1599 : f32 to vector<2x256xf32>
    %1601 = arith.mulf %1586, %1600 : vector<2x256xf32>
    %1602 = arith.addf %1583, %1601 : vector<2x256xf32>
    %1603 = vector.extract_strided_slice %1496 {offsets = [0, 32], sizes = [2, 256], strides = [1, 1]} : vector<2x290xf32> to vector<2x256xf32>
    %1604 = vector.broadcast %20 : vector<1x256xf32> to vector<2x256xf32>
    %1605 = arith.mulf %1603, %1604 : vector<2x256xf32>
    %c0_594 = arith.constant 0 : index
    %c6_595 = arith.constant 6 : index
    %1606 = memref.load %arg5[%c0_594, %c6_595] : memref<4x36xf32, #tpu.memory_space<smem>>
    %1607 = vector.broadcast %1606 : f32 to vector<2x256xf32>
    %1608 = arith.mulf %1605, %1607 : vector<2x256xf32>
    %1609 = arith.addf %1590, %1608 : vector<2x256xf32>
    %c1_596 = arith.constant 1 : index
    %c6_597 = arith.constant 6 : index
    %1610 = memref.load %arg5[%c1_596, %c6_597] : memref<4x36xf32, #tpu.memory_space<smem>>
    %1611 = vector.broadcast %1610 : f32 to vector<2x256xf32>
    %1612 = arith.mulf %1605, %1611 : vector<2x256xf32>
    %1613 = arith.addf %1594, %1612 : vector<2x256xf32>
    %c2_598 = arith.constant 2 : index
    %c6_599 = arith.constant 6 : index
    %1614 = memref.load %arg5[%c2_598, %c6_599] : memref<4x36xf32, #tpu.memory_space<smem>>
    %1615 = vector.broadcast %1614 : f32 to vector<2x256xf32>
    %1616 = arith.mulf %1605, %1615 : vector<2x256xf32>
    %1617 = arith.addf %1598, %1616 : vector<2x256xf32>
    %c3_600 = arith.constant 3 : index
    %c6_601 = arith.constant 6 : index
    %1618 = memref.load %arg5[%c3_600, %c6_601] : memref<4x36xf32, #tpu.memory_space<smem>>
    %1619 = vector.broadcast %1618 : f32 to vector<2x256xf32>
    %1620 = arith.mulf %1605, %1619 : vector<2x256xf32>
    %1621 = arith.addf %1602, %1620 : vector<2x256xf32>
    %1622 = vector.extract_strided_slice %1496 {offsets = [0, 33], sizes = [2, 256], strides = [1, 1]} : vector<2x290xf32> to vector<2x256xf32>
    %c0_602 = arith.constant 0 : index
    %c7_603 = arith.constant 7 : index
    %1623 = memref.load %arg5[%c0_602, %c7_603] : memref<4x36xf32, #tpu.memory_space<smem>>
    %1624 = vector.broadcast %1623 : f32 to vector<2x256xf32>
    %1625 = arith.mulf %1622, %1624 : vector<2x256xf32>
    %1626 = arith.addf %1609, %1625 : vector<2x256xf32>
    %c1_604 = arith.constant 1 : index
    %c7_605 = arith.constant 7 : index
    %1627 = memref.load %arg5[%c1_604, %c7_605] : memref<4x36xf32, #tpu.memory_space<smem>>
    %1628 = vector.broadcast %1627 : f32 to vector<2x256xf32>
    %1629 = arith.mulf %1622, %1628 : vector<2x256xf32>
    %1630 = arith.addf %1613, %1629 : vector<2x256xf32>
    %c2_606 = arith.constant 2 : index
    %c7_607 = arith.constant 7 : index
    %1631 = memref.load %arg5[%c2_606, %c7_607] : memref<4x36xf32, #tpu.memory_space<smem>>
    %1632 = vector.broadcast %1631 : f32 to vector<2x256xf32>
    %1633 = arith.mulf %1622, %1632 : vector<2x256xf32>
    %1634 = arith.addf %1617, %1633 : vector<2x256xf32>
    %c3_608 = arith.constant 3 : index
    %c7_609 = arith.constant 7 : index
    %1635 = memref.load %arg5[%c3_608, %c7_609] : memref<4x36xf32, #tpu.memory_space<smem>>
    %1636 = vector.broadcast %1635 : f32 to vector<2x256xf32>
    %1637 = arith.mulf %1622, %1636 : vector<2x256xf32>
    %1638 = arith.addf %1621, %1637 : vector<2x256xf32>
    %1639 = vector.extract_strided_slice %1496 {offsets = [0, 34], sizes = [2, 256], strides = [1, 1]} : vector<2x290xf32> to vector<2x256xf32>
    %1640 = vector.broadcast %24 : vector<1x256xf32> to vector<2x256xf32>
    %1641 = arith.mulf %1639, %1640 : vector<2x256xf32>
    %c0_610 = arith.constant 0 : index
    %c8_611 = arith.constant 8 : index
    %1642 = memref.load %arg5[%c0_610, %c8_611] : memref<4x36xf32, #tpu.memory_space<smem>>
    %1643 = vector.broadcast %1642 : f32 to vector<2x256xf32>
    %1644 = arith.mulf %1641, %1643 : vector<2x256xf32>
    %1645 = arith.addf %1626, %1644 : vector<2x256xf32>
    %c1_612 = arith.constant 1 : index
    %c8_613 = arith.constant 8 : index
    %1646 = memref.load %arg5[%c1_612, %c8_613] : memref<4x36xf32, #tpu.memory_space<smem>>
    %1647 = vector.broadcast %1646 : f32 to vector<2x256xf32>
    %1648 = arith.mulf %1641, %1647 : vector<2x256xf32>
    %1649 = arith.addf %1630, %1648 : vector<2x256xf32>
    %c2_614 = arith.constant 2 : index
    %c8_615 = arith.constant 8 : index
    %1650 = memref.load %arg5[%c2_614, %c8_615] : memref<4x36xf32, #tpu.memory_space<smem>>
    %1651 = vector.broadcast %1650 : f32 to vector<2x256xf32>
    %1652 = arith.mulf %1641, %1651 : vector<2x256xf32>
    %1653 = arith.addf %1634, %1652 : vector<2x256xf32>
    %c3_616 = arith.constant 3 : index
    %c8_617 = arith.constant 8 : index
    %1654 = memref.load %arg5[%c3_616, %c8_617] : memref<4x36xf32, #tpu.memory_space<smem>>
    %1655 = vector.broadcast %1654 : f32 to vector<2x256xf32>
    %1656 = arith.mulf %1641, %1655 : vector<2x256xf32>
    %1657 = arith.addf %1638, %1656 : vector<2x256xf32>
    %1658 = tpu.concatenate %25, %1431, %25 in 1 : vector<2x17xf32>, vector<2x256xf32>, vector<2x17xf32> -> vector<2x290xf32>
    %1659 = vector.extract_strided_slice %1658 {offsets = [0, 0], sizes = [2, 256], strides = [1, 1]} : vector<2x290xf32> to vector<2x256xf32>
    %1660 = vector.broadcast %20 : vector<1x256xf32> to vector<2x256xf32>
    %1661 = arith.mulf %1659, %1660 : vector<2x256xf32>
    %c0_618 = arith.constant 0 : index
    %c9_619 = arith.constant 9 : index
    %1662 = memref.load %arg5[%c0_618, %c9_619] : memref<4x36xf32, #tpu.memory_space<smem>>
    %1663 = vector.broadcast %1662 : f32 to vector<2x256xf32>
    %1664 = arith.mulf %1661, %1663 : vector<2x256xf32>
    %1665 = arith.addf %1645, %1664 : vector<2x256xf32>
    %c1_620 = arith.constant 1 : index
    %c9_621 = arith.constant 9 : index
    %1666 = memref.load %arg5[%c1_620, %c9_621] : memref<4x36xf32, #tpu.memory_space<smem>>
    %1667 = vector.broadcast %1666 : f32 to vector<2x256xf32>
    %1668 = arith.mulf %1661, %1667 : vector<2x256xf32>
    %1669 = arith.addf %1649, %1668 : vector<2x256xf32>
    %c2_622 = arith.constant 2 : index
    %c9_623 = arith.constant 9 : index
    %1670 = memref.load %arg5[%c2_622, %c9_623] : memref<4x36xf32, #tpu.memory_space<smem>>
    %1671 = vector.broadcast %1670 : f32 to vector<2x256xf32>
    %1672 = arith.mulf %1661, %1671 : vector<2x256xf32>
    %1673 = arith.addf %1653, %1672 : vector<2x256xf32>
    %c3_624 = arith.constant 3 : index
    %c9_625 = arith.constant 9 : index
    %1674 = memref.load %arg5[%c3_624, %c9_625] : memref<4x36xf32, #tpu.memory_space<smem>>
    %1675 = vector.broadcast %1674 : f32 to vector<2x256xf32>
    %1676 = arith.mulf %1661, %1675 : vector<2x256xf32>
    %1677 = arith.addf %1657, %1676 : vector<2x256xf32>
    %1678 = vector.extract_strided_slice %1658 {offsets = [0, 1], sizes = [2, 256], strides = [1, 1]} : vector<2x290xf32> to vector<2x256xf32>
    %c0_626 = arith.constant 0 : index
    %c10_627 = arith.constant 10 : index
    %1679 = memref.load %arg5[%c0_626, %c10_627] : memref<4x36xf32, #tpu.memory_space<smem>>
    %1680 = vector.broadcast %1679 : f32 to vector<2x256xf32>
    %1681 = arith.mulf %1678, %1680 : vector<2x256xf32>
    %1682 = arith.addf %1665, %1681 : vector<2x256xf32>
    %c1_628 = arith.constant 1 : index
    %c10_629 = arith.constant 10 : index
    %1683 = memref.load %arg5[%c1_628, %c10_629] : memref<4x36xf32, #tpu.memory_space<smem>>
    %1684 = vector.broadcast %1683 : f32 to vector<2x256xf32>
    %1685 = arith.mulf %1678, %1684 : vector<2x256xf32>
    %1686 = arith.addf %1669, %1685 : vector<2x256xf32>
    %c2_630 = arith.constant 2 : index
    %c10_631 = arith.constant 10 : index
    %1687 = memref.load %arg5[%c2_630, %c10_631] : memref<4x36xf32, #tpu.memory_space<smem>>
    %1688 = vector.broadcast %1687 : f32 to vector<2x256xf32>
    %1689 = arith.mulf %1678, %1688 : vector<2x256xf32>
    %1690 = arith.addf %1673, %1689 : vector<2x256xf32>
    %c3_632 = arith.constant 3 : index
    %c10_633 = arith.constant 10 : index
    %1691 = memref.load %arg5[%c3_632, %c10_633] : memref<4x36xf32, #tpu.memory_space<smem>>
    %1692 = vector.broadcast %1691 : f32 to vector<2x256xf32>
    %1693 = arith.mulf %1678, %1692 : vector<2x256xf32>
    %1694 = arith.addf %1677, %1693 : vector<2x256xf32>
    %1695 = vector.extract_strided_slice %1658 {offsets = [0, 2], sizes = [2, 256], strides = [1, 1]} : vector<2x290xf32> to vector<2x256xf32>
    %1696 = vector.broadcast %24 : vector<1x256xf32> to vector<2x256xf32>
    %1697 = arith.mulf %1695, %1696 : vector<2x256xf32>
    %c0_634 = arith.constant 0 : index
    %c11_635 = arith.constant 11 : index
    %1698 = memref.load %arg5[%c0_634, %c11_635] : memref<4x36xf32, #tpu.memory_space<smem>>
    %1699 = vector.broadcast %1698 : f32 to vector<2x256xf32>
    %1700 = arith.mulf %1697, %1699 : vector<2x256xf32>
    %1701 = arith.addf %1682, %1700 : vector<2x256xf32>
    %c1_636 = arith.constant 1 : index
    %c11_637 = arith.constant 11 : index
    %1702 = memref.load %arg5[%c1_636, %c11_637] : memref<4x36xf32, #tpu.memory_space<smem>>
    %1703 = vector.broadcast %1702 : f32 to vector<2x256xf32>
    %1704 = arith.mulf %1697, %1703 : vector<2x256xf32>
    %1705 = arith.addf %1686, %1704 : vector<2x256xf32>
    %c2_638 = arith.constant 2 : index
    %c11_639 = arith.constant 11 : index
    %1706 = memref.load %arg5[%c2_638, %c11_639] : memref<4x36xf32, #tpu.memory_space<smem>>
    %1707 = vector.broadcast %1706 : f32 to vector<2x256xf32>
    %1708 = arith.mulf %1697, %1707 : vector<2x256xf32>
    %1709 = arith.addf %1690, %1708 : vector<2x256xf32>
    %c3_640 = arith.constant 3 : index
    %c11_641 = arith.constant 11 : index
    %1710 = memref.load %arg5[%c3_640, %c11_641] : memref<4x36xf32, #tpu.memory_space<smem>>
    %1711 = vector.broadcast %1710 : f32 to vector<2x256xf32>
    %1712 = arith.mulf %1697, %1711 : vector<2x256xf32>
    %1713 = arith.addf %1694, %1712 : vector<2x256xf32>
    %1714 = vector.extract_strided_slice %1658 {offsets = [0, 16], sizes = [2, 256], strides = [1, 1]} : vector<2x290xf32> to vector<2x256xf32>
    %1715 = vector.broadcast %20 : vector<1x256xf32> to vector<2x256xf32>
    %1716 = arith.mulf %1714, %1715 : vector<2x256xf32>
    %c0_642 = arith.constant 0 : index
    %c12_643 = arith.constant 12 : index
    %1717 = memref.load %arg5[%c0_642, %c12_643] : memref<4x36xf32, #tpu.memory_space<smem>>
    %1718 = vector.broadcast %1717 : f32 to vector<2x256xf32>
    %1719 = arith.mulf %1716, %1718 : vector<2x256xf32>
    %1720 = arith.addf %1701, %1719 : vector<2x256xf32>
    %c1_644 = arith.constant 1 : index
    %c12_645 = arith.constant 12 : index
    %1721 = memref.load %arg5[%c1_644, %c12_645] : memref<4x36xf32, #tpu.memory_space<smem>>
    %1722 = vector.broadcast %1721 : f32 to vector<2x256xf32>
    %1723 = arith.mulf %1716, %1722 : vector<2x256xf32>
    %1724 = arith.addf %1705, %1723 : vector<2x256xf32>
    %c2_646 = arith.constant 2 : index
    %c12_647 = arith.constant 12 : index
    %1725 = memref.load %arg5[%c2_646, %c12_647] : memref<4x36xf32, #tpu.memory_space<smem>>
    %1726 = vector.broadcast %1725 : f32 to vector<2x256xf32>
    %1727 = arith.mulf %1716, %1726 : vector<2x256xf32>
    %1728 = arith.addf %1709, %1727 : vector<2x256xf32>
    %c3_648 = arith.constant 3 : index
    %c12_649 = arith.constant 12 : index
    %1729 = memref.load %arg5[%c3_648, %c12_649] : memref<4x36xf32, #tpu.memory_space<smem>>
    %1730 = vector.broadcast %1729 : f32 to vector<2x256xf32>
    %1731 = arith.mulf %1716, %1730 : vector<2x256xf32>
    %1732 = arith.addf %1713, %1731 : vector<2x256xf32>
    %1733 = vector.extract_strided_slice %1658 {offsets = [0, 17], sizes = [2, 256], strides = [1, 1]} : vector<2x290xf32> to vector<2x256xf32>
    %c0_650 = arith.constant 0 : index
    %c13_651 = arith.constant 13 : index
    %1734 = memref.load %arg5[%c0_650, %c13_651] : memref<4x36xf32, #tpu.memory_space<smem>>
    %1735 = vector.broadcast %1734 : f32 to vector<2x256xf32>
    %1736 = arith.mulf %1733, %1735 : vector<2x256xf32>
    %1737 = arith.addf %1720, %1736 : vector<2x256xf32>
    %c1_652 = arith.constant 1 : index
    %c13_653 = arith.constant 13 : index
    %1738 = memref.load %arg5[%c1_652, %c13_653] : memref<4x36xf32, #tpu.memory_space<smem>>
    %1739 = vector.broadcast %1738 : f32 to vector<2x256xf32>
    %1740 = arith.mulf %1733, %1739 : vector<2x256xf32>
    %1741 = arith.addf %1724, %1740 : vector<2x256xf32>
    %c2_654 = arith.constant 2 : index
    %c13_655 = arith.constant 13 : index
    %1742 = memref.load %arg5[%c2_654, %c13_655] : memref<4x36xf32, #tpu.memory_space<smem>>
    %1743 = vector.broadcast %1742 : f32 to vector<2x256xf32>
    %1744 = arith.mulf %1733, %1743 : vector<2x256xf32>
    %1745 = arith.addf %1728, %1744 : vector<2x256xf32>
    %c3_656 = arith.constant 3 : index
    %c13_657 = arith.constant 13 : index
    %1746 = memref.load %arg5[%c3_656, %c13_657] : memref<4x36xf32, #tpu.memory_space<smem>>
    %1747 = vector.broadcast %1746 : f32 to vector<2x256xf32>
    %1748 = arith.mulf %1733, %1747 : vector<2x256xf32>
    %1749 = arith.addf %1732, %1748 : vector<2x256xf32>
    %1750 = vector.extract_strided_slice %1658 {offsets = [0, 18], sizes = [2, 256], strides = [1, 1]} : vector<2x290xf32> to vector<2x256xf32>
    %1751 = vector.broadcast %24 : vector<1x256xf32> to vector<2x256xf32>
    %1752 = arith.mulf %1750, %1751 : vector<2x256xf32>
    %c0_658 = arith.constant 0 : index
    %c14_659 = arith.constant 14 : index
    %1753 = memref.load %arg5[%c0_658, %c14_659] : memref<4x36xf32, #tpu.memory_space<smem>>
    %1754 = vector.broadcast %1753 : f32 to vector<2x256xf32>
    %1755 = arith.mulf %1752, %1754 : vector<2x256xf32>
    %1756 = arith.addf %1737, %1755 : vector<2x256xf32>
    %c1_660 = arith.constant 1 : index
    %c14_661 = arith.constant 14 : index
    %1757 = memref.load %arg5[%c1_660, %c14_661] : memref<4x36xf32, #tpu.memory_space<smem>>
    %1758 = vector.broadcast %1757 : f32 to vector<2x256xf32>
    %1759 = arith.mulf %1752, %1758 : vector<2x256xf32>
    %1760 = arith.addf %1741, %1759 : vector<2x256xf32>
    %c2_662 = arith.constant 2 : index
    %c14_663 = arith.constant 14 : index
    %1761 = memref.load %arg5[%c2_662, %c14_663] : memref<4x36xf32, #tpu.memory_space<smem>>
    %1762 = vector.broadcast %1761 : f32 to vector<2x256xf32>
    %1763 = arith.mulf %1752, %1762 : vector<2x256xf32>
    %1764 = arith.addf %1745, %1763 : vector<2x256xf32>
    %c3_664 = arith.constant 3 : index
    %c14_665 = arith.constant 14 : index
    %1765 = memref.load %arg5[%c3_664, %c14_665] : memref<4x36xf32, #tpu.memory_space<smem>>
    %1766 = vector.broadcast %1765 : f32 to vector<2x256xf32>
    %1767 = arith.mulf %1752, %1766 : vector<2x256xf32>
    %1768 = arith.addf %1749, %1767 : vector<2x256xf32>
    %1769 = vector.extract_strided_slice %1658 {offsets = [0, 32], sizes = [2, 256], strides = [1, 1]} : vector<2x290xf32> to vector<2x256xf32>
    %1770 = vector.broadcast %20 : vector<1x256xf32> to vector<2x256xf32>
    %1771 = arith.mulf %1769, %1770 : vector<2x256xf32>
    %c0_666 = arith.constant 0 : index
    %c15_667 = arith.constant 15 : index
    %1772 = memref.load %arg5[%c0_666, %c15_667] : memref<4x36xf32, #tpu.memory_space<smem>>
    %1773 = vector.broadcast %1772 : f32 to vector<2x256xf32>
    %1774 = arith.mulf %1771, %1773 : vector<2x256xf32>
    %1775 = arith.addf %1756, %1774 : vector<2x256xf32>
    %c1_668 = arith.constant 1 : index
    %c15_669 = arith.constant 15 : index
    %1776 = memref.load %arg5[%c1_668, %c15_669] : memref<4x36xf32, #tpu.memory_space<smem>>
    %1777 = vector.broadcast %1776 : f32 to vector<2x256xf32>
    %1778 = arith.mulf %1771, %1777 : vector<2x256xf32>
    %1779 = arith.addf %1760, %1778 : vector<2x256xf32>
    %c2_670 = arith.constant 2 : index
    %c15_671 = arith.constant 15 : index
    %1780 = memref.load %arg5[%c2_670, %c15_671] : memref<4x36xf32, #tpu.memory_space<smem>>
    %1781 = vector.broadcast %1780 : f32 to vector<2x256xf32>
    %1782 = arith.mulf %1771, %1781 : vector<2x256xf32>
    %1783 = arith.addf %1764, %1782 : vector<2x256xf32>
    %c3_672 = arith.constant 3 : index
    %c15_673 = arith.constant 15 : index
    %1784 = memref.load %arg5[%c3_672, %c15_673] : memref<4x36xf32, #tpu.memory_space<smem>>
    %1785 = vector.broadcast %1784 : f32 to vector<2x256xf32>
    %1786 = arith.mulf %1771, %1785 : vector<2x256xf32>
    %1787 = arith.addf %1768, %1786 : vector<2x256xf32>
    %1788 = vector.extract_strided_slice %1658 {offsets = [0, 33], sizes = [2, 256], strides = [1, 1]} : vector<2x290xf32> to vector<2x256xf32>
    %c0_674 = arith.constant 0 : index
    %c16_675 = arith.constant 16 : index
    %1789 = memref.load %arg5[%c0_674, %c16_675] : memref<4x36xf32, #tpu.memory_space<smem>>
    %1790 = vector.broadcast %1789 : f32 to vector<2x256xf32>
    %1791 = arith.mulf %1788, %1790 : vector<2x256xf32>
    %1792 = arith.addf %1775, %1791 : vector<2x256xf32>
    %c1_676 = arith.constant 1 : index
    %c16_677 = arith.constant 16 : index
    %1793 = memref.load %arg5[%c1_676, %c16_677] : memref<4x36xf32, #tpu.memory_space<smem>>
    %1794 = vector.broadcast %1793 : f32 to vector<2x256xf32>
    %1795 = arith.mulf %1788, %1794 : vector<2x256xf32>
    %1796 = arith.addf %1779, %1795 : vector<2x256xf32>
    %c2_678 = arith.constant 2 : index
    %c16_679 = arith.constant 16 : index
    %1797 = memref.load %arg5[%c2_678, %c16_679] : memref<4x36xf32, #tpu.memory_space<smem>>
    %1798 = vector.broadcast %1797 : f32 to vector<2x256xf32>
    %1799 = arith.mulf %1788, %1798 : vector<2x256xf32>
    %1800 = arith.addf %1783, %1799 : vector<2x256xf32>
    %c3_680 = arith.constant 3 : index
    %c16_681 = arith.constant 16 : index
    %1801 = memref.load %arg5[%c3_680, %c16_681] : memref<4x36xf32, #tpu.memory_space<smem>>
    %1802 = vector.broadcast %1801 : f32 to vector<2x256xf32>
    %1803 = arith.mulf %1788, %1802 : vector<2x256xf32>
    %1804 = arith.addf %1787, %1803 : vector<2x256xf32>
    %1805 = vector.extract_strided_slice %1658 {offsets = [0, 34], sizes = [2, 256], strides = [1, 1]} : vector<2x290xf32> to vector<2x256xf32>
    %1806 = vector.broadcast %24 : vector<1x256xf32> to vector<2x256xf32>
    %1807 = arith.mulf %1805, %1806 : vector<2x256xf32>
    %c0_682 = arith.constant 0 : index
    %c17_683 = arith.constant 17 : index
    %1808 = memref.load %arg5[%c0_682, %c17_683] : memref<4x36xf32, #tpu.memory_space<smem>>
    %1809 = vector.broadcast %1808 : f32 to vector<2x256xf32>
    %1810 = arith.mulf %1807, %1809 : vector<2x256xf32>
    %1811 = arith.addf %1792, %1810 : vector<2x256xf32>
    %c1_684 = arith.constant 1 : index
    %c17_685 = arith.constant 17 : index
    %1812 = memref.load %arg5[%c1_684, %c17_685] : memref<4x36xf32, #tpu.memory_space<smem>>
    %1813 = vector.broadcast %1812 : f32 to vector<2x256xf32>
    %1814 = arith.mulf %1807, %1813 : vector<2x256xf32>
    %1815 = arith.addf %1796, %1814 : vector<2x256xf32>
    %c2_686 = arith.constant 2 : index
    %c17_687 = arith.constant 17 : index
    %1816 = memref.load %arg5[%c2_686, %c17_687] : memref<4x36xf32, #tpu.memory_space<smem>>
    %1817 = vector.broadcast %1816 : f32 to vector<2x256xf32>
    %1818 = arith.mulf %1807, %1817 : vector<2x256xf32>
    %1819 = arith.addf %1800, %1818 : vector<2x256xf32>
    %c3_688 = arith.constant 3 : index
    %c17_689 = arith.constant 17 : index
    %1820 = memref.load %arg5[%c3_688, %c17_689] : memref<4x36xf32, #tpu.memory_space<smem>>
    %1821 = vector.broadcast %1820 : f32 to vector<2x256xf32>
    %1822 = arith.mulf %1807, %1821 : vector<2x256xf32>
    %1823 = arith.addf %1804, %1822 : vector<2x256xf32>
    %1824 = tpu.concatenate %25, %1463, %25 in 1 : vector<2x17xf32>, vector<2x256xf32>, vector<2x17xf32> -> vector<2x290xf32>
    %1825 = vector.extract_strided_slice %1824 {offsets = [0, 0], sizes = [2, 256], strides = [1, 1]} : vector<2x290xf32> to vector<2x256xf32>
    %1826 = vector.broadcast %20 : vector<1x256xf32> to vector<2x256xf32>
    %1827 = arith.mulf %1825, %1826 : vector<2x256xf32>
    %c0_690 = arith.constant 0 : index
    %c18_691 = arith.constant 18 : index
    %1828 = memref.load %arg5[%c0_690, %c18_691] : memref<4x36xf32, #tpu.memory_space<smem>>
    %1829 = vector.broadcast %1828 : f32 to vector<2x256xf32>
    %1830 = arith.mulf %1827, %1829 : vector<2x256xf32>
    %1831 = arith.addf %1811, %1830 : vector<2x256xf32>
    %c1_692 = arith.constant 1 : index
    %c18_693 = arith.constant 18 : index
    %1832 = memref.load %arg5[%c1_692, %c18_693] : memref<4x36xf32, #tpu.memory_space<smem>>
    %1833 = vector.broadcast %1832 : f32 to vector<2x256xf32>
    %1834 = arith.mulf %1827, %1833 : vector<2x256xf32>
    %1835 = arith.addf %1815, %1834 : vector<2x256xf32>
    %c2_694 = arith.constant 2 : index
    %c18_695 = arith.constant 18 : index
    %1836 = memref.load %arg5[%c2_694, %c18_695] : memref<4x36xf32, #tpu.memory_space<smem>>
    %1837 = vector.broadcast %1836 : f32 to vector<2x256xf32>
    %1838 = arith.mulf %1827, %1837 : vector<2x256xf32>
    %1839 = arith.addf %1819, %1838 : vector<2x256xf32>
    %c3_696 = arith.constant 3 : index
    %c18_697 = arith.constant 18 : index
    %1840 = memref.load %arg5[%c3_696, %c18_697] : memref<4x36xf32, #tpu.memory_space<smem>>
    %1841 = vector.broadcast %1840 : f32 to vector<2x256xf32>
    %1842 = arith.mulf %1827, %1841 : vector<2x256xf32>
    %1843 = arith.addf %1823, %1842 : vector<2x256xf32>
    %1844 = vector.extract_strided_slice %1824 {offsets = [0, 1], sizes = [2, 256], strides = [1, 1]} : vector<2x290xf32> to vector<2x256xf32>
    %c0_698 = arith.constant 0 : index
    %c19_699 = arith.constant 19 : index
    %1845 = memref.load %arg5[%c0_698, %c19_699] : memref<4x36xf32, #tpu.memory_space<smem>>
    %1846 = vector.broadcast %1845 : f32 to vector<2x256xf32>
    %1847 = arith.mulf %1844, %1846 : vector<2x256xf32>
    %1848 = arith.addf %1831, %1847 : vector<2x256xf32>
    %c1_700 = arith.constant 1 : index
    %c19_701 = arith.constant 19 : index
    %1849 = memref.load %arg5[%c1_700, %c19_701] : memref<4x36xf32, #tpu.memory_space<smem>>
    %1850 = vector.broadcast %1849 : f32 to vector<2x256xf32>
    %1851 = arith.mulf %1844, %1850 : vector<2x256xf32>
    %1852 = arith.addf %1835, %1851 : vector<2x256xf32>
    %c2_702 = arith.constant 2 : index
    %c19_703 = arith.constant 19 : index
    %1853 = memref.load %arg5[%c2_702, %c19_703] : memref<4x36xf32, #tpu.memory_space<smem>>
    %1854 = vector.broadcast %1853 : f32 to vector<2x256xf32>
    %1855 = arith.mulf %1844, %1854 : vector<2x256xf32>
    %1856 = arith.addf %1839, %1855 : vector<2x256xf32>
    %c3_704 = arith.constant 3 : index
    %c19_705 = arith.constant 19 : index
    %1857 = memref.load %arg5[%c3_704, %c19_705] : memref<4x36xf32, #tpu.memory_space<smem>>
    %1858 = vector.broadcast %1857 : f32 to vector<2x256xf32>
    %1859 = arith.mulf %1844, %1858 : vector<2x256xf32>
    %1860 = arith.addf %1843, %1859 : vector<2x256xf32>
    %1861 = vector.extract_strided_slice %1824 {offsets = [0, 2], sizes = [2, 256], strides = [1, 1]} : vector<2x290xf32> to vector<2x256xf32>
    %1862 = vector.broadcast %24 : vector<1x256xf32> to vector<2x256xf32>
    %1863 = arith.mulf %1861, %1862 : vector<2x256xf32>
    %c0_706 = arith.constant 0 : index
    %c20_707 = arith.constant 20 : index
    %1864 = memref.load %arg5[%c0_706, %c20_707] : memref<4x36xf32, #tpu.memory_space<smem>>
    %1865 = vector.broadcast %1864 : f32 to vector<2x256xf32>
    %1866 = arith.mulf %1863, %1865 : vector<2x256xf32>
    %1867 = arith.addf %1848, %1866 : vector<2x256xf32>
    %c1_708 = arith.constant 1 : index
    %c20_709 = arith.constant 20 : index
    %1868 = memref.load %arg5[%c1_708, %c20_709] : memref<4x36xf32, #tpu.memory_space<smem>>
    %1869 = vector.broadcast %1868 : f32 to vector<2x256xf32>
    %1870 = arith.mulf %1863, %1869 : vector<2x256xf32>
    %1871 = arith.addf %1852, %1870 : vector<2x256xf32>
    %c2_710 = arith.constant 2 : index
    %c20_711 = arith.constant 20 : index
    %1872 = memref.load %arg5[%c2_710, %c20_711] : memref<4x36xf32, #tpu.memory_space<smem>>
    %1873 = vector.broadcast %1872 : f32 to vector<2x256xf32>
    %1874 = arith.mulf %1863, %1873 : vector<2x256xf32>
    %1875 = arith.addf %1856, %1874 : vector<2x256xf32>
    %c3_712 = arith.constant 3 : index
    %c20_713 = arith.constant 20 : index
    %1876 = memref.load %arg5[%c3_712, %c20_713] : memref<4x36xf32, #tpu.memory_space<smem>>
    %1877 = vector.broadcast %1876 : f32 to vector<2x256xf32>
    %1878 = arith.mulf %1863, %1877 : vector<2x256xf32>
    %1879 = arith.addf %1860, %1878 : vector<2x256xf32>
    %1880 = vector.extract_strided_slice %1824 {offsets = [0, 16], sizes = [2, 256], strides = [1, 1]} : vector<2x290xf32> to vector<2x256xf32>
    %1881 = vector.broadcast %20 : vector<1x256xf32> to vector<2x256xf32>
    %1882 = arith.mulf %1880, %1881 : vector<2x256xf32>
    %c0_714 = arith.constant 0 : index
    %c21_715 = arith.constant 21 : index
    %1883 = memref.load %arg5[%c0_714, %c21_715] : memref<4x36xf32, #tpu.memory_space<smem>>
    %1884 = vector.broadcast %1883 : f32 to vector<2x256xf32>
    %1885 = arith.mulf %1882, %1884 : vector<2x256xf32>
    %1886 = arith.addf %1867, %1885 : vector<2x256xf32>
    %c1_716 = arith.constant 1 : index
    %c21_717 = arith.constant 21 : index
    %1887 = memref.load %arg5[%c1_716, %c21_717] : memref<4x36xf32, #tpu.memory_space<smem>>
    %1888 = vector.broadcast %1887 : f32 to vector<2x256xf32>
    %1889 = arith.mulf %1882, %1888 : vector<2x256xf32>
    %1890 = arith.addf %1871, %1889 : vector<2x256xf32>
    %c2_718 = arith.constant 2 : index
    %c21_719 = arith.constant 21 : index
    %1891 = memref.load %arg5[%c2_718, %c21_719] : memref<4x36xf32, #tpu.memory_space<smem>>
    %1892 = vector.broadcast %1891 : f32 to vector<2x256xf32>
    %1893 = arith.mulf %1882, %1892 : vector<2x256xf32>
    %1894 = arith.addf %1875, %1893 : vector<2x256xf32>
    %c3_720 = arith.constant 3 : index
    %c21_721 = arith.constant 21 : index
    %1895 = memref.load %arg5[%c3_720, %c21_721] : memref<4x36xf32, #tpu.memory_space<smem>>
    %1896 = vector.broadcast %1895 : f32 to vector<2x256xf32>
    %1897 = arith.mulf %1882, %1896 : vector<2x256xf32>
    %1898 = arith.addf %1879, %1897 : vector<2x256xf32>
    %1899 = vector.extract_strided_slice %1824 {offsets = [0, 17], sizes = [2, 256], strides = [1, 1]} : vector<2x290xf32> to vector<2x256xf32>
    %c0_722 = arith.constant 0 : index
    %c22_723 = arith.constant 22 : index
    %1900 = memref.load %arg5[%c0_722, %c22_723] : memref<4x36xf32, #tpu.memory_space<smem>>
    %1901 = vector.broadcast %1900 : f32 to vector<2x256xf32>
    %1902 = arith.mulf %1899, %1901 : vector<2x256xf32>
    %1903 = arith.addf %1886, %1902 : vector<2x256xf32>
    %c1_724 = arith.constant 1 : index
    %c22_725 = arith.constant 22 : index
    %1904 = memref.load %arg5[%c1_724, %c22_725] : memref<4x36xf32, #tpu.memory_space<smem>>
    %1905 = vector.broadcast %1904 : f32 to vector<2x256xf32>
    %1906 = arith.mulf %1899, %1905 : vector<2x256xf32>
    %1907 = arith.addf %1890, %1906 : vector<2x256xf32>
    %c2_726 = arith.constant 2 : index
    %c22_727 = arith.constant 22 : index
    %1908 = memref.load %arg5[%c2_726, %c22_727] : memref<4x36xf32, #tpu.memory_space<smem>>
    %1909 = vector.broadcast %1908 : f32 to vector<2x256xf32>
    %1910 = arith.mulf %1899, %1909 : vector<2x256xf32>
    %1911 = arith.addf %1894, %1910 : vector<2x256xf32>
    %c3_728 = arith.constant 3 : index
    %c22_729 = arith.constant 22 : index
    %1912 = memref.load %arg5[%c3_728, %c22_729] : memref<4x36xf32, #tpu.memory_space<smem>>
    %1913 = vector.broadcast %1912 : f32 to vector<2x256xf32>
    %1914 = arith.mulf %1899, %1913 : vector<2x256xf32>
    %1915 = arith.addf %1898, %1914 : vector<2x256xf32>
    %1916 = vector.extract_strided_slice %1824 {offsets = [0, 18], sizes = [2, 256], strides = [1, 1]} : vector<2x290xf32> to vector<2x256xf32>
    %1917 = vector.broadcast %24 : vector<1x256xf32> to vector<2x256xf32>
    %1918 = arith.mulf %1916, %1917 : vector<2x256xf32>
    %c0_730 = arith.constant 0 : index
    %c23_731 = arith.constant 23 : index
    %1919 = memref.load %arg5[%c0_730, %c23_731] : memref<4x36xf32, #tpu.memory_space<smem>>
    %1920 = vector.broadcast %1919 : f32 to vector<2x256xf32>
    %1921 = arith.mulf %1918, %1920 : vector<2x256xf32>
    %1922 = arith.addf %1903, %1921 : vector<2x256xf32>
    %c1_732 = arith.constant 1 : index
    %c23_733 = arith.constant 23 : index
    %1923 = memref.load %arg5[%c1_732, %c23_733] : memref<4x36xf32, #tpu.memory_space<smem>>
    %1924 = vector.broadcast %1923 : f32 to vector<2x256xf32>
    %1925 = arith.mulf %1918, %1924 : vector<2x256xf32>
    %1926 = arith.addf %1907, %1925 : vector<2x256xf32>
    %c2_734 = arith.constant 2 : index
    %c23_735 = arith.constant 23 : index
    %1927 = memref.load %arg5[%c2_734, %c23_735] : memref<4x36xf32, #tpu.memory_space<smem>>
    %1928 = vector.broadcast %1927 : f32 to vector<2x256xf32>
    %1929 = arith.mulf %1918, %1928 : vector<2x256xf32>
    %1930 = arith.addf %1911, %1929 : vector<2x256xf32>
    %c3_736 = arith.constant 3 : index
    %c23_737 = arith.constant 23 : index
    %1931 = memref.load %arg5[%c3_736, %c23_737] : memref<4x36xf32, #tpu.memory_space<smem>>
    %1932 = vector.broadcast %1931 : f32 to vector<2x256xf32>
    %1933 = arith.mulf %1918, %1932 : vector<2x256xf32>
    %1934 = arith.addf %1915, %1933 : vector<2x256xf32>
    %1935 = vector.extract_strided_slice %1824 {offsets = [0, 32], sizes = [2, 256], strides = [1, 1]} : vector<2x290xf32> to vector<2x256xf32>
    %1936 = vector.broadcast %20 : vector<1x256xf32> to vector<2x256xf32>
    %1937 = arith.mulf %1935, %1936 : vector<2x256xf32>
    %c0_738 = arith.constant 0 : index
    %c24_739 = arith.constant 24 : index
    %1938 = memref.load %arg5[%c0_738, %c24_739] : memref<4x36xf32, #tpu.memory_space<smem>>
    %1939 = vector.broadcast %1938 : f32 to vector<2x256xf32>
    %1940 = arith.mulf %1937, %1939 : vector<2x256xf32>
    %1941 = arith.addf %1922, %1940 : vector<2x256xf32>
    %c1_740 = arith.constant 1 : index
    %c24_741 = arith.constant 24 : index
    %1942 = memref.load %arg5[%c1_740, %c24_741] : memref<4x36xf32, #tpu.memory_space<smem>>
    %1943 = vector.broadcast %1942 : f32 to vector<2x256xf32>
    %1944 = arith.mulf %1937, %1943 : vector<2x256xf32>
    %1945 = arith.addf %1926, %1944 : vector<2x256xf32>
    %c2_742 = arith.constant 2 : index
    %c24_743 = arith.constant 24 : index
    %1946 = memref.load %arg5[%c2_742, %c24_743] : memref<4x36xf32, #tpu.memory_space<smem>>
    %1947 = vector.broadcast %1946 : f32 to vector<2x256xf32>
    %1948 = arith.mulf %1937, %1947 : vector<2x256xf32>
    %1949 = arith.addf %1930, %1948 : vector<2x256xf32>
    %c3_744 = arith.constant 3 : index
    %c24_745 = arith.constant 24 : index
    %1950 = memref.load %arg5[%c3_744, %c24_745] : memref<4x36xf32, #tpu.memory_space<smem>>
    %1951 = vector.broadcast %1950 : f32 to vector<2x256xf32>
    %1952 = arith.mulf %1937, %1951 : vector<2x256xf32>
    %1953 = arith.addf %1934, %1952 : vector<2x256xf32>
    %1954 = vector.extract_strided_slice %1824 {offsets = [0, 33], sizes = [2, 256], strides = [1, 1]} : vector<2x290xf32> to vector<2x256xf32>
    %c0_746 = arith.constant 0 : index
    %c25_747 = arith.constant 25 : index
    %1955 = memref.load %arg5[%c0_746, %c25_747] : memref<4x36xf32, #tpu.memory_space<smem>>
    %1956 = vector.broadcast %1955 : f32 to vector<2x256xf32>
    %1957 = arith.mulf %1954, %1956 : vector<2x256xf32>
    %1958 = arith.addf %1941, %1957 : vector<2x256xf32>
    %c1_748 = arith.constant 1 : index
    %c25_749 = arith.constant 25 : index
    %1959 = memref.load %arg5[%c1_748, %c25_749] : memref<4x36xf32, #tpu.memory_space<smem>>
    %1960 = vector.broadcast %1959 : f32 to vector<2x256xf32>
    %1961 = arith.mulf %1954, %1960 : vector<2x256xf32>
    %1962 = arith.addf %1945, %1961 : vector<2x256xf32>
    %c2_750 = arith.constant 2 : index
    %c25_751 = arith.constant 25 : index
    %1963 = memref.load %arg5[%c2_750, %c25_751] : memref<4x36xf32, #tpu.memory_space<smem>>
    %1964 = vector.broadcast %1963 : f32 to vector<2x256xf32>
    %1965 = arith.mulf %1954, %1964 : vector<2x256xf32>
    %1966 = arith.addf %1949, %1965 : vector<2x256xf32>
    %c3_752 = arith.constant 3 : index
    %c25_753 = arith.constant 25 : index
    %1967 = memref.load %arg5[%c3_752, %c25_753] : memref<4x36xf32, #tpu.memory_space<smem>>
    %1968 = vector.broadcast %1967 : f32 to vector<2x256xf32>
    %1969 = arith.mulf %1954, %1968 : vector<2x256xf32>
    %1970 = arith.addf %1953, %1969 : vector<2x256xf32>
    %1971 = vector.extract_strided_slice %1824 {offsets = [0, 34], sizes = [2, 256], strides = [1, 1]} : vector<2x290xf32> to vector<2x256xf32>
    %1972 = vector.broadcast %24 : vector<1x256xf32> to vector<2x256xf32>
    %1973 = arith.mulf %1971, %1972 : vector<2x256xf32>
    %c0_754 = arith.constant 0 : index
    %c26_755 = arith.constant 26 : index
    %1974 = memref.load %arg5[%c0_754, %c26_755] : memref<4x36xf32, #tpu.memory_space<smem>>
    %1975 = vector.broadcast %1974 : f32 to vector<2x256xf32>
    %1976 = arith.mulf %1973, %1975 : vector<2x256xf32>
    %1977 = arith.addf %1958, %1976 : vector<2x256xf32>
    %c1_756 = arith.constant 1 : index
    %c26_757 = arith.constant 26 : index
    %1978 = memref.load %arg5[%c1_756, %c26_757] : memref<4x36xf32, #tpu.memory_space<smem>>
    %1979 = vector.broadcast %1978 : f32 to vector<2x256xf32>
    %1980 = arith.mulf %1973, %1979 : vector<2x256xf32>
    %1981 = arith.addf %1962, %1980 : vector<2x256xf32>
    %c2_758 = arith.constant 2 : index
    %c26_759 = arith.constant 26 : index
    %1982 = memref.load %arg5[%c2_758, %c26_759] : memref<4x36xf32, #tpu.memory_space<smem>>
    %1983 = vector.broadcast %1982 : f32 to vector<2x256xf32>
    %1984 = arith.mulf %1973, %1983 : vector<2x256xf32>
    %1985 = arith.addf %1966, %1984 : vector<2x256xf32>
    %c3_760 = arith.constant 3 : index
    %c26_761 = arith.constant 26 : index
    %1986 = memref.load %arg5[%c3_760, %c26_761] : memref<4x36xf32, #tpu.memory_space<smem>>
    %1987 = vector.broadcast %1986 : f32 to vector<2x256xf32>
    %1988 = arith.mulf %1973, %1987 : vector<2x256xf32>
    %1989 = arith.addf %1970, %1988 : vector<2x256xf32>
    %1990 = tpu.concatenate %25, %1495, %25 in 1 : vector<2x17xf32>, vector<2x256xf32>, vector<2x17xf32> -> vector<2x290xf32>
    %1991 = vector.extract_strided_slice %1990 {offsets = [0, 0], sizes = [2, 256], strides = [1, 1]} : vector<2x290xf32> to vector<2x256xf32>
    %1992 = vector.broadcast %20 : vector<1x256xf32> to vector<2x256xf32>
    %1993 = arith.mulf %1991, %1992 : vector<2x256xf32>
    %c0_762 = arith.constant 0 : index
    %c27_763 = arith.constant 27 : index
    %1994 = memref.load %arg5[%c0_762, %c27_763] : memref<4x36xf32, #tpu.memory_space<smem>>
    %1995 = vector.broadcast %1994 : f32 to vector<2x256xf32>
    %1996 = arith.mulf %1993, %1995 : vector<2x256xf32>
    %1997 = arith.addf %1977, %1996 : vector<2x256xf32>
    %c1_764 = arith.constant 1 : index
    %c27_765 = arith.constant 27 : index
    %1998 = memref.load %arg5[%c1_764, %c27_765] : memref<4x36xf32, #tpu.memory_space<smem>>
    %1999 = vector.broadcast %1998 : f32 to vector<2x256xf32>
    %2000 = arith.mulf %1993, %1999 : vector<2x256xf32>
    %2001 = arith.addf %1981, %2000 : vector<2x256xf32>
    %c2_766 = arith.constant 2 : index
    %c27_767 = arith.constant 27 : index
    %2002 = memref.load %arg5[%c2_766, %c27_767] : memref<4x36xf32, #tpu.memory_space<smem>>
    %2003 = vector.broadcast %2002 : f32 to vector<2x256xf32>
    %2004 = arith.mulf %1993, %2003 : vector<2x256xf32>
    %2005 = arith.addf %1985, %2004 : vector<2x256xf32>
    %c3_768 = arith.constant 3 : index
    %c27_769 = arith.constant 27 : index
    %2006 = memref.load %arg5[%c3_768, %c27_769] : memref<4x36xf32, #tpu.memory_space<smem>>
    %2007 = vector.broadcast %2006 : f32 to vector<2x256xf32>
    %2008 = arith.mulf %1993, %2007 : vector<2x256xf32>
    %2009 = arith.addf %1989, %2008 : vector<2x256xf32>
    %2010 = vector.extract_strided_slice %1990 {offsets = [0, 1], sizes = [2, 256], strides = [1, 1]} : vector<2x290xf32> to vector<2x256xf32>
    %c0_770 = arith.constant 0 : index
    %c28_771 = arith.constant 28 : index
    %2011 = memref.load %arg5[%c0_770, %c28_771] : memref<4x36xf32, #tpu.memory_space<smem>>
    %2012 = vector.broadcast %2011 : f32 to vector<2x256xf32>
    %2013 = arith.mulf %2010, %2012 : vector<2x256xf32>
    %2014 = arith.addf %1997, %2013 : vector<2x256xf32>
    %c1_772 = arith.constant 1 : index
    %c28_773 = arith.constant 28 : index
    %2015 = memref.load %arg5[%c1_772, %c28_773] : memref<4x36xf32, #tpu.memory_space<smem>>
    %2016 = vector.broadcast %2015 : f32 to vector<2x256xf32>
    %2017 = arith.mulf %2010, %2016 : vector<2x256xf32>
    %2018 = arith.addf %2001, %2017 : vector<2x256xf32>
    %c2_774 = arith.constant 2 : index
    %c28_775 = arith.constant 28 : index
    %2019 = memref.load %arg5[%c2_774, %c28_775] : memref<4x36xf32, #tpu.memory_space<smem>>
    %2020 = vector.broadcast %2019 : f32 to vector<2x256xf32>
    %2021 = arith.mulf %2010, %2020 : vector<2x256xf32>
    %2022 = arith.addf %2005, %2021 : vector<2x256xf32>
    %c3_776 = arith.constant 3 : index
    %c28_777 = arith.constant 28 : index
    %2023 = memref.load %arg5[%c3_776, %c28_777] : memref<4x36xf32, #tpu.memory_space<smem>>
    %2024 = vector.broadcast %2023 : f32 to vector<2x256xf32>
    %2025 = arith.mulf %2010, %2024 : vector<2x256xf32>
    %2026 = arith.addf %2009, %2025 : vector<2x256xf32>
    %2027 = vector.extract_strided_slice %1990 {offsets = [0, 2], sizes = [2, 256], strides = [1, 1]} : vector<2x290xf32> to vector<2x256xf32>
    %2028 = vector.broadcast %24 : vector<1x256xf32> to vector<2x256xf32>
    %2029 = arith.mulf %2027, %2028 : vector<2x256xf32>
    %c0_778 = arith.constant 0 : index
    %c29_779 = arith.constant 29 : index
    %2030 = memref.load %arg5[%c0_778, %c29_779] : memref<4x36xf32, #tpu.memory_space<smem>>
    %2031 = vector.broadcast %2030 : f32 to vector<2x256xf32>
    %2032 = arith.mulf %2029, %2031 : vector<2x256xf32>
    %2033 = arith.addf %2014, %2032 : vector<2x256xf32>
    %c1_780 = arith.constant 1 : index
    %c29_781 = arith.constant 29 : index
    %2034 = memref.load %arg5[%c1_780, %c29_781] : memref<4x36xf32, #tpu.memory_space<smem>>
    %2035 = vector.broadcast %2034 : f32 to vector<2x256xf32>
    %2036 = arith.mulf %2029, %2035 : vector<2x256xf32>
    %2037 = arith.addf %2018, %2036 : vector<2x256xf32>
    %c2_782 = arith.constant 2 : index
    %c29_783 = arith.constant 29 : index
    %2038 = memref.load %arg5[%c2_782, %c29_783] : memref<4x36xf32, #tpu.memory_space<smem>>
    %2039 = vector.broadcast %2038 : f32 to vector<2x256xf32>
    %2040 = arith.mulf %2029, %2039 : vector<2x256xf32>
    %2041 = arith.addf %2022, %2040 : vector<2x256xf32>
    %c3_784 = arith.constant 3 : index
    %c29_785 = arith.constant 29 : index
    %2042 = memref.load %arg5[%c3_784, %c29_785] : memref<4x36xf32, #tpu.memory_space<smem>>
    %2043 = vector.broadcast %2042 : f32 to vector<2x256xf32>
    %2044 = arith.mulf %2029, %2043 : vector<2x256xf32>
    %2045 = arith.addf %2026, %2044 : vector<2x256xf32>
    %2046 = vector.extract_strided_slice %1990 {offsets = [0, 16], sizes = [2, 256], strides = [1, 1]} : vector<2x290xf32> to vector<2x256xf32>
    %2047 = vector.broadcast %20 : vector<1x256xf32> to vector<2x256xf32>
    %2048 = arith.mulf %2046, %2047 : vector<2x256xf32>
    %c0_786 = arith.constant 0 : index
    %c30_787 = arith.constant 30 : index
    %2049 = memref.load %arg5[%c0_786, %c30_787] : memref<4x36xf32, #tpu.memory_space<smem>>
    %2050 = vector.broadcast %2049 : f32 to vector<2x256xf32>
    %2051 = arith.mulf %2048, %2050 : vector<2x256xf32>
    %2052 = arith.addf %2033, %2051 : vector<2x256xf32>
    %c1_788 = arith.constant 1 : index
    %c30_789 = arith.constant 30 : index
    %2053 = memref.load %arg5[%c1_788, %c30_789] : memref<4x36xf32, #tpu.memory_space<smem>>
    %2054 = vector.broadcast %2053 : f32 to vector<2x256xf32>
    %2055 = arith.mulf %2048, %2054 : vector<2x256xf32>
    %2056 = arith.addf %2037, %2055 : vector<2x256xf32>
    %c2_790 = arith.constant 2 : index
    %c30_791 = arith.constant 30 : index
    %2057 = memref.load %arg5[%c2_790, %c30_791] : memref<4x36xf32, #tpu.memory_space<smem>>
    %2058 = vector.broadcast %2057 : f32 to vector<2x256xf32>
    %2059 = arith.mulf %2048, %2058 : vector<2x256xf32>
    %2060 = arith.addf %2041, %2059 : vector<2x256xf32>
    %c3_792 = arith.constant 3 : index
    %c30_793 = arith.constant 30 : index
    %2061 = memref.load %arg5[%c3_792, %c30_793] : memref<4x36xf32, #tpu.memory_space<smem>>
    %2062 = vector.broadcast %2061 : f32 to vector<2x256xf32>
    %2063 = arith.mulf %2048, %2062 : vector<2x256xf32>
    %2064 = arith.addf %2045, %2063 : vector<2x256xf32>
    %2065 = vector.extract_strided_slice %1990 {offsets = [0, 17], sizes = [2, 256], strides = [1, 1]} : vector<2x290xf32> to vector<2x256xf32>
    %c0_794 = arith.constant 0 : index
    %c31_795 = arith.constant 31 : index
    %2066 = memref.load %arg5[%c0_794, %c31_795] : memref<4x36xf32, #tpu.memory_space<smem>>
    %2067 = vector.broadcast %2066 : f32 to vector<2x256xf32>
    %2068 = arith.mulf %2065, %2067 : vector<2x256xf32>
    %2069 = arith.addf %2052, %2068 : vector<2x256xf32>
    %c1_796 = arith.constant 1 : index
    %c31_797 = arith.constant 31 : index
    %2070 = memref.load %arg5[%c1_796, %c31_797] : memref<4x36xf32, #tpu.memory_space<smem>>
    %2071 = vector.broadcast %2070 : f32 to vector<2x256xf32>
    %2072 = arith.mulf %2065, %2071 : vector<2x256xf32>
    %2073 = arith.addf %2056, %2072 : vector<2x256xf32>
    %c2_798 = arith.constant 2 : index
    %c31_799 = arith.constant 31 : index
    %2074 = memref.load %arg5[%c2_798, %c31_799] : memref<4x36xf32, #tpu.memory_space<smem>>
    %2075 = vector.broadcast %2074 : f32 to vector<2x256xf32>
    %2076 = arith.mulf %2065, %2075 : vector<2x256xf32>
    %2077 = arith.addf %2060, %2076 : vector<2x256xf32>
    %c3_800 = arith.constant 3 : index
    %c31_801 = arith.constant 31 : index
    %2078 = memref.load %arg5[%c3_800, %c31_801] : memref<4x36xf32, #tpu.memory_space<smem>>
    %2079 = vector.broadcast %2078 : f32 to vector<2x256xf32>
    %2080 = arith.mulf %2065, %2079 : vector<2x256xf32>
    %2081 = arith.addf %2064, %2080 : vector<2x256xf32>
    %2082 = vector.extract_strided_slice %1990 {offsets = [0, 18], sizes = [2, 256], strides = [1, 1]} : vector<2x290xf32> to vector<2x256xf32>
    %2083 = vector.broadcast %24 : vector<1x256xf32> to vector<2x256xf32>
    %2084 = arith.mulf %2082, %2083 : vector<2x256xf32>
    %c0_802 = arith.constant 0 : index
    %c32_803 = arith.constant 32 : index
    %2085 = memref.load %arg5[%c0_802, %c32_803] : memref<4x36xf32, #tpu.memory_space<smem>>
    %2086 = vector.broadcast %2085 : f32 to vector<2x256xf32>
    %2087 = arith.mulf %2084, %2086 : vector<2x256xf32>
    %2088 = arith.addf %2069, %2087 : vector<2x256xf32>
    %c1_804 = arith.constant 1 : index
    %c32_805 = arith.constant 32 : index
    %2089 = memref.load %arg5[%c1_804, %c32_805] : memref<4x36xf32, #tpu.memory_space<smem>>
    %2090 = vector.broadcast %2089 : f32 to vector<2x256xf32>
    %2091 = arith.mulf %2084, %2090 : vector<2x256xf32>
    %2092 = arith.addf %2073, %2091 : vector<2x256xf32>
    %c2_806 = arith.constant 2 : index
    %c32_807 = arith.constant 32 : index
    %2093 = memref.load %arg5[%c2_806, %c32_807] : memref<4x36xf32, #tpu.memory_space<smem>>
    %2094 = vector.broadcast %2093 : f32 to vector<2x256xf32>
    %2095 = arith.mulf %2084, %2094 : vector<2x256xf32>
    %2096 = arith.addf %2077, %2095 : vector<2x256xf32>
    %c3_808 = arith.constant 3 : index
    %c32_809 = arith.constant 32 : index
    %2097 = memref.load %arg5[%c3_808, %c32_809] : memref<4x36xf32, #tpu.memory_space<smem>>
    %2098 = vector.broadcast %2097 : f32 to vector<2x256xf32>
    %2099 = arith.mulf %2084, %2098 : vector<2x256xf32>
    %2100 = arith.addf %2081, %2099 : vector<2x256xf32>
    %2101 = vector.extract_strided_slice %1990 {offsets = [0, 32], sizes = [2, 256], strides = [1, 1]} : vector<2x290xf32> to vector<2x256xf32>
    %2102 = vector.broadcast %20 : vector<1x256xf32> to vector<2x256xf32>
    %2103 = arith.mulf %2101, %2102 : vector<2x256xf32>
    %c0_810 = arith.constant 0 : index
    %c33_811 = arith.constant 33 : index
    %2104 = memref.load %arg5[%c0_810, %c33_811] : memref<4x36xf32, #tpu.memory_space<smem>>
    %2105 = vector.broadcast %2104 : f32 to vector<2x256xf32>
    %2106 = arith.mulf %2103, %2105 : vector<2x256xf32>
    %2107 = arith.addf %2088, %2106 : vector<2x256xf32>
    %c1_812 = arith.constant 1 : index
    %c33_813 = arith.constant 33 : index
    %2108 = memref.load %arg5[%c1_812, %c33_813] : memref<4x36xf32, #tpu.memory_space<smem>>
    %2109 = vector.broadcast %2108 : f32 to vector<2x256xf32>
    %2110 = arith.mulf %2103, %2109 : vector<2x256xf32>
    %2111 = arith.addf %2092, %2110 : vector<2x256xf32>
    %c2_814 = arith.constant 2 : index
    %c33_815 = arith.constant 33 : index
    %2112 = memref.load %arg5[%c2_814, %c33_815] : memref<4x36xf32, #tpu.memory_space<smem>>
    %2113 = vector.broadcast %2112 : f32 to vector<2x256xf32>
    %2114 = arith.mulf %2103, %2113 : vector<2x256xf32>
    %2115 = arith.addf %2096, %2114 : vector<2x256xf32>
    %c3_816 = arith.constant 3 : index
    %c33_817 = arith.constant 33 : index
    %2116 = memref.load %arg5[%c3_816, %c33_817] : memref<4x36xf32, #tpu.memory_space<smem>>
    %2117 = vector.broadcast %2116 : f32 to vector<2x256xf32>
    %2118 = arith.mulf %2103, %2117 : vector<2x256xf32>
    %2119 = arith.addf %2100, %2118 : vector<2x256xf32>
    %2120 = vector.extract_strided_slice %1990 {offsets = [0, 33], sizes = [2, 256], strides = [1, 1]} : vector<2x290xf32> to vector<2x256xf32>
    %c0_818 = arith.constant 0 : index
    %c34_819 = arith.constant 34 : index
    %2121 = memref.load %arg5[%c0_818, %c34_819] : memref<4x36xf32, #tpu.memory_space<smem>>
    %2122 = vector.broadcast %2121 : f32 to vector<2x256xf32>
    %2123 = arith.mulf %2120, %2122 : vector<2x256xf32>
    %2124 = arith.addf %2107, %2123 : vector<2x256xf32>
    %c1_820 = arith.constant 1 : index
    %c34_821 = arith.constant 34 : index
    %2125 = memref.load %arg5[%c1_820, %c34_821] : memref<4x36xf32, #tpu.memory_space<smem>>
    %2126 = vector.broadcast %2125 : f32 to vector<2x256xf32>
    %2127 = arith.mulf %2120, %2126 : vector<2x256xf32>
    %2128 = arith.addf %2111, %2127 : vector<2x256xf32>
    %c2_822 = arith.constant 2 : index
    %c34_823 = arith.constant 34 : index
    %2129 = memref.load %arg5[%c2_822, %c34_823] : memref<4x36xf32, #tpu.memory_space<smem>>
    %2130 = vector.broadcast %2129 : f32 to vector<2x256xf32>
    %2131 = arith.mulf %2120, %2130 : vector<2x256xf32>
    %2132 = arith.addf %2115, %2131 : vector<2x256xf32>
    %c3_824 = arith.constant 3 : index
    %c34_825 = arith.constant 34 : index
    %2133 = memref.load %arg5[%c3_824, %c34_825] : memref<4x36xf32, #tpu.memory_space<smem>>
    %2134 = vector.broadcast %2133 : f32 to vector<2x256xf32>
    %2135 = arith.mulf %2120, %2134 : vector<2x256xf32>
    %2136 = arith.addf %2119, %2135 : vector<2x256xf32>
    %2137 = vector.extract_strided_slice %1990 {offsets = [0, 34], sizes = [2, 256], strides = [1, 1]} : vector<2x290xf32> to vector<2x256xf32>
    %2138 = vector.broadcast %24 : vector<1x256xf32> to vector<2x256xf32>
    %2139 = arith.mulf %2137, %2138 : vector<2x256xf32>
    %c0_826 = arith.constant 0 : index
    %c35_827 = arith.constant 35 : index
    %2140 = memref.load %arg5[%c0_826, %c35_827] : memref<4x36xf32, #tpu.memory_space<smem>>
    %2141 = vector.broadcast %2140 : f32 to vector<2x256xf32>
    %2142 = arith.mulf %2139, %2141 : vector<2x256xf32>
    %2143 = arith.addf %2124, %2142 : vector<2x256xf32>
    %c1_828 = arith.constant 1 : index
    %c35_829 = arith.constant 35 : index
    %2144 = memref.load %arg5[%c1_828, %c35_829] : memref<4x36xf32, #tpu.memory_space<smem>>
    %2145 = vector.broadcast %2144 : f32 to vector<2x256xf32>
    %2146 = arith.mulf %2139, %2145 : vector<2x256xf32>
    %2147 = arith.addf %2128, %2146 : vector<2x256xf32>
    %c2_830 = arith.constant 2 : index
    %c35_831 = arith.constant 35 : index
    %2148 = memref.load %arg5[%c2_830, %c35_831] : memref<4x36xf32, #tpu.memory_space<smem>>
    %2149 = vector.broadcast %2148 : f32 to vector<2x256xf32>
    %2150 = arith.mulf %2139, %2149 : vector<2x256xf32>
    %2151 = arith.addf %2132, %2150 : vector<2x256xf32>
    %c3_832 = arith.constant 3 : index
    %c35_833 = arith.constant 35 : index
    %2152 = memref.load %arg5[%c3_832, %c35_833] : memref<4x36xf32, #tpu.memory_space<smem>>
    %2153 = vector.broadcast %2152 : f32 to vector<2x256xf32>
    %2154 = arith.mulf %2139, %2153 : vector<2x256xf32>
    %2155 = arith.addf %2136, %2154 : vector<2x256xf32>
    %2156 = vector.shape_cast %2143 : vector<2x256xf32> to vector<1x2x256xf32>
    %cst_834 = arith.constant dense<0.000000e+00> : vector<1xf32>
    %2157 = vector.multi_reduction <add>, %2156, %cst_834 [1, 2] : vector<1x2x256xf32> to vector<1xf32>
    %2158 = vector.shape_cast %2157 : vector<1xf32> to vector<1x1x1xf32>
    %2159 = vector.extract %2158[0, 0, 0] : f32 from vector<1x1x1xf32>
    %2160 = vector.broadcast %2159 : f32 to vector<1x1xf32>
    %cst_835 = arith.constant 5.120000e+02 : f32
    %2161 = vector.broadcast %cst_835 : f32 to vector<1x1xf32>
    %2162 = arith.divf %2160, %2161 : vector<1x1xf32>
    %2163 = vector.broadcast %2162 : vector<1x1xf32> to vector<2x256xf32>
    %2164 = arith.subf %2143, %2163 : vector<2x256xf32>
    %2165 = arith.mulf %2164, %2164 : vector<2x256xf32>
    %2166 = vector.shape_cast %2165 : vector<2x256xf32> to vector<1x2x256xf32>
    %cst_836 = arith.constant dense<0.000000e+00> : vector<1xf32>
    %2167 = vector.multi_reduction <add>, %2166, %cst_836 [1, 2] : vector<1x2x256xf32> to vector<1xf32>
    %2168 = vector.shape_cast %2167 : vector<1xf32> to vector<1x1x1xf32>
    %2169 = vector.extract %2168[0, 0, 0] : f32 from vector<1x1x1xf32>
    %2170 = vector.broadcast %2169 : f32 to vector<1x1xf32>
    %cst_837 = arith.constant 5.120000e+02 : f32
    %2171 = vector.broadcast %cst_837 : f32 to vector<1x1xf32>
    %2172 = arith.divf %2170, %2171 : vector<1x1xf32>
    %2173 = vector.broadcast %2162 : vector<1x1xf32> to vector<2x256xf32>
    %2174 = arith.subf %2143, %2173 : vector<2x256xf32>
    %cst_838 = arith.constant 9.99999974E-6 : f32
    %2175 = vector.broadcast %cst_838 : f32 to vector<1x1xf32>
    %2176 = arith.addf %2172, %2175 : vector<1x1xf32>
    %2177 = math.rsqrt %2176 : vector<1x1xf32>
    %2178 = vector.broadcast %2177 : vector<1x1xf32> to vector<2x256xf32>
    %2179 = arith.mulf %2174, %2178 : vector<2x256xf32>
    %c0_839 = arith.constant 0 : index
    %2180 = memref.load %arg6[%c0_839] : memref<4xf32, #tpu.memory_space<smem>>
    %2181 = vector.broadcast %2180 : f32 to vector<2x256xf32>
    %2182 = arith.mulf %2179, %2181 : vector<2x256xf32>
    %c0_840 = arith.constant 0 : index
    %2183 = memref.load %arg7[%c0_840] : memref<4xf32, #tpu.memory_space<smem>>
    %2184 = vector.broadcast %2183 : f32 to vector<2x256xf32>
    %2185 = arith.addf %2182, %2184 : vector<2x256xf32>
    %cst_841 = arith.constant 0.000000e+00 : f32
    %2186 = vector.broadcast %cst_841 : f32 to vector<2x256xf32>
    %2187 = arith.maximumf %2185, %2186 : vector<2x256xf32>
    %2188 = vector.shape_cast %2147 : vector<2x256xf32> to vector<1x2x256xf32>
    %cst_842 = arith.constant dense<0.000000e+00> : vector<1xf32>
    %2189 = vector.multi_reduction <add>, %2188, %cst_842 [1, 2] : vector<1x2x256xf32> to vector<1xf32>
    %2190 = vector.shape_cast %2189 : vector<1xf32> to vector<1x1x1xf32>
    %2191 = vector.extract %2190[0, 0, 0] : f32 from vector<1x1x1xf32>
    %2192 = vector.broadcast %2191 : f32 to vector<1x1xf32>
    %cst_843 = arith.constant 5.120000e+02 : f32
    %2193 = vector.broadcast %cst_843 : f32 to vector<1x1xf32>
    %2194 = arith.divf %2192, %2193 : vector<1x1xf32>
    %2195 = vector.broadcast %2194 : vector<1x1xf32> to vector<2x256xf32>
    %2196 = arith.subf %2147, %2195 : vector<2x256xf32>
    %2197 = arith.mulf %2196, %2196 : vector<2x256xf32>
    %2198 = vector.shape_cast %2197 : vector<2x256xf32> to vector<1x2x256xf32>
    %cst_844 = arith.constant dense<0.000000e+00> : vector<1xf32>
    %2199 = vector.multi_reduction <add>, %2198, %cst_844 [1, 2] : vector<1x2x256xf32> to vector<1xf32>
    %2200 = vector.shape_cast %2199 : vector<1xf32> to vector<1x1x1xf32>
    %2201 = vector.extract %2200[0, 0, 0] : f32 from vector<1x1x1xf32>
    %2202 = vector.broadcast %2201 : f32 to vector<1x1xf32>
    %cst_845 = arith.constant 5.120000e+02 : f32
    %2203 = vector.broadcast %cst_845 : f32 to vector<1x1xf32>
    %2204 = arith.divf %2202, %2203 : vector<1x1xf32>
    %2205 = vector.broadcast %2194 : vector<1x1xf32> to vector<2x256xf32>
    %2206 = arith.subf %2147, %2205 : vector<2x256xf32>
    %cst_846 = arith.constant 9.99999974E-6 : f32
    %2207 = vector.broadcast %cst_846 : f32 to vector<1x1xf32>
    %2208 = arith.addf %2204, %2207 : vector<1x1xf32>
    %2209 = math.rsqrt %2208 : vector<1x1xf32>
    %2210 = vector.broadcast %2209 : vector<1x1xf32> to vector<2x256xf32>
    %2211 = arith.mulf %2206, %2210 : vector<2x256xf32>
    %c1_847 = arith.constant 1 : index
    %2212 = memref.load %arg6[%c1_847] : memref<4xf32, #tpu.memory_space<smem>>
    %2213 = vector.broadcast %2212 : f32 to vector<2x256xf32>
    %2214 = arith.mulf %2211, %2213 : vector<2x256xf32>
    %c1_848 = arith.constant 1 : index
    %2215 = memref.load %arg7[%c1_848] : memref<4xf32, #tpu.memory_space<smem>>
    %2216 = vector.broadcast %2215 : f32 to vector<2x256xf32>
    %2217 = arith.addf %2214, %2216 : vector<2x256xf32>
    %cst_849 = arith.constant 0.000000e+00 : f32
    %2218 = vector.broadcast %cst_849 : f32 to vector<2x256xf32>
    %2219 = arith.maximumf %2217, %2218 : vector<2x256xf32>
    %2220 = vector.shape_cast %2151 : vector<2x256xf32> to vector<1x2x256xf32>
    %cst_850 = arith.constant dense<0.000000e+00> : vector<1xf32>
    %2221 = vector.multi_reduction <add>, %2220, %cst_850 [1, 2] : vector<1x2x256xf32> to vector<1xf32>
    %2222 = vector.shape_cast %2221 : vector<1xf32> to vector<1x1x1xf32>
    %2223 = vector.extract %2222[0, 0, 0] : f32 from vector<1x1x1xf32>
    %2224 = vector.broadcast %2223 : f32 to vector<1x1xf32>
    %cst_851 = arith.constant 5.120000e+02 : f32
    %2225 = vector.broadcast %cst_851 : f32 to vector<1x1xf32>
    %2226 = arith.divf %2224, %2225 : vector<1x1xf32>
    %2227 = vector.broadcast %2226 : vector<1x1xf32> to vector<2x256xf32>
    %2228 = arith.subf %2151, %2227 : vector<2x256xf32>
    %2229 = arith.mulf %2228, %2228 : vector<2x256xf32>
    %2230 = vector.shape_cast %2229 : vector<2x256xf32> to vector<1x2x256xf32>
    %cst_852 = arith.constant dense<0.000000e+00> : vector<1xf32>
    %2231 = vector.multi_reduction <add>, %2230, %cst_852 [1, 2] : vector<1x2x256xf32> to vector<1xf32>
    %2232 = vector.shape_cast %2231 : vector<1xf32> to vector<1x1x1xf32>
    %2233 = vector.extract %2232[0, 0, 0] : f32 from vector<1x1x1xf32>
    %2234 = vector.broadcast %2233 : f32 to vector<1x1xf32>
    %cst_853 = arith.constant 5.120000e+02 : f32
    %2235 = vector.broadcast %cst_853 : f32 to vector<1x1xf32>
    %2236 = arith.divf %2234, %2235 : vector<1x1xf32>
    %2237 = vector.broadcast %2226 : vector<1x1xf32> to vector<2x256xf32>
    %2238 = arith.subf %2151, %2237 : vector<2x256xf32>
    %cst_854 = arith.constant 9.99999974E-6 : f32
    %2239 = vector.broadcast %cst_854 : f32 to vector<1x1xf32>
    %2240 = arith.addf %2236, %2239 : vector<1x1xf32>
    %2241 = math.rsqrt %2240 : vector<1x1xf32>
    %2242 = vector.broadcast %2241 : vector<1x1xf32> to vector<2x256xf32>
    %2243 = arith.mulf %2238, %2242 : vector<2x256xf32>
    %c2_855 = arith.constant 2 : index
    %2244 = memref.load %arg6[%c2_855] : memref<4xf32, #tpu.memory_space<smem>>
    %2245 = vector.broadcast %2244 : f32 to vector<2x256xf32>
    %2246 = arith.mulf %2243, %2245 : vector<2x256xf32>
    %c2_856 = arith.constant 2 : index
    %2247 = memref.load %arg7[%c2_856] : memref<4xf32, #tpu.memory_space<smem>>
    %2248 = vector.broadcast %2247 : f32 to vector<2x256xf32>
    %2249 = arith.addf %2246, %2248 : vector<2x256xf32>
    %cst_857 = arith.constant 0.000000e+00 : f32
    %2250 = vector.broadcast %cst_857 : f32 to vector<2x256xf32>
    %2251 = arith.maximumf %2249, %2250 : vector<2x256xf32>
    %2252 = vector.shape_cast %2155 : vector<2x256xf32> to vector<1x2x256xf32>
    %cst_858 = arith.constant dense<0.000000e+00> : vector<1xf32>
    %2253 = vector.multi_reduction <add>, %2252, %cst_858 [1, 2] : vector<1x2x256xf32> to vector<1xf32>
    %2254 = vector.shape_cast %2253 : vector<1xf32> to vector<1x1x1xf32>
    %2255 = vector.extract %2254[0, 0, 0] : f32 from vector<1x1x1xf32>
    %2256 = vector.broadcast %2255 : f32 to vector<1x1xf32>
    %cst_859 = arith.constant 5.120000e+02 : f32
    %2257 = vector.broadcast %cst_859 : f32 to vector<1x1xf32>
    %2258 = arith.divf %2256, %2257 : vector<1x1xf32>
    %2259 = vector.broadcast %2258 : vector<1x1xf32> to vector<2x256xf32>
    %2260 = arith.subf %2155, %2259 : vector<2x256xf32>
    %2261 = arith.mulf %2260, %2260 : vector<2x256xf32>
    %2262 = vector.shape_cast %2261 : vector<2x256xf32> to vector<1x2x256xf32>
    %cst_860 = arith.constant dense<0.000000e+00> : vector<1xf32>
    %2263 = vector.multi_reduction <add>, %2262, %cst_860 [1, 2] : vector<1x2x256xf32> to vector<1xf32>
    %2264 = vector.shape_cast %2263 : vector<1xf32> to vector<1x1x1xf32>
    %2265 = vector.extract %2264[0, 0, 0] : f32 from vector<1x1x1xf32>
    %2266 = vector.broadcast %2265 : f32 to vector<1x1xf32>
    %cst_861 = arith.constant 5.120000e+02 : f32
    %2267 = vector.broadcast %cst_861 : f32 to vector<1x1xf32>
    %2268 = arith.divf %2266, %2267 : vector<1x1xf32>
    %2269 = vector.broadcast %2258 : vector<1x1xf32> to vector<2x256xf32>
    %2270 = arith.subf %2155, %2269 : vector<2x256xf32>
    %cst_862 = arith.constant 9.99999974E-6 : f32
    %2271 = vector.broadcast %cst_862 : f32 to vector<1x1xf32>
    %2272 = arith.addf %2268, %2271 : vector<1x1xf32>
    %2273 = math.rsqrt %2272 : vector<1x1xf32>
    %2274 = vector.broadcast %2273 : vector<1x1xf32> to vector<2x256xf32>
    %2275 = arith.mulf %2270, %2274 : vector<2x256xf32>
    %c3_863 = arith.constant 3 : index
    %2276 = memref.load %arg6[%c3_863] : memref<4xf32, #tpu.memory_space<smem>>
    %2277 = vector.broadcast %2276 : f32 to vector<2x256xf32>
    %2278 = arith.mulf %2275, %2277 : vector<2x256xf32>
    %c3_864 = arith.constant 3 : index
    %2279 = memref.load %arg7[%c3_864] : memref<4xf32, #tpu.memory_space<smem>>
    %2280 = vector.broadcast %2279 : f32 to vector<2x256xf32>
    %2281 = arith.addf %2278, %2280 : vector<2x256xf32>
    %cst_865 = arith.constant 0.000000e+00 : f32
    %2282 = vector.broadcast %cst_865 : f32 to vector<2x256xf32>
    %2283 = arith.maximumf %2281, %2282 : vector<2x256xf32>
    %2284 = vector.shape_cast %2187 : vector<2x256xf32> to vector<2x1x256xf32>
    %2285 = vector.shape_cast %2219 : vector<2x256xf32> to vector<2x1x256xf32>
    %2286 = vector.shape_cast %2251 : vector<2x256xf32> to vector<2x1x256xf32>
    %2287 = vector.shape_cast %2283 : vector<2x256xf32> to vector<2x1x256xf32>
    %2288 = tpu.concatenate %2284, %2285, %2286, %2287 in 1 : vector<2x1x256xf32>, vector<2x1x256xf32>, vector<2x1x256xf32>, vector<2x1x256xf32> -> vector<2x4x256xf32>
    %c0_866 = arith.constant 0 : index
    %c0_867 = arith.constant 0 : index
    %c0_868 = arith.constant 0 : index
    %2289 = vector.load %arg8[%c0_866, %c0_867, %c0_868] : memref<2x4x256xf32, #tpu.memory_space<vmem>>, vector<2x4x256xf32>
    tpu.vector_store %arg8[%c0_866, %c0_867, %c0_868], %2288 {strides = array<i32>} : memref<2x4x256xf32, #tpu.memory_space<vmem>>, vector<2x4x256xf32>,
    return
  }
}

</mosaic_0001>

<llo_original>
// kernel: up_forward.1
$region0: #{up_forward.1}
  #allocation0 [shape = 'u32[]', space=smem, size = 0x4, offset = 0x4, fixed_abs, tag = 'smem constant byte address 0x4 - core index']
  #allocation1 [shape = 'u32[72,128]{1,0:T(1,128)}', space=vmem, size = 0x9000, scoped, tag = 'internal scratch']
  %s0 = inlined_call_operand.vmem [shape: f32[2,4,256], index: 0, kind: input, shape index: {}]
  %s1 = inlined_call_operand.vmem [shape: f32[2,4,256], index: 1, kind: input, shape index: {}]
  %s2 = inlined_call_operand.vmem [shape: f32[4,72], index: 2, kind: input, shape index: {}]
  %s3 = inlined_call_operand.vmem [shape: f32[4], index: 3, kind: input, shape index: {}]
  %s4 = inlined_call_operand.vmem [shape: f32[4], index: 4, kind: input, shape index: {}]
  %s5 = inlined_call_operand.vmem [shape: f32[4,36], index: 5, kind: input, shape index: {}]
  %s6 = inlined_call_operand.vmem [shape: f32[4], index: 6, kind: input, shape index: {}]
  %s7 = inlined_call_operand.vmem [shape: f32[4], index: 7, kind: input, shape index: {}]
  %s8 = inlined_call_operand.vmem [shape: f32[2,4,256], index: 8, kind: output, shape index: {}]
  %s9 = sld [smem:[#allocation0]]
  $region66: #{up_forward.1} parent=0
    _
  %s11 = ssub.s32 1, %s9
  %s12 = scalar_select 0, %s11, %s9
  $region1: #{up_forward.1} parent=0
    #allocation2 [shape = 'u8[2048]{0}', space=smem, size = 0x800, scoped, tag = 'input window, operand 2, single buffered']
    #allocation3 [shape = 's32[1]{0}', space=sflag, size = 0x4, scoped, tag = 'scoped memory for up_forward.1']
    #allocation4 [shape = 'u8[512]{0}', space=smem, size = 0x200, scoped, tag = 'input window, operand 3, single buffered']
    #allocation5 [shape = 's32[1]{0}', space=sflag, size = 0x4, scoped, tag = 'scoped memory for up_forward.1']
    #allocation6 [shape = 'u8[512]{0}', space=smem, size = 0x200, scoped, tag = 'input window, operand 4, single buffered']
    #allocation7 [shape = 'u8[2048]{0}', space=smem, size = 0x800, scoped, tag = 'input window, operand 5, single buffered']
    #allocation8 [shape = 's32[1]{0}', space=sflag, size = 0x4, scoped, tag = 'scoped memory for up_forward.1']
    #allocation9 [shape = 'u8[512]{0}', space=smem, size = 0x200, scoped, tag = 'input window, operand 6, single buffered']
    #allocation10 [shape = 'u8[512]{0}', space=smem, size = 0x200, scoped, tag = 'input window, operand 7, single buffered']
    #allocation11 [shape = 's32[1]{0}', space=sflag, size = 0x4, scoped, tag = 'scoped memory for up_forward.1']
    %13 = vsyncpa [#allocation3], 0
    %14 = vsyncpa [#allocation5], 0
    %15 = vsyncpa [#allocation8], 0
    %16 = vsyncpa [#allocation11], 0
    // Predicated region
    $region2: #{up_forward.1} parent=1 // pred_check
      _
    $region3: #{up_forward.1} parent=1 // pred_check_branch
      %18 = sbr.rel (0) target = $region5
    $region4: #{up_forward.1} parent=1 // pred_region
      _
    $region5: #{up_forward.1} parent=1 // pred_fallthru
      _
    // Predicated region
    $region6: #{up_forward.1} parent=1 // pred_check
      _
    $region7: #{up_forward.1} parent=1 // pred_check_branch
      %20 = sbr.rel (0) target = $region9
    $region8: #{up_forward.1} parent=1 // pred_region
      _
    $region9: #{up_forward.1} parent=1 // pred_fallthru
      _
    // Predicated region
    $region10: #{up_forward.1} parent=1 // pred_check
      _
    $region11: #{up_forward.1} parent=1 // pred_check_branch
      %22 = sbr.rel (0) target = $region13
    $region12: #{up_forward.1} parent=1 // pred_region
      %24 = vsyncadd [#allocation3], 0
      %s26 = sshll.u32 %s2, 4
      %s27 = int_to_ptr.vmem [resolvable:$true] %s26
      %29 = dma.vmem_to_smem %s27, 64, [#allocation2], [#allocation3]
    $region13: #{up_forward.1} parent=1 // pred_fallthru
      _
    // Predicated region
    $region14: #{up_forward.1} parent=1 // pred_check
      _
    $region15: #{up_forward.1} parent=1 // pred_check_branch
      %31 = sbr.rel (0) target = $region17
    $region16: #{up_forward.1} parent=1 // pred_region
      %33 = vsyncadd [#allocation5], 0
      %s35 = sshll.u32 %s3, 4
      %s36 = int_to_ptr.vmem [resolvable:$true] %s35
      %38 = dma.vmem_to_smem %s36, 16, [#allocation4], [#allocation5]
    $region17: #{up_forward.1} parent=1 // pred_fallthru
      _
    // Predicated region
    $region18: #{up_forward.1} parent=1 // pred_check
      _
    $region19: #{up_forward.1} parent=1 // pred_check_branch
      %40 = sbr.rel (0) target = $region21
    $region20: #{up_forward.1} parent=1 // pred_region
      %42 = vsyncadd [#allocation5], 0
      %s44 = sshll.u32 %s4, 4
      %s45 = int_to_ptr.vmem [resolvable:$true] %s44
      %47 = dma.vmem_to_smem %s45, 16, [#allocation6], [#allocation5]
    $region21: #{up_forward.1} parent=1 // pred_fallthru
      _
    // Predicated region
    $region22: #{up_forward.1} parent=1 // pred_check
      _
    $region23: #{up_forward.1} parent=1 // pred_check_branch
      %49 = sbr.rel (0) target = $region25
    $region24: #{up_forward.1} parent=1 // pred_region
      %51 = vsyncadd [#allocation8], 0
      %s53 = sshll.u32 %s5, 4
      %s54 = int_to_ptr.vmem [resolvable:$true] %s53
      %56 = dma.vmem_to_smem %s54, 64, [#allocation7], [#allocation8]
    $region25: #{up_forward.1} parent=1 // pred_fallthru
      _
    // Predicated region
    $region26: #{up_forward.1} parent=1 // pred_check
      _
    $region27: #{up_forward.1} parent=1 // pred_check_branch
      %58 = sbr.rel (0) target = $region29
    $region28: #{up_forward.1} parent=1 // pred_region
      %60 = vsyncadd [#allocation8], 0
      %s62 = sshll.u32 %s6, 4
      %s63 = int_to_ptr.vmem [resolvable:$true] %s62
      %65 = dma.vmem_to_smem %s63, 16, [#allocation9], [#allocation8]
    $region29: #{up_forward.1} parent=1 // pred_fallthru
      _
    // Predicated region
    $region30: #{up_forward.1} parent=1 // pred_check
      _
    $region31: #{up_forward.1} parent=1 // pred_check_branch
      %67 = sbr.rel (0) target = $region33
    $region32: #{up_forward.1} parent=1 // pred_region
      %69 = vsyncadd [#allocation11], 0
      %s71 = sshll.u32 %s7, 4
      %s72 = int_to_ptr.vmem [resolvable:$true] %s71
      %74 = dma.vmem_to_smem %s72, 16, [#allocation10], [#allocation11]
    $region33: #{up_forward.1} parent=1 // pred_fallthru
      _
    // Predicated region
    $region34: #{up_forward.1} parent=1 // pred_check
      _
    $region35: #{up_forward.1} parent=1 // pred_check_branch
      %76 = sbr.rel (0) target = $region37
    $region36: #{up_forward.1} parent=1 // pred_region
      %78 = dma.done [#allocation3], 64
    $region37: #{up_forward.1} parent=1 // pred_fallthru
      _
    // Predicated region
    $region38: #{up_forward.1} parent=1 // pred_check
      _
    $region39: #{up_forward.1} parent=1 // pred_check_branch
      %80 = sbr.rel (0) target = $region41
    $region40: #{up_forward.1} parent=1 // pred_region
      %82 = dma.done [#allocation5], 16
    $region41: #{up_forward.1} parent=1 // pred_fallthru
      _
    // Predicated region
    $region42: #{up_forward.1} parent=1 // pred_check
      _
    $region43: #{up_forward.1} parent=1 // pred_check_branch
      %84 = sbr.rel (0) target = $region45
    $region44: #{up_forward.1} parent=1 // pred_region
      %86 = dma.done [#allocation5], 16
    $region45: #{up_forward.1} parent=1 // pred_fallthru
      _
    // Predicated region
    $region46: #{up_forward.1} parent=1 // pred_check
      _
    $region47: #{up_forward.1} parent=1 // pred_check_branch
      %88 = sbr.rel (0) target = $region49
    $region48: #{up_forward.1} parent=1 // pred_region
      %90 = dma.done [#allocation8], 64
    $region49: #{up_forward.1} parent=1 // pred_fallthru
      _
    // Predicated region
    $region50: #{up_forward.1} parent=1 // pred_check
      _
    $region51: #{up_forward.1} parent=1 // pred_check_branch
      %92 = sbr.rel (0) target = $region53
    $region52: #{up_forward.1} parent=1 // pred_region
      %94 = dma.done [#allocation8], 16
    $region53: #{up_forward.1} parent=1 // pred_fallthru
      _
    // Predicated region
    $region54: #{up_forward.1} parent=1 // pred_check
      _
    $region55: #{up_forward.1} parent=1 // pred_check_branch
      %96 = sbr.rel (0) target = $region57
    $region56: #{up_forward.1} parent=1 // pred_region
      %98 = dma.done [#allocation11], 16
    $region57: #{up_forward.1} parent=1 // pred_fallthru
      _
    %99 = sfence
    %v100 = vlaneseq
    %v101 = vand.u32 %v100, 127
    %v102 = vadd.s32 %v101, 128
    %vm103 = vcmp.lt.s32.totalorder %v101, 0
    %v104 = vsub.s32 0, %v101
    %v105 = vsel %vm103, %v104, %v101
    %v106 = vshrl.u32 %v105, 4
    %v107 = vand.u32 %v105, 15
    %v108 = vsub.s32 0, %v107
    %v109 = vsel %vm103, %v108, %v107
    %vm110 = vcmp.lt.s32.totalorder %v102, 0
    %v111 = vsub.s32 0, %v102
    %v112 = vsel %vm110, %v111, %v102
    %v113 = vshrl.u32 %v112, 4
    %v114 = vand.u32 %v112, 15
    %v115 = vsub.s32 0, %v114
    %v116 = vsel %vm110, %v115, %v114
    %vm117 = vcmp.ne.s32.totalorder %v109, 0
    %vm118 = vcmp.ne.s32.totalorder %v116, 0
    %vm119 = vcmp.lt.s32.totalorder %v109, 0
    %vm120 = vcmp.lt.s32.totalorder %v116, 0
    %vm121 = vmand %vm119, %vm117
    %vm122 = vmand %vm120, %vm118
    %v123 = vadd.s32 %v109, 16
    %v124 = vadd.s32 %v116, 16
    %v125 = vsel %vm121, %v123, %v109
    %v126 = vsel %vm122, %v124, %v116
    %vm127 = vcmp.ge.s32.totalorder %v125, 1
    %vm128 = vcmp.ge.s32.totalorder %v126, 1
    %v129 = vsel %vm127, 1, 0
    %v130 = vsel %vm128, 1, 0
    %v131 = vcvt.s32.f32 %v129
    %v132 = vcvt.s32.f32 %v130
    %vm133 = vcmp.lt.s32.totalorder %v125, 15
    %vm134 = vcmp.lt.s32.totalorder %v126, 15
    %v135 = vsel %vm133, 1, 0
    %v136 = vsel %vm134, 1, 0
    %v137 = vcvt.s32.f32 %v135
    %v138 = vcvt.s32.f32 %v136
    %v139 = vld [vmem:[%s0] sm:$0xff]
    %v140 = vld [vmem:[%s0 + $0x8] sm:$0xff]
    %v141 = vld [vmem:[%s1] sm:$0xff]
    %v142 = vld [vmem:[%s1 + $0x8] sm:$0xff]
    %v145 = vperm.slane %v139, 0
    %v146 = vperm.slane %v139, 4
    %v147 = vperm.slane %v140, 0
    %v148 = vperm.slane %v140, 4
    %vm149 = vcmask 1041409
    %v150 = vsel %vm149, %v147, %v145
    %v151 = vsel %vm149, %v148, %v146
    %152 = vrot.lane.b32.xlu0 %v150, 17
    %v153 = vpop.permute.xlu0 %152
    %154 = vrot.lane.b32.xlu0 %v151, 17
    %v155 = vpop.permute.xlu0 %154
    %vm156 = vcmask 138240
    %v157 = vsel %vm156, %v153, %v155
    %v161 = vsel %vm156, 0.0, %v153
    %v162 = vsel %vm156, %v155, 0.0
    %v163 = vmul.f32 %v161, %v131
    %v164 = vmul.f32 %v157, %v132
    %s165 = sld [smem:[#allocation2]]
    %v166 = vstv %s165
    %v167 = vmul.f32 %v163, %v166
    %v168 = vmul.f32 %v164, %v166
    %s169 = sld [smem:[#allocation2 + $0x80]]
    %v170 = vstv %s169
    %v171 = vmul.f32 %v163, %v170
    %v172 = vmul.f32 %v164, %v170
    %s173 = sld [smem:[#allocation2 + $0x100]]
    %v174 = vstv %s173
    %v175 = vmul.f32 %v163, %v174
    %v176 = vmul.f32 %v164, %v174
    %s177 = sld [smem:[#allocation2 + $0x180]]
    %v178 = vstv %s177
    %v179 = vmul.f32 %v163, %v178
    %v180 = vmul.f32 %v164, %v178
    %s181 = sld [smem:[#allocation2 + $0x1]]
    %v182 = vstv %s181
    %v183 = vmul.f32 %v161, %v182
    %v184 = vmul.f32 %v157, %v182
    %v185 = vmul.f32 %v162, %v182
    %189 = vrot.lane.b32.xlu0 %v183, 127
    %v190 = vpop.permute.xlu0 %189
    %191 = vrot.lane.b32.xlu0 %v184, 127
    %v192 = vpop.permute.xlu0 %191
    %193 = vrot.lane.b32.xlu0 %v185, 127
    %v194 = vpop.permute.xlu0 %193
    %vm195 = vcmask 1039360
    %v196 = vsel %vm195, %v190, %v192
    %v197 = vsel %vm195, %v192, %v194
    %v200 = vadd.f32 %v167, %v196
    %v201 = vadd.f32 %v168, %v197
    %s202 = sld [smem:[#allocation2 + $0x81]]
    %v203 = vstv %s202
    %v204 = vmul.f32 %v161, %v203
    %v205 = vmul.f32 %v157, %v203
    %v206 = vmul.f32 %v162, %v203
    %210 = vrot.lane.b32.xlu0 %v204, 127
    %v211 = vpop.permute.xlu0 %210
    %212 = vrot.lane.b32.xlu0 %v205, 127
    %v213 = vpop.permute.xlu0 %212
    %214 = vrot.lane.b32.xlu0 %v206, 127
    %v215 = vpop.permute.xlu0 %214
    %v216 = vsel %vm195, %v211, %v213
    %v217 = vsel %vm195, %v213, %v215
    %v220 = vadd.f32 %v171, %v216
    %v221 = vadd.f32 %v172, %v217
    %s222 = sld [smem:[#allocation2 + $0x101]]
    %v223 = vstv %s222
    %v224 = vmul.f32 %v161, %v223
    %v225 = vmul.f32 %v157, %v223
    %v226 = vmul.f32 %v162, %v223
    %230 = vrot.lane.b32.xlu0 %v224, 127
    %v231 = vpop.permute.xlu0 %230
    %232 = vrot.lane.b32.xlu0 %v225, 127
    %v233 = vpop.permute.xlu0 %232
    %234 = vrot.lane.b32.xlu0 %v226, 127
    %v235 = vpop.permute.xlu0 %234
    %v236 = vsel %vm195, %v231, %v233
    %v237 = vsel %vm195, %v233, %v235
    %v240 = vadd.f32 %v175, %v236
    %v241 = vadd.f32 %v176, %v237
    %s242 = sld [smem:[#allocation2 + $0x181]]
    %v243 = vstv %s242
    %v244 = vmul.f32 %v161, %v243
    %v245 = vmul.f32 %v157, %v243
    %v246 = vmul.f32 %v162, %v243
    %250 = vrot.lane.b32.xlu0 %v244, 127
    %v251 = vpop.permute.xlu0 %250
    %252 = vrot.lane.b32.xlu0 %v245, 127
    %v253 = vpop.permute.xlu0 %252
    %254 = vrot.lane.b32.xlu0 %v246, 127
    %v255 = vpop.permute.xlu0 %254
    %v256 = vsel %vm195, %v251, %v253
    %v257 = vsel %vm195, %v253, %v255
    %v260 = vadd.f32 %v179, %v256
    %v261 = vadd.f32 %v180, %v257
    %264 = vrot.lane.b32.xlu0 %v137, 2
    %v265 = vpop.permute.xlu0 %264
    %266 = vrot.lane.b32.xlu0 %v138, 2
    %v267 = vpop.permute.xlu0 %266
    %vm268 = vcmask 15360
    %v269 = vsel %vm268, %v265, %v267
    %v273 = vmul.f32 %v161, %v265
    %v274 = vmul.f32 %v157, %v269
    %v275 = vmul.f32 %v162, %v267
    %s276 = sld [smem:[#allocation2 + $0x2]]
    %v277 = vstv %s276
    %v278 = vmul.f32 %v273, %v277
    %v279 = vmul.f32 %v274, %v277
    %v280 = vmul.f32 %v275, %v277
    %284 = vrot.lane.b32.xlu0 %v278, 126
    %v285 = vpop.permute.xlu0 %284
    %286 = vrot.lane.b32.xlu0 %v279, 126
    %v287 = vpop.permute.xlu0 %286
    %288 = vrot.lane.b32.xlu0 %v280, 126
    %v289 = vpop.permute.xlu0 %288
    %vm290 = vcmask 1031168
    %v291 = vsel %vm290, %v285, %v287
    %v292 = vsel %vm290, %v287, %v289
    %v295 = vadd.f32 %v200, %v291
    %v296 = vadd.f32 %v201, %v292
    %s297 = sld [smem:[#allocation2 + $0x82]]
    %v298 = vstv %s297
    %v299 = vmul.f32 %v273, %v298
    %v300 = vmul.f32 %v274, %v298
    %v301 = vmul.f32 %v275, %v298
    %305 = vrot.lane.b32.xlu0 %v299, 126
    %v306 = vpop.permute.xlu0 %305
    %307 = vrot.lane.b32.xlu0 %v300, 126
    %v308 = vpop.permute.xlu0 %307
    %309 = vrot.lane.b32.xlu0 %v301, 126
    %v310 = vpop.permute.xlu0 %309
    %v311 = vsel %vm290, %v306, %v308
    %v312 = vsel %vm290, %v308, %v310
    %v315 = vadd.f32 %v220, %v311
    %v316 = vadd.f32 %v221, %v312
    %s317 = sld [smem:[#allocation2 + $0x102]]
    %v318 = vstv %s317
    %v319 = vmul.f32 %v273, %v318
    %v320 = vmul.f32 %v274, %v318
    %v321 = vmul.f32 %v275, %v318
    %325 = vrot.lane.b32.xlu0 %v319, 126
    %v326 = vpop.permute.xlu0 %325
    %327 = vrot.lane.b32.xlu0 %v320, 126
    %v328 = vpop.permute.xlu0 %327
    %329 = vrot.lane.b32.xlu0 %v321, 126
    %v330 = vpop.permute.xlu0 %329
    %v331 = vsel %vm290, %v326, %v328
    %v332 = vsel %vm290, %v328, %v330
    %v335 = vadd.f32 %v240, %v331
    %v336 = vadd.f32 %v241, %v332
    %s337 = sld [smem:[#allocation2 + $0x182]]
    %v338 = vstv %s337
    %v339 = vmul.f32 %v273, %v338
    %v340 = vmul.f32 %v274, %v338
    %v341 = vmul.f32 %v275, %v338
    %345 = vrot.lane.b32.xlu0 %v339, 126
    %v346 = vpop.permute.xlu0 %345
    %347 = vrot.lane.b32.xlu0 %v340, 126
    %v348 = vpop.permute.xlu0 %347
    %349 = vrot.lane.b32.xlu0 %v341, 126
    %v350 = vpop.permute.xlu0 %349
    %v351 = vsel %vm290, %v346, %v348
    %v352 = vsel %vm290, %v348, %v350
    %v355 = vadd.f32 %v260, %v351
    %v356 = vadd.f32 %v261, %v352
    %359 = vrot.lane.b32.xlu0 %v131, 16
    %v360 = vpop.permute.xlu0 %359
    %361 = vrot.lane.b32.xlu0 %v132, 16
    %v362 = vpop.permute.xlu0 %361
    %vm363 = vcmask 130048
    %v364 = vsel %vm363, %v360, %v362
    %v368 = vmul.f32 %v161, %v360
    %v369 = vmul.f32 %v157, %v364
    %v370 = vmul.f32 %v162, %v362
    %s371 = sld [smem:[#allocation2 + $0x3]]
    %v372 = vstv %s371
    %v373 = vmul.f32 %v368, %v372
    %v374 = vmul.f32 %v369, %v372
    %v375 = vmul.f32 %v370, %v372
    %379 = vrot.lane.b32.xlu0 %v373, 112
    %v380 = vpop.permute.xlu0 %379
    %381 = vrot.lane.b32.xlu0 %v374, 112
    %v382 = vpop.permute.xlu0 %381
    %383 = vrot.lane.b32.xlu0 %v375, 112
    %v384 = vpop.permute.xlu0 %383
    %vm385 = vcmask 916480
    %v386 = vsel %vm385, %v380, %v382
    %v387 = vsel %vm385, %v382, %v384
    %v390 = vadd.f32 %v295, %v386
    %v391 = vadd.f32 %v296, %v387
    %s392 = sld [smem:[#allocation2 + $0x83]]
    %v393 = vstv %s392
    %v394 = vmul.f32 %v368, %v393
    %v395 = vmul.f32 %v369, %v393
    %v396 = vmul.f32 %v370, %v393
    %400 = vrot.lane.b32.xlu0 %v394, 112
    %v401 = vpop.permute.xlu0 %400
    %402 = vrot.lane.b32.xlu0 %v395, 112
    %v403 = vpop.permute.xlu0 %402
    %404 = vrot.lane.b32.xlu0 %v396, 112
    %v405 = vpop.permute.xlu0 %404
    %v406 = vsel %vm385, %v401, %v403
    %v407 = vsel %vm385, %v403, %v405
    %v410 = vadd.f32 %v315, %v406
    %v411 = vadd.f32 %v316, %v407
    %s412 = sld [smem:[#allocation2 + $0x103]]
    %v413 = vstv %s412
    %v414 = vmul.f32 %v368, %v413
    %v415 = vmul.f32 %v369, %v413
    %v416 = vmul.f32 %v370, %v413
    %420 = vrot.lane.b32.xlu0 %v414, 112
    %v421 = vpop.permute.xlu0 %420
    %422 = vrot.lane.b32.xlu0 %v415, 112
    %v423 = vpop.permute.xlu0 %422
    %424 = vrot.lane.b32.xlu0 %v416, 112
    %v425 = vpop.permute.xlu0 %424
    %v426 = vsel %vm385, %v421, %v423
    %v427 = vsel %vm385, %v423, %v425
    %v430 = vadd.f32 %v335, %v426
    %v431 = vadd.f32 %v336, %v427
    %s432 = sld [smem:[#allocation2 + $0x183]]
    %v433 = vstv %s432
    %v434 = vmul.f32 %v368, %v433
    %v435 = vmul.f32 %v369, %v433
    %v436 = vmul.f32 %v370, %v433
    %440 = vrot.lane.b32.xlu0 %v434, 112
    %v441 = vpop.permute.xlu0 %440
    %442 = vrot.lane.b32.xlu0 %v435, 112
    %v443 = vpop.permute.xlu0 %442
    %444 = vrot.lane.b32.xlu0 %v436, 112
    %v445 = vpop.permute.xlu0 %444
    %v446 = vsel %vm385, %v441, %v443
    %v447 = vsel %vm385, %v443, %v445
    %v450 = vadd.f32 %v355, %v446
    %v451 = vadd.f32 %v356, %v447
    %s452 = sld [smem:[#allocation2 + $0x4]]
    %v453 = vstv %s452
    %v454 = vmul.f32 %v161, %v453
    %v455 = vmul.f32 %v157, %v453
    %v456 = vmul.f32 %v162, %v453
    %460 = vrot.lane.b32.xlu0 %v454, 111
    %v461 = vpop.permute.xlu0 %460
    %462 = vrot.lane.b32.xlu0 %v455, 111
    %v463 = vpop.permute.xlu0 %462
    %464 = vrot.lane.b32.xlu0 %v456, 111
    %v465 = vpop.permute.xlu0 %464
    %vm466 = vcmask 908288
    %v467 = vsel %vm466, %v461, %v463
    %v468 = vsel %vm466, %v463, %v465
    %v471 = vadd.f32 %v390, %v467
    %v472 = vadd.f32 %v391, %v468
    %s473 = sld [smem:[#allocation2 + $0x84]]
    %v474 = vstv %s473
    %v475 = vmul.f32 %v161, %v474
    %v476 = vmul.f32 %v157, %v474
    %v477 = vmul.f32 %v162, %v474
    %481 = vrot.lane.b32.xlu0 %v475, 111
    %v482 = vpop.permute.xlu0 %481
    %483 = vrot.lane.b32.xlu0 %v476, 111
    %v484 = vpop.permute.xlu0 %483
    %485 = vrot.lane.b32.xlu0 %v477, 111
    %v486 = vpop.permute.xlu0 %485
    %v487 = vsel %vm466, %v482, %v484
    %v488 = vsel %vm466, %v484, %v486
    %v491 = vadd.f32 %v410, %v487
    %v492 = vadd.f32 %v411, %v488
    %s493 = sld [smem:[#allocation2 + $0x104]]
    %v494 = vstv %s493
    %v495 = vmul.f32 %v161, %v494
    %v496 = vmul.f32 %v157, %v494
    %v497 = vmul.f32 %v162, %v494
    %501 = vrot.lane.b32.xlu0 %v495, 111
    %v502 = vpop.permute.xlu0 %501
    %503 = vrot.lane.b32.xlu0 %v496, 111
    %v504 = vpop.permute.xlu0 %503
    %505 = vrot.lane.b32.xlu0 %v497, 111
    %v506 = vpop.permute.xlu0 %505
    %v507 = vsel %vm466, %v502, %v504
    %v508 = vsel %vm466, %v504, %v506
    %v511 = vadd.f32 %v430, %v507
    %v512 = vadd.f32 %v431, %v508
    %s513 = sld [smem:[#allocation2 + $0x184]]
    %v514 = vstv %s513
    %v515 = vmul.f32 %v161, %v514
    %v516 = vmul.f32 %v157, %v514
    %v517 = vmul.f32 %v162, %v514
    %521 = vrot.lane.b32.xlu0 %v515, 111
    %v522 = vpop.permute.xlu0 %521
    %523 = vrot.lane.b32.xlu0 %v516, 111
    %v524 = vpop.permute.xlu0 %523
    %525 = vrot.lane.b32.xlu0 %v517, 111
    %v526 = vpop.permute.xlu0 %525
    %v527 = vsel %vm466, %v522, %v524
    %v528 = vsel %vm466, %v524, %v526
    %v531 = vadd.f32 %v450, %v527
    %v532 = vadd.f32 %v451, %v528
    %533 = vrot.lane.b32.xlu0 %v137, 18
    %v534 = vpop.permute.xlu0 %533
    %535 = vrot.lane.b32.xlu0 %v138, 18
    %v536 = vpop.permute.xlu0 %535
    %vm537 = vcmask 146432
    %v538 = vsel %vm537, %v534, %v536
    %v542 = vmul.f32 %v161, %v534
    %v543 = vmul.f32 %v157, %v538
    %v544 = vmul.f32 %v162, %v536
    %s545 = sld [smem:[#allocation2 + $0x5]]
    %v546 = vstv %s545
    %v547 = vmul.f32 %v542, %v546
    %v548 = vmul.f32 %v543, %v546
    %v549 = vmul.f32 %v544, %v546
    %553 = vrot.lane.b32.xlu0 %v547, 110
    %v554 = vpop.permute.xlu0 %553
    %555 = vrot.lane.b32.xlu0 %v548, 110
    %v556 = vpop.permute.xlu0 %555
    %557 = vrot.lane.b32.xlu0 %v549, 110
    %v558 = vpop.permute.xlu0 %557
    %vm559 = vcmask 900096
    %v560 = vsel %vm559, %v554, %v556
    %v561 = vsel %vm559, %v556, %v558
    %v564 = vadd.f32 %v471, %v560
    %v565 = vadd.f32 %v472, %v561
    %s566 = sld [smem:[#allocation2 + $0x85]]
    %v567 = vstv %s566
    %v568 = vmul.f32 %v542, %v567
    %v569 = vmul.f32 %v543, %v567
    %v570 = vmul.f32 %v544, %v567
    %574 = vrot.lane.b32.xlu0 %v568, 110
    %v575 = vpop.permute.xlu0 %574
    %576 = vrot.lane.b32.xlu0 %v569, 110
    %v577 = vpop.permute.xlu0 %576
    %578 = vrot.lane.b32.xlu0 %v570, 110
    %v579 = vpop.permute.xlu0 %578
    %v580 = vsel %vm559, %v575, %v577
    %v581 = vsel %vm559, %v577, %v579
    %v584 = vadd.f32 %v491, %v580
    %v585 = vadd.f32 %v492, %v581
    %s586 = sld [smem:[#allocation2 + $0x105]]
    %v587 = vstv %s586
    %v588 = vmul.f32 %v542, %v587
    %v589 = vmul.f32 %v543, %v587
    %v590 = vmul.f32 %v544, %v587
    %594 = vrot.lane.b32.xlu0 %v588, 110
    %v595 = vpop.permute.xlu0 %594
    %596 = vrot.lane.b32.xlu0 %v589, 110
    %v597 = vpop.permute.xlu0 %596
    %598 = vrot.lane.b32.xlu0 %v590, 110
    %v599 = vpop.permute.xlu0 %598
    %v600 = vsel %vm559, %v595, %v597
    %v601 = vsel %vm559, %v597, %v599
    %v604 = vadd.f32 %v511, %v600
    %v605 = vadd.f32 %v512, %v601
    %s606 = sld [smem:[#allocation2 + $0x185]]
    %v607 = vstv %s606
    %v608 = vmul.f32 %v542, %v607
    %v609 = vmul.f32 %v543, %v607
    %v610 = vmul.f32 %v544, %v607
    %614 = vrot.lane.b32.xlu0 %v608, 110
    %v615 = vpop.permute.xlu0 %614
    %616 = vrot.lane.b32.xlu0 %v609, 110
    %v617 = vpop.permute.xlu0 %616
    %618 = vrot.lane.b32.xlu0 %v610, 110
    %v619 = vpop.permute.xlu0 %618
    %v620 = vsel %vm559, %v615, %v617
    %v621 = vsel %vm559, %v617, %v619
    %v624 = vadd.f32 %v531, %v620
    %v625 = vadd.f32 %v532, %v621
    %626 = vrot.lane.b32.xlu0 %v131, 32
    %v627 = vpop.permute.xlu0 %626
    %628 = vrot.lane.b32.xlu0 %v132, 32
    %v629 = vpop.permute.xlu0 %628
    %vm630 = vcmask 261120
    %v631 = vsel %vm630, %v627, %v629
    %v635 = vmul.f32 %v161, %v627
    %v636 = vmul.f32 %v157, %v631
    %v637 = vmul.f32 %v162, %v629
    %s638 = sld [smem:[#allocation2 + $0x6]]
    %v639 = vstv %s638
    %v640 = vmul.f32 %v635, %v639
    %v641 = vmul.f32 %v636, %v639
    %v642 = vmul.f32 %v637, %v639
    %646 = vrot.lane.b32.xlu0 %v640, 96
    %v647 = vpop.permute.xlu0 %646
    %648 = vrot.lane.b32.xlu0 %v641, 96
    %v649 = vpop.permute.xlu0 %648
    %650 = vrot.lane.b32.xlu0 %v642, 96
    %v651 = vpop.permute.xlu0 %650
    %vm652 = vcmask 785408
    %v653 = vsel %vm652, %v647, %v649
    %v654 = vsel %vm652, %v649, %v651
    %v657 = vadd.f32 %v564, %v653
    %v658 = vadd.f32 %v565, %v654
    %s659 = sld [smem:[#allocation2 + $0x86]]
    %v660 = vstv %s659
    %v661 = vmul.f32 %v635, %v660
    %v662 = vmul.f32 %v636, %v660
    %v663 = vmul.f32 %v637, %v660
    %667 = vrot.lane.b32.xlu0 %v661, 96
    %v668 = vpop.permute.xlu0 %667
    %669 = vrot.lane.b32.xlu0 %v662, 96
    %v670 = vpop.permute.xlu0 %669
    %671 = vrot.lane.b32.xlu0 %v663, 96
    %v672 = vpop.permute.xlu0 %671
    %v673 = vsel %vm652, %v668, %v670
    %v674 = vsel %vm652, %v670, %v672
    %v677 = vadd.f32 %v584, %v673
    %v678 = vadd.f32 %v585, %v674
    %s679 = sld [smem:[#allocation2 + $0x106]]
    %v680 = vstv %s679
    %v681 = vmul.f32 %v635, %v680
    %v682 = vmul.f32 %v636, %v680
    %v683 = vmul.f32 %v637, %v680
    %687 = vrot.lane.b32.xlu0 %v681, 96
    %v688 = vpop.permute.xlu0 %687
    %689 = vrot.lane.b32.xlu0 %v682, 96
    %v690 = vpop.permute.xlu0 %689
    %691 = vrot.lane.b32.xlu0 %v683, 96
    %v692 = vpop.permute.xlu0 %691
    %v693 = vsel %vm652, %v688, %v690
    %v694 = vsel %vm652, %v690, %v692
    %v697 = vadd.f32 %v604, %v693
    %v698 = vadd.f32 %v605, %v694
    %s699 = sld [smem:[#allocation2 + $0x186]]
    %v700 = vstv %s699
    %v701 = vmul.f32 %v635, %v700
    %v702 = vmul.f32 %v636, %v700
    %v703 = vmul.f32 %v637, %v700
    %707 = vrot.lane.b32.xlu0 %v701, 96
    %v708 = vpop.permute.xlu0 %707
    %709 = vrot.lane.b32.xlu0 %v702, 96
    %v710 = vpop.permute.xlu0 %709
    %711 = vrot.lane.b32.xlu0 %v703, 96
    %v712 = vpop.permute.xlu0 %711
    %v713 = vsel %vm652, %v708, %v710
    %v714 = vsel %vm652, %v710, %v712
    %v717 = vadd.f32 %v624, %v713
    %v718 = vadd.f32 %v625, %v714
    %s719 = sld [smem:[#allocation2 + $0x7]]
    %v720 = vstv %s719
    %v721 = vmul.f32 %v161, %v720
    %v722 = vmul.f32 %v157, %v720
    %v723 = vmul.f32 %v162, %v720
    %727 = vrot.lane.b32.xlu0 %v721, 95
    %v728 = vpop.permute.xlu0 %727
    %729 = vrot.lane.b32.xlu0 %v722, 95
    %v730 = vpop.permute.xlu0 %729
    %731 = vrot.lane.b32.xlu0 %v723, 95
    %v732 = vpop.permute.xlu0 %731
    %vm733 = vcmask 777216
    %v734 = vsel %vm733, %v728, %v730
    %v735 = vsel %vm733, %v730, %v732
    %v738 = vadd.f32 %v657, %v734
    %v739 = vadd.f32 %v658, %v735
    %s740 = sld [smem:[#allocation2 + $0x87]]
    %v741 = vstv %s740
    %v742 = vmul.f32 %v161, %v741
    %v743 = vmul.f32 %v157, %v741
    %v744 = vmul.f32 %v162, %v741
    %748 = vrot.lane.b32.xlu0 %v742, 95
    %v749 = vpop.permute.xlu0 %748
    %750 = vrot.lane.b32.xlu0 %v743, 95
    %v751 = vpop.permute.xlu0 %750
    %752 = vrot.lane.b32.xlu0 %v744, 95
    %v753 = vpop.permute.xlu0 %752
    %v754 = vsel %vm733, %v749, %v751
    %v755 = vsel %vm733, %v751, %v753
    %v758 = vadd.f32 %v677, %v754
    %v759 = vadd.f32 %v678, %v755
    %s760 = sld [smem:[#allocation2 + $0x107]]
    %v761 = vstv %s760
    %v762 = vmul.f32 %v161, %v761
    %v763 = vmul.f32 %v157, %v761
    %v764 = vmul.f32 %v162, %v761
    %768 = vrot.lane.b32.xlu0 %v762, 95
    %v769 = vpop.permute.xlu0 %768
    %770 = vrot.lane.b32.xlu0 %v763, 95
    %v771 = vpop.permute.xlu0 %770
    %772 = vrot.lane.b32.xlu0 %v764, 95
    %v773 = vpop.permute.xlu0 %772
    %v774 = vsel %vm733, %v769, %v771
    %v775 = vsel %vm733, %v771, %v773
    %v778 = vadd.f32 %v697, %v774
    %v779 = vadd.f32 %v698, %v775
    %s780 = sld [smem:[#allocation2 + $0x187]]
    %v781 = vstv %s780
    %v782 = vmul.f32 %v161, %v781
    %v783 = vmul.f32 %v157, %v781
    %v784 = vmul.f32 %v162, %v781
    %788 = vrot.lane.b32.xlu0 %v782, 95
    %v789 = vpop.permute.xlu0 %788
    %790 = vrot.lane.b32.xlu0 %v783, 95
    %v791 = vpop.permute.xlu0 %790
    %792 = vrot.lane.b32.xlu0 %v784, 95
    %v793 = vpop.permute.xlu0 %792
    %v794 = vsel %vm733, %v789, %v791
    %v795 = vsel %vm733, %v791, %v793
    %v798 = vadd.f32 %v717, %v794
    %v799 = vadd.f32 %v718, %v795
    %800 = vrot.lane.b32.xlu0 %v137, 34
    %v801 = vpop.permute.xlu0 %800
    %802 = vrot.lane.b32.xlu0 %v138, 34
    %v803 = vpop.permute.xlu0 %802
    %vm804 = vcmask 277504
    %v805 = vsel %vm804, %v801, %v803
    %v809 = vmul.f32 %v161, %v801
    %v810 = vmul.f32 %v157, %v805
    %v811 = vmul.f32 %v162, %v803
    %s812 = sld [smem:[#allocation2 + $0x8]]
    %v813 = vstv %s812
    %v814 = vmul.f32 %v809, %v813
    %v815 = vmul.f32 %v810, %v813
    %v816 = vmul.f32 %v811, %v813
    %820 = vrot.lane.b32.xlu0 %v814, 94
    %v821 = vpop.permute.xlu0 %820
    %822 = vrot.lane.b32.xlu0 %v815, 94
    %v823 = vpop.permute.xlu0 %822
    %824 = vrot.lane.b32.xlu0 %v816, 94
    %v825 = vpop.permute.xlu0 %824
    %vm826 = vcmask 769024
    %v827 = vsel %vm826, %v821, %v823
    %v828 = vsel %vm826, %v823, %v825
    %v831 = vadd.f32 %v738, %v827
    %v832 = vadd.f32 %v739, %v828
    %s833 = sld [smem:[#allocation2 + $0x88]]
    %v834 = vstv %s833
    %v835 = vmul.f32 %v809, %v834
    %v836 = vmul.f32 %v810, %v834
    %v837 = vmul.f32 %v811, %v834
    %841 = vrot.lane.b32.xlu0 %v835, 94
    %v842 = vpop.permute.xlu0 %841
    %843 = vrot.lane.b32.xlu0 %v836, 94
    %v844 = vpop.permute.xlu0 %843
    %845 = vrot.lane.b32.xlu0 %v837, 94
    %v846 = vpop.permute.xlu0 %845
    %v847 = vsel %vm826, %v842, %v844
    %v848 = vsel %vm826, %v844, %v846
    %v851 = vadd.f32 %v758, %v847
    %v852 = vadd.f32 %v759, %v848
    %s853 = sld [smem:[#allocation2 + $0x108]]
    %v854 = vstv %s853
    %v855 = vmul.f32 %v809, %v854
    %v856 = vmul.f32 %v810, %v854
    %v857 = vmul.f32 %v811, %v854
    %861 = vrot.lane.b32.xlu0 %v855, 94
    %v862 = vpop.permute.xlu0 %861
    %863 = vrot.lane.b32.xlu0 %v856, 94
    %v864 = vpop.permute.xlu0 %863
    %865 = vrot.lane.b32.xlu0 %v857, 94
    %v866 = vpop.permute.xlu0 %865
    %v867 = vsel %vm826, %v862, %v864
    %v868 = vsel %vm826, %v864, %v866
    %v871 = vadd.f32 %v778, %v867
    %v872 = vadd.f32 %v779, %v868
    %s873 = sld [smem:[#allocation2 + $0x188]]
    %v874 = vstv %s873
    %v875 = vmul.f32 %v809, %v874
    %v876 = vmul.f32 %v810, %v874
    %v877 = vmul.f32 %v811, %v874
    %881 = vrot.lane.b32.xlu0 %v875, 94
    %v882 = vpop.permute.xlu0 %881
    %883 = vrot.lane.b32.xlu0 %v876, 94
    %v884 = vpop.permute.xlu0 %883
    %885 = vrot.lane.b32.xlu0 %v877, 94
    %v886 = vpop.permute.xlu0 %885
    %v887 = vsel %vm826, %v882, %v884
    %v888 = vsel %vm826, %v884, %v886
    %v891 = vadd.f32 %v798, %v887
    %v892 = vadd.f32 %v799, %v888
    %v893 = vperm.slane %v139, 1
    %v894 = vperm.slane %v139, 5
    %v895 = vperm.slane %v140, 1
    %v896 = vperm.slane %v140, 5
    %v897 = vsel %vm149, %v895, %v893
    %v898 = vsel %vm149, %v896, %v894
    %899 = vrot.lane.b32.xlu0 %v897, 17
    %v900 = vpop.permute.xlu0 %899
    %901 = vrot.lane.b32.xlu0 %v898, 17
    %v902 = vpop.permute.xlu0 %901
    %v903 = vsel %vm156, %v900, %v902
    %v907 = vsel %vm156, 0.0, %v900
    %v908 = vsel %vm156, %v902, 0.0
    %v909 = vmul.f32 %v907, %v131
    %v910 = vmul.f32 %v903, %v132
    %s911 = sld [smem:[#allocation2 + $0x9]]
    %v912 = vstv %s911
    %v913 = vmul.f32 %v909, %v912
    %v914 = vmul.f32 %v910, %v912
    %v915 = vadd.f32 %v831, %v913
    %v916 = vadd.f32 %v832, %v914
    %s917 = sld [smem:[#allocation2 + $0x89]]
    %v918 = vstv %s917
    %v919 = vmul.f32 %v909, %v918
    %v920 = vmul.f32 %v910, %v918
    %v921 = vadd.f32 %v851, %v919
    %v922 = vadd.f32 %v852, %v920
    %s923 = sld [smem:[#allocation2 + $0x109]]
    %v924 = vstv %s923
    %v925 = vmul.f32 %v909, %v924
    %v926 = vmul.f32 %v910, %v924
    %v927 = vadd.f32 %v871, %v925
    %v928 = vadd.f32 %v872, %v926
    %s929 = sld [smem:[#allocation2 + $0x189]]
    %v930 = vstv %s929
    %v931 = vmul.f32 %v909, %v930
    %v932 = vmul.f32 %v910, %v930
    %v933 = vadd.f32 %v891, %v931
    %v934 = vadd.f32 %v892, %v932
    %s935 = sld [smem:[#allocation2 + $0xa]]
    %v936 = vstv %s935
    %v937 = vmul.f32 %v907, %v936
    %v938 = vmul.f32 %v903, %v936
    %v939 = vmul.f32 %v908, %v936
    %943 = vrot.lane.b32.xlu0 %v937, 127
    %v944 = vpop.permute.xlu0 %943
    %945 = vrot.lane.b32.xlu0 %v938, 127
    %v946 = vpop.permute.xlu0 %945
    %947 = vrot.lane.b32.xlu0 %v939, 127
    %v948 = vpop.permute.xlu0 %947
    %v949 = vsel %vm195, %v944, %v946
    %v950 = vsel %vm195, %v946, %v948
    %v953 = vadd.f32 %v915, %v949
    %v954 = vadd.f32 %v916, %v950
    %s955 = sld [smem:[#allocation2 + $0x8a]]
    %v956 = vstv %s955
    %v957 = vmul.f32 %v907, %v956
    %v958 = vmul.f32 %v903, %v956
    %v959 = vmul.f32 %v908, %v956
    %963 = vrot.lane.b32.xlu0 %v957, 127
    %v964 = vpop.permute.xlu0 %963
    %965 = vrot.lane.b32.xlu0 %v958, 127
    %v966 = vpop.permute.xlu0 %965
    %967 = vrot.lane.b32.xlu0 %v959, 127
    %v968 = vpop.permute.xlu0 %967
    %v969 = vsel %vm195, %v964, %v966
    %v970 = vsel %vm195, %v966, %v968
    %v973 = vadd.f32 %v921, %v969
    %v974 = vadd.f32 %v922, %v970
    %s975 = sld [smem:[#allocation2 + $0x10a]]
    %v976 = vstv %s975
    %v977 = vmul.f32 %v907, %v976
    %v978 = vmul.f32 %v903, %v976
    %v979 = vmul.f32 %v908, %v976
    %983 = vrot.lane.b32.xlu0 %v977, 127
    %v984 = vpop.permute.xlu0 %983
    %985 = vrot.lane.b32.xlu0 %v978, 127
    %v986 = vpop.permute.xlu0 %985
    %987 = vrot.lane.b32.xlu0 %v979, 127
    %v988 = vpop.permute.xlu0 %987
    %v989 = vsel %vm195, %v984, %v986
    %v990 = vsel %vm195, %v986, %v988
    %v993 = vadd.f32 %v927, %v989
    %v994 = vadd.f32 %v928, %v990
    %s995 = sld [smem:[#allocation2 + $0x18a]]
    %v996 = vstv %s995
    %v997 = vmul.f32 %v907, %v996
    %v998 = vmul.f32 %v903, %v996
    %v999 = vmul.f32 %v908, %v996
    %1003 = vrot.lane.b32.xlu0 %v997, 127
    %v1004 = vpop.permute.xlu0 %1003
    %1005 = vrot.lane.b32.xlu0 %v998, 127
    %v1006 = vpop.permute.xlu0 %1005
    %1007 = vrot.lane.b32.xlu0 %v999, 127
    %v1008 = vpop.permute.xlu0 %1007
    %v1009 = vsel %vm195, %v1004, %v1006
    %v1010 = vsel %vm195, %v1006, %v1008
    %v1013 = vadd.f32 %v933, %v1009
    %v1014 = vadd.f32 %v934, %v1010
    %v1015 = vmul.f32 %v907, %v265
    %v1016 = vmul.f32 %v903, %v269
    %v1017 = vmul.f32 %v908, %v267
    %s1018 = sld [smem:[#allocation2 + $0xb]]
    %v1019 = vstv %s1018
    %v1020 = vmul.f32 %v1015, %v1019
    %v1021 = vmul.f32 %v1016, %v1019
    %v1022 = vmul.f32 %v1017, %v1019
    %1026 = vrot.lane.b32.xlu0 %v1020, 126
    %v1027 = vpop.permute.xlu0 %1026
    %1028 = vrot.lane.b32.xlu0 %v1021, 126
    %v1029 = vpop.permute.xlu0 %1028
    %1030 = vrot.lane.b32.xlu0 %v1022, 126
    %v1031 = vpop.permute.xlu0 %1030
    %v1032 = vsel %vm290, %v1027, %v1029
    %v1033 = vsel %vm290, %v1029, %v1031
    %v1036 = vadd.f32 %v953, %v1032
    %v1037 = vadd.f32 %v954, %v1033
    %s1038 = sld [smem:[#allocation2 + $0x8b]]
    %v1039 = vstv %s1038
    %v1040 = vmul.f32 %v1015, %v1039
    %v1041 = vmul.f32 %v1016, %v1039
    %v1042 = vmul.f32 %v1017, %v1039
    %1046 = vrot.lane.b32.xlu0 %v1040, 126
    %v1047 = vpop.permute.xlu0 %1046
    %1048 = vrot.lane.b32.xlu0 %v1041, 126
    %v1049 = vpop.permute.xlu0 %1048
    %1050 = vrot.lane.b32.xlu0 %v1042, 126
    %v1051 = vpop.permute.xlu0 %1050
    %v1052 = vsel %vm290, %v1047, %v1049
    %v1053 = vsel %vm290, %v1049, %v1051
    %v1056 = vadd.f32 %v973, %v1052
    %v1057 = vadd.f32 %v974, %v1053
    %s1058 = sld [smem:[#allocation2 + $0x10b]]
    %v1059 = vstv %s1058
    %v1060 = vmul.f32 %v1015, %v1059
    %v1061 = vmul.f32 %v1016, %v1059
    %v1062 = vmul.f32 %v1017, %v1059
    %1066 = vrot.lane.b32.xlu0 %v1060, 126
    %v1067 = vpop.permute.xlu0 %1066
    %1068 = vrot.lane.b32.xlu0 %v1061, 126
    %v1069 = vpop.permute.xlu0 %1068
    %1070 = vrot.lane.b32.xlu0 %v1062, 126
    %v1071 = vpop.permute.xlu0 %1070
    %v1072 = vsel %vm290, %v1067, %v1069
    %v1073 = vsel %vm290, %v1069, %v1071
    %v1076 = vadd.f32 %v993, %v1072
    %v1077 = vadd.f32 %v994, %v1073
    %s1078 = sld [smem:[#allocation2 + $0x18b]]
    %v1079 = vstv %s1078
    %v1080 = vmul.f32 %v1015, %v1079
    %v1081 = vmul.f32 %v1016, %v1079
    %v1082 = vmul.f32 %v1017, %v1079
    %1086 = vrot.lane.b32.xlu0 %v1080, 126
    %v1087 = vpop.permute.xlu0 %1086
    %1088 = vrot.lane.b32.xlu0 %v1081, 126
    %v1089 = vpop.permute.xlu0 %1088
    %1090 = vrot.lane.b32.xlu0 %v1082, 126
    %v1091 = vpop.permute.xlu0 %1090
    %v1092 = vsel %vm290, %v1087, %v1089
    %v1093 = vsel %vm290, %v1089, %v1091
    %v1096 = vadd.f32 %v1013, %v1092
    %v1097 = vadd.f32 %v1014, %v1093
    %v1098 = vmul.f32 %v907, %v360
    %v1099 = vmul.f32 %v903, %v364
    %v1100 = vmul.f32 %v908, %v362
    %s1101 = sld [smem:[#allocation2 + $0xc]]
    %v1102 = vstv %s1101
    %v1103 = vmul.f32 %v1098, %v1102
    %v1104 = vmul.f32 %v1099, %v1102
    %v1105 = vmul.f32 %v1100, %v1102
    %1109 = vrot.lane.b32.xlu0 %v1103, 112
    %v1110 = vpop.permute.xlu0 %1109
    %1111 = vrot.lane.b32.xlu0 %v1104, 112
    %v1112 = vpop.permute.xlu0 %1111
    %1113 = vrot.lane.b32.xlu0 %v1105, 112
    %v1114 = vpop.permute.xlu0 %1113
    %v1115 = vsel %vm385, %v1110, %v1112
    %v1116 = vsel %vm385, %v1112, %v1114
    %v1119 = vadd.f32 %v1036, %v1115
    %v1120 = vadd.f32 %v1037, %v1116
    %s1121 = sld [smem:[#allocation2 + $0x8c]]
    %v1122 = vstv %s1121
    %v1123 = vmul.f32 %v1098, %v1122
    %v1124 = vmul.f32 %v1099, %v1122
    %v1125 = vmul.f32 %v1100, %v1122
    %1129 = vrot.lane.b32.xlu0 %v1123, 112
    %v1130 = vpop.permute.xlu0 %1129
    %1131 = vrot.lane.b32.xlu0 %v1124, 112
    %v1132 = vpop.permute.xlu0 %1131
    %1133 = vrot.lane.b32.xlu0 %v1125, 112
    %v1134 = vpop.permute.xlu0 %1133
    %v1135 = vsel %vm385, %v1130, %v1132
    %v1136 = vsel %vm385, %v1132, %v1134
    %v1139 = vadd.f32 %v1056, %v1135
    %v1140 = vadd.f32 %v1057, %v1136
    %s1141 = sld [smem:[#allocation2 + $0x10c]]
    %v1142 = vstv %s1141
    %v1143 = vmul.f32 %v1098, %v1142
    %v1144 = vmul.f32 %v1099, %v1142
    %v1145 = vmul.f32 %v1100, %v1142
    %1149 = vrot.lane.b32.xlu0 %v1143, 112
    %v1150 = vpop.permute.xlu0 %1149
    %1151 = vrot.lane.b32.xlu0 %v1144, 112
    %v1152 = vpop.permute.xlu0 %1151
    %1153 = vrot.lane.b32.xlu0 %v1145, 112
    %v1154 = vpop.permute.xlu0 %1153
    %v1155 = vsel %vm385, %v1150, %v1152
    %v1156 = vsel %vm385, %v1152, %v1154
    %v1159 = vadd.f32 %v1076, %v1155
    %v1160 = vadd.f32 %v1077, %v1156
    %s1161 = sld [smem:[#allocation2 + $0x18c]]
    %v1162 = vstv %s1161
    %v1163 = vmul.f32 %v1098, %v1162
    %v1164 = vmul.f32 %v1099, %v1162
    %v1165 = vmul.f32 %v1100, %v1162
    %1169 = vrot.lane.b32.xlu0 %v1163, 112
    %v1170 = vpop.permute.xlu0 %1169
    %1171 = vrot.lane.b32.xlu0 %v1164, 112
    %v1172 = vpop.permute.xlu0 %1171
    %1173 = vrot.lane.b32.xlu0 %v1165, 112
    %v1174 = vpop.permute.xlu0 %1173
    %v1175 = vsel %vm385, %v1170, %v1172
    %v1176 = vsel %vm385, %v1172, %v1174
    %v1179 = vadd.f32 %v1096, %v1175
    %v1180 = vadd.f32 %v1097, %v1176
    %s1181 = sld [smem:[#allocation2 + $0xd]]
    %v1182 = vstv %s1181
    %v1183 = vmul.f32 %v907, %v1182
    %v1184 = vmul.f32 %v903, %v1182
    %v1185 = vmul.f32 %v908, %v1182
    %1189 = vrot.lane.b32.xlu0 %v1183, 111
    %v1190 = vpop.permute.xlu0 %1189
    %1191 = vrot.lane.b32.xlu0 %v1184, 111
    %v1192 = vpop.permute.xlu0 %1191
    %1193 = vrot.lane.b32.xlu0 %v1185, 111
    %v1194 = vpop.permute.xlu0 %1193
    %v1195 = vsel %vm466, %v1190, %v1192
    %v1196 = vsel %vm466, %v1192, %v1194
    %v1199 = vadd.f32 %v1119, %v1195
    %v1200 = vadd.f32 %v1120, %v1196
    %s1201 = sld [smem:[#allocation2 + $0x8d]]
    %v1202 = vstv %s1201
    %v1203 = vmul.f32 %v907, %v1202
    %v1204 = vmul.f32 %v903, %v1202
    %v1205 = vmul.f32 %v908, %v1202
    %1209 = vrot.lane.b32.xlu0 %v1203, 111
    %v1210 = vpop.permute.xlu0 %1209
    %1211 = vrot.lane.b32.xlu0 %v1204, 111
    %v1212 = vpop.permute.xlu0 %1211
    %1213 = vrot.lane.b32.xlu0 %v1205, 111
    %v1214 = vpop.permute.xlu0 %1213
    %v1215 = vsel %vm466, %v1210, %v1212
    %v1216 = vsel %vm466, %v1212, %v1214
    %v1219 = vadd.f32 %v1139, %v1215
    %v1220 = vadd.f32 %v1140, %v1216
    %s1221 = sld [smem:[#allocation2 + $0x10d]]
    %v1222 = vstv %s1221
    %v1223 = vmul.f32 %v907, %v1222
    %v1224 = vmul.f32 %v903, %v1222
    %v1225 = vmul.f32 %v908, %v1222
    %1229 = vrot.lane.b32.xlu0 %v1223, 111
    %v1230 = vpop.permute.xlu0 %1229
    %1231 = vrot.lane.b32.xlu0 %v1224, 111
    %v1232 = vpop.permute.xlu0 %1231
    %1233 = vrot.lane.b32.xlu0 %v1225, 111
    %v1234 = vpop.permute.xlu0 %1233
    %v1235 = vsel %vm466, %v1230, %v1232
    %v1236 = vsel %vm466, %v1232, %v1234
    %v1239 = vadd.f32 %v1159, %v1235
    %v1240 = vadd.f32 %v1160, %v1236
    %s1241 = sld [smem:[#allocation2 + $0x18d]]
    %v1242 = vstv %s1241
    %v1243 = vmul.f32 %v907, %v1242
    %v1244 = vmul.f32 %v903, %v1242
    %v1245 = vmul.f32 %v908, %v1242
    %1249 = vrot.lane.b32.xlu0 %v1243, 111
    %v1250 = vpop.permute.xlu0 %1249
    %1251 = vrot.lane.b32.xlu0 %v1244, 111
    %v1252 = vpop.permute.xlu0 %1251
    %1253 = vrot.lane.b32.xlu0 %v1245, 111
    %v1254 = vpop.permute.xlu0 %1253
    %v1255 = vsel %vm466, %v1250, %v1252
    %v1256 = vsel %vm466, %v1252, %v1254
    %v1259 = vadd.f32 %v1179, %v1255
    %v1260 = vadd.f32 %v1180, %v1256
    %v1261 = vmul.f32 %v907, %v534
    %v1262 = vmul.f32 %v903, %v538
    %v1263 = vmul.f32 %v908, %v536
    %s1264 = sld [smem:[#allocation2 + $0xe]]
    %v1265 = vstv %s1264
    %v1266 = vmul.f32 %v1261, %v1265
    %v1267 = vmul.f32 %v1262, %v1265
    %v1268 = vmul.f32 %v1263, %v1265
    %1272 = vrot.lane.b32.xlu0 %v1266, 110
    %v1273 = vpop.permute.xlu0 %1272
    %1274 = vrot.lane.b32.xlu0 %v1267, 110
    %v1275 = vpop.permute.xlu0 %1274
    %1276 = vrot.lane.b32.xlu0 %v1268, 110
    %v1277 = vpop.permute.xlu0 %1276
    %v1278 = vsel %vm559, %v1273, %v1275
    %v1279 = vsel %vm559, %v1275, %v1277
    %v1282 = vadd.f32 %v1199, %v1278
    %v1283 = vadd.f32 %v1200, %v1279
    %s1284 = sld [smem:[#allocation2 + $0x8e]]
    %v1285 = vstv %s1284
    %v1286 = vmul.f32 %v1261, %v1285
    %v1287 = vmul.f32 %v1262, %v1285
    %v1288 = vmul.f32 %v1263, %v1285
    %1292 = vrot.lane.b32.xlu0 %v1286, 110
    %v1293 = vpop.permute.xlu0 %1292
    %1294 = vrot.lane.b32.xlu0 %v1287, 110
    %v1295 = vpop.permute.xlu0 %1294
    %1296 = vrot.lane.b32.xlu0 %v1288, 110
    %v1297 = vpop.permute.xlu0 %1296
    %v1298 = vsel %vm559, %v1293, %v1295
    %v1299 = vsel %vm559, %v1295, %v1297
    %v1302 = vadd.f32 %v1219, %v1298
    %v1303 = vadd.f32 %v1220, %v1299
    %s1304 = sld [smem:[#allocation2 + $0x10e]]
    %v1305 = vstv %s1304
    %v1306 = vmul.f32 %v1261, %v1305
    %v1307 = vmul.f32 %v1262, %v1305
    %v1308 = vmul.f32 %v1263, %v1305
    %1312 = vrot.lane.b32.xlu0 %v1306, 110
    %v1313 = vpop.permute.xlu0 %1312
    %1314 = vrot.lane.b32.xlu0 %v1307, 110
    %v1315 = vpop.permute.xlu0 %1314
    %1316 = vrot.lane.b32.xlu0 %v1308, 110
    %v1317 = vpop.permute.xlu0 %1316
    %v1318 = vsel %vm559, %v1313, %v1315
    %v1319 = vsel %vm559, %v1315, %v1317
    %v1322 = vadd.f32 %v1239, %v1318
    %v1323 = vadd.f32 %v1240, %v1319
    %s1324 = sld [smem:[#allocation2 + $0x18e]]
    %v1325 = vstv %s1324
    %v1326 = vmul.f32 %v1261, %v1325
    %v1327 = vmul.f32 %v1262, %v1325
    %v1328 = vmul.f32 %v1263, %v1325
    %1332 = vrot.lane.b32.xlu0 %v1326, 110
    %v1333 = vpop.permute.xlu0 %1332
    %1334 = vrot.lane.b32.xlu0 %v1327, 110
    %v1335 = vpop.permute.xlu0 %1334
    %1336 = vrot.lane.b32.xlu0 %v1328, 110
    %v1337 = vpop.permute.xlu0 %1336
    %v1338 = vsel %vm559, %v1333, %v1335
    %v1339 = vsel %vm559, %v1335, %v1337
    %v1342 = vadd.f32 %v1259, %v1338
    %v1343 = vadd.f32 %v1260, %v1339
    %v1344 = vmul.f32 %v907, %v627
    %v1345 = vmul.f32 %v903, %v631
    %v1346 = vmul.f32 %v908, %v629
    %s1347 = sld [smem:[#allocation2 + $0xf]]
    %v1348 = vstv %s1347
    %v1349 = vmul.f32 %v1344, %v1348
    %v1350 = vmul.f32 %v1345, %v1348
    %v1351 = vmul.f32 %v1346, %v1348
    %1355 = vrot.lane.b32.xlu0 %v1349, 96
    %v1356 = vpop.permute.xlu0 %1355
    %1357 = vrot.lane.b32.xlu0 %v1350, 96
    %v1358 = vpop.permute.xlu0 %1357
    %1359 = vrot.lane.b32.xlu0 %v1351, 96
    %v1360 = vpop.permute.xlu0 %1359
    %v1361 = vsel %vm652, %v1356, %v1358
    %v1362 = vsel %vm652, %v1358, %v1360
    %v1365 = vadd.f32 %v1282, %v1361
    %v1366 = vadd.f32 %v1283, %v1362
    %s1367 = sld [smem:[#allocation2 + $0x8f]]
    %v1368 = vstv %s1367
    %v1369 = vmul.f32 %v1344, %v1368
    %v1370 = vmul.f32 %v1345, %v1368
    %v1371 = vmul.f32 %v1346, %v1368
    %1375 = vrot.lane.b32.xlu0 %v1369, 96
    %v1376 = vpop.permute.xlu0 %1375
    %1377 = vrot.lane.b32.xlu0 %v1370, 96
    %v1378 = vpop.permute.xlu0 %1377
    %1379 = vrot.lane.b32.xlu0 %v1371, 96
    %v1380 = vpop.permute.xlu0 %1379
    %v1381 = vsel %vm652, %v1376, %v1378
    %v1382 = vsel %vm652, %v1378, %v1380
    %v1385 = vadd.f32 %v1302, %v1381
    %v1386 = vadd.f32 %v1303, %v1382
    %s1387 = sld [smem:[#allocation2 + $0x10f]]
    %v1388 = vstv %s1387
    %v1389 = vmul.f32 %v1344, %v1388
    %v1390 = vmul.f32 %v1345, %v1388
    %v1391 = vmul.f32 %v1346, %v1388
    %1395 = vrot.lane.b32.xlu0 %v1389, 96
    %v1396 = vpop.permute.xlu0 %1395
    %1397 = vrot.lane.b32.xlu0 %v1390, 96
    %v1398 = vpop.permute.xlu0 %1397
    %1399 = vrot.lane.b32.xlu0 %v1391, 96
    %v1400 = vpop.permute.xlu0 %1399
    %v1401 = vsel %vm652, %v1396, %v1398
    %v1402 = vsel %vm652, %v1398, %v1400
    %v1405 = vadd.f32 %v1322, %v1401
    %v1406 = vadd.f32 %v1323, %v1402
    %s1407 = sld [smem:[#allocation2 + $0x18f]]
    %v1408 = vstv %s1407
    %v1409 = vmul.f32 %v1344, %v1408
    %v1410 = vmul.f32 %v1345, %v1408
    %v1411 = vmul.f32 %v1346, %v1408
    %1415 = vrot.lane.b32.xlu0 %v1409, 96
    %v1416 = vpop.permute.xlu0 %1415
    %1417 = vrot.lane.b32.xlu0 %v1410, 96
    %v1418 = vpop.permute.xlu0 %1417
    %1419 = vrot.lane.b32.xlu0 %v1411, 96
    %v1420 = vpop.permute.xlu0 %1419
    %v1421 = vsel %vm652, %v1416, %v1418
    %v1422 = vsel %vm652, %v1418, %v1420
    %v1425 = vadd.f32 %v1342, %v1421
    %v1426 = vadd.f32 %v1343, %v1422
    %s1427 = sld [smem:[#allocation2 + $0x10]]
    %v1428 = vstv %s1427
    %v1429 = vmul.f32 %v907, %v1428
    %v1430 = vmul.f32 %v903, %v1428
    %v1431 = vmul.f32 %v908, %v1428
    %1435 = vrot.lane.b32.xlu0 %v1429, 95
    %v1436 = vpop.permute.xlu0 %1435
    %1437 = vrot.lane.b32.xlu0 %v1430, 95
    %v1438 = vpop.permute.xlu0 %1437
    %1439 = vrot.lane.b32.xlu0 %v1431, 95
    %v1440 = vpop.permute.xlu0 %1439
    %v1441 = vsel %vm733, %v1436, %v1438
    %v1442 = vsel %vm733, %v1438, %v1440
    %v1445 = vadd.f32 %v1365, %v1441
    %v1446 = vadd.f32 %v1366, %v1442
    %s1447 = sld [smem:[#allocation2 + $0x90]]
    %v1448 = vstv %s1447
    %v1449 = vmul.f32 %v907, %v1448
    %v1450 = vmul.f32 %v903, %v1448
    %v1451 = vmul.f32 %v908, %v1448
    %1455 = vrot.lane.b32.xlu0 %v1449, 95
    %v1456 = vpop.permute.xlu0 %1455
    %1457 = vrot.lane.b32.xlu0 %v1450, 95
    %v1458 = vpop.permute.xlu0 %1457
    %1459 = vrot.lane.b32.xlu0 %v1451, 95
    %v1460 = vpop.permute.xlu0 %1459
    %v1461 = vsel %vm733, %v1456, %v1458
    %v1462 = vsel %vm733, %v1458, %v1460
    %v1465 = vadd.f32 %v1385, %v1461
    %v1466 = vadd.f32 %v1386, %v1462
    %s1467 = sld [smem:[#allocation2 + $0x110]]
    %v1468 = vstv %s1467
    %v1469 = vmul.f32 %v907, %v1468
    %v1470 = vmul.f32 %v903, %v1468
    %v1471 = vmul.f32 %v908, %v1468
    %1475 = vrot.lane.b32.xlu0 %v1469, 95
    %v1476 = vpop.permute.xlu0 %1475
    %1477 = vrot.lane.b32.xlu0 %v1470, 95
    %v1478 = vpop.permute.xlu0 %1477
    %1479 = vrot.lane.b32.xlu0 %v1471, 95
    %v1480 = vpop.permute.xlu0 %1479
    %v1481 = vsel %vm733, %v1476, %v1478
    %v1482 = vsel %vm733, %v1478, %v1480
    %v1485 = vadd.f32 %v1405, %v1481
    %v1486 = vadd.f32 %v1406, %v1482
    %s1487 = sld [smem:[#allocation2 + $0x190]]
    %v1488 = vstv %s1487
    %v1489 = vmul.f32 %v907, %v1488
    %v1490 = vmul.f32 %v903, %v1488
    %v1491 = vmul.f32 %v908, %v1488
    %1495 = vrot.lane.b32.xlu0 %v1489, 95
    %v1496 = vpop.permute.xlu0 %1495
    %1497 = vrot.lane.b32.xlu0 %v1490, 95
    %v1498 = vpop.permute.xlu0 %1497
    %1499 = vrot.lane.b32.xlu0 %v1491, 95
    %v1500 = vpop.permute.xlu0 %1499
    %v1501 = vsel %vm733, %v1496, %v1498
    %v1502 = vsel %vm733, %v1498, %v1500
    %v1505 = vadd.f32 %v1425, %v1501
    %v1506 = vadd.f32 %v1426, %v1502
    %v1507 = vmul.f32 %v907, %v801
    %v1508 = vmul.f32 %v903, %v805
    %v1509 = vmul.f32 %v908, %v803
    %s1510 = sld [smem:[#allocation2 + $0x11]]
    %v1511 = vstv %s1510
    %v1512 = vmul.f32 %v1507, %v1511
    %v1513 = vmul.f32 %v1508, %v1511
    %v1514 = vmul.f32 %v1509, %v1511
    %1518 = vrot.lane.b32.xlu0 %v1512, 94
    %v1519 = vpop.permute.xlu0 %1518
    %1520 = vrot.lane.b32.xlu0 %v1513, 94
    %v1521 = vpop.permute.xlu0 %1520
    %1522 = vrot.lane.b32.xlu0 %v1514, 94
    %v1523 = vpop.permute.xlu0 %1522
    %v1524 = vsel %vm826, %v1519, %v1521
    %v1525 = vsel %vm826, %v1521, %v1523
    %v1528 = vadd.f32 %v1445, %v1524
    %v1529 = vadd.f32 %v1446, %v1525
    %s1530 = sld [smem:[#allocation2 + $0x91]]
    %v1531 = vstv %s1530
    %v1532 = vmul.f32 %v1507, %v1531
    %v1533 = vmul.f32 %v1508, %v1531
    %v1534 = vmul.f32 %v1509, %v1531
    %1538 = vrot.lane.b32.xlu0 %v1532, 94
    %v1539 = vpop.permute.xlu0 %1538
    %1540 = vrot.lane.b32.xlu0 %v1533, 94
    %v1541 = vpop.permute.xlu0 %1540
    %1542 = vrot.lane.b32.xlu0 %v1534, 94
    %v1543 = vpop.permute.xlu0 %1542
    %v1544 = vsel %vm826, %v1539, %v1541
    %v1545 = vsel %vm826, %v1541, %v1543
    %v1548 = vadd.f32 %v1465, %v1544
    %v1549 = vadd.f32 %v1466, %v1545
    %s1550 = sld [smem:[#allocation2 + $0x111]]
    %v1551 = vstv %s1550
    %v1552 = vmul.f32 %v1507, %v1551
    %v1553 = vmul.f32 %v1508, %v1551
    %v1554 = vmul.f32 %v1509, %v1551
    %1558 = vrot.lane.b32.xlu0 %v1552, 94
    %v1559 = vpop.permute.xlu0 %1558
    %1560 = vrot.lane.b32.xlu0 %v1553, 94
    %v1561 = vpop.permute.xlu0 %1560
    %1562 = vrot.lane.b32.xlu0 %v1554, 94
    %v1563 = vpop.permute.xlu0 %1562
    %v1564 = vsel %vm826, %v1559, %v1561
    %v1565 = vsel %vm826, %v1561, %v1563
    %v1568 = vadd.f32 %v1485, %v1564
    %v1569 = vadd.f32 %v1486, %v1565
    %s1570 = sld [smem:[#allocation2 + $0x191]]
    %v1571 = vstv %s1570
    %v1572 = vmul.f32 %v1507, %v1571
    %v1573 = vmul.f32 %v1508, %v1571
    %v1574 = vmul.f32 %v1509, %v1571
    %1578 = vrot.lane.b32.xlu0 %v1572, 94
    %v1579 = vpop.permute.xlu0 %1578
    %1580 = vrot.lane.b32.xlu0 %v1573, 94
    %v1581 = vpop.permute.xlu0 %1580
    %1582 = vrot.lane.b32.xlu0 %v1574, 94
    %v1583 = vpop.permute.xlu0 %1582
    %v1584 = vsel %vm826, %v1579, %v1581
    %v1585 = vsel %vm826, %v1581, %v1583
    %v1588 = vadd.f32 %v1505, %v1584
    %v1589 = vadd.f32 %v1506, %v1585
    %v1590 = vperm.slane %v139, 2
    %v1591 = vperm.slane %v139, 6
    %v1592 = vperm.slane %v140, 2
    %v1593 = vperm.slane %v140, 6
    %v1594 = vsel %vm149, %v1592, %v1590
    %v1595 = vsel %vm149, %v1593, %v1591
    %1596 = vrot.lane.b32.xlu0 %v1594, 17
    %v1597 = vpop.permute.xlu0 %1596
    %1598 = vrot.lane.b32.xlu0 %v1595, 17
    %v1599 = vpop.permute.xlu0 %1598
    %v1600 = vsel %vm156, %v1597, %v1599
    %v1604 = vsel %vm156, 0.0, %v1597
    %v1605 = vsel %vm156, %v1599, 0.0
    %v1606 = vmul.f32 %v1604, %v131
    %v1607 = vmul.f32 %v1600, %v132
    %s1608 = sld [smem:[#allocation2 + $0x12]]
    %v1609 = vstv %s1608
    %v1610 = vmul.f32 %v1606, %v1609
    %v1611 = vmul.f32 %v1607, %v1609
    %v1612 = vadd.f32 %v1528, %v1610
    %v1613 = vadd.f32 %v1529, %v1611
    %s1614 = sld [smem:[#allocation2 + $0x92]]
    %v1615 = vstv %s1614
    %v1616 = vmul.f32 %v1606, %v1615
    %v1617 = vmul.f32 %v1607, %v1615
    %v1618 = vadd.f32 %v1548, %v1616
    %v1619 = vadd.f32 %v1549, %v1617
    %s1620 = sld [smem:[#allocation2 + $0x112]]
    %v1621 = vstv %s1620
    %v1622 = vmul.f32 %v1606, %v1621
    %v1623 = vmul.f32 %v1607, %v1621
    %v1624 = vadd.f32 %v1568, %v1622
    %v1625 = vadd.f32 %v1569, %v1623
    %s1626 = sld [smem:[#allocation2 + $0x192]]
    %v1627 = vstv %s1626
    %v1628 = vmul.f32 %v1606, %v1627
    %v1629 = vmul.f32 %v1607, %v1627
    %v1630 = vadd.f32 %v1588, %v1628
    %v1631 = vadd.f32 %v1589, %v1629
    %s1632 = sld [smem:[#allocation2 + $0x13]]
    %v1633 = vstv %s1632
    %v1634 = vmul.f32 %v1604, %v1633
    %v1635 = vmul.f32 %v1600, %v1633
    %v1636 = vmul.f32 %v1605, %v1633
    %1640 = vrot.lane.b32.xlu0 %v1634, 127
    %v1641 = vpop.permute.xlu0 %1640
    %1642 = vrot.lane.b32.xlu0 %v1635, 127
    %v1643 = vpop.permute.xlu0 %1642
    %1644 = vrot.lane.b32.xlu0 %v1636, 127
    %v1645 = vpop.permute.xlu0 %1644
    %v1646 = vsel %vm195, %v1641, %v1643
    %v1647 = vsel %vm195, %v1643, %v1645
    %v1650 = vadd.f32 %v1612, %v1646
    %v1651 = vadd.f32 %v1613, %v1647
    %s1652 = sld [smem:[#allocation2 + $0x93]]
    %v1653 = vstv %s1652
    %v1654 = vmul.f32 %v1604, %v1653
    %v1655 = vmul.f32 %v1600, %v1653
    %v1656 = vmul.f32 %v1605, %v1653
    %1660 = vrot.lane.b32.xlu0 %v1654, 127
    %v1661 = vpop.permute.xlu0 %1660
    %1662 = vrot.lane.b32.xlu0 %v1655, 127
    %v1663 = vpop.permute.xlu0 %1662
    %1664 = vrot.lane.b32.xlu0 %v1656, 127
    %v1665 = vpop.permute.xlu0 %1664
    %v1666 = vsel %vm195, %v1661, %v1663
    %v1667 = vsel %vm195, %v1663, %v1665
    %v1670 = vadd.f32 %v1618, %v1666
    %v1671 = vadd.f32 %v1619, %v1667
    %s1672 = sld [smem:[#allocation2 + $0x113]]
    %v1673 = vstv %s1672
    %v1674 = vmul.f32 %v1604, %v1673
    %v1675 = vmul.f32 %v1600, %v1673
    %v1676 = vmul.f32 %v1605, %v1673
    %1680 = vrot.lane.b32.xlu0 %v1674, 127
    %v1681 = vpop.permute.xlu0 %1680
    %1682 = vrot.lane.b32.xlu0 %v1675, 127
    %v1683 = vpop.permute.xlu0 %1682
    %1684 = vrot.lane.b32.xlu0 %v1676, 127
    %v1685 = vpop.permute.xlu0 %1684
    %v1686 = vsel %vm195, %v1681, %v1683
    %v1687 = vsel %vm195, %v1683, %v1685
    %v1690 = vadd.f32 %v1624, %v1686
    %v1691 = vadd.f32 %v1625, %v1687
    %s1692 = sld [smem:[#allocation2 + $0x193]]
    %v1693 = vstv %s1692
    %v1694 = vmul.f32 %v1604, %v1693
    %v1695 = vmul.f32 %v1600, %v1693
    %v1696 = vmul.f32 %v1605, %v1693
    %1700 = vrot.lane.b32.xlu0 %v1694, 127
    %v1701 = vpop.permute.xlu0 %1700
    %1702 = vrot.lane.b32.xlu0 %v1695, 127
    %v1703 = vpop.permute.xlu0 %1702
    %1704 = vrot.lane.b32.xlu0 %v1696, 127
    %v1705 = vpop.permute.xlu0 %1704
    %v1706 = vsel %vm195, %v1701, %v1703
    %v1707 = vsel %vm195, %v1703, %v1705
    %v1710 = vadd.f32 %v1630, %v1706
    %v1711 = vadd.f32 %v1631, %v1707
    %v1712 = vmul.f32 %v1604, %v265
    %v1713 = vmul.f32 %v1600, %v269
    %v1714 = vmul.f32 %v1605, %v267
    %s1715 = sld [smem:[#allocation2 + $0x14]]
    %v1716 = vstv %s1715
    %v1717 = vmul.f32 %v1712, %v1716
    %v1718 = vmul.f32 %v1713, %v1716
    %v1719 = vmul.f32 %v1714, %v1716
    %1723 = vrot.lane.b32.xlu0 %v1717, 126
    %v1724 = vpop.permute.xlu0 %1723
    %1725 = vrot.lane.b32.xlu0 %v1718, 126
    %v1726 = vpop.permute.xlu0 %1725
    %1727 = vrot.lane.b32.xlu0 %v1719, 126
    %v1728 = vpop.permute.xlu0 %1727
    %v1729 = vsel %vm290, %v1724, %v1726
    %v1730 = vsel %vm290, %v1726, %v1728
    %v1733 = vadd.f32 %v1650, %v1729
    %v1734 = vadd.f32 %v1651, %v1730
    %s1735 = sld [smem:[#allocation2 + $0x94]]
    %v1736 = vstv %s1735
    %v1737 = vmul.f32 %v1712, %v1736
    %v1738 = vmul.f32 %v1713, %v1736
    %v1739 = vmul.f32 %v1714, %v1736
    %1743 = vrot.lane.b32.xlu0 %v1737, 126
    %v1744 = vpop.permute.xlu0 %1743
    %1745 = vrot.lane.b32.xlu0 %v1738, 126
    %v1746 = vpop.permute.xlu0 %1745
    %1747 = vrot.lane.b32.xlu0 %v1739, 126
    %v1748 = vpop.permute.xlu0 %1747
    %v1749 = vsel %vm290, %v1744, %v1746
    %v1750 = vsel %vm290, %v1746, %v1748
    %v1753 = vadd.f32 %v1670, %v1749
    %v1754 = vadd.f32 %v1671, %v1750
    %s1755 = sld [smem:[#allocation2 + $0x114]]
    %v1756 = vstv %s1755
    %v1757 = vmul.f32 %v1712, %v1756
    %v1758 = vmul.f32 %v1713, %v1756
    %v1759 = vmul.f32 %v1714, %v1756
    %1763 = vrot.lane.b32.xlu0 %v1757, 126
    %v1764 = vpop.permute.xlu0 %1763
    %1765 = vrot.lane.b32.xlu0 %v1758, 126
    %v1766 = vpop.permute.xlu0 %1765
    %1767 = vrot.lane.b32.xlu0 %v1759, 126
    %v1768 = vpop.permute.xlu0 %1767
    %v1769 = vsel %vm290, %v1764, %v1766
    %v1770 = vsel %vm290, %v1766, %v1768
    %v1773 = vadd.f32 %v1690, %v1769
    %v1774 = vadd.f32 %v1691, %v1770
    %s1775 = sld [smem:[#allocation2 + $0x194]]
    %v1776 = vstv %s1775
    %v1777 = vmul.f32 %v1712, %v1776
    %v1778 = vmul.f32 %v1713, %v1776
    %v1779 = vmul.f32 %v1714, %v1776
    %1783 = vrot.lane.b32.xlu0 %v1777, 126
    %v1784 = vpop.permute.xlu0 %1783
    %1785 = vrot.lane.b32.xlu0 %v1778, 126
    %v1786 = vpop.permute.xlu0 %1785
    %1787 = vrot.lane.b32.xlu0 %v1779, 126
    %v1788 = vpop.permute.xlu0 %1787
    %v1789 = vsel %vm290, %v1784, %v1786
    %v1790 = vsel %vm290, %v1786, %v1788
    %v1793 = vadd.f32 %v1710, %v1789
    %v1794 = vadd.f32 %v1711, %v1790
    %v1795 = vmul.f32 %v1604, %v360
    %v1796 = vmul.f32 %v1600, %v364
    %v1797 = vmul.f32 %v1605, %v362
    %s1798 = sld [smem:[#allocation2 + $0x15]]
    %v1799 = vstv %s1798
    %v1800 = vmul.f32 %v1795, %v1799
    %v1801 = vmul.f32 %v1796, %v1799
    %v1802 = vmul.f32 %v1797, %v1799
    %1806 = vrot.lane.b32.xlu0 %v1800, 112
    %v1807 = vpop.permute.xlu0 %1806
    %1808 = vrot.lane.b32.xlu0 %v1801, 112
    %v1809 = vpop.permute.xlu0 %1808
    %1810 = vrot.lane.b32.xlu0 %v1802, 112
    %v1811 = vpop.permute.xlu0 %1810
    %v1812 = vsel %vm385, %v1807, %v1809
    %v1813 = vsel %vm385, %v1809, %v1811
    %v1816 = vadd.f32 %v1733, %v1812
    %v1817 = vadd.f32 %v1734, %v1813
    %s1818 = sld [smem:[#allocation2 + $0x95]]
    %v1819 = vstv %s1818
    %v1820 = vmul.f32 %v1795, %v1819
    %v1821 = vmul.f32 %v1796, %v1819
    %v1822 = vmul.f32 %v1797, %v1819
    %1826 = vrot.lane.b32.xlu0 %v1820, 112
    %v1827 = vpop.permute.xlu0 %1826
    %1828 = vrot.lane.b32.xlu0 %v1821, 112
    %v1829 = vpop.permute.xlu0 %1828
    %1830 = vrot.lane.b32.xlu0 %v1822, 112
    %v1831 = vpop.permute.xlu0 %1830
    %v1832 = vsel %vm385, %v1827, %v1829
    %v1833 = vsel %vm385, %v1829, %v1831
    %v1836 = vadd.f32 %v1753, %v1832
    %v1837 = vadd.f32 %v1754, %v1833
    %s1838 = sld [smem:[#allocation2 + $0x115]]
    %v1839 = vstv %s1838
    %v1840 = vmul.f32 %v1795, %v1839
    %v1841 = vmul.f32 %v1796, %v1839
    %v1842 = vmul.f32 %v1797, %v1839
    %1846 = vrot.lane.b32.xlu0 %v1840, 112
    %v1847 = vpop.permute.xlu0 %1846
    %1848 = vrot.lane.b32.xlu0 %v1841, 112
    %v1849 = vpop.permute.xlu0 %1848
    %1850 = vrot.lane.b32.xlu0 %v1842, 112
    %v1851 = vpop.permute.xlu0 %1850
    %v1852 = vsel %vm385, %v1847, %v1849
    %v1853 = vsel %vm385, %v1849, %v1851
    %v1856 = vadd.f32 %v1773, %v1852
    %v1857 = vadd.f32 %v1774, %v1853
    %s1858 = sld [smem:[#allocation2 + $0x195]]
    %v1859 = vstv %s1858
    %v1860 = vmul.f32 %v1795, %v1859
    %v1861 = vmul.f32 %v1796, %v1859
    %v1862 = vmul.f32 %v1797, %v1859
    %1866 = vrot.lane.b32.xlu0 %v1860, 112
    %v1867 = vpop.permute.xlu0 %1866
    %1868 = vrot.lane.b32.xlu0 %v1861, 112
    %v1869 = vpop.permute.xlu0 %1868
    %1870 = vrot.lane.b32.xlu0 %v1862, 112
    %v1871 = vpop.permute.xlu0 %1870
    %v1872 = vsel %vm385, %v1867, %v1869
    %v1873 = vsel %vm385, %v1869, %v1871
    %v1876 = vadd.f32 %v1793, %v1872
    %v1877 = vadd.f32 %v1794, %v1873
    %s1878 = sld [smem:[#allocation2 + $0x16]]
    %v1879 = vstv %s1878
    %v1880 = vmul.f32 %v1604, %v1879
    %v1881 = vmul.f32 %v1600, %v1879
    %v1882 = vmul.f32 %v1605, %v1879
    %1886 = vrot.lane.b32.xlu0 %v1880, 111
    %v1887 = vpop.permute.xlu0 %1886
    %1888 = vrot.lane.b32.xlu0 %v1881, 111
    %v1889 = vpop.permute.xlu0 %1888
    %1890 = vrot.lane.b32.xlu0 %v1882, 111
    %v1891 = vpop.permute.xlu0 %1890
    %v1892 = vsel %vm466, %v1887, %v1889
    %v1893 = vsel %vm466, %v1889, %v1891
    %v1896 = vadd.f32 %v1816, %v1892
    %v1897 = vadd.f32 %v1817, %v1893
    %s1898 = sld [smem:[#allocation2 + $0x96]]
    %v1899 = vstv %s1898
    %v1900 = vmul.f32 %v1604, %v1899
    %v1901 = vmul.f32 %v1600, %v1899
    %v1902 = vmul.f32 %v1605, %v1899
    %1906 = vrot.lane.b32.xlu0 %v1900, 111
    %v1907 = vpop.permute.xlu0 %1906
    %1908 = vrot.lane.b32.xlu0 %v1901, 111
    %v1909 = vpop.permute.xlu0 %1908
    %1910 = vrot.lane.b32.xlu0 %v1902, 111
    %v1911 = vpop.permute.xlu0 %1910
    %v1912 = vsel %vm466, %v1907, %v1909
    %v1913 = vsel %vm466, %v1909, %v1911
    %v1916 = vadd.f32 %v1836, %v1912
    %v1917 = vadd.f32 %v1837, %v1913
    %s1918 = sld [smem:[#allocation2 + $0x116]]
    %v1919 = vstv %s1918
    %v1920 = vmul.f32 %v1604, %v1919
    %v1921 = vmul.f32 %v1600, %v1919
    %v1922 = vmul.f32 %v1605, %v1919
    %1926 = vrot.lane.b32.xlu0 %v1920, 111
    %v1927 = vpop.permute.xlu0 %1926
    %1928 = vrot.lane.b32.xlu0 %v1921, 111
    %v1929 = vpop.permute.xlu0 %1928
    %1930 = vrot.lane.b32.xlu0 %v1922, 111
    %v1931 = vpop.permute.xlu0 %1930
    %v1932 = vsel %vm466, %v1927, %v1929
    %v1933 = vsel %vm466, %v1929, %v1931
    %v1936 = vadd.f32 %v1856, %v1932
    %v1937 = vadd.f32 %v1857, %v1933
    %s1938 = sld [smem:[#allocation2 + $0x196]]
    %v1939 = vstv %s1938
    %v1940 = vmul.f32 %v1604, %v1939
    %v1941 = vmul.f32 %v1600, %v1939
    %v1942 = vmul.f32 %v1605, %v1939
    %1946 = vrot.lane.b32.xlu0 %v1940, 111
    %v1947 = vpop.permute.xlu0 %1946
    %1948 = vrot.lane.b32.xlu0 %v1941, 111
    %v1949 = vpop.permute.xlu0 %1948
    %1950 = vrot.lane.b32.xlu0 %v1942, 111
    %v1951 = vpop.permute.xlu0 %1950
    %v1952 = vsel %vm466, %v1947, %v1949
    %v1953 = vsel %vm466, %v1949, %v1951
    %v1956 = vadd.f32 %v1876, %v1952
    %v1957 = vadd.f32 %v1877, %v1953
    %v1958 = vmul.f32 %v1604, %v534
    %v1959 = vmul.f32 %v1600, %v538
    %v1960 = vmul.f32 %v1605, %v536
    %s1961 = sld [smem:[#allocation2 + $0x17]]
    %v1962 = vstv %s1961
    %v1963 = vmul.f32 %v1958, %v1962
    %v1964 = vmul.f32 %v1959, %v1962
    %v1965 = vmul.f32 %v1960, %v1962
    %1969 = vrot.lane.b32.xlu0 %v1963, 110
    %v1970 = vpop.permute.xlu0 %1969
    %1971 = vrot.lane.b32.xlu0 %v1964, 110
    %v1972 = vpop.permute.xlu0 %1971
    %1973 = vrot.lane.b32.xlu0 %v1965, 110
    %v1974 = vpop.permute.xlu0 %1973
    %v1975 = vsel %vm559, %v1970, %v1972
    %v1976 = vsel %vm559, %v1972, %v1974
    %v1979 = vadd.f32 %v1896, %v1975
    %v1980 = vadd.f32 %v1897, %v1976
    %s1981 = sld [smem:[#allocation2 + $0x97]]
    %v1982 = vstv %s1981
    %v1983 = vmul.f32 %v1958, %v1982
    %v1984 = vmul.f32 %v1959, %v1982
    %v1985 = vmul.f32 %v1960, %v1982
    %1989 = vrot.lane.b32.xlu0 %v1983, 110
    %v1990 = vpop.permute.xlu0 %1989
    %1991 = vrot.lane.b32.xlu0 %v1984, 110
    %v1992 = vpop.permute.xlu0 %1991
    %1993 = vrot.lane.b32.xlu0 %v1985, 110
    %v1994 = vpop.permute.xlu0 %1993
    %v1995 = vsel %vm559, %v1990, %v1992
    %v1996 = vsel %vm559, %v1992, %v1994
    %v1999 = vadd.f32 %v1916, %v1995
    %v2000 = vadd.f32 %v1917, %v1996
    %s2001 = sld [smem:[#allocation2 + $0x117]]
    %v2002 = vstv %s2001
    %v2003 = vmul.f32 %v1958, %v2002
    %v2004 = vmul.f32 %v1959, %v2002
    %v2005 = vmul.f32 %v1960, %v2002
    %2009 = vrot.lane.b32.xlu0 %v2003, 110
    %v2010 = vpop.permute.xlu0 %2009
    %2011 = vrot.lane.b32.xlu0 %v2004, 110
    %v2012 = vpop.permute.xlu0 %2011
    %2013 = vrot.lane.b32.xlu0 %v2005, 110
    %v2014 = vpop.permute.xlu0 %2013
    %v2015 = vsel %vm559, %v2010, %v2012
    %v2016 = vsel %vm559, %v2012, %v2014
    %v2019 = vadd.f32 %v1936, %v2015
    %v2020 = vadd.f32 %v1937, %v2016
    %s2021 = sld [smem:[#allocation2 + $0x197]]
    %v2022 = vstv %s2021
    %v2023 = vmul.f32 %v1958, %v2022
    %v2024 = vmul.f32 %v1959, %v2022
    %v2025 = vmul.f32 %v1960, %v2022
    %2029 = vrot.lane.b32.xlu0 %v2023, 110
    %v2030 = vpop.permute.xlu0 %2029
    %2031 = vrot.lane.b32.xlu0 %v2024, 110
    %v2032 = vpop.permute.xlu0 %2031
    %2033 = vrot.lane.b32.xlu0 %v2025, 110
    %v2034 = vpop.permute.xlu0 %2033
    %v2035 = vsel %vm559, %v2030, %v2032
    %v2036 = vsel %vm559, %v2032, %v2034
    %v2039 = vadd.f32 %v1956, %v2035
    %v2040 = vadd.f32 %v1957, %v2036
    %v2041 = vmul.f32 %v1604, %v627
    %v2042 = vmul.f32 %v1600, %v631
    %v2043 = vmul.f32 %v1605, %v629
    %s2044 = sld [smem:[#allocation2 + $0x18]]
    %v2045 = vstv %s2044
    %v2046 = vmul.f32 %v2041, %v2045
    %v2047 = vmul.f32 %v2042, %v2045
    %v2048 = vmul.f32 %v2043, %v2045
    %2052 = vrot.lane.b32.xlu0 %v2046, 96
    %v2053 = vpop.permute.xlu0 %2052
    %2054 = vrot.lane.b32.xlu0 %v2047, 96
    %v2055 = vpop.permute.xlu0 %2054
    %2056 = vrot.lane.b32.xlu0 %v2048, 96
    %v2057 = vpop.permute.xlu0 %2056
    %v2058 = vsel %vm652, %v2053, %v2055
    %v2059 = vsel %vm652, %v2055, %v2057
    %v2062 = vadd.f32 %v1979, %v2058
    %v2063 = vadd.f32 %v1980, %v2059
    %s2064 = sld [smem:[#allocation2 + $0x98]]
    %v2065 = vstv %s2064
    %v2066 = vmul.f32 %v2041, %v2065
    %v2067 = vmul.f32 %v2042, %v2065
    %v2068 = vmul.f32 %v2043, %v2065
    %2072 = vrot.lane.b32.xlu0 %v2066, 96
    %v2073 = vpop.permute.xlu0 %2072
    %2074 = vrot.lane.b32.xlu0 %v2067, 96
    %v2075 = vpop.permute.xlu0 %2074
    %2076 = vrot.lane.b32.xlu0 %v2068, 96
    %v2077 = vpop.permute.xlu0 %2076
    %v2078 = vsel %vm652, %v2073, %v2075
    %v2079 = vsel %vm652, %v2075, %v2077
    %v2082 = vadd.f32 %v1999, %v2078
    %v2083 = vadd.f32 %v2000, %v2079
    %s2084 = sld [smem:[#allocation2 + $0x118]]
    %v2085 = vstv %s2084
    %v2086 = vmul.f32 %v2041, %v2085
    %v2087 = vmul.f32 %v2042, %v2085
    %v2088 = vmul.f32 %v2043, %v2085
    %2092 = vrot.lane.b32.xlu0 %v2086, 96
    %v2093 = vpop.permute.xlu0 %2092
    %2094 = vrot.lane.b32.xlu0 %v2087, 96
    %v2095 = vpop.permute.xlu0 %2094
    %2096 = vrot.lane.b32.xlu0 %v2088, 96
    %v2097 = vpop.permute.xlu0 %2096
    %v2098 = vsel %vm652, %v2093, %v2095
    %v2099 = vsel %vm652, %v2095, %v2097
    %v2102 = vadd.f32 %v2019, %v2098
    %v2103 = vadd.f32 %v2020, %v2099
    %s2104 = sld [smem:[#allocation2 + $0x198]]
    %v2105 = vstv %s2104
    %v2106 = vmul.f32 %v2041, %v2105
    %v2107 = vmul.f32 %v2042, %v2105
    %v2108 = vmul.f32 %v2043, %v2105
    %2112 = vrot.lane.b32.xlu0 %v2106, 96
    %v2113 = vpop.permute.xlu0 %2112
    %2114 = vrot.lane.b32.xlu0 %v2107, 96
    %v2115 = vpop.permute.xlu0 %2114
    %2116 = vrot.lane.b32.xlu0 %v2108, 96
    %v2117 = vpop.permute.xlu0 %2116
    %v2118 = vsel %vm652, %v2113, %v2115
    %v2119 = vsel %vm652, %v2115, %v2117
    %v2122 = vadd.f32 %v2039, %v2118
    %v2123 = vadd.f32 %v2040, %v2119
    %s2124 = sld [smem:[#allocation2 + $0x19]]
    %v2125 = vstv %s2124
    %v2126 = vmul.f32 %v1604, %v2125
    %v2127 = vmul.f32 %v1600, %v2125
    %v2128 = vmul.f32 %v1605, %v2125
    %2132 = vrot.lane.b32.xlu0 %v2126, 95
    %v2133 = vpop.permute.xlu0 %2132
    %2134 = vrot.lane.b32.xlu0 %v2127, 95
    %v2135 = vpop.permute.xlu0 %2134
    %2136 = vrot.lane.b32.xlu0 %v2128, 95
    %v2137 = vpop.permute.xlu0 %2136
    %v2138 = vsel %vm733, %v2133, %v2135
    %v2139 = vsel %vm733, %v2135, %v2137
    %v2142 = vadd.f32 %v2062, %v2138
    %v2143 = vadd.f32 %v2063, %v2139
    %s2144 = sld [smem:[#allocation2 + $0x99]]
    %v2145 = vstv %s2144
    %v2146 = vmul.f32 %v1604, %v2145
    %v2147 = vmul.f32 %v1600, %v2145
    %v2148 = vmul.f32 %v1605, %v2145
    %2152 = vrot.lane.b32.xlu0 %v2146, 95
    %v2153 = vpop.permute.xlu0 %2152
    %2154 = vrot.lane.b32.xlu0 %v2147, 95
    %v2155 = vpop.permute.xlu0 %2154
    %2156 = vrot.lane.b32.xlu0 %v2148, 95
    %v2157 = vpop.permute.xlu0 %2156
    %v2158 = vsel %vm733, %v2153, %v2155
    %v2159 = vsel %vm733, %v2155, %v2157
    %v2162 = vadd.f32 %v2082, %v2158
    %v2163 = vadd.f32 %v2083, %v2159
    %s2164 = sld [smem:[#allocation2 + $0x119]]
    %v2165 = vstv %s2164
    %v2166 = vmul.f32 %v1604, %v2165
    %v2167 = vmul.f32 %v1600, %v2165
    %v2168 = vmul.f32 %v1605, %v2165
    %2172 = vrot.lane.b32.xlu0 %v2166, 95
    %v2173 = vpop.permute.xlu0 %2172
    %2174 = vrot.lane.b32.xlu0 %v2167, 95
    %v2175 = vpop.permute.xlu0 %2174
    %2176 = vrot.lane.b32.xlu0 %v2168, 95
    %v2177 = vpop.permute.xlu0 %2176
    %v2178 = vsel %vm733, %v2173, %v2175
    %v2179 = vsel %vm733, %v2175, %v2177
    %v2182 = vadd.f32 %v2102, %v2178
    %v2183 = vadd.f32 %v2103, %v2179
    %s2184 = sld [smem:[#allocation2 + $0x199]]
    %v2185 = vstv %s2184
    %v2186 = vmul.f32 %v1604, %v2185
    %v2187 = vmul.f32 %v1600, %v2185
    %v2188 = vmul.f32 %v1605, %v2185
    %2192 = vrot.lane.b32.xlu0 %v2186, 95
    %v2193 = vpop.permute.xlu0 %2192
    %2194 = vrot.lane.b32.xlu0 %v2187, 95
    %v2195 = vpop.permute.xlu0 %2194
    %2196 = vrot.lane.b32.xlu0 %v2188, 95
    %v2197 = vpop.permute.xlu0 %2196
    %v2198 = vsel %vm733, %v2193, %v2195
    %v2199 = vsel %vm733, %v2195, %v2197
    %v2202 = vadd.f32 %v2122, %v2198
    %v2203 = vadd.f32 %v2123, %v2199
    %v2204 = vmul.f32 %v1604, %v801
    %v2205 = vmul.f32 %v1600, %v805
    %v2206 = vmul.f32 %v1605, %v803
    %s2207 = sld [smem:[#allocation2 + $0x1a]]
    %v2208 = vstv %s2207
    %v2209 = vmul.f32 %v2204, %v2208
    %v2210 = vmul.f32 %v2205, %v2208
    %v2211 = vmul.f32 %v2206, %v2208
    %2215 = vrot.lane.b32.xlu0 %v2209, 94
    %v2216 = vpop.permute.xlu0 %2215
    %2217 = vrot.lane.b32.xlu0 %v2210, 94
    %v2218 = vpop.permute.xlu0 %2217
    %2219 = vrot.lane.b32.xlu0 %v2211, 94
    %v2220 = vpop.permute.xlu0 %2219
    %v2221 = vsel %vm826, %v2216, %v2218
    %v2222 = vsel %vm826, %v2218, %v2220
    %v2225 = vadd.f32 %v2142, %v2221
    %v2226 = vadd.f32 %v2143, %v2222
    %s2227 = sld [smem:[#allocation2 + $0x9a]]
    %v2228 = vstv %s2227
    %v2229 = vmul.f32 %v2204, %v2228
    %v2230 = vmul.f32 %v2205, %v2228
    %v2231 = vmul.f32 %v2206, %v2228
    %2235 = vrot.lane.b32.xlu0 %v2229, 94
    %v2236 = vpop.permute.xlu0 %2235
    %2237 = vrot.lane.b32.xlu0 %v2230, 94
    %v2238 = vpop.permute.xlu0 %2237
    %2239 = vrot.lane.b32.xlu0 %v2231, 94
    %v2240 = vpop.permute.xlu0 %2239
    %v2241 = vsel %vm826, %v2236, %v2238
    %v2242 = vsel %vm826, %v2238, %v2240
    %v2245 = vadd.f32 %v2162, %v2241
    %v2246 = vadd.f32 %v2163, %v2242
    %s2247 = sld [smem:[#allocation2 + $0x11a]]
    %v2248 = vstv %s2247
    %v2249 = vmul.f32 %v2204, %v2248
    %v2250 = vmul.f32 %v2205, %v2248
    %v2251 = vmul.f32 %v2206, %v2248
    %2255 = vrot.lane.b32.xlu0 %v2249, 94
    %v2256 = vpop.permute.xlu0 %2255
    %2257 = vrot.lane.b32.xlu0 %v2250, 94
    %v2258 = vpop.permute.xlu0 %2257
    %2259 = vrot.lane.b32.xlu0 %v2251, 94
    %v2260 = vpop.permute.xlu0 %2259
    %v2261 = vsel %vm826, %v2256, %v2258
    %v2262 = vsel %vm826, %v2258, %v2260
    %v2265 = vadd.f32 %v2182, %v2261
    %v2266 = vadd.f32 %v2183, %v2262
    %s2267 = sld [smem:[#allocation2 + $0x19a]]
    %v2268 = vstv %s2267
    %v2269 = vmul.f32 %v2204, %v2268
    %v2270 = vmul.f32 %v2205, %v2268
    %v2271 = vmul.f32 %v2206, %v2268
    %2275 = vrot.lane.b32.xlu0 %v2269, 94
    %v2276 = vpop.permute.xlu0 %2275
    %2277 = vrot.lane.b32.xlu0 %v2270, 94
    %v2278 = vpop.permute.xlu0 %2277
    %2279 = vrot.lane.b32.xlu0 %v2271, 94
    %v2280 = vpop.permute.xlu0 %2279
    %v2281 = vsel %vm826, %v2276, %v2278
    %v2282 = vsel %vm826, %v2278, %v2280
    %v2285 = vadd.f32 %v2202, %v2281
    %v2286 = vadd.f32 %v2203, %v2282
    %v2287 = vperm.slane %v139, 3
    %v2288 = vperm.slane %v139, 7
    %v2289 = vperm.slane %v140, 3
    %v2290 = vperm.slane %v140, 7
    %v2291 = vsel %vm149, %v2289, %v2287
    %v2292 = vsel %vm149, %v2290, %v2288
    %2293 = vrot.lane.b32.xlu0 %v2291, 17
    %v2294 = vpop.permute.xlu0 %2293
    %2295 = vrot.lane.b32.xlu0 %v2292, 17
    %v2296 = vpop.permute.xlu0 %2295
    %v2297 = vsel %vm156, %v2294, %v2296
    %v2301 = vsel %vm156, 0.0, %v2294
    %v2302 = vsel %vm156, %v2296, 0.0
    %v2303 = vmul.f32 %v2301, %v131
    %v2304 = vmul.f32 %v2297, %v132
    %s2305 = sld [smem:[#allocation2 + $0x1b]]
    %v2306 = vstv %s2305
    %v2307 = vmul.f32 %v2303, %v2306
    %v2308 = vmul.f32 %v2304, %v2306
    %v2309 = vadd.f32 %v2225, %v2307
    %v2310 = vadd.f32 %v2226, %v2308
    %s2311 = sld [smem:[#allocation2 + $0x9b]]
    %v2312 = vstv %s2311
    %v2313 = vmul.f32 %v2303, %v2312
    %v2314 = vmul.f32 %v2304, %v2312
    %v2315 = vadd.f32 %v2245, %v2313
    %v2316 = vadd.f32 %v2246, %v2314
    %s2317 = sld [smem:[#allocation2 + $0x11b]]
    %v2318 = vstv %s2317
    %v2319 = vmul.f32 %v2303, %v2318
    %v2320 = vmul.f32 %v2304, %v2318
    %v2321 = vadd.f32 %v2265, %v2319
    %v2322 = vadd.f32 %v2266, %v2320
    %s2323 = sld [smem:[#allocation2 + $0x19b]]
    %v2324 = vstv %s2323
    %v2325 = vmul.f32 %v2303, %v2324
    %v2326 = vmul.f32 %v2304, %v2324
    %v2327 = vadd.f32 %v2285, %v2325
    %v2328 = vadd.f32 %v2286, %v2326
    %s2329 = sld [smem:[#allocation2 + $0x1c]]
    %v2330 = vstv %s2329
    %v2331 = vmul.f32 %v2301, %v2330
    %v2332 = vmul.f32 %v2297, %v2330
    %v2333 = vmul.f32 %v2302, %v2330
    %2337 = vrot.lane.b32.xlu0 %v2331, 127
    %v2338 = vpop.permute.xlu0 %2337
    %2339 = vrot.lane.b32.xlu0 %v2332, 127
    %v2340 = vpop.permute.xlu0 %2339
    %2341 = vrot.lane.b32.xlu0 %v2333, 127
    %v2342 = vpop.permute.xlu0 %2341
    %v2343 = vsel %vm195, %v2338, %v2340
    %v2344 = vsel %vm195, %v2340, %v2342
    %v2347 = vadd.f32 %v2309, %v2343
    %v2348 = vadd.f32 %v2310, %v2344
    %s2349 = sld [smem:[#allocation2 + $0x9c]]
    %v2350 = vstv %s2349
    %v2351 = vmul.f32 %v2301, %v2350
    %v2352 = vmul.f32 %v2297, %v2350
    %v2353 = vmul.f32 %v2302, %v2350
    %2357 = vrot.lane.b32.xlu0 %v2351, 127
    %v2358 = vpop.permute.xlu0 %2357
    %2359 = vrot.lane.b32.xlu0 %v2352, 127
    %v2360 = vpop.permute.xlu0 %2359
    %2361 = vrot.lane.b32.xlu0 %v2353, 127
    %v2362 = vpop.permute.xlu0 %2361
    %v2363 = vsel %vm195, %v2358, %v2360
    %v2364 = vsel %vm195, %v2360, %v2362
    %v2367 = vadd.f32 %v2315, %v2363
    %v2368 = vadd.f32 %v2316, %v2364
    %s2369 = sld [smem:[#allocation2 + $0x11c]]
    %v2370 = vstv %s2369
    %v2371 = vmul.f32 %v2301, %v2370
    %v2372 = vmul.f32 %v2297, %v2370
    %v2373 = vmul.f32 %v2302, %v2370
    %2377 = vrot.lane.b32.xlu0 %v2371, 127
    %v2378 = vpop.permute.xlu0 %2377
    %2379 = vrot.lane.b32.xlu0 %v2372, 127
    %v2380 = vpop.permute.xlu0 %2379
    %2381 = vrot.lane.b32.xlu0 %v2373, 127
    %v2382 = vpop.permute.xlu0 %2381
    %v2383 = vsel %vm195, %v2378, %v2380
    %v2384 = vsel %vm195, %v2380, %v2382
    %v2387 = vadd.f32 %v2321, %v2383
    %v2388 = vadd.f32 %v2322, %v2384
    %s2389 = sld [smem:[#allocation2 + $0x19c]]
    %v2390 = vstv %s2389
    %v2391 = vmul.f32 %v2301, %v2390
    %v2392 = vmul.f32 %v2297, %v2390
    %v2393 = vmul.f32 %v2302, %v2390
    %2397 = vrot.lane.b32.xlu0 %v2391, 127
    %v2398 = vpop.permute.xlu0 %2397
    %2399 = vrot.lane.b32.xlu0 %v2392, 127
    %v2400 = vpop.permute.xlu0 %2399
    %2401 = vrot.lane.b32.xlu0 %v2393, 127
    %v2402 = vpop.permute.xlu0 %2401
    %v2403 = vsel %vm195, %v2398, %v2400
    %v2404 = vsel %vm195, %v2400, %v2402
    %v2407 = vadd.f32 %v2327, %v2403
    %v2408 = vadd.f32 %v2328, %v2404
    %v2409 = vmul.f32 %v2301, %v265
    %v2410 = vmul.f32 %v2297, %v269
    %v2411 = vmul.f32 %v2302, %v267
    %s2412 = sld [smem:[#allocation2 + $0x1d]]
    %v2413 = vstv %s2412
    %v2414 = vmul.f32 %v2409, %v2413
    %v2415 = vmul.f32 %v2410, %v2413
    %v2416 = vmul.f32 %v2411, %v2413
    %2420 = vrot.lane.b32.xlu0 %v2414, 126
    %v2421 = vpop.permute.xlu0 %2420
    %2422 = vrot.lane.b32.xlu0 %v2415, 126
    %v2423 = vpop.permute.xlu0 %2422
    %2424 = vrot.lane.b32.xlu0 %v2416, 126
    %v2425 = vpop.permute.xlu0 %2424
    %v2426 = vsel %vm290, %v2421, %v2423
    %v2427 = vsel %vm290, %v2423, %v2425
    %v2430 = vadd.f32 %v2347, %v2426
    %v2431 = vadd.f32 %v2348, %v2427
    %s2432 = sld [smem:[#allocation2 + $0x9d]]
    %v2433 = vstv %s2432
    %v2434 = vmul.f32 %v2409, %v2433
    %v2435 = vmul.f32 %v2410, %v2433
    %v2436 = vmul.f32 %v2411, %v2433
    %2440 = vrot.lane.b32.xlu0 %v2434, 126
    %v2441 = vpop.permute.xlu0 %2440
    %2442 = vrot.lane.b32.xlu0 %v2435, 126
    %v2443 = vpop.permute.xlu0 %2442
    %2444 = vrot.lane.b32.xlu0 %v2436, 126
    %v2445 = vpop.permute.xlu0 %2444
    %v2446 = vsel %vm290, %v2441, %v2443
    %v2447 = vsel %vm290, %v2443, %v2445
    %v2450 = vadd.f32 %v2367, %v2446
    %v2451 = vadd.f32 %v2368, %v2447
    %s2452 = sld [smem:[#allocation2 + $0x11d]]
    %v2453 = vstv %s2452
    %v2454 = vmul.f32 %v2409, %v2453
    %v2455 = vmul.f32 %v2410, %v2453
    %v2456 = vmul.f32 %v2411, %v2453
    %2460 = vrot.lane.b32.xlu0 %v2454, 126
    %v2461 = vpop.permute.xlu0 %2460
    %2462 = vrot.lane.b32.xlu0 %v2455, 126
    %v2463 = vpop.permute.xlu0 %2462
    %2464 = vrot.lane.b32.xlu0 %v2456, 126
    %v2465 = vpop.permute.xlu0 %2464
    %v2466 = vsel %vm290, %v2461, %v2463
    %v2467 = vsel %vm290, %v2463, %v2465
    %v2470 = vadd.f32 %v2387, %v2466
    %v2471 = vadd.f32 %v2388, %v2467
    %s2472 = sld [smem:[#allocation2 + $0x19d]]
    %v2473 = vstv %s2472
    %v2474 = vmul.f32 %v2409, %v2473
    %v2475 = vmul.f32 %v2410, %v2473
    %v2476 = vmul.f32 %v2411, %v2473
    %2480 = vrot.lane.b32.xlu0 %v2474, 126
    %v2481 = vpop.permute.xlu0 %2480
    %2482 = vrot.lane.b32.xlu0 %v2475, 126
    %v2483 = vpop.permute.xlu0 %2482
    %2484 = vrot.lane.b32.xlu0 %v2476, 126
    %v2485 = vpop.permute.xlu0 %2484
    %v2486 = vsel %vm290, %v2481, %v2483
    %v2487 = vsel %vm290, %v2483, %v2485
    %v2490 = vadd.f32 %v2407, %v2486
    %v2491 = vadd.f32 %v2408, %v2487
    %v2492 = vmul.f32 %v2301, %v360
    %v2493 = vmul.f32 %v2297, %v364
    %v2494 = vmul.f32 %v2302, %v362
    %s2495 = sld [smem:[#allocation2 + $0x1e]]
    %v2496 = vstv %s2495
    %v2497 = vmul.f32 %v2492, %v2496
    %v2498 = vmul.f32 %v2493, %v2496
    %v2499 = vmul.f32 %v2494, %v2496
    %2503 = vrot.lane.b32.xlu0 %v2497, 112
    %v2504 = vpop.permute.xlu0 %2503
    %2505 = vrot.lane.b32.xlu0 %v2498, 112
    %v2506 = vpop.permute.xlu0 %2505
    %2507 = vrot.lane.b32.xlu0 %v2499, 112
    %v2508 = vpop.permute.xlu0 %2507
    %v2509 = vsel %vm385, %v2504, %v2506
    %v2510 = vsel %vm385, %v2506, %v2508
    %v2513 = vadd.f32 %v2430, %v2509
    %v2514 = vadd.f32 %v2431, %v2510
    %s2515 = sld [smem:[#allocation2 + $0x9e]]
    %v2516 = vstv %s2515
    %v2517 = vmul.f32 %v2492, %v2516
    %v2518 = vmul.f32 %v2493, %v2516
    %v2519 = vmul.f32 %v2494, %v2516
    %2523 = vrot.lane.b32.xlu0 %v2517, 112
    %v2524 = vpop.permute.xlu0 %2523
    %2525 = vrot.lane.b32.xlu0 %v2518, 112
    %v2526 = vpop.permute.xlu0 %2525
    %2527 = vrot.lane.b32.xlu0 %v2519, 112
    %v2528 = vpop.permute.xlu0 %2527
    %v2529 = vsel %vm385, %v2524, %v2526
    %v2530 = vsel %vm385, %v2526, %v2528
    %v2533 = vadd.f32 %v2450, %v2529
    %v2534 = vadd.f32 %v2451, %v2530
    %s2535 = sld [smem:[#allocation2 + $0x11e]]
    %v2536 = vstv %s2535
    %v2537 = vmul.f32 %v2492, %v2536
    %v2538 = vmul.f32 %v2493, %v2536
    %v2539 = vmul.f32 %v2494, %v2536
    %2543 = vrot.lane.b32.xlu0 %v2537, 112
    %v2544 = vpop.permute.xlu0 %2543
    %2545 = vrot.lane.b32.xlu0 %v2538, 112
    %v2546 = vpop.permute.xlu0 %2545
    %2547 = vrot.lane.b32.xlu0 %v2539, 112
    %v2548 = vpop.permute.xlu0 %2547
    %v2549 = vsel %vm385, %v2544, %v2546
    %v2550 = vsel %vm385, %v2546, %v2548
    %v2553 = vadd.f32 %v2470, %v2549
    %v2554 = vadd.f32 %v2471, %v2550
    %s2555 = sld [smem:[#allocation2 + $0x19e]]
    %v2556 = vstv %s2555
    %v2557 = vmul.f32 %v2492, %v2556
    %v2558 = vmul.f32 %v2493, %v2556
    %v2559 = vmul.f32 %v2494, %v2556
    %2563 = vrot.lane.b32.xlu0 %v2557, 112
    %v2564 = vpop.permute.xlu0 %2563
    %2565 = vrot.lane.b32.xlu0 %v2558, 112
    %v2566 = vpop.permute.xlu0 %2565
    %2567 = vrot.lane.b32.xlu0 %v2559, 112
    %v2568 = vpop.permute.xlu0 %2567
    %v2569 = vsel %vm385, %v2564, %v2566
    %v2570 = vsel %vm385, %v2566, %v2568
    %v2573 = vadd.f32 %v2490, %v2569
    %v2574 = vadd.f32 %v2491, %v2570
    %s2575 = sld [smem:[#allocation2 + $0x1f]]
    %v2576 = vstv %s2575
    %v2577 = vmul.f32 %v2301, %v2576
    %v2578 = vmul.f32 %v2297, %v2576
    %v2579 = vmul.f32 %v2302, %v2576
    %2583 = vrot.lane.b32.xlu0 %v2577, 111
    %v2584 = vpop.permute.xlu0 %2583
    %2585 = vrot.lane.b32.xlu0 %v2578, 111
    %v2586 = vpop.permute.xlu0 %2585
    %2587 = vrot.lane.b32.xlu0 %v2579, 111
    %v2588 = vpop.permute.xlu0 %2587
    %v2589 = vsel %vm466, %v2584, %v2586
    %v2590 = vsel %vm466, %v2586, %v2588
    %v2593 = vadd.f32 %v2513, %v2589
    %v2594 = vadd.f32 %v2514, %v2590
    %s2595 = sld [smem:[#allocation2 + $0x9f]]
    %v2596 = vstv %s2595
    %v2597 = vmul.f32 %v2301, %v2596
    %v2598 = vmul.f32 %v2297, %v2596
    %v2599 = vmul.f32 %v2302, %v2596
    %2603 = vrot.lane.b32.xlu0 %v2597, 111
    %v2604 = vpop.permute.xlu0 %2603
    %2605 = vrot.lane.b32.xlu0 %v2598, 111
    %v2606 = vpop.permute.xlu0 %2605
    %2607 = vrot.lane.b32.xlu0 %v2599, 111
    %v2608 = vpop.permute.xlu0 %2607
    %v2609 = vsel %vm466, %v2604, %v2606
    %v2610 = vsel %vm466, %v2606, %v2608
    %v2613 = vadd.f32 %v2533, %v2609
    %v2614 = vadd.f32 %v2534, %v2610
    %s2615 = sld [smem:[#allocation2 + $0x11f]]
    %v2616 = vstv %s2615
    %v2617 = vmul.f32 %v2301, %v2616
    %v2618 = vmul.f32 %v2297, %v2616
    %v2619 = vmul.f32 %v2302, %v2616
    %2623 = vrot.lane.b32.xlu0 %v2617, 111
    %v2624 = vpop.permute.xlu0 %2623
    %2625 = vrot.lane.b32.xlu0 %v2618, 111
    %v2626 = vpop.permute.xlu0 %2625
    %2627 = vrot.lane.b32.xlu0 %v2619, 111
    %v2628 = vpop.permute.xlu0 %2627
    %v2629 = vsel %vm466, %v2624, %v2626
    %v2630 = vsel %vm466, %v2626, %v2628
    %v2633 = vadd.f32 %v2553, %v2629
    %v2634 = vadd.f32 %v2554, %v2630
    %s2635 = sld [smem:[#allocation2 + $0x19f]]
    %v2636 = vstv %s2635
    %v2637 = vmul.f32 %v2301, %v2636
    %v2638 = vmul.f32 %v2297, %v2636
    %v2639 = vmul.f32 %v2302, %v2636
    %2643 = vrot.lane.b32.xlu0 %v2637, 111
    %v2644 = vpop.permute.xlu0 %2643
    %2645 = vrot.lane.b32.xlu0 %v2638, 111
    %v2646 = vpop.permute.xlu0 %2645
    %2647 = vrot.lane.b32.xlu0 %v2639, 111
    %v2648 = vpop.permute.xlu0 %2647
    %v2649 = vsel %vm466, %v2644, %v2646
    %v2650 = vsel %vm466, %v2646, %v2648
    %v2653 = vadd.f32 %v2573, %v2649
    %v2654 = vadd.f32 %v2574, %v2650
    %v2655 = vmul.f32 %v2301, %v534
    %v2656 = vmul.f32 %v2297, %v538
    %v2657 = vmul.f32 %v2302, %v536
    %s2658 = sld [smem:[#allocation2 + $0x20]]
    %v2659 = vstv %s2658
    %v2660 = vmul.f32 %v2655, %v2659
    %v2661 = vmul.f32 %v2656, %v2659
    %v2662 = vmul.f32 %v2657, %v2659
    %2666 = vrot.lane.b32.xlu0 %v2660, 110
    %v2667 = vpop.permute.xlu0 %2666
    %2668 = vrot.lane.b32.xlu0 %v2661, 110
    %v2669 = vpop.permute.xlu0 %2668
    %2670 = vrot.lane.b32.xlu0 %v2662, 110
    %v2671 = vpop.permute.xlu0 %2670
    %v2672 = vsel %vm559, %v2667, %v2669
    %v2673 = vsel %vm559, %v2669, %v2671
    %v2676 = vadd.f32 %v2593, %v2672
    %v2677 = vadd.f32 %v2594, %v2673
    %s2678 = sld [smem:[#allocation2 + $0xa0]]
    %v2679 = vstv %s2678
    %v2680 = vmul.f32 %v2655, %v2679
    %v2681 = vmul.f32 %v2656, %v2679
    %v2682 = vmul.f32 %v2657, %v2679
    %2686 = vrot.lane.b32.xlu0 %v2680, 110
    %v2687 = vpop.permute.xlu0 %2686
    %2688 = vrot.lane.b32.xlu0 %v2681, 110
    %v2689 = vpop.permute.xlu0 %2688
    %2690 = vrot.lane.b32.xlu0 %v2682, 110
    %v2691 = vpop.permute.xlu0 %2690
    %v2692 = vsel %vm559, %v2687, %v2689
    %v2693 = vsel %vm559, %v2689, %v2691
    %v2696 = vadd.f32 %v2613, %v2692
    %v2697 = vadd.f32 %v2614, %v2693
    %s2698 = sld [smem:[#allocation2 + $0x120]]
    %v2699 = vstv %s2698
    %v2700 = vmul.f32 %v2655, %v2699
    %v2701 = vmul.f32 %v2656, %v2699
    %v2702 = vmul.f32 %v2657, %v2699
    %2706 = vrot.lane.b32.xlu0 %v2700, 110
    %v2707 = vpop.permute.xlu0 %2706
    %2708 = vrot.lane.b32.xlu0 %v2701, 110
    %v2709 = vpop.permute.xlu0 %2708
    %2710 = vrot.lane.b32.xlu0 %v2702, 110
    %v2711 = vpop.permute.xlu0 %2710
    %v2712 = vsel %vm559, %v2707, %v2709
    %v2713 = vsel %vm559, %v2709, %v2711
    %v2716 = vadd.f32 %v2633, %v2712
    %v2717 = vadd.f32 %v2634, %v2713
    %s2718 = sld [smem:[#allocation2 + $0x1a0]]
    %v2719 = vstv %s2718
    %v2720 = vmul.f32 %v2655, %v2719
    %v2721 = vmul.f32 %v2656, %v2719
    %v2722 = vmul.f32 %v2657, %v2719
    %2726 = vrot.lane.b32.xlu0 %v2720, 110
    %v2727 = vpop.permute.xlu0 %2726
    %2728 = vrot.lane.b32.xlu0 %v2721, 110
    %v2729 = vpop.permute.xlu0 %2728
    %2730 = vrot.lane.b32.xlu0 %v2722, 110
    %v2731 = vpop.permute.xlu0 %2730
    %v2732 = vsel %vm559, %v2727, %v2729
    %v2733 = vsel %vm559, %v2729, %v2731
    %v2736 = vadd.f32 %v2653, %v2732
    %v2737 = vadd.f32 %v2654, %v2733
    %v2738 = vmul.f32 %v2301, %v627
    %v2739 = vmul.f32 %v2297, %v631
    %v2740 = vmul.f32 %v2302, %v629
    %s2741 = sld [smem:[#allocation2 + $0x21]]
    %v2742 = vstv %s2741
    %v2743 = vmul.f32 %v2738, %v2742
    %v2744 = vmul.f32 %v2739, %v2742
    %v2745 = vmul.f32 %v2740, %v2742
    %2749 = vrot.lane.b32.xlu0 %v2743, 96
    %v2750 = vpop.permute.xlu0 %2749
    %2751 = vrot.lane.b32.xlu0 %v2744, 96
    %v2752 = vpop.permute.xlu0 %2751
    %2753 = vrot.lane.b32.xlu0 %v2745, 96
    %v2754 = vpop.permute.xlu0 %2753
    %v2755 = vsel %vm652, %v2750, %v2752
    %v2756 = vsel %vm652, %v2752, %v2754
    %v2759 = vadd.f32 %v2676, %v2755
    %v2760 = vadd.f32 %v2677, %v2756
    %s2761 = sld [smem:[#allocation2 + $0xa1]]
    %v2762 = vstv %s2761
    %v2763 = vmul.f32 %v2738, %v2762
    %v2764 = vmul.f32 %v2739, %v2762
    %v2765 = vmul.f32 %v2740, %v2762
    %2769 = vrot.lane.b32.xlu0 %v2763, 96
    %v2770 = vpop.permute.xlu0 %2769
    %2771 = vrot.lane.b32.xlu0 %v2764, 96
    %v2772 = vpop.permute.xlu0 %2771
    %2773 = vrot.lane.b32.xlu0 %v2765, 96
    %v2774 = vpop.permute.xlu0 %2773
    %v2775 = vsel %vm652, %v2770, %v2772
    %v2776 = vsel %vm652, %v2772, %v2774
    %v2779 = vadd.f32 %v2696, %v2775
    %v2780 = vadd.f32 %v2697, %v2776
    %s2781 = sld [smem:[#allocation2 + $0x121]]
    %v2782 = vstv %s2781
    %v2783 = vmul.f32 %v2738, %v2782
    %v2784 = vmul.f32 %v2739, %v2782
    %v2785 = vmul.f32 %v2740, %v2782
    %2789 = vrot.lane.b32.xlu0 %v2783, 96
    %v2790 = vpop.permute.xlu0 %2789
    %2791 = vrot.lane.b32.xlu0 %v2784, 96
    %v2792 = vpop.permute.xlu0 %2791
    %2793 = vrot.lane.b32.xlu0 %v2785, 96
    %v2794 = vpop.permute.xlu0 %2793
    %v2795 = vsel %vm652, %v2790, %v2792
    %v2796 = vsel %vm652, %v2792, %v2794
    %v2799 = vadd.f32 %v2716, %v2795
    %v2800 = vadd.f32 %v2717, %v2796
    %s2801 = sld [smem:[#allocation2 + $0x1a1]]
    %v2802 = vstv %s2801
    %v2803 = vmul.f32 %v2738, %v2802
    %v2804 = vmul.f32 %v2739, %v2802
    %v2805 = vmul.f32 %v2740, %v2802
    %2809 = vrot.lane.b32.xlu0 %v2803, 96
    %v2810 = vpop.permute.xlu0 %2809
    %2811 = vrot.lane.b32.xlu0 %v2804, 96
    %v2812 = vpop.permute.xlu0 %2811
    %2813 = vrot.lane.b32.xlu0 %v2805, 96
    %v2814 = vpop.permute.xlu0 %2813
    %v2815 = vsel %vm652, %v2810, %v2812
    %v2816 = vsel %vm652, %v2812, %v2814
    %v2819 = vadd.f32 %v2736, %v2815
    %v2820 = vadd.f32 %v2737, %v2816
    %s2821 = sld [smem:[#allocation2 + $0x22]]
    %v2822 = vstv %s2821
    %v2823 = vmul.f32 %v2301, %v2822
    %v2824 = vmul.f32 %v2297, %v2822
    %v2825 = vmul.f32 %v2302, %v2822
    %2829 = vrot.lane.b32.xlu0 %v2823, 95
    %v2830 = vpop.permute.xlu0 %2829
    %2831 = vrot.lane.b32.xlu0 %v2824, 95
    %v2832 = vpop.permute.xlu0 %2831
    %2833 = vrot.lane.b32.xlu0 %v2825, 95
    %v2834 = vpop.permute.xlu0 %2833
    %v2835 = vsel %vm733, %v2830, %v2832
    %v2836 = vsel %vm733, %v2832, %v2834
    %v2839 = vadd.f32 %v2759, %v2835
    %v2840 = vadd.f32 %v2760, %v2836
    %s2841 = sld [smem:[#allocation2 + $0xa2]]
    %v2842 = vstv %s2841
    %v2843 = vmul.f32 %v2301, %v2842
    %v2844 = vmul.f32 %v2297, %v2842
    %v2845 = vmul.f32 %v2302, %v2842
    %2849 = vrot.lane.b32.xlu0 %v2843, 95
    %v2850 = vpop.permute.xlu0 %2849
    %2851 = vrot.lane.b32.xlu0 %v2844, 95
    %v2852 = vpop.permute.xlu0 %2851
    %2853 = vrot.lane.b32.xlu0 %v2845, 95
    %v2854 = vpop.permute.xlu0 %2853
    %v2855 = vsel %vm733, %v2850, %v2852
    %v2856 = vsel %vm733, %v2852, %v2854
    %v2859 = vadd.f32 %v2779, %v2855
    %v2860 = vadd.f32 %v2780, %v2856
    %s2861 = sld [smem:[#allocation2 + $0x122]]
    %v2862 = vstv %s2861
    %v2863 = vmul.f32 %v2301, %v2862
    %v2864 = vmul.f32 %v2297, %v2862
    %v2865 = vmul.f32 %v2302, %v2862
    %2869 = vrot.lane.b32.xlu0 %v2863, 95
    %v2870 = vpop.permute.xlu0 %2869
    %2871 = vrot.lane.b32.xlu0 %v2864, 95
    %v2872 = vpop.permute.xlu0 %2871
    %2873 = vrot.lane.b32.xlu0 %v2865, 95
    %v2874 = vpop.permute.xlu0 %2873
    %v2875 = vsel %vm733, %v2870, %v2872
    %v2876 = vsel %vm733, %v2872, %v2874
    %v2879 = vadd.f32 %v2799, %v2875
    %v2880 = vadd.f32 %v2800, %v2876
    %s2881 = sld [smem:[#allocation2 + $0x1a2]]
    %v2882 = vstv %s2881
    %v2883 = vmul.f32 %v2301, %v2882
    %v2884 = vmul.f32 %v2297, %v2882
    %v2885 = vmul.f32 %v2302, %v2882
    %2889 = vrot.lane.b32.xlu0 %v2883, 95
    %v2890 = vpop.permute.xlu0 %2889
    %2891 = vrot.lane.b32.xlu0 %v2884, 95
    %v2892 = vpop.permute.xlu0 %2891
    %2893 = vrot.lane.b32.xlu0 %v2885, 95
    %v2894 = vpop.permute.xlu0 %2893
    %v2895 = vsel %vm733, %v2890, %v2892
    %v2896 = vsel %vm733, %v2892, %v2894
    %v2899 = vadd.f32 %v2819, %v2895
    %v2900 = vadd.f32 %v2820, %v2896
    %v2901 = vmul.f32 %v2301, %v801
    %v2902 = vmul.f32 %v2297, %v805
    %v2903 = vmul.f32 %v2302, %v803
    %s2904 = sld [smem:[#allocation2 + $0x23]]
    %v2905 = vstv %s2904
    %v2906 = vmul.f32 %v2901, %v2905
    %v2907 = vmul.f32 %v2902, %v2905
    %v2908 = vmul.f32 %v2903, %v2905
    %2912 = vrot.lane.b32.xlu0 %v2906, 94
    %v2913 = vpop.permute.xlu0 %2912
    %2914 = vrot.lane.b32.xlu0 %v2907, 94
    %v2915 = vpop.permute.xlu0 %2914
    %2916 = vrot.lane.b32.xlu0 %v2908, 94
    %v2917 = vpop.permute.xlu0 %2916
    %v2918 = vsel %vm826, %v2913, %v2915
    %v2919 = vsel %vm826, %v2915, %v2917
    %v2922 = vadd.f32 %v2839, %v2918
    %v2923 = vadd.f32 %v2840, %v2919
    %s2924 = sld [smem:[#allocation2 + $0xa3]]
    %v2925 = vstv %s2924
    %v2926 = vmul.f32 %v2901, %v2925
    %v2927 = vmul.f32 %v2902, %v2925
    %v2928 = vmul.f32 %v2903, %v2925
    %2932 = vrot.lane.b32.xlu0 %v2926, 94
    %v2933 = vpop.permute.xlu0 %2932
    %2934 = vrot.lane.b32.xlu0 %v2927, 94
    %v2935 = vpop.permute.xlu0 %2934
    %2936 = vrot.lane.b32.xlu0 %v2928, 94
    %v2937 = vpop.permute.xlu0 %2936
    %v2938 = vsel %vm826, %v2933, %v2935
    %v2939 = vsel %vm826, %v2935, %v2937
    %v2942 = vadd.f32 %v2859, %v2938
    %v2943 = vadd.f32 %v2860, %v2939
    %s2944 = sld [smem:[#allocation2 + $0x123]]
    %v2945 = vstv %s2944
    %v2946 = vmul.f32 %v2901, %v2945
    %v2947 = vmul.f32 %v2902, %v2945
    %v2948 = vmul.f32 %v2903, %v2945
    %2952 = vrot.lane.b32.xlu0 %v2946, 94
    %v2953 = vpop.permute.xlu0 %2952
    %2954 = vrot.lane.b32.xlu0 %v2947, 94
    %v2955 = vpop.permute.xlu0 %2954
    %2956 = vrot.lane.b32.xlu0 %v2948, 94
    %v2957 = vpop.permute.xlu0 %2956
    %v2958 = vsel %vm826, %v2953, %v2955
    %v2959 = vsel %vm826, %v2955, %v2957
    %v2962 = vadd.f32 %v2879, %v2958
    %v2963 = vadd.f32 %v2880, %v2959
    %s2964 = sld [smem:[#allocation2 + $0x1a3]]
    %v2965 = vstv %s2964
    %v2966 = vmul.f32 %v2901, %v2965
    %v2967 = vmul.f32 %v2902, %v2965
    %v2968 = vmul.f32 %v2903, %v2965
    %2972 = vrot.lane.b32.xlu0 %v2966, 94
    %v2973 = vpop.permute.xlu0 %2972
    %2974 = vrot.lane.b32.xlu0 %v2967, 94
    %v2975 = vpop.permute.xlu0 %2974
    %2976 = vrot.lane.b32.xlu0 %v2968, 94
    %v2977 = vpop.permute.xlu0 %2976
    %v2978 = vsel %vm826, %v2973, %v2975
    %v2979 = vsel %vm826, %v2975, %v2977
    %v2982 = vadd.f32 %v2899, %v2978
    %v2983 = vadd.f32 %v2900, %v2979
    %v2986 = vperm.slane %v141, 0
    %v2987 = vperm.slane %v141, 4
    %v2988 = vperm.slane %v142, 0
    %v2989 = vperm.slane %v142, 4
    %v2990 = vsel %vm149, %v2988, %v2986
    %v2991 = vsel %vm149, %v2989, %v2987
    %2992 = vrot.lane.b32.xlu0 %v2990, 17
    %v2993 = vpop.permute.xlu0 %2992
    %2994 = vrot.lane.b32.xlu0 %v2991, 17
    %v2995 = vpop.permute.xlu0 %2994
    %v2996 = vsel %vm156, %v2993, %v2995
    %v3000 = vsel %vm156, 0.0, %v2993
    %v3001 = vsel %vm156, %v2995, 0.0
    %v3002 = vmul.f32 %v3000, %v131
    %v3003 = vmul.f32 %v2996, %v132
    %s3004 = sld [smem:[#allocation2 + $0x24]]
    %v3005 = vstv %s3004
    %v3006 = vmul.f32 %v3002, %v3005
    %v3007 = vmul.f32 %v3003, %v3005
    %v3008 = vadd.f32 %v2922, %v3006
    %v3009 = vadd.f32 %v2923, %v3007
    %s3010 = sld [smem:[#allocation2 + $0xa4]]
    %v3011 = vstv %s3010
    %v3012 = vmul.f32 %v3002, %v3011
    %v3013 = vmul.f32 %v3003, %v3011
    %v3014 = vadd.f32 %v2942, %v3012
    %v3015 = vadd.f32 %v2943, %v3013
    %s3016 = sld [smem:[#allocation2 + $0x124]]
    %v3017 = vstv %s3016
    %v3018 = vmul.f32 %v3002, %v3017
    %v3019 = vmul.f32 %v3003, %v3017
    %v3020 = vadd.f32 %v2962, %v3018
    %v3021 = vadd.f32 %v2963, %v3019
    %s3022 = sld [smem:[#allocation2 + $0x1a4]]
    %v3023 = vstv %s3022
    %v3024 = vmul.f32 %v3002, %v3023
    %v3025 = vmul.f32 %v3003, %v3023
    %v3026 = vadd.f32 %v2982, %v3024
    %v3027 = vadd.f32 %v2983, %v3025
    %s3028 = sld [smem:[#allocation2 + $0x25]]
    %v3029 = vstv %s3028
    %v3030 = vmul.f32 %v3000, %v3029
    %v3031 = vmul.f32 %v2996, %v3029
    %v3032 = vmul.f32 %v3001, %v3029
    %3036 = vrot.lane.b32.xlu0 %v3030, 127
    %v3037 = vpop.permute.xlu0 %3036
    %3038 = vrot.lane.b32.xlu0 %v3031, 127
    %v3039 = vpop.permute.xlu0 %3038
    %3040 = vrot.lane.b32.xlu0 %v3032, 127
    %v3041 = vpop.permute.xlu0 %3040
    %v3042 = vsel %vm195, %v3037, %v3039
    %v3043 = vsel %vm195, %v3039, %v3041
    %v3046 = vadd.f32 %v3008, %v3042
    %v3047 = vadd.f32 %v3009, %v3043
    %s3048 = sld [smem:[#allocation2 + $0xa5]]
    %v3049 = vstv %s3048
    %v3050 = vmul.f32 %v3000, %v3049
    %v3051 = vmul.f32 %v2996, %v3049
    %v3052 = vmul.f32 %v3001, %v3049
    %3056 = vrot.lane.b32.xlu0 %v3050, 127
    %v3057 = vpop.permute.xlu0 %3056
    %3058 = vrot.lane.b32.xlu0 %v3051, 127
    %v3059 = vpop.permute.xlu0 %3058
    %3060 = vrot.lane.b32.xlu0 %v3052, 127
    %v3061 = vpop.permute.xlu0 %3060
    %v3062 = vsel %vm195, %v3057, %v3059
    %v3063 = vsel %vm195, %v3059, %v3061
    %v3066 = vadd.f32 %v3014, %v3062
    %v3067 = vadd.f32 %v3015, %v3063
    %s3068 = sld [smem:[#allocation2 + $0x125]]
    %v3069 = vstv %s3068
    %v3070 = vmul.f32 %v3000, %v3069
    %v3071 = vmul.f32 %v2996, %v3069
    %v3072 = vmul.f32 %v3001, %v3069
    %3076 = vrot.lane.b32.xlu0 %v3070, 127
    %v3077 = vpop.permute.xlu0 %3076
    %3078 = vrot.lane.b32.xlu0 %v3071, 127
    %v3079 = vpop.permute.xlu0 %3078
    %3080 = vrot.lane.b32.xlu0 %v3072, 127
    %v3081 = vpop.permute.xlu0 %3080
    %v3082 = vsel %vm195, %v3077, %v3079
    %v3083 = vsel %vm195, %v3079, %v3081
    %v3086 = vadd.f32 %v3020, %v3082
    %v3087 = vadd.f32 %v3021, %v3083
    %s3088 = sld [smem:[#allocation2 + $0x1a5]]
    %v3089 = vstv %s3088
    %v3090 = vmul.f32 %v3000, %v3089
    %v3091 = vmul.f32 %v2996, %v3089
    %v3092 = vmul.f32 %v3001, %v3089
    %3096 = vrot.lane.b32.xlu0 %v3090, 127
    %v3097 = vpop.permute.xlu0 %3096
    %3098 = vrot.lane.b32.xlu0 %v3091, 127
    %v3099 = vpop.permute.xlu0 %3098
    %3100 = vrot.lane.b32.xlu0 %v3092, 127
    %v3101 = vpop.permute.xlu0 %3100
    %v3102 = vsel %vm195, %v3097, %v3099
    %v3103 = vsel %vm195, %v3099, %v3101
    %v3106 = vadd.f32 %v3026, %v3102
    %v3107 = vadd.f32 %v3027, %v3103
    %v3108 = vmul.f32 %v3000, %v265
    %v3109 = vmul.f32 %v2996, %v269
    %v3110 = vmul.f32 %v3001, %v267
    %s3111 = sld [smem:[#allocation2 + $0x26]]
    %v3112 = vstv %s3111
    %v3113 = vmul.f32 %v3108, %v3112
    %v3114 = vmul.f32 %v3109, %v3112
    %v3115 = vmul.f32 %v3110, %v3112
    %3119 = vrot.lane.b32.xlu0 %v3113, 126
    %v3120 = vpop.permute.xlu0 %3119
    %3121 = vrot.lane.b32.xlu0 %v3114, 126
    %v3122 = vpop.permute.xlu0 %3121
    %3123 = vrot.lane.b32.xlu0 %v3115, 126
    %v3124 = vpop.permute.xlu0 %3123
    %v3125 = vsel %vm290, %v3120, %v3122
    %v3126 = vsel %vm290, %v3122, %v3124
    %v3129 = vadd.f32 %v3046, %v3125
    %v3130 = vadd.f32 %v3047, %v3126
    %s3131 = sld [smem:[#allocation2 + $0xa6]]
    %v3132 = vstv %s3131
    %v3133 = vmul.f32 %v3108, %v3132
    %v3134 = vmul.f32 %v3109, %v3132
    %v3135 = vmul.f32 %v3110, %v3132
    %3139 = vrot.lane.b32.xlu0 %v3133, 126
    %v3140 = vpop.permute.xlu0 %3139
    %3141 = vrot.lane.b32.xlu0 %v3134, 126
    %v3142 = vpop.permute.xlu0 %3141
    %3143 = vrot.lane.b32.xlu0 %v3135, 126
    %v3144 = vpop.permute.xlu0 %3143
    %v3145 = vsel %vm290, %v3140, %v3142
    %v3146 = vsel %vm290, %v3142, %v3144
    %v3149 = vadd.f32 %v3066, %v3145
    %v3150 = vadd.f32 %v3067, %v3146
    %s3151 = sld [smem:[#allocation2 + $0x126]]
    %v3152 = vstv %s3151
    %v3153 = vmul.f32 %v3108, %v3152
    %v3154 = vmul.f32 %v3109, %v3152
    %v3155 = vmul.f32 %v3110, %v3152
    %3159 = vrot.lane.b32.xlu0 %v3153, 126
    %v3160 = vpop.permute.xlu0 %3159
    %3161 = vrot.lane.b32.xlu0 %v3154, 126
    %v3162 = vpop.permute.xlu0 %3161
    %3163 = vrot.lane.b32.xlu0 %v3155, 126
    %v3164 = vpop.permute.xlu0 %3163
    %v3165 = vsel %vm290, %v3160, %v3162
    %v3166 = vsel %vm290, %v3162, %v3164
    %v3169 = vadd.f32 %v3086, %v3165
    %v3170 = vadd.f32 %v3087, %v3166
    %s3171 = sld [smem:[#allocation2 + $0x1a6]]
    %v3172 = vstv %s3171
    %v3173 = vmul.f32 %v3108, %v3172
    %v3174 = vmul.f32 %v3109, %v3172
    %v3175 = vmul.f32 %v3110, %v3172
    %3179 = vrot.lane.b32.xlu0 %v3173, 126
    %v3180 = vpop.permute.xlu0 %3179
    %3181 = vrot.lane.b32.xlu0 %v3174, 126
    %v3182 = vpop.permute.xlu0 %3181
    %3183 = vrot.lane.b32.xlu0 %v3175, 126
    %v3184 = vpop.permute.xlu0 %3183
    %v3185 = vsel %vm290, %v3180, %v3182
    %v3186 = vsel %vm290, %v3182, %v3184
    %v3189 = vadd.f32 %v3106, %v3185
    %v3190 = vadd.f32 %v3107, %v3186
    %v3191 = vmul.f32 %v3000, %v360
    %v3192 = vmul.f32 %v2996, %v364
    %v3193 = vmul.f32 %v3001, %v362
    %s3194 = sld [smem:[#allocation2 + $0x27]]
    %v3195 = vstv %s3194
    %v3196 = vmul.f32 %v3191, %v3195
    %v3197 = vmul.f32 %v3192, %v3195
    %v3198 = vmul.f32 %v3193, %v3195
    %3202 = vrot.lane.b32.xlu0 %v3196, 112
    %v3203 = vpop.permute.xlu0 %3202
    %3204 = vrot.lane.b32.xlu0 %v3197, 112
    %v3205 = vpop.permute.xlu0 %3204
    %3206 = vrot.lane.b32.xlu0 %v3198, 112
    %v3207 = vpop.permute.xlu0 %3206
    %v3208 = vsel %vm385, %v3203, %v3205
    %v3209 = vsel %vm385, %v3205, %v3207
    %v3212 = vadd.f32 %v3129, %v3208
    %v3213 = vadd.f32 %v3130, %v3209
    %s3214 = sld [smem:[#allocation2 + $0xa7]]
    %v3215 = vstv %s3214
    %v3216 = vmul.f32 %v3191, %v3215
    %v3217 = vmul.f32 %v3192, %v3215
    %v3218 = vmul.f32 %v3193, %v3215
    %3222 = vrot.lane.b32.xlu0 %v3216, 112
    %v3223 = vpop.permute.xlu0 %3222
    %3224 = vrot.lane.b32.xlu0 %v3217, 112
    %v3225 = vpop.permute.xlu0 %3224
    %3226 = vrot.lane.b32.xlu0 %v3218, 112
    %v3227 = vpop.permute.xlu0 %3226
    %v3228 = vsel %vm385, %v3223, %v3225
    %v3229 = vsel %vm385, %v3225, %v3227
    %v3232 = vadd.f32 %v3149, %v3228
    %v3233 = vadd.f32 %v3150, %v3229
    %s3234 = sld [smem:[#allocation2 + $0x127]]
    %v3235 = vstv %s3234
    %v3236 = vmul.f32 %v3191, %v3235
    %v3237 = vmul.f32 %v3192, %v3235
    %v3238 = vmul.f32 %v3193, %v3235
    %3242 = vrot.lane.b32.xlu0 %v3236, 112
    %v3243 = vpop.permute.xlu0 %3242
    %3244 = vrot.lane.b32.xlu0 %v3237, 112
    %v3245 = vpop.permute.xlu0 %3244
    %3246 = vrot.lane.b32.xlu0 %v3238, 112
    %v3247 = vpop.permute.xlu0 %3246
    %v3248 = vsel %vm385, %v3243, %v3245
    %v3249 = vsel %vm385, %v3245, %v3247
    %v3252 = vadd.f32 %v3169, %v3248
    %v3253 = vadd.f32 %v3170, %v3249
    %s3254 = sld [smem:[#allocation2 + $0x1a7]]
    %v3255 = vstv %s3254
    %v3256 = vmul.f32 %v3191, %v3255
    %v3257 = vmul.f32 %v3192, %v3255
    %v3258 = vmul.f32 %v3193, %v3255
    %3262 = vrot.lane.b32.xlu0 %v3256, 112
    %v3263 = vpop.permute.xlu0 %3262
    %3264 = vrot.lane.b32.xlu0 %v3257, 112
    %v3265 = vpop.permute.xlu0 %3264
    %3266 = vrot.lane.b32.xlu0 %v3258, 112
    %v3267 = vpop.permute.xlu0 %3266
    %v3268 = vsel %vm385, %v3263, %v3265
    %v3269 = vsel %vm385, %v3265, %v3267
    %v3272 = vadd.f32 %v3189, %v3268
    %v3273 = vadd.f32 %v3190, %v3269
    %s3274 = sld [smem:[#allocation2 + $0x28]]
    %v3275 = vstv %s3274
    %v3276 = vmul.f32 %v3000, %v3275
    %v3277 = vmul.f32 %v2996, %v3275
    %v3278 = vmul.f32 %v3001, %v3275
    %3282 = vrot.lane.b32.xlu0 %v3276, 111
    %v3283 = vpop.permute.xlu0 %3282
    %3284 = vrot.lane.b32.xlu0 %v3277, 111
    %v3285 = vpop.permute.xlu0 %3284
    %3286 = vrot.lane.b32.xlu0 %v3278, 111
    %v3287 = vpop.permute.xlu0 %3286
    %v3288 = vsel %vm466, %v3283, %v3285
    %v3289 = vsel %vm466, %v3285, %v3287
    %v3292 = vadd.f32 %v3212, %v3288
    %v3293 = vadd.f32 %v3213, %v3289
    %s3294 = sld [smem:[#allocation2 + $0xa8]]
    %v3295 = vstv %s3294
    %v3296 = vmul.f32 %v3000, %v3295
    %v3297 = vmul.f32 %v2996, %v3295
    %v3298 = vmul.f32 %v3001, %v3295
    %3302 = vrot.lane.b32.xlu0 %v3296, 111
    %v3303 = vpop.permute.xlu0 %3302
    %3304 = vrot.lane.b32.xlu0 %v3297, 111
    %v3305 = vpop.permute.xlu0 %3304
    %3306 = vrot.lane.b32.xlu0 %v3298, 111
    %v3307 = vpop.permute.xlu0 %3306
    %v3308 = vsel %vm466, %v3303, %v3305
    %v3309 = vsel %vm466, %v3305, %v3307
    %v3312 = vadd.f32 %v3232, %v3308
    %v3313 = vadd.f32 %v3233, %v3309
    %s3314 = sld [smem:[#allocation2 + $0x128]]
    %v3315 = vstv %s3314
    %v3316 = vmul.f32 %v3000, %v3315
    %v3317 = vmul.f32 %v2996, %v3315
    %v3318 = vmul.f32 %v3001, %v3315
    %3322 = vrot.lane.b32.xlu0 %v3316, 111
    %v3323 = vpop.permute.xlu0 %3322
    %3324 = vrot.lane.b32.xlu0 %v3317, 111
    %v3325 = vpop.permute.xlu0 %3324
    %3326 = vrot.lane.b32.xlu0 %v3318, 111
    %v3327 = vpop.permute.xlu0 %3326
    %v3328 = vsel %vm466, %v3323, %v3325
    %v3329 = vsel %vm466, %v3325, %v3327
    %v3332 = vadd.f32 %v3252, %v3328
    %v3333 = vadd.f32 %v3253, %v3329
    %s3334 = sld [smem:[#allocation2 + $0x1a8]]
    %v3335 = vstv %s3334
    %v3336 = vmul.f32 %v3000, %v3335
    %v3337 = vmul.f32 %v2996, %v3335
    %v3338 = vmul.f32 %v3001, %v3335
    %3342 = vrot.lane.b32.xlu0 %v3336, 111
    %v3343 = vpop.permute.xlu0 %3342
    %3344 = vrot.lane.b32.xlu0 %v3337, 111
    %v3345 = vpop.permute.xlu0 %3344
    %3346 = vrot.lane.b32.xlu0 %v3338, 111
    %v3347 = vpop.permute.xlu0 %3346
    %v3348 = vsel %vm466, %v3343, %v3345
    %v3349 = vsel %vm466, %v3345, %v3347
    %v3352 = vadd.f32 %v3272, %v3348
    %v3353 = vadd.f32 %v3273, %v3349
    %v3354 = vmul.f32 %v3000, %v534
    %v3355 = vmul.f32 %v2996, %v538
    %v3356 = vmul.f32 %v3001, %v536
    %s3357 = sld [smem:[#allocation2 + $0x29]]
    %v3358 = vstv %s3357
    %v3359 = vmul.f32 %v3354, %v3358
    %v3360 = vmul.f32 %v3355, %v3358
    %v3361 = vmul.f32 %v3356, %v3358
    %3365 = vrot.lane.b32.xlu0 %v3359, 110
    %v3366 = vpop.permute.xlu0 %3365
    %3367 = vrot.lane.b32.xlu0 %v3360, 110
    %v3368 = vpop.permute.xlu0 %3367
    %3369 = vrot.lane.b32.xlu0 %v3361, 110
    %v3370 = vpop.permute.xlu0 %3369
    %v3371 = vsel %vm559, %v3366, %v3368
    %v3372 = vsel %vm559, %v3368, %v3370
    %v3375 = vadd.f32 %v3292, %v3371
    %v3376 = vadd.f32 %v3293, %v3372
    %s3377 = sld [smem:[#allocation2 + $0xa9]]
    %v3378 = vstv %s3377
    %v3379 = vmul.f32 %v3354, %v3378
    %v3380 = vmul.f32 %v3355, %v3378
    %v3381 = vmul.f32 %v3356, %v3378
    %3385 = vrot.lane.b32.xlu0 %v3379, 110
    %v3386 = vpop.permute.xlu0 %3385
    %3387 = vrot.lane.b32.xlu0 %v3380, 110
    %v3388 = vpop.permute.xlu0 %3387
    %3389 = vrot.lane.b32.xlu0 %v3381, 110
    %v3390 = vpop.permute.xlu0 %3389
    %v3391 = vsel %vm559, %v3386, %v3388
    %v3392 = vsel %vm559, %v3388, %v3390
    %v3395 = vadd.f32 %v3312, %v3391
    %v3396 = vadd.f32 %v3313, %v3392
    %s3397 = sld [smem:[#allocation2 + $0x129]]
    %v3398 = vstv %s3397
    %v3399 = vmul.f32 %v3354, %v3398
    %v3400 = vmul.f32 %v3355, %v3398
    %v3401 = vmul.f32 %v3356, %v3398
    %3405 = vrot.lane.b32.xlu0 %v3399, 110
    %v3406 = vpop.permute.xlu0 %3405
    %3407 = vrot.lane.b32.xlu0 %v3400, 110
    %v3408 = vpop.permute.xlu0 %3407
    %3409 = vrot.lane.b32.xlu0 %v3401, 110
    %v3410 = vpop.permute.xlu0 %3409
    %v3411 = vsel %vm559, %v3406, %v3408
    %v3412 = vsel %vm559, %v3408, %v3410
    %v3415 = vadd.f32 %v3332, %v3411
    %v3416 = vadd.f32 %v3333, %v3412
    %s3417 = sld [smem:[#allocation2 + $0x1a9]]
    %v3418 = vstv %s3417
    %v3419 = vmul.f32 %v3354, %v3418
    %v3420 = vmul.f32 %v3355, %v3418
    %v3421 = vmul.f32 %v3356, %v3418
    %3425 = vrot.lane.b32.xlu0 %v3419, 110
    %v3426 = vpop.permute.xlu0 %3425
    %3427 = vrot.lane.b32.xlu0 %v3420, 110
    %v3428 = vpop.permute.xlu0 %3427
    %3429 = vrot.lane.b32.xlu0 %v3421, 110
    %v3430 = vpop.permute.xlu0 %3429
    %v3431 = vsel %vm559, %v3426, %v3428
    %v3432 = vsel %vm559, %v3428, %v3430
    %v3435 = vadd.f32 %v3352, %v3431
    %v3436 = vadd.f32 %v3353, %v3432
    %v3437 = vmul.f32 %v3000, %v627
    %v3438 = vmul.f32 %v2996, %v631
    %v3439 = vmul.f32 %v3001, %v629
    %s3440 = sld [smem:[#allocation2 + $0x2a]]
    %v3441 = vstv %s3440
    %v3442 = vmul.f32 %v3437, %v3441
    %v3443 = vmul.f32 %v3438, %v3441
    %v3444 = vmul.f32 %v3439, %v3441
    %3448 = vrot.lane.b32.xlu0 %v3442, 96
    %v3449 = vpop.permute.xlu0 %3448
    %3450 = vrot.lane.b32.xlu0 %v3443, 96
    %v3451 = vpop.permute.xlu0 %3450
    %3452 = vrot.lane.b32.xlu0 %v3444, 96
    %v3453 = vpop.permute.xlu0 %3452
    %v3454 = vsel %vm652, %v3449, %v3451
    %v3455 = vsel %vm652, %v3451, %v3453
    %v3458 = vadd.f32 %v3375, %v3454
    %v3459 = vadd.f32 %v3376, %v3455
    %s3460 = sld [smem:[#allocation2 + $0xaa]]
    %v3461 = vstv %s3460
    %v3462 = vmul.f32 %v3437, %v3461
    %v3463 = vmul.f32 %v3438, %v3461
    %v3464 = vmul.f32 %v3439, %v3461
    %3468 = vrot.lane.b32.xlu0 %v3462, 96
    %v3469 = vpop.permute.xlu0 %3468
    %3470 = vrot.lane.b32.xlu0 %v3463, 96
    %v3471 = vpop.permute.xlu0 %3470
    %3472 = vrot.lane.b32.xlu0 %v3464, 96
    %v3473 = vpop.permute.xlu0 %3472
    %v3474 = vsel %vm652, %v3469, %v3471
    %v3475 = vsel %vm652, %v3471, %v3473
    %v3478 = vadd.f32 %v3395, %v3474
    %v3479 = vadd.f32 %v3396, %v3475
    %s3480 = sld [smem:[#allocation2 + $0x12a]]
    %v3481 = vstv %s3480
    %v3482 = vmul.f32 %v3437, %v3481
    %v3483 = vmul.f32 %v3438, %v3481
    %v3484 = vmul.f32 %v3439, %v3481
    %3488 = vrot.lane.b32.xlu0 %v3482, 96
    %v3489 = vpop.permute.xlu0 %3488
    %3490 = vrot.lane.b32.xlu0 %v3483, 96
    %v3491 = vpop.permute.xlu0 %3490
    %3492 = vrot.lane.b32.xlu0 %v3484, 96
    %v3493 = vpop.permute.xlu0 %3492
    %v3494 = vsel %vm652, %v3489, %v3491
    %v3495 = vsel %vm652, %v3491, %v3493
    %v3498 = vadd.f32 %v3415, %v3494
    %v3499 = vadd.f32 %v3416, %v3495
    %s3500 = sld [smem:[#allocation2 + $0x1aa]]
    %v3501 = vstv %s3500
    %v3502 = vmul.f32 %v3437, %v3501
    %v3503 = vmul.f32 %v3438, %v3501
    %v3504 = vmul.f32 %v3439, %v3501
    %3508 = vrot.lane.b32.xlu0 %v3502, 96
    %v3509 = vpop.permute.xlu0 %3508
    %3510 = vrot.lane.b32.xlu0 %v3503, 96
    %v3511 = vpop.permute.xlu0 %3510
    %3512 = vrot.lane.b32.xlu0 %v3504, 96
    %v3513 = vpop.permute.xlu0 %3512
    %v3514 = vsel %vm652, %v3509, %v3511
    %v3515 = vsel %vm652, %v3511, %v3513
    %v3518 = vadd.f32 %v3435, %v3514
    %v3519 = vadd.f32 %v3436, %v3515
    %s3520 = sld [smem:[#allocation2 + $0x2b]]
    %v3521 = vstv %s3520
    %v3522 = vmul.f32 %v3000, %v3521
    %v3523 = vmul.f32 %v2996, %v3521
    %v3524 = vmul.f32 %v3001, %v3521
    %3528 = vrot.lane.b32.xlu0 %v3522, 95
    %v3529 = vpop.permute.xlu0 %3528
    %3530 = vrot.lane.b32.xlu0 %v3523, 95
    %v3531 = vpop.permute.xlu0 %3530
    %3532 = vrot.lane.b32.xlu0 %v3524, 95
    %v3533 = vpop.permute.xlu0 %3532
    %v3534 = vsel %vm733, %v3529, %v3531
    %v3535 = vsel %vm733, %v3531, %v3533
    %v3538 = vadd.f32 %v3458, %v3534
    %v3539 = vadd.f32 %v3459, %v3535
    %s3540 = sld [smem:[#allocation2 + $0xab]]
    %v3541 = vstv %s3540
    %v3542 = vmul.f32 %v3000, %v3541
    %v3543 = vmul.f32 %v2996, %v3541
    %v3544 = vmul.f32 %v3001, %v3541
    %3548 = vrot.lane.b32.xlu0 %v3542, 95
    %v3549 = vpop.permute.xlu0 %3548
    %3550 = vrot.lane.b32.xlu0 %v3543, 95
    %v3551 = vpop.permute.xlu0 %3550
    %3552 = vrot.lane.b32.xlu0 %v3544, 95
    %v3553 = vpop.permute.xlu0 %3552
    %v3554 = vsel %vm733, %v3549, %v3551
    %v3555 = vsel %vm733, %v3551, %v3553
    %v3558 = vadd.f32 %v3478, %v3554
    %v3559 = vadd.f32 %v3479, %v3555
    %s3560 = sld [smem:[#allocation2 + $0x12b]]
    %v3561 = vstv %s3560
    %v3562 = vmul.f32 %v3000, %v3561
    %v3563 = vmul.f32 %v2996, %v3561
    %v3564 = vmul.f32 %v3001, %v3561
    %3568 = vrot.lane.b32.xlu0 %v3562, 95
    %v3569 = vpop.permute.xlu0 %3568
    %3570 = vrot.lane.b32.xlu0 %v3563, 95
    %v3571 = vpop.permute.xlu0 %3570
    %3572 = vrot.lane.b32.xlu0 %v3564, 95
    %v3573 = vpop.permute.xlu0 %3572
    %v3574 = vsel %vm733, %v3569, %v3571
    %v3575 = vsel %vm733, %v3571, %v3573
    %v3578 = vadd.f32 %v3498, %v3574
    %v3579 = vadd.f32 %v3499, %v3575
    %s3580 = sld [smem:[#allocation2 + $0x1ab]]
    %v3581 = vstv %s3580
    %v3582 = vmul.f32 %v3000, %v3581
    %v3583 = vmul.f32 %v2996, %v3581
    %v3584 = vmul.f32 %v3001, %v3581
    %3588 = vrot.lane.b32.xlu0 %v3582, 95
    %v3589 = vpop.permute.xlu0 %3588
    %3590 = vrot.lane.b32.xlu0 %v3583, 95
    %v3591 = vpop.permute.xlu0 %3590
    %3592 = vrot.lane.b32.xlu0 %v3584, 95
    %v3593 = vpop.permute.xlu0 %3592
    %v3594 = vsel %vm733, %v3589, %v3591
    %v3595 = vsel %vm733, %v3591, %v3593
    %v3598 = vadd.f32 %v3518, %v3594
    %v3599 = vadd.f32 %v3519, %v3595
    %v3600 = vmul.f32 %v3000, %v801
    %v3601 = vmul.f32 %v2996, %v805
    %v3602 = vmul.f32 %v3001, %v803
    %s3603 = sld [smem:[#allocation2 + $0x2c]]
    %v3604 = vstv %s3603
    %v3605 = vmul.f32 %v3600, %v3604
    %v3606 = vmul.f32 %v3601, %v3604
    %v3607 = vmul.f32 %v3602, %v3604
    %3611 = vrot.lane.b32.xlu0 %v3605, 94
    %v3612 = vpop.permute.xlu0 %3611
    %3613 = vrot.lane.b32.xlu0 %v3606, 94
    %v3614 = vpop.permute.xlu0 %3613
    %3615 = vrot.lane.b32.xlu0 %v3607, 94
    %v3616 = vpop.permute.xlu0 %3615
    %v3617 = vsel %vm826, %v3612, %v3614
    %v3618 = vsel %vm826, %v3614, %v3616
    %v3621 = vadd.f32 %v3538, %v3617
    %v3622 = vadd.f32 %v3539, %v3618
    %s3623 = sld [smem:[#allocation2 + $0xac]]
    %v3624 = vstv %s3623
    %v3625 = vmul.f32 %v3600, %v3624
    %v3626 = vmul.f32 %v3601, %v3624
    %v3627 = vmul.f32 %v3602, %v3624
    %3631 = vrot.lane.b32.xlu0 %v3625, 94
    %v3632 = vpop.permute.xlu0 %3631
    %3633 = vrot.lane.b32.xlu0 %v3626, 94
    %v3634 = vpop.permute.xlu0 %3633
    %3635 = vrot.lane.b32.xlu0 %v3627, 94
    %v3636 = vpop.permute.xlu0 %3635
    %v3637 = vsel %vm826, %v3632, %v3634
    %v3638 = vsel %vm826, %v3634, %v3636
    %v3641 = vadd.f32 %v3558, %v3637
    %v3642 = vadd.f32 %v3559, %v3638
    %s3643 = sld [smem:[#allocation2 + $0x12c]]
    %v3644 = vstv %s3643
    %v3645 = vmul.f32 %v3600, %v3644
    %v3646 = vmul.f32 %v3601, %v3644
    %v3647 = vmul.f32 %v3602, %v3644
    %3651 = vrot.lane.b32.xlu0 %v3645, 94
    %v3652 = vpop.permute.xlu0 %3651
    %3653 = vrot.lane.b32.xlu0 %v3646, 94
    %v3654 = vpop.permute.xlu0 %3653
    %3655 = vrot.lane.b32.xlu0 %v3647, 94
    %v3656 = vpop.permute.xlu0 %3655
    %v3657 = vsel %vm826, %v3652, %v3654
    %v3658 = vsel %vm826, %v3654, %v3656
    %v3661 = vadd.f32 %v3578, %v3657
    %v3662 = vadd.f32 %v3579, %v3658
    %s3663 = sld [smem:[#allocation2 + $0x1ac]]
    %v3664 = vstv %s3663
    %v3665 = vmul.f32 %v3600, %v3664
    %v3666 = vmul.f32 %v3601, %v3664
    %v3667 = vmul.f32 %v3602, %v3664
    %3671 = vrot.lane.b32.xlu0 %v3665, 94
    %v3672 = vpop.permute.xlu0 %3671
    %3673 = vrot.lane.b32.xlu0 %v3666, 94
    %v3674 = vpop.permute.xlu0 %3673
    %3675 = vrot.lane.b32.xlu0 %v3667, 94
    %v3676 = vpop.permute.xlu0 %3675
    %v3677 = vsel %vm826, %v3672, %v3674
    %v3678 = vsel %vm826, %v3674, %v3676
    %v3681 = vadd.f32 %v3598, %v3677
    %v3682 = vadd.f32 %v3599, %v3678
    %v3683 = vperm.slane %v141, 1
    %v3684 = vperm.slane %v141, 5
    %v3685 = vperm.slane %v142, 1
    %v3686 = vperm.slane %v142, 5
    %v3687 = vsel %vm149, %v3685, %v3683
    %v3688 = vsel %vm149, %v3686, %v3684
    %3689 = vrot.lane.b32.xlu0 %v3687, 17
    %v3690 = vpop.permute.xlu0 %3689
    %3691 = vrot.lane.b32.xlu0 %v3688, 17
    %v3692 = vpop.permute.xlu0 %3691
    %v3693 = vsel %vm156, %v3690, %v3692
    %v3697 = vsel %vm156, 0.0, %v3690
    %v3698 = vsel %vm156, %v3692, 0.0
    %v3699 = vmul.f32 %v3697, %v131
    %v3700 = vmul.f32 %v3693, %v132
    %s3701 = sld [smem:[#allocation2 + $0x2d]]
    %v3702 = vstv %s3701
    %v3703 = vmul.f32 %v3699, %v3702
    %v3704 = vmul.f32 %v3700, %v3702
    %v3705 = vadd.f32 %v3621, %v3703
    %v3706 = vadd.f32 %v3622, %v3704
    %s3707 = sld [smem:[#allocation2 + $0xad]]
    %v3708 = vstv %s3707
    %v3709 = vmul.f32 %v3699, %v3708
    %v3710 = vmul.f32 %v3700, %v3708
    %v3711 = vadd.f32 %v3641, %v3709
    %v3712 = vadd.f32 %v3642, %v3710
    %s3713 = sld [smem:[#allocation2 + $0x12d]]
    %v3714 = vstv %s3713
    %v3715 = vmul.f32 %v3699, %v3714
    %v3716 = vmul.f32 %v3700, %v3714
    %v3717 = vadd.f32 %v3661, %v3715
    %v3718 = vadd.f32 %v3662, %v3716
    %s3719 = sld [smem:[#allocation2 + $0x1ad]]
    %v3720 = vstv %s3719
    %v3721 = vmul.f32 %v3699, %v3720
    %v3722 = vmul.f32 %v3700, %v3720
    %v3723 = vadd.f32 %v3681, %v3721
    %v3724 = vadd.f32 %v3682, %v3722
    %s3725 = sld [smem:[#allocation2 + $0x2e]]
    %v3726 = vstv %s3725
    %v3727 = vmul.f32 %v3697, %v3726
    %v3728 = vmul.f32 %v3693, %v3726
    %v3729 = vmul.f32 %v3698, %v3726
    %3733 = vrot.lane.b32.xlu0 %v3727, 127
    %v3734 = vpop.permute.xlu0 %3733
    %3735 = vrot.lane.b32.xlu0 %v3728, 127
    %v3736 = vpop.permute.xlu0 %3735
    %3737 = vrot.lane.b32.xlu0 %v3729, 127
    %v3738 = vpop.permute.xlu0 %3737
    %v3739 = vsel %vm195, %v3734, %v3736
    %v3740 = vsel %vm195, %v3736, %v3738
    %v3743 = vadd.f32 %v3705, %v3739
    %v3744 = vadd.f32 %v3706, %v3740
    %s3745 = sld [smem:[#allocation2 + $0xae]]
    %v3746 = vstv %s3745
    %v3747 = vmul.f32 %v3697, %v3746
    %v3748 = vmul.f32 %v3693, %v3746
    %v3749 = vmul.f32 %v3698, %v3746
    %3753 = vrot.lane.b32.xlu0 %v3747, 127
    %v3754 = vpop.permute.xlu0 %3753
    %3755 = vrot.lane.b32.xlu0 %v3748, 127
    %v3756 = vpop.permute.xlu0 %3755
    %3757 = vrot.lane.b32.xlu0 %v3749, 127
    %v3758 = vpop.permute.xlu0 %3757
    %v3759 = vsel %vm195, %v3754, %v3756
    %v3760 = vsel %vm195, %v3756, %v3758
    %v3763 = vadd.f32 %v3711, %v3759
    %v3764 = vadd.f32 %v3712, %v3760
    %s3765 = sld [smem:[#allocation2 + $0x12e]]
    %v3766 = vstv %s3765
    %v3767 = vmul.f32 %v3697, %v3766
    %v3768 = vmul.f32 %v3693, %v3766
    %v3769 = vmul.f32 %v3698, %v3766
    %3773 = vrot.lane.b32.xlu0 %v3767, 127
    %v3774 = vpop.permute.xlu0 %3773
    %3775 = vrot.lane.b32.xlu0 %v3768, 127
    %v3776 = vpop.permute.xlu0 %3775
    %3777 = vrot.lane.b32.xlu0 %v3769, 127
    %v3778 = vpop.permute.xlu0 %3777
    %v3779 = vsel %vm195, %v3774, %v3776
    %v3780 = vsel %vm195, %v3776, %v3778
    %v3783 = vadd.f32 %v3717, %v3779
    %v3784 = vadd.f32 %v3718, %v3780
    %s3785 = sld [smem:[#allocation2 + $0x1ae]]
    %v3786 = vstv %s3785
    %v3787 = vmul.f32 %v3697, %v3786
    %v3788 = vmul.f32 %v3693, %v3786
    %v3789 = vmul.f32 %v3698, %v3786
    %3793 = vrot.lane.b32.xlu0 %v3787, 127
    %v3794 = vpop.permute.xlu0 %3793
    %3795 = vrot.lane.b32.xlu0 %v3788, 127
    %v3796 = vpop.permute.xlu0 %3795
    %3797 = vrot.lane.b32.xlu0 %v3789, 127
    %v3798 = vpop.permute.xlu0 %3797
    %v3799 = vsel %vm195, %v3794, %v3796
    %v3800 = vsel %vm195, %v3796, %v3798
    %v3803 = vadd.f32 %v3723, %v3799
    %v3804 = vadd.f32 %v3724, %v3800
    %v3805 = vmul.f32 %v3697, %v265
    %v3806 = vmul.f32 %v3693, %v269
    %v3807 = vmul.f32 %v3698, %v267
    %s3808 = sld [smem:[#allocation2 + $0x2f]]
    %v3809 = vstv %s3808
    %v3810 = vmul.f32 %v3805, %v3809
    %v3811 = vmul.f32 %v3806, %v3809
    %v3812 = vmul.f32 %v3807, %v3809
    %3816 = vrot.lane.b32.xlu0 %v3810, 126
    %v3817 = vpop.permute.xlu0 %3816
    %3818 = vrot.lane.b32.xlu0 %v3811, 126
    %v3819 = vpop.permute.xlu0 %3818
    %3820 = vrot.lane.b32.xlu0 %v3812, 126
    %v3821 = vpop.permute.xlu0 %3820
    %v3822 = vsel %vm290, %v3817, %v3819
    %v3823 = vsel %vm290, %v3819, %v3821
    %v3826 = vadd.f32 %v3743, %v3822
    %v3827 = vadd.f32 %v3744, %v3823
    %s3828 = sld [smem:[#allocation2 + $0xaf]]
    %v3829 = vstv %s3828
    %v3830 = vmul.f32 %v3805, %v3829
    %v3831 = vmul.f32 %v3806, %v3829
    %v3832 = vmul.f32 %v3807, %v3829
    %3836 = vrot.lane.b32.xlu0 %v3830, 126
    %v3837 = vpop.permute.xlu0 %3836
    %3838 = vrot.lane.b32.xlu0 %v3831, 126
    %v3839 = vpop.permute.xlu0 %3838
    %3840 = vrot.lane.b32.xlu0 %v3832, 126
    %v3841 = vpop.permute.xlu0 %3840
    %v3842 = vsel %vm290, %v3837, %v3839
    %v3843 = vsel %vm290, %v3839, %v3841
    %v3846 = vadd.f32 %v3763, %v3842
    %v3847 = vadd.f32 %v3764, %v3843
    %s3848 = sld [smem:[#allocation2 + $0x12f]]
    %v3849 = vstv %s3848
    %v3850 = vmul.f32 %v3805, %v3849
    %v3851 = vmul.f32 %v3806, %v3849
    %v3852 = vmul.f32 %v3807, %v3849
    %3856 = vrot.lane.b32.xlu0 %v3850, 126
    %v3857 = vpop.permute.xlu0 %3856
    %3858 = vrot.lane.b32.xlu0 %v3851, 126
    %v3859 = vpop.permute.xlu0 %3858
    %3860 = vrot.lane.b32.xlu0 %v3852, 126
    %v3861 = vpop.permute.xlu0 %3860
    %v3862 = vsel %vm290, %v3857, %v3859
    %v3863 = vsel %vm290, %v3859, %v3861
    %v3866 = vadd.f32 %v3783, %v3862
    %v3867 = vadd.f32 %v3784, %v3863
    %s3868 = sld [smem:[#allocation2 + $0x1af]]
    %v3869 = vstv %s3868
    %v3870 = vmul.f32 %v3805, %v3869
    %v3871 = vmul.f32 %v3806, %v3869
    %v3872 = vmul.f32 %v3807, %v3869
    %3876 = vrot.lane.b32.xlu0 %v3870, 126
    %v3877 = vpop.permute.xlu0 %3876
    %3878 = vrot.lane.b32.xlu0 %v3871, 126
    %v3879 = vpop.permute.xlu0 %3878
    %3880 = vrot.lane.b32.xlu0 %v3872, 126
    %v3881 = vpop.permute.xlu0 %3880
    %v3882 = vsel %vm290, %v3877, %v3879
    %v3883 = vsel %vm290, %v3879, %v3881
    %v3886 = vadd.f32 %v3803, %v3882
    %v3887 = vadd.f32 %v3804, %v3883
    %v3888 = vmul.f32 %v3697, %v360
    %v3889 = vmul.f32 %v3693, %v364
    %v3890 = vmul.f32 %v3698, %v362
    %s3891 = sld [smem:[#allocation2 + $0x30]]
    %v3892 = vstv %s3891
    %v3893 = vmul.f32 %v3888, %v3892
    %v3894 = vmul.f32 %v3889, %v3892
    %v3895 = vmul.f32 %v3890, %v3892
    %3899 = vrot.lane.b32.xlu0 %v3893, 112
    %v3900 = vpop.permute.xlu0 %3899
    %3901 = vrot.lane.b32.xlu0 %v3894, 112
    %v3902 = vpop.permute.xlu0 %3901
    %3903 = vrot.lane.b32.xlu0 %v3895, 112
    %v3904 = vpop.permute.xlu0 %3903
    %v3905 = vsel %vm385, %v3900, %v3902
    %v3906 = vsel %vm385, %v3902, %v3904
    %v3909 = vadd.f32 %v3826, %v3905
    %v3910 = vadd.f32 %v3827, %v3906
    %s3911 = sld [smem:[#allocation2 + $0xb0]]
    %v3912 = vstv %s3911
    %v3913 = vmul.f32 %v3888, %v3912
    %v3914 = vmul.f32 %v3889, %v3912
    %v3915 = vmul.f32 %v3890, %v3912
    %3919 = vrot.lane.b32.xlu0 %v3913, 112
    %v3920 = vpop.permute.xlu0 %3919
    %3921 = vrot.lane.b32.xlu0 %v3914, 112
    %v3922 = vpop.permute.xlu0 %3921
    %3923 = vrot.lane.b32.xlu0 %v3915, 112
    %v3924 = vpop.permute.xlu0 %3923
    %v3925 = vsel %vm385, %v3920, %v3922
    %v3926 = vsel %vm385, %v3922, %v3924
    %v3929 = vadd.f32 %v3846, %v3925
    %v3930 = vadd.f32 %v3847, %v3926
    %s3931 = sld [smem:[#allocation2 + $0x130]]
    %v3932 = vstv %s3931
    %v3933 = vmul.f32 %v3888, %v3932
    %v3934 = vmul.f32 %v3889, %v3932
    %v3935 = vmul.f32 %v3890, %v3932
    %3939 = vrot.lane.b32.xlu0 %v3933, 112
    %v3940 = vpop.permute.xlu0 %3939
    %3941 = vrot.lane.b32.xlu0 %v3934, 112
    %v3942 = vpop.permute.xlu0 %3941
    %3943 = vrot.lane.b32.xlu0 %v3935, 112
    %v3944 = vpop.permute.xlu0 %3943
    %v3945 = vsel %vm385, %v3940, %v3942
    %v3946 = vsel %vm385, %v3942, %v3944
    %v3949 = vadd.f32 %v3866, %v3945
    %v3950 = vadd.f32 %v3867, %v3946
    %s3951 = sld [smem:[#allocation2 + $0x1b0]]
    %v3952 = vstv %s3951
    %v3953 = vmul.f32 %v3888, %v3952
    %v3954 = vmul.f32 %v3889, %v3952
    %v3955 = vmul.f32 %v3890, %v3952
    %3959 = vrot.lane.b32.xlu0 %v3953, 112
    %v3960 = vpop.permute.xlu0 %3959
    %3961 = vrot.lane.b32.xlu0 %v3954, 112
    %v3962 = vpop.permute.xlu0 %3961
    %3963 = vrot.lane.b32.xlu0 %v3955, 112
    %v3964 = vpop.permute.xlu0 %3963
    %v3965 = vsel %vm385, %v3960, %v3962
    %v3966 = vsel %vm385, %v3962, %v3964
    %v3969 = vadd.f32 %v3886, %v3965
    %v3970 = vadd.f32 %v3887, %v3966
    %s3971 = sld [smem:[#allocation2 + $0x31]]
    %v3972 = vstv %s3971
    %v3973 = vmul.f32 %v3697, %v3972
    %v3974 = vmul.f32 %v3693, %v3972
    %v3975 = vmul.f32 %v3698, %v3972
    %3979 = vrot.lane.b32.xlu0 %v3973, 111
    %v3980 = vpop.permute.xlu0 %3979
    %3981 = vrot.lane.b32.xlu0 %v3974, 111
    %v3982 = vpop.permute.xlu0 %3981
    %3983 = vrot.lane.b32.xlu0 %v3975, 111
    %v3984 = vpop.permute.xlu0 %3983
    %v3985 = vsel %vm466, %v3980, %v3982
    %v3986 = vsel %vm466, %v3982, %v3984
    %v3989 = vadd.f32 %v3909, %v3985
    %v3990 = vadd.f32 %v3910, %v3986
    %s3991 = sld [smem:[#allocation2 + $0xb1]]
    %v3992 = vstv %s3991
    %v3993 = vmul.f32 %v3697, %v3992
    %v3994 = vmul.f32 %v3693, %v3992
    %v3995 = vmul.f32 %v3698, %v3992
    %3999 = vrot.lane.b32.xlu0 %v3993, 111
    %v4000 = vpop.permute.xlu0 %3999
    %4001 = vrot.lane.b32.xlu0 %v3994, 111
    %v4002 = vpop.permute.xlu0 %4001
    %4003 = vrot.lane.b32.xlu0 %v3995, 111
    %v4004 = vpop.permute.xlu0 %4003
    %v4005 = vsel %vm466, %v4000, %v4002
    %v4006 = vsel %vm466, %v4002, %v4004
    %v4009 = vadd.f32 %v3929, %v4005
    %v4010 = vadd.f32 %v3930, %v4006
    %s4011 = sld [smem:[#allocation2 + $0x131]]
    %v4012 = vstv %s4011
    %v4013 = vmul.f32 %v3697, %v4012
    %v4014 = vmul.f32 %v3693, %v4012
    %v4015 = vmul.f32 %v3698, %v4012
    %4019 = vrot.lane.b32.xlu0 %v4013, 111
    %v4020 = vpop.permute.xlu0 %4019
    %4021 = vrot.lane.b32.xlu0 %v4014, 111
    %v4022 = vpop.permute.xlu0 %4021
    %4023 = vrot.lane.b32.xlu0 %v4015, 111
    %v4024 = vpop.permute.xlu0 %4023
    %v4025 = vsel %vm466, %v4020, %v4022
    %v4026 = vsel %vm466, %v4022, %v4024
    %v4029 = vadd.f32 %v3949, %v4025
    %v4030 = vadd.f32 %v3950, %v4026
    %s4031 = sld [smem:[#allocation2 + $0x1b1]]
    %v4032 = vstv %s4031
    %v4033 = vmul.f32 %v3697, %v4032
    %v4034 = vmul.f32 %v3693, %v4032
    %v4035 = vmul.f32 %v3698, %v4032
    %4039 = vrot.lane.b32.xlu0 %v4033, 111
    %v4040 = vpop.permute.xlu0 %4039
    %4041 = vrot.lane.b32.xlu0 %v4034, 111
    %v4042 = vpop.permute.xlu0 %4041
    %4043 = vrot.lane.b32.xlu0 %v4035, 111
    %v4044 = vpop.permute.xlu0 %4043
    %v4045 = vsel %vm466, %v4040, %v4042
    %v4046 = vsel %vm466, %v4042, %v4044
    %v4049 = vadd.f32 %v3969, %v4045
    %v4050 = vadd.f32 %v3970, %v4046
    %v4051 = vmul.f32 %v3697, %v534
    %v4052 = vmul.f32 %v3693, %v538
    %v4053 = vmul.f32 %v3698, %v536
    %s4054 = sld [smem:[#allocation2 + $0x32]]
    %v4055 = vstv %s4054
    %v4056 = vmul.f32 %v4051, %v4055
    %v4057 = vmul.f32 %v4052, %v4055
    %v4058 = vmul.f32 %v4053, %v4055
    %4062 = vrot.lane.b32.xlu0 %v4056, 110
    %v4063 = vpop.permute.xlu0 %4062
    %4064 = vrot.lane.b32.xlu0 %v4057, 110
    %v4065 = vpop.permute.xlu0 %4064
    %4066 = vrot.lane.b32.xlu0 %v4058, 110
    %v4067 = vpop.permute.xlu0 %4066
    %v4068 = vsel %vm559, %v4063, %v4065
    %v4069 = vsel %vm559, %v4065, %v4067
    %v4072 = vadd.f32 %v3989, %v4068
    %v4073 = vadd.f32 %v3990, %v4069
    %s4074 = sld [smem:[#allocation2 + $0xb2]]
    %v4075 = vstv %s4074
    %v4076 = vmul.f32 %v4051, %v4075
    %v4077 = vmul.f32 %v4052, %v4075
    %v4078 = vmul.f32 %v4053, %v4075
    %4082 = vrot.lane.b32.xlu0 %v4076, 110
    %v4083 = vpop.permute.xlu0 %4082
    %4084 = vrot.lane.b32.xlu0 %v4077, 110
    %v4085 = vpop.permute.xlu0 %4084
    %4086 = vrot.lane.b32.xlu0 %v4078, 110
    %v4087 = vpop.permute.xlu0 %4086
    %v4088 = vsel %vm559, %v4083, %v4085
    %v4089 = vsel %vm559, %v4085, %v4087
    %v4092 = vadd.f32 %v4009, %v4088
    %v4093 = vadd.f32 %v4010, %v4089
    %s4094 = sld [smem:[#allocation2 + $0x132]]
    %v4095 = vstv %s4094
    %v4096 = vmul.f32 %v4051, %v4095
    %v4097 = vmul.f32 %v4052, %v4095
    %v4098 = vmul.f32 %v4053, %v4095
    %4102 = vrot.lane.b32.xlu0 %v4096, 110
    %v4103 = vpop.permute.xlu0 %4102
    %4104 = vrot.lane.b32.xlu0 %v4097, 110
    %v4105 = vpop.permute.xlu0 %4104
    %4106 = vrot.lane.b32.xlu0 %v4098, 110
    %v4107 = vpop.permute.xlu0 %4106
    %v4108 = vsel %vm559, %v4103, %v4105
    %v4109 = vsel %vm559, %v4105, %v4107
    %v4112 = vadd.f32 %v4029, %v4108
    %v4113 = vadd.f32 %v4030, %v4109
    %s4114 = sld [smem:[#allocation2 + $0x1b2]]
    %v4115 = vstv %s4114
    %v4116 = vmul.f32 %v4051, %v4115
    %v4117 = vmul.f32 %v4052, %v4115
    %v4118 = vmul.f32 %v4053, %v4115
    %4122 = vrot.lane.b32.xlu0 %v4116, 110
    %v4123 = vpop.permute.xlu0 %4122
    %4124 = vrot.lane.b32.xlu0 %v4117, 110
    %v4125 = vpop.permute.xlu0 %4124
    %4126 = vrot.lane.b32.xlu0 %v4118, 110
    %v4127 = vpop.permute.xlu0 %4126
    %v4128 = vsel %vm559, %v4123, %v4125
    %v4129 = vsel %vm559, %v4125, %v4127
    %v4132 = vadd.f32 %v4049, %v4128
    %v4133 = vadd.f32 %v4050, %v4129
    %v4134 = vmul.f32 %v3697, %v627
    %v4135 = vmul.f32 %v3693, %v631
    %v4136 = vmul.f32 %v3698, %v629
    %s4137 = sld [smem:[#allocation2 + $0x33]]
    %v4138 = vstv %s4137
    %v4139 = vmul.f32 %v4134, %v4138
    %v4140 = vmul.f32 %v4135, %v4138
    %v4141 = vmul.f32 %v4136, %v4138
    %4145 = vrot.lane.b32.xlu0 %v4139, 96
    %v4146 = vpop.permute.xlu0 %4145
    %4147 = vrot.lane.b32.xlu0 %v4140, 96
    %v4148 = vpop.permute.xlu0 %4147
    %4149 = vrot.lane.b32.xlu0 %v4141, 96
    %v4150 = vpop.permute.xlu0 %4149
    %v4151 = vsel %vm652, %v4146, %v4148
    %v4152 = vsel %vm652, %v4148, %v4150
    %v4155 = vadd.f32 %v4072, %v4151
    %v4156 = vadd.f32 %v4073, %v4152
    %s4157 = sld [smem:[#allocation2 + $0xb3]]
    %v4158 = vstv %s4157
    %v4159 = vmul.f32 %v4134, %v4158
    %v4160 = vmul.f32 %v4135, %v4158
    %v4161 = vmul.f32 %v4136, %v4158
    %4165 = vrot.lane.b32.xlu0 %v4159, 96
    %v4166 = vpop.permute.xlu0 %4165
    %4167 = vrot.lane.b32.xlu0 %v4160, 96
    %v4168 = vpop.permute.xlu0 %4167
    %4169 = vrot.lane.b32.xlu0 %v4161, 96
    %v4170 = vpop.permute.xlu0 %4169
    %v4171 = vsel %vm652, %v4166, %v4168
    %v4172 = vsel %vm652, %v4168, %v4170
    %v4175 = vadd.f32 %v4092, %v4171
    %v4176 = vadd.f32 %v4093, %v4172
    %s4177 = sld [smem:[#allocation2 + $0x133]]
    %v4178 = vstv %s4177
    %v4179 = vmul.f32 %v4134, %v4178
    %v4180 = vmul.f32 %v4135, %v4178
    %v4181 = vmul.f32 %v4136, %v4178
    %4185 = vrot.lane.b32.xlu0 %v4179, 96
    %v4186 = vpop.permute.xlu0 %4185
    %4187 = vrot.lane.b32.xlu0 %v4180, 96
    %v4188 = vpop.permute.xlu0 %4187
    %4189 = vrot.lane.b32.xlu0 %v4181, 96
    %v4190 = vpop.permute.xlu0 %4189
    %v4191 = vsel %vm652, %v4186, %v4188
    %v4192 = vsel %vm652, %v4188, %v4190
    %v4195 = vadd.f32 %v4112, %v4191
    %v4196 = vadd.f32 %v4113, %v4192
    %s4197 = sld [smem:[#allocation2 + $0x1b3]]
    %v4198 = vstv %s4197
    %v4199 = vmul.f32 %v4134, %v4198
    %v4200 = vmul.f32 %v4135, %v4198
    %v4201 = vmul.f32 %v4136, %v4198
    %4205 = vrot.lane.b32.xlu0 %v4199, 96
    %v4206 = vpop.permute.xlu0 %4205
    %4207 = vrot.lane.b32.xlu0 %v4200, 96
    %v4208 = vpop.permute.xlu0 %4207
    %4209 = vrot.lane.b32.xlu0 %v4201, 96
    %v4210 = vpop.permute.xlu0 %4209
    %v4211 = vsel %vm652, %v4206, %v4208
    %v4212 = vsel %vm652, %v4208, %v4210
    %v4215 = vadd.f32 %v4132, %v4211
    %v4216 = vadd.f32 %v4133, %v4212
    %s4217 = sld [smem:[#allocation2 + $0x34]]
    %v4218 = vstv %s4217
    %v4219 = vmul.f32 %v3697, %v4218
    %v4220 = vmul.f32 %v3693, %v4218
    %v4221 = vmul.f32 %v3698, %v4218
    %4225 = vrot.lane.b32.xlu0 %v4219, 95
    %v4226 = vpop.permute.xlu0 %4225
    %4227 = vrot.lane.b32.xlu0 %v4220, 95
    %v4228 = vpop.permute.xlu0 %4227
    %4229 = vrot.lane.b32.xlu0 %v4221, 95
    %v4230 = vpop.permute.xlu0 %4229
    %v4231 = vsel %vm733, %v4226, %v4228
    %v4232 = vsel %vm733, %v4228, %v4230
    %v4235 = vadd.f32 %v4155, %v4231
    %v4236 = vadd.f32 %v4156, %v4232
    %s4237 = sld [smem:[#allocation2 + $0xb4]]
    %v4238 = vstv %s4237
    %v4239 = vmul.f32 %v3697, %v4238
    %v4240 = vmul.f32 %v3693, %v4238
    %v4241 = vmul.f32 %v3698, %v4238
    %4245 = vrot.lane.b32.xlu0 %v4239, 95
    %v4246 = vpop.permute.xlu0 %4245
    %4247 = vrot.lane.b32.xlu0 %v4240, 95
    %v4248 = vpop.permute.xlu0 %4247
    %4249 = vrot.lane.b32.xlu0 %v4241, 95
    %v4250 = vpop.permute.xlu0 %4249
    %v4251 = vsel %vm733, %v4246, %v4248
    %v4252 = vsel %vm733, %v4248, %v4250
    %v4255 = vadd.f32 %v4175, %v4251
    %v4256 = vadd.f32 %v4176, %v4252
    %s4257 = sld [smem:[#allocation2 + $0x134]]
    %v4258 = vstv %s4257
    %v4259 = vmul.f32 %v3697, %v4258
    %v4260 = vmul.f32 %v3693, %v4258
    %v4261 = vmul.f32 %v3698, %v4258
    %4265 = vrot.lane.b32.xlu0 %v4259, 95
    %v4266 = vpop.permute.xlu0 %4265
    %4267 = vrot.lane.b32.xlu0 %v4260, 95
    %v4268 = vpop.permute.xlu0 %4267
    %4269 = vrot.lane.b32.xlu0 %v4261, 95
    %v4270 = vpop.permute.xlu0 %4269
    %v4271 = vsel %vm733, %v4266, %v4268
    %v4272 = vsel %vm733, %v4268, %v4270
    %v4275 = vadd.f32 %v4195, %v4271
    %v4276 = vadd.f32 %v4196, %v4272
    %s4277 = sld [smem:[#allocation2 + $0x1b4]]
    %v4278 = vstv %s4277
    %v4279 = vmul.f32 %v3697, %v4278
    %v4280 = vmul.f32 %v3693, %v4278
    %v4281 = vmul.f32 %v3698, %v4278
    %4285 = vrot.lane.b32.xlu0 %v4279, 95
    %v4286 = vpop.permute.xlu0 %4285
    %4287 = vrot.lane.b32.xlu0 %v4280, 95
    %v4288 = vpop.permute.xlu0 %4287
    %4289 = vrot.lane.b32.xlu0 %v4281, 95
    %v4290 = vpop.permute.xlu0 %4289
    %v4291 = vsel %vm733, %v4286, %v4288
    %v4292 = vsel %vm733, %v4288, %v4290
    %v4295 = vadd.f32 %v4215, %v4291
    %v4296 = vadd.f32 %v4216, %v4292
    %v4297 = vmul.f32 %v3697, %v801
    %v4298 = vmul.f32 %v3693, %v805
    %v4299 = vmul.f32 %v3698, %v803
    %s4300 = sld [smem:[#allocation2 + $0x35]]
    %v4301 = vstv %s4300
    %v4302 = vmul.f32 %v4297, %v4301
    %v4303 = vmul.f32 %v4298, %v4301
    %v4304 = vmul.f32 %v4299, %v4301
    %4308 = vrot.lane.b32.xlu0 %v4302, 94
    %v4309 = vpop.permute.xlu0 %4308
    %4310 = vrot.lane.b32.xlu0 %v4303, 94
    %v4311 = vpop.permute.xlu0 %4310
    %4312 = vrot.lane.b32.xlu0 %v4304, 94
    %v4313 = vpop.permute.xlu0 %4312
    %v4314 = vsel %vm826, %v4309, %v4311
    %v4315 = vsel %vm826, %v4311, %v4313
    %v4318 = vadd.f32 %v4235, %v4314
    %v4319 = vadd.f32 %v4236, %v4315
    %s4320 = sld [smem:[#allocation2 + $0xb5]]
    %v4321 = vstv %s4320
    %v4322 = vmul.f32 %v4297, %v4321
    %v4323 = vmul.f32 %v4298, %v4321
    %v4324 = vmul.f32 %v4299, %v4321
    %4328 = vrot.lane.b32.xlu0 %v4322, 94
    %v4329 = vpop.permute.xlu0 %4328
    %4330 = vrot.lane.b32.xlu0 %v4323, 94
    %v4331 = vpop.permute.xlu0 %4330
    %4332 = vrot.lane.b32.xlu0 %v4324, 94
    %v4333 = vpop.permute.xlu0 %4332
    %v4334 = vsel %vm826, %v4329, %v4331
    %v4335 = vsel %vm826, %v4331, %v4333
    %v4338 = vadd.f32 %v4255, %v4334
    %v4339 = vadd.f32 %v4256, %v4335
    %s4340 = sld [smem:[#allocation2 + $0x135]]
    %v4341 = vstv %s4340
    %v4342 = vmul.f32 %v4297, %v4341
    %v4343 = vmul.f32 %v4298, %v4341
    %v4344 = vmul.f32 %v4299, %v4341
    %4348 = vrot.lane.b32.xlu0 %v4342, 94
    %v4349 = vpop.permute.xlu0 %4348
    %4350 = vrot.lane.b32.xlu0 %v4343, 94
    %v4351 = vpop.permute.xlu0 %4350
    %4352 = vrot.lane.b32.xlu0 %v4344, 94
    %v4353 = vpop.permute.xlu0 %4352
    %v4354 = vsel %vm826, %v4349, %v4351
    %v4355 = vsel %vm826, %v4351, %v4353
    %v4358 = vadd.f32 %v4275, %v4354
    %v4359 = vadd.f32 %v4276, %v4355
    %s4360 = sld [smem:[#allocation2 + $0x1b5]]
    %v4361 = vstv %s4360
    %v4362 = vmul.f32 %v4297, %v4361
    %v4363 = vmul.f32 %v4298, %v4361
    %v4364 = vmul.f32 %v4299, %v4361
    %4368 = vrot.lane.b32.xlu0 %v4362, 94
    %v4369 = vpop.permute.xlu0 %4368
    %4370 = vrot.lane.b32.xlu0 %v4363, 94
    %v4371 = vpop.permute.xlu0 %4370
    %4372 = vrot.lane.b32.xlu0 %v4364, 94
    %v4373 = vpop.permute.xlu0 %4372
    %v4374 = vsel %vm826, %v4369, %v4371
    %v4375 = vsel %vm826, %v4371, %v4373
    %v4378 = vadd.f32 %v4295, %v4374
    %v4379 = vadd.f32 %v4296, %v4375
    %v4380 = vperm.slane %v141, 2
    %v4381 = vperm.slane %v141, 6
    %v4382 = vperm.slane %v142, 2
    %v4383 = vperm.slane %v142, 6
    %v4384 = vsel %vm149, %v4382, %v4380
    %v4385 = vsel %vm149, %v4383, %v4381
    %4386 = vrot.lane.b32.xlu0 %v4384, 17
    %v4387 = vpop.permute.xlu0 %4386
    %4388 = vrot.lane.b32.xlu0 %v4385, 17
    %v4389 = vpop.permute.xlu0 %4388
    %v4390 = vsel %vm156, %v4387, %v4389
    %v4394 = vsel %vm156, 0.0, %v4387
    %v4395 = vsel %vm156, %v4389, 0.0
    %v4396 = vmul.f32 %v4394, %v131
    %v4397 = vmul.f32 %v4390, %v132
    %s4398 = sld [smem:[#allocation2 + $0x36]]
    %v4399 = vstv %s4398
    %v4400 = vmul.f32 %v4396, %v4399
    %v4401 = vmul.f32 %v4397, %v4399
    %v4402 = vadd.f32 %v4318, %v4400
    %v4403 = vadd.f32 %v4319, %v4401
    %s4404 = sld [smem:[#allocation2 + $0xb6]]
    %v4405 = vstv %s4404
    %v4406 = vmul.f32 %v4396, %v4405
    %v4407 = vmul.f32 %v4397, %v4405
    %v4408 = vadd.f32 %v4338, %v4406
    %v4409 = vadd.f32 %v4339, %v4407
    %s4410 = sld [smem:[#allocation2 + $0x136]]
    %v4411 = vstv %s4410
    %v4412 = vmul.f32 %v4396, %v4411
    %v4413 = vmul.f32 %v4397, %v4411
    %v4414 = vadd.f32 %v4358, %v4412
    %v4415 = vadd.f32 %v4359, %v4413
    %s4416 = sld [smem:[#allocation2 + $0x1b6]]
    %v4417 = vstv %s4416
    %v4418 = vmul.f32 %v4396, %v4417
    %v4419 = vmul.f32 %v4397, %v4417
    %v4420 = vadd.f32 %v4378, %v4418
    %v4421 = vadd.f32 %v4379, %v4419
    %s4422 = sld [smem:[#allocation2 + $0x37]]
    %v4423 = vstv %s4422
    %v4424 = vmul.f32 %v4394, %v4423
    %v4425 = vmul.f32 %v4390, %v4423
    %v4426 = vmul.f32 %v4395, %v4423
    %4430 = vrot.lane.b32.xlu0 %v4424, 127
    %v4431 = vpop.permute.xlu0 %4430
    %4432 = vrot.lane.b32.xlu0 %v4425, 127
    %v4433 = vpop.permute.xlu0 %4432
    %4434 = vrot.lane.b32.xlu0 %v4426, 127
    %v4435 = vpop.permute.xlu0 %4434
    %v4436 = vsel %vm195, %v4431, %v4433
    %v4437 = vsel %vm195, %v4433, %v4435
    %v4440 = vadd.f32 %v4402, %v4436
    %v4441 = vadd.f32 %v4403, %v4437
    %s4442 = sld [smem:[#allocation2 + $0xb7]]
    %v4443 = vstv %s4442
    %v4444 = vmul.f32 %v4394, %v4443
    %v4445 = vmul.f32 %v4390, %v4443
    %v4446 = vmul.f32 %v4395, %v4443
    %4450 = vrot.lane.b32.xlu0 %v4444, 127
    %v4451 = vpop.permute.xlu0 %4450
    %4452 = vrot.lane.b32.xlu0 %v4445, 127
    %v4453 = vpop.permute.xlu0 %4452
    %4454 = vrot.lane.b32.xlu0 %v4446, 127
    %v4455 = vpop.permute.xlu0 %4454
    %v4456 = vsel %vm195, %v4451, %v4453
    %v4457 = vsel %vm195, %v4453, %v4455
    %v4460 = vadd.f32 %v4408, %v4456
    %v4461 = vadd.f32 %v4409, %v4457
    %s4462 = sld [smem:[#allocation2 + $0x137]]
    %v4463 = vstv %s4462
    %v4464 = vmul.f32 %v4394, %v4463
    %v4465 = vmul.f32 %v4390, %v4463
    %v4466 = vmul.f32 %v4395, %v4463
    %4470 = vrot.lane.b32.xlu0 %v4464, 127
    %v4471 = vpop.permute.xlu0 %4470
    %4472 = vrot.lane.b32.xlu0 %v4465, 127
    %v4473 = vpop.permute.xlu0 %4472
    %4474 = vrot.lane.b32.xlu0 %v4466, 127
    %v4475 = vpop.permute.xlu0 %4474
    %v4476 = vsel %vm195, %v4471, %v4473
    %v4477 = vsel %vm195, %v4473, %v4475
    %v4480 = vadd.f32 %v4414, %v4476
    %v4481 = vadd.f32 %v4415, %v4477
    %s4482 = sld [smem:[#allocation2 + $0x1b7]]
    %v4483 = vstv %s4482
    %v4484 = vmul.f32 %v4394, %v4483
    %v4485 = vmul.f32 %v4390, %v4483
    %v4486 = vmul.f32 %v4395, %v4483
    %4490 = vrot.lane.b32.xlu0 %v4484, 127
    %v4491 = vpop.permute.xlu0 %4490
    %4492 = vrot.lane.b32.xlu0 %v4485, 127
    %v4493 = vpop.permute.xlu0 %4492
    %4494 = vrot.lane.b32.xlu0 %v4486, 127
    %v4495 = vpop.permute.xlu0 %4494
    %v4496 = vsel %vm195, %v4491, %v4493
    %v4497 = vsel %vm195, %v4493, %v4495
    %v4500 = vadd.f32 %v4420, %v4496
    %v4501 = vadd.f32 %v4421, %v4497
    %v4502 = vmul.f32 %v4394, %v265
    %v4503 = vmul.f32 %v4390, %v269
    %v4504 = vmul.f32 %v4395, %v267
    %s4505 = sld [smem:[#allocation2 + $0x38]]
    %v4506 = vstv %s4505
    %v4507 = vmul.f32 %v4502, %v4506
    %v4508 = vmul.f32 %v4503, %v4506
    %v4509 = vmul.f32 %v4504, %v4506
    %4513 = vrot.lane.b32.xlu0 %v4507, 126
    %v4514 = vpop.permute.xlu0 %4513
    %4515 = vrot.lane.b32.xlu0 %v4508, 126
    %v4516 = vpop.permute.xlu0 %4515
    %4517 = vrot.lane.b32.xlu0 %v4509, 126
    %v4518 = vpop.permute.xlu0 %4517
    %v4519 = vsel %vm290, %v4514, %v4516
    %v4520 = vsel %vm290, %v4516, %v4518
    %v4523 = vadd.f32 %v4440, %v4519
    %v4524 = vadd.f32 %v4441, %v4520
    %s4525 = sld [smem:[#allocation2 + $0xb8]]
    %v4526 = vstv %s4525
    %v4527 = vmul.f32 %v4502, %v4526
    %v4528 = vmul.f32 %v4503, %v4526
    %v4529 = vmul.f32 %v4504, %v4526
    %4533 = vrot.lane.b32.xlu0 %v4527, 126
    %v4534 = vpop.permute.xlu0 %4533
    %4535 = vrot.lane.b32.xlu0 %v4528, 126
    %v4536 = vpop.permute.xlu0 %4535
    %4537 = vrot.lane.b32.xlu0 %v4529, 126
    %v4538 = vpop.permute.xlu0 %4537
    %v4539 = vsel %vm290, %v4534, %v4536
    %v4540 = vsel %vm290, %v4536, %v4538
    %v4543 = vadd.f32 %v4460, %v4539
    %v4544 = vadd.f32 %v4461, %v4540
    %s4545 = sld [smem:[#allocation2 + $0x138]]
    %v4546 = vstv %s4545
    %v4547 = vmul.f32 %v4502, %v4546
    %v4548 = vmul.f32 %v4503, %v4546
    %v4549 = vmul.f32 %v4504, %v4546
    %4553 = vrot.lane.b32.xlu0 %v4547, 126
    %v4554 = vpop.permute.xlu0 %4553
    %4555 = vrot.lane.b32.xlu0 %v4548, 126
    %v4556 = vpop.permute.xlu0 %4555
    %4557 = vrot.lane.b32.xlu0 %v4549, 126
    %v4558 = vpop.permute.xlu0 %4557
    %v4559 = vsel %vm290, %v4554, %v4556
    %v4560 = vsel %vm290, %v4556, %v4558
    %v4563 = vadd.f32 %v4480, %v4559
    %v4564 = vadd.f32 %v4481, %v4560
    %s4565 = sld [smem:[#allocation2 + $0x1b8]]
    %v4566 = vstv %s4565
    %v4567 = vmul.f32 %v4502, %v4566
    %v4568 = vmul.f32 %v4503, %v4566
    %v4569 = vmul.f32 %v4504, %v4566
    %4573 = vrot.lane.b32.xlu0 %v4567, 126
    %v4574 = vpop.permute.xlu0 %4573
    %4575 = vrot.lane.b32.xlu0 %v4568, 126
    %v4576 = vpop.permute.xlu0 %4575
    %4577 = vrot.lane.b32.xlu0 %v4569, 126
    %v4578 = vpop.permute.xlu0 %4577
    %v4579 = vsel %vm290, %v4574, %v4576
    %v4580 = vsel %vm290, %v4576, %v4578
    %v4583 = vadd.f32 %v4500, %v4579
    %v4584 = vadd.f32 %v4501, %v4580
    %v4585 = vmul.f32 %v4394, %v360
    %v4586 = vmul.f32 %v4390, %v364
    %v4587 = vmul.f32 %v4395, %v362
    %s4588 = sld [smem:[#allocation2 + $0x39]]
    %v4589 = vstv %s4588
    %v4590 = vmul.f32 %v4585, %v4589
    %v4591 = vmul.f32 %v4586, %v4589
    %v4592 = vmul.f32 %v4587, %v4589
    %4596 = vrot.lane.b32.xlu0 %v4590, 112
    %v4597 = vpop.permute.xlu0 %4596
    %4598 = vrot.lane.b32.xlu0 %v4591, 112
    %v4599 = vpop.permute.xlu0 %4598
    %4600 = vrot.lane.b32.xlu0 %v4592, 112
    %v4601 = vpop.permute.xlu0 %4600
    %v4602 = vsel %vm385, %v4597, %v4599
    %v4603 = vsel %vm385, %v4599, %v4601
    %v4606 = vadd.f32 %v4523, %v4602
    %v4607 = vadd.f32 %v4524, %v4603
    %s4608 = sld [smem:[#allocation2 + $0xb9]]
    %v4609 = vstv %s4608
    %v4610 = vmul.f32 %v4585, %v4609
    %v4611 = vmul.f32 %v4586, %v4609
    %v4612 = vmul.f32 %v4587, %v4609
    %4616 = vrot.lane.b32.xlu0 %v4610, 112
    %v4617 = vpop.permute.xlu0 %4616
    %4618 = vrot.lane.b32.xlu0 %v4611, 112
    %v4619 = vpop.permute.xlu0 %4618
    %4620 = vrot.lane.b32.xlu0 %v4612, 112
    %v4621 = vpop.permute.xlu0 %4620
    %v4622 = vsel %vm385, %v4617, %v4619
    %v4623 = vsel %vm385, %v4619, %v4621
    %v4626 = vadd.f32 %v4543, %v4622
    %v4627 = vadd.f32 %v4544, %v4623
    %s4628 = sld [smem:[#allocation2 + $0x139]]
    %v4629 = vstv %s4628
    %v4630 = vmul.f32 %v4585, %v4629
    %v4631 = vmul.f32 %v4586, %v4629
    %v4632 = vmul.f32 %v4587, %v4629
    %4636 = vrot.lane.b32.xlu0 %v4630, 112
    %v4637 = vpop.permute.xlu0 %4636
    %4638 = vrot.lane.b32.xlu0 %v4631, 112
    %v4639 = vpop.permute.xlu0 %4638
    %4640 = vrot.lane.b32.xlu0 %v4632, 112
    %v4641 = vpop.permute.xlu0 %4640
    %v4642 = vsel %vm385, %v4637, %v4639
    %v4643 = vsel %vm385, %v4639, %v4641
    %v4646 = vadd.f32 %v4563, %v4642
    %v4647 = vadd.f32 %v4564, %v4643
    %s4648 = sld [smem:[#allocation2 + $0x1b9]]
    %v4649 = vstv %s4648
    %v4650 = vmul.f32 %v4585, %v4649
    %v4651 = vmul.f32 %v4586, %v4649
    %v4652 = vmul.f32 %v4587, %v4649
    %4656 = vrot.lane.b32.xlu0 %v4650, 112
    %v4657 = vpop.permute.xlu0 %4656
    %4658 = vrot.lane.b32.xlu0 %v4651, 112
    %v4659 = vpop.permute.xlu0 %4658
    %4660 = vrot.lane.b32.xlu0 %v4652, 112
    %v4661 = vpop.permute.xlu0 %4660
    %v4662 = vsel %vm385, %v4657, %v4659
    %v4663 = vsel %vm385, %v4659, %v4661
    %v4666 = vadd.f32 %v4583, %v4662
    %v4667 = vadd.f32 %v4584, %v4663
    %s4668 = sld [smem:[#allocation2 + $0x3a]]
    %v4669 = vstv %s4668
    %v4670 = vmul.f32 %v4394, %v4669
    %v4671 = vmul.f32 %v4390, %v4669
    %v4672 = vmul.f32 %v4395, %v4669
    %4676 = vrot.lane.b32.xlu0 %v4670, 111
    %v4677 = vpop.permute.xlu0 %4676
    %4678 = vrot.lane.b32.xlu0 %v4671, 111
    %v4679 = vpop.permute.xlu0 %4678
    %4680 = vrot.lane.b32.xlu0 %v4672, 111
    %v4681 = vpop.permute.xlu0 %4680
    %v4682 = vsel %vm466, %v4677, %v4679
    %v4683 = vsel %vm466, %v4679, %v4681
    %v4686 = vadd.f32 %v4606, %v4682
    %v4687 = vadd.f32 %v4607, %v4683
    %s4688 = sld [smem:[#allocation2 + $0xba]]
    %v4689 = vstv %s4688
    %v4690 = vmul.f32 %v4394, %v4689
    %v4691 = vmul.f32 %v4390, %v4689
    %v4692 = vmul.f32 %v4395, %v4689
    %4696 = vrot.lane.b32.xlu0 %v4690, 111
    %v4697 = vpop.permute.xlu0 %4696
    %4698 = vrot.lane.b32.xlu0 %v4691, 111
    %v4699 = vpop.permute.xlu0 %4698
    %4700 = vrot.lane.b32.xlu0 %v4692, 111
    %v4701 = vpop.permute.xlu0 %4700
    %v4702 = vsel %vm466, %v4697, %v4699
    %v4703 = vsel %vm466, %v4699, %v4701
    %v4706 = vadd.f32 %v4626, %v4702
    %v4707 = vadd.f32 %v4627, %v4703
    %s4708 = sld [smem:[#allocation2 + $0x13a]]
    %v4709 = vstv %s4708
    %v4710 = vmul.f32 %v4394, %v4709
    %v4711 = vmul.f32 %v4390, %v4709
    %v4712 = vmul.f32 %v4395, %v4709
    %4716 = vrot.lane.b32.xlu0 %v4710, 111
    %v4717 = vpop.permute.xlu0 %4716
    %4718 = vrot.lane.b32.xlu0 %v4711, 111
    %v4719 = vpop.permute.xlu0 %4718
    %4720 = vrot.lane.b32.xlu0 %v4712, 111
    %v4721 = vpop.permute.xlu0 %4720
    %v4722 = vsel %vm466, %v4717, %v4719
    %v4723 = vsel %vm466, %v4719, %v4721
    %v4726 = vadd.f32 %v4646, %v4722
    %v4727 = vadd.f32 %v4647, %v4723
    %s4728 = sld [smem:[#allocation2 + $0x1ba]]
    %v4729 = vstv %s4728
    %v4730 = vmul.f32 %v4394, %v4729
    %v4731 = vmul.f32 %v4390, %v4729
    %v4732 = vmul.f32 %v4395, %v4729
    %4736 = vrot.lane.b32.xlu0 %v4730, 111
    %v4737 = vpop.permute.xlu0 %4736
    %4738 = vrot.lane.b32.xlu0 %v4731, 111
    %v4739 = vpop.permute.xlu0 %4738
    %4740 = vrot.lane.b32.xlu0 %v4732, 111
    %v4741 = vpop.permute.xlu0 %4740
    %v4742 = vsel %vm466, %v4737, %v4739
    %v4743 = vsel %vm466, %v4739, %v4741
    %v4746 = vadd.f32 %v4666, %v4742
    %v4747 = vadd.f32 %v4667, %v4743
    %v4748 = vmul.f32 %v4394, %v534
    %v4749 = vmul.f32 %v4390, %v538
    %v4750 = vmul.f32 %v4395, %v536
    %s4751 = sld [smem:[#allocation2 + $0x3b]]
    %v4752 = vstv %s4751
    %v4753 = vmul.f32 %v4748, %v4752
    %v4754 = vmul.f32 %v4749, %v4752
    %v4755 = vmul.f32 %v4750, %v4752
    %4759 = vrot.lane.b32.xlu0 %v4753, 110
    %v4760 = vpop.permute.xlu0 %4759
    %4761 = vrot.lane.b32.xlu0 %v4754, 110
    %v4762 = vpop.permute.xlu0 %4761
    %4763 = vrot.lane.b32.xlu0 %v4755, 110
    %v4764 = vpop.permute.xlu0 %4763
    %v4765 = vsel %vm559, %v4760, %v4762
    %v4766 = vsel %vm559, %v4762, %v4764
    %v4769 = vadd.f32 %v4686, %v4765
    %v4770 = vadd.f32 %v4687, %v4766
    %s4771 = sld [smem:[#allocation2 + $0xbb]]
    %v4772 = vstv %s4771
    %v4773 = vmul.f32 %v4748, %v4772
    %v4774 = vmul.f32 %v4749, %v4772
    %v4775 = vmul.f32 %v4750, %v4772
    %4779 = vrot.lane.b32.xlu0 %v4773, 110
    %v4780 = vpop.permute.xlu0 %4779
    %4781 = vrot.lane.b32.xlu0 %v4774, 110
    %v4782 = vpop.permute.xlu0 %4781
    %4783 = vrot.lane.b32.xlu0 %v4775, 110
    %v4784 = vpop.permute.xlu0 %4783
    %v4785 = vsel %vm559, %v4780, %v4782
    %v4786 = vsel %vm559, %v4782, %v4784
    %v4789 = vadd.f32 %v4706, %v4785
    %v4790 = vadd.f32 %v4707, %v4786
    %s4791 = sld [smem:[#allocation2 + $0x13b]]
    %v4792 = vstv %s4791
    %v4793 = vmul.f32 %v4748, %v4792
    %v4794 = vmul.f32 %v4749, %v4792
    %v4795 = vmul.f32 %v4750, %v4792
    %4799 = vrot.lane.b32.xlu0 %v4793, 110
    %v4800 = vpop.permute.xlu0 %4799
    %4801 = vrot.lane.b32.xlu0 %v4794, 110
    %v4802 = vpop.permute.xlu0 %4801
    %4803 = vrot.lane.b32.xlu0 %v4795, 110
    %v4804 = vpop.permute.xlu0 %4803
    %v4805 = vsel %vm559, %v4800, %v4802
    %v4806 = vsel %vm559, %v4802, %v4804
    %v4809 = vadd.f32 %v4726, %v4805
    %v4810 = vadd.f32 %v4727, %v4806
    %s4811 = sld [smem:[#allocation2 + $0x1bb]]
    %v4812 = vstv %s4811
    %v4813 = vmul.f32 %v4748, %v4812
    %v4814 = vmul.f32 %v4749, %v4812
    %v4815 = vmul.f32 %v4750, %v4812
    %4819 = vrot.lane.b32.xlu0 %v4813, 110
    %v4820 = vpop.permute.xlu0 %4819
    %4821 = vrot.lane.b32.xlu0 %v4814, 110
    %v4822 = vpop.permute.xlu0 %4821
    %4823 = vrot.lane.b32.xlu0 %v4815, 110
    %v4824 = vpop.permute.xlu0 %4823
    %v4825 = vsel %vm559, %v4820, %v4822
    %v4826 = vsel %vm559, %v4822, %v4824
    %v4829 = vadd.f32 %v4746, %v4825
    %v4830 = vadd.f32 %v4747, %v4826
    %v4831 = vmul.f32 %v4394, %v627
    %v4832 = vmul.f32 %v4390, %v631
    %v4833 = vmul.f32 %v4395, %v629
    %s4834 = sld [smem:[#allocation2 + $0x3c]]
    %v4835 = vstv %s4834
    %v4836 = vmul.f32 %v4831, %v4835
    %v4837 = vmul.f32 %v4832, %v4835
    %v4838 = vmul.f32 %v4833, %v4835
    %4842 = vrot.lane.b32.xlu0 %v4836, 96
    %v4843 = vpop.permute.xlu0 %4842
    %4844 = vrot.lane.b32.xlu0 %v4837, 96
    %v4845 = vpop.permute.xlu0 %4844
    %4846 = vrot.lane.b32.xlu0 %v4838, 96
    %v4847 = vpop.permute.xlu0 %4846
    %v4848 = vsel %vm652, %v4843, %v4845
    %v4849 = vsel %vm652, %v4845, %v4847
    %v4852 = vadd.f32 %v4769, %v4848
    %v4853 = vadd.f32 %v4770, %v4849
    %s4854 = sld [smem:[#allocation2 + $0xbc]]
    %v4855 = vstv %s4854
    %v4856 = vmul.f32 %v4831, %v4855
    %v4857 = vmul.f32 %v4832, %v4855
    %v4858 = vmul.f32 %v4833, %v4855
    %4862 = vrot.lane.b32.xlu0 %v4856, 96
    %v4863 = vpop.permute.xlu0 %4862
    %4864 = vrot.lane.b32.xlu0 %v4857, 96
    %v4865 = vpop.permute.xlu0 %4864
    %4866 = vrot.lane.b32.xlu0 %v4858, 96
    %v4867 = vpop.permute.xlu0 %4866
    %v4868 = vsel %vm652, %v4863, %v4865
    %v4869 = vsel %vm652, %v4865, %v4867
    %v4872 = vadd.f32 %v4789, %v4868
    %v4873 = vadd.f32 %v4790, %v4869
    %s4874 = sld [smem:[#allocation2 + $0x13c]]
    %v4875 = vstv %s4874
    %v4876 = vmul.f32 %v4831, %v4875
    %v4877 = vmul.f32 %v4832, %v4875
    %v4878 = vmul.f32 %v4833, %v4875
    %4882 = vrot.lane.b32.xlu0 %v4876, 96
    %v4883 = vpop.permute.xlu0 %4882
    %4884 = vrot.lane.b32.xlu0 %v4877, 96
    %v4885 = vpop.permute.xlu0 %4884
    %4886 = vrot.lane.b32.xlu0 %v4878, 96
    %v4887 = vpop.permute.xlu0 %4886
    %v4888 = vsel %vm652, %v4883, %v4885
    %v4889 = vsel %vm652, %v4885, %v4887
    %v4892 = vadd.f32 %v4809, %v4888
    %v4893 = vadd.f32 %v4810, %v4889
    %s4894 = sld [smem:[#allocation2 + $0x1bc]]
    %v4895 = vstv %s4894
    %v4896 = vmul.f32 %v4831, %v4895
    %v4897 = vmul.f32 %v4832, %v4895
    %v4898 = vmul.f32 %v4833, %v4895
    %4902 = vrot.lane.b32.xlu0 %v4896, 96
    %v4903 = vpop.permute.xlu0 %4902
    %4904 = vrot.lane.b32.xlu0 %v4897, 96
    %v4905 = vpop.permute.xlu0 %4904
    %4906 = vrot.lane.b32.xlu0 %v4898, 96
    %v4907 = vpop.permute.xlu0 %4906
    %v4908 = vsel %vm652, %v4903, %v4905
    %v4909 = vsel %vm652, %v4905, %v4907
    %v4912 = vadd.f32 %v4829, %v4908
    %v4913 = vadd.f32 %v4830, %v4909
    %s4914 = sld [smem:[#allocation2 + $0x3d]]
    %v4915 = vstv %s4914
    %v4916 = vmul.f32 %v4394, %v4915
    %v4917 = vmul.f32 %v4390, %v4915
    %v4918 = vmul.f32 %v4395, %v4915
    %4922 = vrot.lane.b32.xlu0 %v4916, 95
    %v4923 = vpop.permute.xlu0 %4922
    %4924 = vrot.lane.b32.xlu0 %v4917, 95
    %v4925 = vpop.permute.xlu0 %4924
    %4926 = vrot.lane.b32.xlu0 %v4918, 95
    %v4927 = vpop.permute.xlu0 %4926
    %v4928 = vsel %vm733, %v4923, %v4925
    %v4929 = vsel %vm733, %v4925, %v4927
    %v4932 = vadd.f32 %v4852, %v4928
    %v4933 = vadd.f32 %v4853, %v4929
    %s4934 = sld [smem:[#allocation2 + $0xbd]]
    %v4935 = vstv %s4934
    %v4936 = vmul.f32 %v4394, %v4935
    %v4937 = vmul.f32 %v4390, %v4935
    %v4938 = vmul.f32 %v4395, %v4935
    %4942 = vrot.lane.b32.xlu0 %v4936, 95
    %v4943 = vpop.permute.xlu0 %4942
    %4944 = vrot.lane.b32.xlu0 %v4937, 95
    %v4945 = vpop.permute.xlu0 %4944
    %4946 = vrot.lane.b32.xlu0 %v4938, 95
    %v4947 = vpop.permute.xlu0 %4946
    %v4948 = vsel %vm733, %v4943, %v4945
    %v4949 = vsel %vm733, %v4945, %v4947
    %v4952 = vadd.f32 %v4872, %v4948
    %v4953 = vadd.f32 %v4873, %v4949
    %s4954 = sld [smem:[#allocation2 + $0x13d]]
    %v4955 = vstv %s4954
    %v4956 = vmul.f32 %v4394, %v4955
    %v4957 = vmul.f32 %v4390, %v4955
    %v4958 = vmul.f32 %v4395, %v4955
    %4962 = vrot.lane.b32.xlu0 %v4956, 95
    %v4963 = vpop.permute.xlu0 %4962
    %4964 = vrot.lane.b32.xlu0 %v4957, 95
    %v4965 = vpop.permute.xlu0 %4964
    %4966 = vrot.lane.b32.xlu0 %v4958, 95
    %v4967 = vpop.permute.xlu0 %4966
    %v4968 = vsel %vm733, %v4963, %v4965
    %v4969 = vsel %vm733, %v4965, %v4967
    %v4972 = vadd.f32 %v4892, %v4968
    %v4973 = vadd.f32 %v4893, %v4969
    %s4974 = sld [smem:[#allocation2 + $0x1bd]]
    %v4975 = vstv %s4974
    %v4976 = vmul.f32 %v4394, %v4975
    %v4977 = vmul.f32 %v4390, %v4975
    %v4978 = vmul.f32 %v4395, %v4975
    %4982 = vrot.lane.b32.xlu0 %v4976, 95
    %v4983 = vpop.permute.xlu0 %4982
    %4984 = vrot.lane.b32.xlu0 %v4977, 95
    %v4985 = vpop.permute.xlu0 %4984
    %4986 = vrot.lane.b32.xlu0 %v4978, 95
    %v4987 = vpop.permute.xlu0 %4986
    %v4988 = vsel %vm733, %v4983, %v4985
    %v4989 = vsel %vm733, %v4985, %v4987
    %v4992 = vadd.f32 %v4912, %v4988
    %v4993 = vadd.f32 %v4913, %v4989
    %v4994 = vmul.f32 %v4394, %v801
    %v4995 = vmul.f32 %v4390, %v805
    %v4996 = vmul.f32 %v4395, %v803
    %s4997 = sld [smem:[#allocation2 + $0x3e]]
    %v4998 = vstv %s4997
    %v4999 = vmul.f32 %v4994, %v4998
    %v5000 = vmul.f32 %v4995, %v4998
    %v5001 = vmul.f32 %v4996, %v4998
    %5005 = vrot.lane.b32.xlu0 %v4999, 94
    %v5006 = vpop.permute.xlu0 %5005
    %5007 = vrot.lane.b32.xlu0 %v5000, 94
    %v5008 = vpop.permute.xlu0 %5007
    %5009 = vrot.lane.b32.xlu0 %v5001, 94
    %v5010 = vpop.permute.xlu0 %5009
    %v5011 = vsel %vm826, %v5006, %v5008
    %v5012 = vsel %vm826, %v5008, %v5010
    %v5015 = vadd.f32 %v4932, %v5011
    %v5016 = vadd.f32 %v4933, %v5012
    %s5017 = sld [smem:[#allocation2 + $0xbe]]
    %v5018 = vstv %s5017
    %v5019 = vmul.f32 %v4994, %v5018
    %v5020 = vmul.f32 %v4995, %v5018
    %v5021 = vmul.f32 %v4996, %v5018
    %5025 = vrot.lane.b32.xlu0 %v5019, 94
    %v5026 = vpop.permute.xlu0 %5025
    %5027 = vrot.lane.b32.xlu0 %v5020, 94
    %v5028 = vpop.permute.xlu0 %5027
    %5029 = vrot.lane.b32.xlu0 %v5021, 94
    %v5030 = vpop.permute.xlu0 %5029
    %v5031 = vsel %vm826, %v5026, %v5028
    %v5032 = vsel %vm826, %v5028, %v5030
    %v5035 = vadd.f32 %v4952, %v5031
    %v5036 = vadd.f32 %v4953, %v5032
    %s5037 = sld [smem:[#allocation2 + $0x13e]]
    %v5038 = vstv %s5037
    %v5039 = vmul.f32 %v4994, %v5038
    %v5040 = vmul.f32 %v4995, %v5038
    %v5041 = vmul.f32 %v4996, %v5038
    %5045 = vrot.lane.b32.xlu0 %v5039, 94
    %v5046 = vpop.permute.xlu0 %5045
    %5047 = vrot.lane.b32.xlu0 %v5040, 94
    %v5048 = vpop.permute.xlu0 %5047
    %5049 = vrot.lane.b32.xlu0 %v5041, 94
    %v5050 = vpop.permute.xlu0 %5049
    %v5051 = vsel %vm826, %v5046, %v5048
    %v5052 = vsel %vm826, %v5048, %v5050
    %v5055 = vadd.f32 %v4972, %v5051
    %v5056 = vadd.f32 %v4973, %v5052
    %s5057 = sld [smem:[#allocation2 + $0x1be]]
    %v5058 = vstv %s5057
    %v5059 = vmul.f32 %v4994, %v5058
    %v5060 = vmul.f32 %v4995, %v5058
    %v5061 = vmul.f32 %v4996, %v5058
    %5065 = vrot.lane.b32.xlu0 %v5059, 94
    %v5066 = vpop.permute.xlu0 %5065
    %5067 = vrot.lane.b32.xlu0 %v5060, 94
    %v5068 = vpop.permute.xlu0 %5067
    %5069 = vrot.lane.b32.xlu0 %v5061, 94
    %v5070 = vpop.permute.xlu0 %5069
    %v5071 = vsel %vm826, %v5066, %v5068
    %v5072 = vsel %vm826, %v5068, %v5070
    %v5075 = vadd.f32 %v4992, %v5071
    %v5076 = vadd.f32 %v4993, %v5072
    %v5077 = vperm.slane %v141, 3
    %v5078 = vperm.slane %v141, 7
    %v5079 = vperm.slane %v142, 3
    %v5080 = vperm.slane %v142, 7
    %v5081 = vsel %vm149, %v5079, %v5077
    %v5082 = vsel %vm149, %v5080, %v5078
    %5083 = vrot.lane.b32.xlu0 %v5081, 17
    %v5084 = vpop.permute.xlu0 %5083
    %5085 = vrot.lane.b32.xlu0 %v5082, 17
    %v5086 = vpop.permute.xlu0 %5085
    %v5087 = vsel %vm156, %v5084, %v5086
    %v5091 = vsel %vm156, 0.0, %v5084
    %v5092 = vsel %vm156, %v5086, 0.0
    %v5093 = vmul.f32 %v5091, %v131
    %v5094 = vmul.f32 %v5087, %v132
    %s5095 = sld [smem:[#allocation2 + $0x3f]]
    %v5096 = vstv %s5095
    %v5097 = vmul.f32 %v5093, %v5096
    %v5098 = vmul.f32 %v5094, %v5096
    %v5099 = vadd.f32 %v5015, %v5097
    %v5100 = vadd.f32 %v5016, %v5098
    %s5101 = sld [smem:[#allocation2 + $0xbf]]
    %v5102 = vstv %s5101
    %v5103 = vmul.f32 %v5093, %v5102
    %v5104 = vmul.f32 %v5094, %v5102
    %v5105 = vadd.f32 %v5035, %v5103
    %v5106 = vadd.f32 %v5036, %v5104
    %s5107 = sld [smem:[#allocation2 + $0x13f]]
    %v5108 = vstv %s5107
    %v5109 = vmul.f32 %v5093, %v5108
    %v5110 = vmul.f32 %v5094, %v5108
    %v5111 = vadd.f32 %v5055, %v5109
    %v5112 = vadd.f32 %v5056, %v5110
    %s5113 = sld [smem:[#allocation2 + $0x1bf]]
    %v5114 = vstv %s5113
    %v5115 = vmul.f32 %v5093, %v5114
    %v5116 = vmul.f32 %v5094, %v5114
    %v5117 = vadd.f32 %v5075, %v5115
    %v5118 = vadd.f32 %v5076, %v5116
    %s5119 = sld [smem:[#allocation2 + $0x40]]
    %v5120 = vstv %s5119
    %v5121 = vmul.f32 %v5091, %v5120
    %v5122 = vmul.f32 %v5087, %v5120
    %v5123 = vmul.f32 %v5092, %v5120
    %5127 = vrot.lane.b32.xlu0 %v5121, 127
    %v5128 = vpop.permute.xlu0 %5127
    %5129 = vrot.lane.b32.xlu0 %v5122, 127
    %v5130 = vpop.permute.xlu0 %5129
    %5131 = vrot.lane.b32.xlu0 %v5123, 127
    %v5132 = vpop.permute.xlu0 %5131
    %v5133 = vsel %vm195, %v5128, %v5130
    %v5134 = vsel %vm195, %v5130, %v5132
    %v5137 = vadd.f32 %v5099, %v5133
    %v5138 = vadd.f32 %v5100, %v5134
    %s5139 = sld [smem:[#allocation2 + $0xc0]]
    %v5140 = vstv %s5139
    %v5141 = vmul.f32 %v5091, %v5140
    %v5142 = vmul.f32 %v5087, %v5140
    %v5143 = vmul.f32 %v5092, %v5140
    %5147 = vrot.lane.b32.xlu0 %v5141, 127
    %v5148 = vpop.permute.xlu0 %5147
    %5149 = vrot.lane.b32.xlu0 %v5142, 127
    %v5150 = vpop.permute.xlu0 %5149
    %5151 = vrot.lane.b32.xlu0 %v5143, 127
    %v5152 = vpop.permute.xlu0 %5151
    %v5153 = vsel %vm195, %v5148, %v5150
    %v5154 = vsel %vm195, %v5150, %v5152
    %v5157 = vadd.f32 %v5105, %v5153
    %v5158 = vadd.f32 %v5106, %v5154
    %s5159 = sld [smem:[#allocation2 + $0x140]]
    %v5160 = vstv %s5159
    %v5161 = vmul.f32 %v5091, %v5160
    %v5162 = vmul.f32 %v5087, %v5160
    %v5163 = vmul.f32 %v5092, %v5160
    %5167 = vrot.lane.b32.xlu0 %v5161, 127
    %v5168 = vpop.permute.xlu0 %5167
    %5169 = vrot.lane.b32.xlu0 %v5162, 127
    %v5170 = vpop.permute.xlu0 %5169
    %5171 = vrot.lane.b32.xlu0 %v5163, 127
    %v5172 = vpop.permute.xlu0 %5171
    %v5173 = vsel %vm195, %v5168, %v5170
    %v5174 = vsel %vm195, %v5170, %v5172
    %v5177 = vadd.f32 %v5111, %v5173
    %v5178 = vadd.f32 %v5112, %v5174
    %s5179 = sld [smem:[#allocation2 + $0x1c0]]
    %v5180 = vstv %s5179
    %v5181 = vmul.f32 %v5091, %v5180
    %v5182 = vmul.f32 %v5087, %v5180
    %v5183 = vmul.f32 %v5092, %v5180
    %5187 = vrot.lane.b32.xlu0 %v5181, 127
    %v5188 = vpop.permute.xlu0 %5187
    %5189 = vrot.lane.b32.xlu0 %v5182, 127
    %v5190 = vpop.permute.xlu0 %5189
    %5191 = vrot.lane.b32.xlu0 %v5183, 127
    %v5192 = vpop.permute.xlu0 %5191
    %v5193 = vsel %vm195, %v5188, %v5190
    %v5194 = vsel %vm195, %v5190, %v5192
    %v5197 = vadd.f32 %v5117, %v5193
    %v5198 = vadd.f32 %v5118, %v5194
    %v5199 = vmul.f32 %v5091, %v265
    %v5200 = vmul.f32 %v5087, %v269
    %v5201 = vmul.f32 %v5092, %v267
    %s5202 = sld [smem:[#allocation2 + $0x41]]
    %v5203 = vstv %s5202
    %v5204 = vmul.f32 %v5199, %v5203
    %v5205 = vmul.f32 %v5200, %v5203
    %v5206 = vmul.f32 %v5201, %v5203
    %5210 = vrot.lane.b32.xlu0 %v5204, 126
    %v5211 = vpop.permute.xlu0 %5210
    %5212 = vrot.lane.b32.xlu0 %v5205, 126
    %v5213 = vpop.permute.xlu0 %5212
    %5214 = vrot.lane.b32.xlu0 %v5206, 126
    %v5215 = vpop.permute.xlu0 %5214
    %v5216 = vsel %vm290, %v5211, %v5213
    %v5217 = vsel %vm290, %v5213, %v5215
    %v5220 = vadd.f32 %v5137, %v5216
    %v5221 = vadd.f32 %v5138, %v5217
    %s5222 = sld [smem:[#allocation2 + $0xc1]]
    %v5223 = vstv %s5222
    %v5224 = vmul.f32 %v5199, %v5223
    %v5225 = vmul.f32 %v5200, %v5223
    %v5226 = vmul.f32 %v5201, %v5223
    %5230 = vrot.lane.b32.xlu0 %v5224, 126
    %v5231 = vpop.permute.xlu0 %5230
    %5232 = vrot.lane.b32.xlu0 %v5225, 126
    %v5233 = vpop.permute.xlu0 %5232
    %5234 = vrot.lane.b32.xlu0 %v5226, 126
    %v5235 = vpop.permute.xlu0 %5234
    %v5236 = vsel %vm290, %v5231, %v5233
    %v5237 = vsel %vm290, %v5233, %v5235
    %v5240 = vadd.f32 %v5157, %v5236
    %v5241 = vadd.f32 %v5158, %v5237
    %s5242 = sld [smem:[#allocation2 + $0x141]]
    %v5243 = vstv %s5242
    %v5244 = vmul.f32 %v5199, %v5243
    %v5245 = vmul.f32 %v5200, %v5243
    %v5246 = vmul.f32 %v5201, %v5243
    %5250 = vrot.lane.b32.xlu0 %v5244, 126
    %v5251 = vpop.permute.xlu0 %5250
    %5252 = vrot.lane.b32.xlu0 %v5245, 126
    %v5253 = vpop.permute.xlu0 %5252
    %5254 = vrot.lane.b32.xlu0 %v5246, 126
    %v5255 = vpop.permute.xlu0 %5254
    %v5256 = vsel %vm290, %v5251, %v5253
    %v5257 = vsel %vm290, %v5253, %v5255
    %v5260 = vadd.f32 %v5177, %v5256
    %v5261 = vadd.f32 %v5178, %v5257
    %s5262 = sld [smem:[#allocation2 + $0x1c1]]
    %v5263 = vstv %s5262
    %v5264 = vmul.f32 %v5199, %v5263
    %v5265 = vmul.f32 %v5200, %v5263
    %v5266 = vmul.f32 %v5201, %v5263
    %5270 = vrot.lane.b32.xlu0 %v5264, 126
    %v5271 = vpop.permute.xlu0 %5270
    %5272 = vrot.lane.b32.xlu0 %v5265, 126
    %v5273 = vpop.permute.xlu0 %5272
    %5274 = vrot.lane.b32.xlu0 %v5266, 126
    %v5275 = vpop.permute.xlu0 %5274
    %v5276 = vsel %vm290, %v5271, %v5273
    %v5277 = vsel %vm290, %v5273, %v5275
    %v5280 = vadd.f32 %v5197, %v5276
    %v5281 = vadd.f32 %v5198, %v5277
    %v5282 = vmul.f32 %v5091, %v360
    %v5283 = vmul.f32 %v5087, %v364
    %v5284 = vmul.f32 %v5092, %v362
    %s5285 = sld [smem:[#allocation2 + $0x42]]
    %v5286 = vstv %s5285
    %v5287 = vmul.f32 %v5282, %v5286
    %v5288 = vmul.f32 %v5283, %v5286
    %v5289 = vmul.f32 %v5284, %v5286
    %5293 = vrot.lane.b32.xlu0 %v5287, 112
    %v5294 = vpop.permute.xlu0 %5293
    %5295 = vrot.lane.b32.xlu0 %v5288, 112
    %v5296 = vpop.permute.xlu0 %5295
    %5297 = vrot.lane.b32.xlu0 %v5289, 112
    %v5298 = vpop.permute.xlu0 %5297
    %v5299 = vsel %vm385, %v5294, %v5296
    %v5300 = vsel %vm385, %v5296, %v5298
    %v5303 = vadd.f32 %v5220, %v5299
    %v5304 = vadd.f32 %v5221, %v5300
    %s5305 = sld [smem:[#allocation2 + $0xc2]]
    %v5306 = vstv %s5305
    %v5307 = vmul.f32 %v5282, %v5306
    %v5308 = vmul.f32 %v5283, %v5306
    %v5309 = vmul.f32 %v5284, %v5306
    %5313 = vrot.lane.b32.xlu0 %v5307, 112
    %v5314 = vpop.permute.xlu0 %5313
    %5315 = vrot.lane.b32.xlu0 %v5308, 112
    %v5316 = vpop.permute.xlu0 %5315
    %5317 = vrot.lane.b32.xlu0 %v5309, 112
    %v5318 = vpop.permute.xlu0 %5317
    %v5319 = vsel %vm385, %v5314, %v5316
    %v5320 = vsel %vm385, %v5316, %v5318
    %v5323 = vadd.f32 %v5240, %v5319
    %v5324 = vadd.f32 %v5241, %v5320
    %s5325 = sld [smem:[#allocation2 + $0x142]]
    %v5326 = vstv %s5325
    %v5327 = vmul.f32 %v5282, %v5326
    %v5328 = vmul.f32 %v5283, %v5326
    %v5329 = vmul.f32 %v5284, %v5326
    %5333 = vrot.lane.b32.xlu0 %v5327, 112
    %v5334 = vpop.permute.xlu0 %5333
    %5335 = vrot.lane.b32.xlu0 %v5328, 112
    %v5336 = vpop.permute.xlu0 %5335
    %5337 = vrot.lane.b32.xlu0 %v5329, 112
    %v5338 = vpop.permute.xlu0 %5337
    %v5339 = vsel %vm385, %v5334, %v5336
    %v5340 = vsel %vm385, %v5336, %v5338
    %v5343 = vadd.f32 %v5260, %v5339
    %v5344 = vadd.f32 %v5261, %v5340
    %s5345 = sld [smem:[#allocation2 + $0x1c2]]
    %v5346 = vstv %s5345
    %v5347 = vmul.f32 %v5282, %v5346
    %v5348 = vmul.f32 %v5283, %v5346
    %v5349 = vmul.f32 %v5284, %v5346
    %5353 = vrot.lane.b32.xlu0 %v5347, 112
    %v5354 = vpop.permute.xlu0 %5353
    %5355 = vrot.lane.b32.xlu0 %v5348, 112
    %v5356 = vpop.permute.xlu0 %5355
    %5357 = vrot.lane.b32.xlu0 %v5349, 112
    %v5358 = vpop.permute.xlu0 %5357
    %v5359 = vsel %vm385, %v5354, %v5356
    %v5360 = vsel %vm385, %v5356, %v5358
    %v5363 = vadd.f32 %v5280, %v5359
    %v5364 = vadd.f32 %v5281, %v5360
    %s5365 = sld [smem:[#allocation2 + $0x43]]
    %v5366 = vstv %s5365
    %v5367 = vmul.f32 %v5091, %v5366
    %v5368 = vmul.f32 %v5087, %v5366
    %v5369 = vmul.f32 %v5092, %v5366
    %5373 = vrot.lane.b32.xlu0 %v5367, 111
    %v5374 = vpop.permute.xlu0 %5373
    %5375 = vrot.lane.b32.xlu0 %v5368, 111
    %v5376 = vpop.permute.xlu0 %5375
    %5377 = vrot.lane.b32.xlu0 %v5369, 111
    %v5378 = vpop.permute.xlu0 %5377
    %v5379 = vsel %vm466, %v5374, %v5376
    %v5380 = vsel %vm466, %v5376, %v5378
    %v5383 = vadd.f32 %v5303, %v5379
    %v5384 = vadd.f32 %v5304, %v5380
    %s5385 = sld [smem:[#allocation2 + $0xc3]]
    %v5386 = vstv %s5385
    %v5387 = vmul.f32 %v5091, %v5386
    %v5388 = vmul.f32 %v5087, %v5386
    %v5389 = vmul.f32 %v5092, %v5386
    %5393 = vrot.lane.b32.xlu0 %v5387, 111
    %v5394 = vpop.permute.xlu0 %5393
    %5395 = vrot.lane.b32.xlu0 %v5388, 111
    %v5396 = vpop.permute.xlu0 %5395
    %5397 = vrot.lane.b32.xlu0 %v5389, 111
    %v5398 = vpop.permute.xlu0 %5397
    %v5399 = vsel %vm466, %v5394, %v5396
    %v5400 = vsel %vm466, %v5396, %v5398
    %v5403 = vadd.f32 %v5323, %v5399
    %v5404 = vadd.f32 %v5324, %v5400
    %s5405 = sld [smem:[#allocation2 + $0x143]]
    %v5406 = vstv %s5405
    %v5407 = vmul.f32 %v5091, %v5406
    %v5408 = vmul.f32 %v5087, %v5406
    %v5409 = vmul.f32 %v5092, %v5406
    %5413 = vrot.lane.b32.xlu0 %v5407, 111
    %v5414 = vpop.permute.xlu0 %5413
    %5415 = vrot.lane.b32.xlu0 %v5408, 111
    %v5416 = vpop.permute.xlu0 %5415
    %5417 = vrot.lane.b32.xlu0 %v5409, 111
    %v5418 = vpop.permute.xlu0 %5417
    %v5419 = vsel %vm466, %v5414, %v5416
    %v5420 = vsel %vm466, %v5416, %v5418
    %v5423 = vadd.f32 %v5343, %v5419
    %v5424 = vadd.f32 %v5344, %v5420
    %s5425 = sld [smem:[#allocation2 + $0x1c3]]
    %v5426 = vstv %s5425
    %v5427 = vmul.f32 %v5091, %v5426
    %v5428 = vmul.f32 %v5087, %v5426
    %v5429 = vmul.f32 %v5092, %v5426
    %5433 = vrot.lane.b32.xlu0 %v5427, 111
    %v5434 = vpop.permute.xlu0 %5433
    %5435 = vrot.lane.b32.xlu0 %v5428, 111
    %v5436 = vpop.permute.xlu0 %5435
    %5437 = vrot.lane.b32.xlu0 %v5429, 111
    %v5438 = vpop.permute.xlu0 %5437
    %v5439 = vsel %vm466, %v5434, %v5436
    %v5440 = vsel %vm466, %v5436, %v5438
    %v5443 = vadd.f32 %v5363, %v5439
    %v5444 = vadd.f32 %v5364, %v5440
    %v5445 = vmul.f32 %v5091, %v534
    %v5446 = vmul.f32 %v5087, %v538
    %v5447 = vmul.f32 %v5092, %v536
    %s5448 = sld [smem:[#allocation2 + $0x44]]
    %v5449 = vstv %s5448
    %v5450 = vmul.f32 %v5445, %v5449
    %v5451 = vmul.f32 %v5446, %v5449
    %v5452 = vmul.f32 %v5447, %v5449
    %5456 = vrot.lane.b32.xlu0 %v5450, 110
    %v5457 = vpop.permute.xlu0 %5456
    %5458 = vrot.lane.b32.xlu0 %v5451, 110
    %v5459 = vpop.permute.xlu0 %5458
    %5460 = vrot.lane.b32.xlu0 %v5452, 110
    %v5461 = vpop.permute.xlu0 %5460
    %v5462 = vsel %vm559, %v5457, %v5459
    %v5463 = vsel %vm559, %v5459, %v5461
    %v5466 = vadd.f32 %v5383, %v5462
    %v5467 = vadd.f32 %v5384, %v5463
    %s5468 = sld [smem:[#allocation2 + $0xc4]]
    %v5469 = vstv %s5468
    %v5470 = vmul.f32 %v5445, %v5469
    %v5471 = vmul.f32 %v5446, %v5469
    %v5472 = vmul.f32 %v5447, %v5469
    %5476 = vrot.lane.b32.xlu0 %v5470, 110
    %v5477 = vpop.permute.xlu0 %5476
    %5478 = vrot.lane.b32.xlu0 %v5471, 110
    %v5479 = vpop.permute.xlu0 %5478
    %5480 = vrot.lane.b32.xlu0 %v5472, 110
    %v5481 = vpop.permute.xlu0 %5480
    %v5482 = vsel %vm559, %v5477, %v5479
    %v5483 = vsel %vm559, %v5479, %v5481
    %v5486 = vadd.f32 %v5403, %v5482
    %v5487 = vadd.f32 %v5404, %v5483
    %s5488 = sld [smem:[#allocation2 + $0x144]]
    %v5489 = vstv %s5488
    %v5490 = vmul.f32 %v5445, %v5489
    %v5491 = vmul.f32 %v5446, %v5489
    %v5492 = vmul.f32 %v5447, %v5489
    %5496 = vrot.lane.b32.xlu0 %v5490, 110
    %v5497 = vpop.permute.xlu0 %5496
    %5498 = vrot.lane.b32.xlu0 %v5491, 110
    %v5499 = vpop.permute.xlu0 %5498
    %5500 = vrot.lane.b32.xlu0 %v5492, 110
    %v5501 = vpop.permute.xlu0 %5500
    %v5502 = vsel %vm559, %v5497, %v5499
    %v5503 = vsel %vm559, %v5499, %v5501
    %v5506 = vadd.f32 %v5423, %v5502
    %v5507 = vadd.f32 %v5424, %v5503
    %s5508 = sld [smem:[#allocation2 + $0x1c4]]
    %v5509 = vstv %s5508
    %v5510 = vmul.f32 %v5445, %v5509
    %v5511 = vmul.f32 %v5446, %v5509
    %v5512 = vmul.f32 %v5447, %v5509
    %5516 = vrot.lane.b32.xlu0 %v5510, 110
    %v5517 = vpop.permute.xlu0 %5516
    %5518 = vrot.lane.b32.xlu0 %v5511, 110
    %v5519 = vpop.permute.xlu0 %5518
    %5520 = vrot.lane.b32.xlu0 %v5512, 110
    %v5521 = vpop.permute.xlu0 %5520
    %v5522 = vsel %vm559, %v5517, %v5519
    %v5523 = vsel %vm559, %v5519, %v5521
    %v5526 = vadd.f32 %v5443, %v5522
    %v5527 = vadd.f32 %v5444, %v5523
    %v5528 = vmul.f32 %v5091, %v627
    %v5529 = vmul.f32 %v5087, %v631
    %v5530 = vmul.f32 %v5092, %v629
    %s5531 = sld [smem:[#allocation2 + $0x45]]
    %v5532 = vstv %s5531
    %v5533 = vmul.f32 %v5528, %v5532
    %v5534 = vmul.f32 %v5529, %v5532
    %v5535 = vmul.f32 %v5530, %v5532
    %5539 = vrot.lane.b32.xlu0 %v5533, 96
    %v5540 = vpop.permute.xlu0 %5539
    %5541 = vrot.lane.b32.xlu0 %v5534, 96
    %v5542 = vpop.permute.xlu0 %5541
    %5543 = vrot.lane.b32.xlu0 %v5535, 96
    %v5544 = vpop.permute.xlu0 %5543
    %v5545 = vsel %vm652, %v5540, %v5542
    %v5546 = vsel %vm652, %v5542, %v5544
    %v5549 = vadd.f32 %v5466, %v5545
    %v5550 = vadd.f32 %v5467, %v5546
    %s5551 = sld [smem:[#allocation2 + $0xc5]]
    %v5552 = vstv %s5551
    %v5553 = vmul.f32 %v5528, %v5552
    %v5554 = vmul.f32 %v5529, %v5552
    %v5555 = vmul.f32 %v5530, %v5552
    %5559 = vrot.lane.b32.xlu0 %v5553, 96
    %v5560 = vpop.permute.xlu0 %5559
    %5561 = vrot.lane.b32.xlu0 %v5554, 96
    %v5562 = vpop.permute.xlu0 %5561
    %5563 = vrot.lane.b32.xlu0 %v5555, 96
    %v5564 = vpop.permute.xlu0 %5563
    %v5565 = vsel %vm652, %v5560, %v5562
    %v5566 = vsel %vm652, %v5562, %v5564
    %v5569 = vadd.f32 %v5486, %v5565
    %v5570 = vadd.f32 %v5487, %v5566
    %s5571 = sld [smem:[#allocation2 + $0x145]]
    %v5572 = vstv %s5571
    %v5573 = vmul.f32 %v5528, %v5572
    %v5574 = vmul.f32 %v5529, %v5572
    %v5575 = vmul.f32 %v5530, %v5572
    %5579 = vrot.lane.b32.xlu0 %v5573, 96
    %v5580 = vpop.permute.xlu0 %5579
    %5581 = vrot.lane.b32.xlu0 %v5574, 96
    %v5582 = vpop.permute.xlu0 %5581
    %5583 = vrot.lane.b32.xlu0 %v5575, 96
    %v5584 = vpop.permute.xlu0 %5583
    %v5585 = vsel %vm652, %v5580, %v5582
    %v5586 = vsel %vm652, %v5582, %v5584
    %v5589 = vadd.f32 %v5506, %v5585
    %v5590 = vadd.f32 %v5507, %v5586
    %s5591 = sld [smem:[#allocation2 + $0x1c5]]
    %v5592 = vstv %s5591
    %v5593 = vmul.f32 %v5528, %v5592
    %v5594 = vmul.f32 %v5529, %v5592
    %v5595 = vmul.f32 %v5530, %v5592
    %5599 = vrot.lane.b32.xlu0 %v5593, 96
    %v5600 = vpop.permute.xlu0 %5599
    %5601 = vrot.lane.b32.xlu0 %v5594, 96
    %v5602 = vpop.permute.xlu0 %5601
    %5603 = vrot.lane.b32.xlu0 %v5595, 96
    %v5604 = vpop.permute.xlu0 %5603
    %v5605 = vsel %vm652, %v5600, %v5602
    %v5606 = vsel %vm652, %v5602, %v5604
    %v5609 = vadd.f32 %v5526, %v5605
    %v5610 = vadd.f32 %v5527, %v5606
    %s5611 = sld [smem:[#allocation2 + $0x46]]
    %v5612 = vstv %s5611
    %v5613 = vmul.f32 %v5091, %v5612
    %v5614 = vmul.f32 %v5087, %v5612
    %v5615 = vmul.f32 %v5092, %v5612
    %5619 = vrot.lane.b32.xlu0 %v5613, 95
    %v5620 = vpop.permute.xlu0 %5619
    %5621 = vrot.lane.b32.xlu0 %v5614, 95
    %v5622 = vpop.permute.xlu0 %5621
    %5623 = vrot.lane.b32.xlu0 %v5615, 95
    %v5624 = vpop.permute.xlu0 %5623
    %v5625 = vsel %vm733, %v5620, %v5622
    %v5626 = vsel %vm733, %v5622, %v5624
    %v5629 = vadd.f32 %v5549, %v5625
    %v5630 = vadd.f32 %v5550, %v5626
    %s5631 = sld [smem:[#allocation2 + $0xc6]]
    %v5632 = vstv %s5631
    %v5633 = vmul.f32 %v5091, %v5632
    %v5634 = vmul.f32 %v5087, %v5632
    %v5635 = vmul.f32 %v5092, %v5632
    %5639 = vrot.lane.b32.xlu0 %v5633, 95
    %v5640 = vpop.permute.xlu0 %5639
    %5641 = vrot.lane.b32.xlu0 %v5634, 95
    %v5642 = vpop.permute.xlu0 %5641
    %5643 = vrot.lane.b32.xlu0 %v5635, 95
    %v5644 = vpop.permute.xlu0 %5643
    %v5645 = vsel %vm733, %v5640, %v5642
    %v5646 = vsel %vm733, %v5642, %v5644
    %v5649 = vadd.f32 %v5569, %v5645
    %v5650 = vadd.f32 %v5570, %v5646
    %s5651 = sld [smem:[#allocation2 + $0x146]]
    %v5652 = vstv %s5651
    %v5653 = vmul.f32 %v5091, %v5652
    %v5654 = vmul.f32 %v5087, %v5652
    %v5655 = vmul.f32 %v5092, %v5652
    %5659 = vrot.lane.b32.xlu0 %v5653, 95
    %v5660 = vpop.permute.xlu0 %5659
    %5661 = vrot.lane.b32.xlu0 %v5654, 95
    %v5662 = vpop.permute.xlu0 %5661
    %5663 = vrot.lane.b32.xlu0 %v5655, 95
    %v5664 = vpop.permute.xlu0 %5663
    %v5665 = vsel %vm733, %v5660, %v5662
    %v5666 = vsel %vm733, %v5662, %v5664
    %v5669 = vadd.f32 %v5589, %v5665
    %v5670 = vadd.f32 %v5590, %v5666
    %s5671 = sld [smem:[#allocation2 + $0x1c6]]
    %v5672 = vstv %s5671
    %v5673 = vmul.f32 %v5091, %v5672
    %v5674 = vmul.f32 %v5087, %v5672
    %v5675 = vmul.f32 %v5092, %v5672
    %5679 = vrot.lane.b32.xlu0 %v5673, 95
    %v5680 = vpop.permute.xlu0 %5679
    %5681 = vrot.lane.b32.xlu0 %v5674, 95
    %v5682 = vpop.permute.xlu0 %5681
    %5683 = vrot.lane.b32.xlu0 %v5675, 95
    %v5684 = vpop.permute.xlu0 %5683
    %v5685 = vsel %vm733, %v5680, %v5682
    %v5686 = vsel %vm733, %v5682, %v5684
    %v5689 = vadd.f32 %v5609, %v5685
    %v5690 = vadd.f32 %v5610, %v5686
    %v5691 = vmul.f32 %v5091, %v801
    %v5692 = vmul.f32 %v5087, %v805
    %v5693 = vmul.f32 %v5092, %v803
    %s5694 = sld [smem:[#allocation2 + $0x47]]
    %v5695 = vstv %s5694
    %v5696 = vmul.f32 %v5691, %v5695
    %v5697 = vmul.f32 %v5692, %v5695
    %v5698 = vmul.f32 %v5693, %v5695
    %5702 = vrot.lane.b32.xlu0 %v5696, 94
    %v5703 = vpop.permute.xlu0 %5702
    %5704 = vrot.lane.b32.xlu0 %v5697, 94
    %v5705 = vpop.permute.xlu0 %5704
    %5706 = vrot.lane.b32.xlu0 %v5698, 94
    %v5707 = vpop.permute.xlu0 %5706
    %v5708 = vsel %vm826, %v5703, %v5705
    %v5709 = vsel %vm826, %v5705, %v5707
    %v5712 = vadd.f32 %v5629, %v5708
    %v5713 = vadd.f32 %v5630, %v5709
    %s5714 = sld [smem:[#allocation2 + $0xc7]]
    %v5715 = vstv %s5714
    %v5716 = vmul.f32 %v5691, %v5715
    %v5717 = vmul.f32 %v5692, %v5715
    %v5718 = vmul.f32 %v5693, %v5715
    %5722 = vrot.lane.b32.xlu0 %v5716, 94
    %v5723 = vpop.permute.xlu0 %5722
    %5724 = vrot.lane.b32.xlu0 %v5717, 94
    %v5725 = vpop.permute.xlu0 %5724
    %5726 = vrot.lane.b32.xlu0 %v5718, 94
    %v5727 = vpop.permute.xlu0 %5726
    %v5728 = vsel %vm826, %v5723, %v5725
    %v5729 = vsel %vm826, %v5725, %v5727
    %v5732 = vadd.f32 %v5649, %v5728
    %v5733 = vadd.f32 %v5650, %v5729
    %s5734 = sld [smem:[#allocation2 + $0x147]]
    %v5735 = vstv %s5734
    %v5736 = vmul.f32 %v5691, %v5735
    %v5737 = vmul.f32 %v5692, %v5735
    %v5738 = vmul.f32 %v5693, %v5735
    %5742 = vrot.lane.b32.xlu0 %v5736, 94
    %v5743 = vpop.permute.xlu0 %5742
    %5744 = vrot.lane.b32.xlu0 %v5737, 94
    %v5745 = vpop.permute.xlu0 %5744
    %5746 = vrot.lane.b32.xlu0 %v5738, 94
    %v5747 = vpop.permute.xlu0 %5746
    %v5748 = vsel %vm826, %v5743, %v5745
    %v5749 = vsel %vm826, %v5745, %v5747
    %v5752 = vadd.f32 %v5669, %v5748
    %v5753 = vadd.f32 %v5670, %v5749
    %s5754 = sld [smem:[#allocation2 + $0x1c7]]
    %v5755 = vstv %s5754
    %v5756 = vmul.f32 %v5691, %v5755
    %v5757 = vmul.f32 %v5692, %v5755
    %v5758 = vmul.f32 %v5693, %v5755
    %5762 = vrot.lane.b32.xlu0 %v5756, 94
    %v5763 = vpop.permute.xlu0 %5762
    %5764 = vrot.lane.b32.xlu0 %v5757, 94
    %v5765 = vpop.permute.xlu0 %5764
    %5766 = vrot.lane.b32.xlu0 %v5758, 94
    %v5767 = vpop.permute.xlu0 %5766
    %v5768 = vsel %vm826, %v5763, %v5765
    %v5769 = vsel %vm826, %v5765, %v5767
    %v5772 = vadd.f32 %v5689, %v5768
    %v5773 = vadd.f32 %v5690, %v5769
    %vm5774 = vcmask 1041408
    %v5775 = vsel %vm5774, %v5712, 0.0
    %v5776 = vsel %vm5774, %v5713, 0.0
    %v5777 = vadd.f32 %v5775, %v5776
    %5778 = vadd.xlane.f32.xlu0 %v5777
    %v5779 = vpop.xlane.xlu0 %5778
    %v5780 = vrot.slane %v5779, 4
    %v5781 = vadd.f32 %v5779, %v5780
    %v5782 = vrot.slane %v5781, 2
    %v5783 = vadd.f32 %v5781, %v5782
    %v5784 = vrot.slane %v5783, 1
    %v5785 = vadd.f32 %v5783, %v5784
    %s5786 = vtos %v5785
    %v5787 = vstv %s5786
    %v5788 = vrcp.pop 512.0
    %v5789 = vmul.f32 512.0, %v5788
    %v5790 = vsub.f32 1.0, %v5789
    %v5791 = vmul.f32 %v5788, %v5790
    %v5792 = vadd.f32 %v5788, %v5791
    %vm5793 = vweird.f32 %v5788
    %v5794 = vsel %vm5793, %v5788, %v5792
    %v5795 = vmul.f32 %v5787, %v5794
    %v5796 = vsub.f32 %v5712, %v5795
    %v5797 = vsub.f32 %v5713, %v5795
    %v5798 = vmul.f32 %v5796, %v5796
    %v5799 = vmul.f32 %v5797, %v5797
    %v5800 = vsel %vm5774, %v5798, 0.0
    %v5801 = vsel %vm5774, %v5799, 0.0
    %v5802 = vadd.f32 %v5800, %v5801
    %5803 = vadd.xlane.f32.xlu0 %v5802
    %v5804 = vpop.xlane.xlu0 %5803
    %v5805 = vrot.slane %v5804, 4
    %v5806 = vadd.f32 %v5804, %v5805
    %v5807 = vrot.slane %v5806, 2
    %v5808 = vadd.f32 %v5806, %v5807
    %v5809 = vrot.slane %v5808, 1
    %v5810 = vadd.f32 %v5808, %v5809
    %s5811 = vtos %v5810
    %v5812 = vstv %s5811
    %v5813 = vmul.f32 %v5812, %v5794
    %v5814 = vadd.f32 %v5813, 1e-05
    %v5815 = vrsqrt.pop %v5814
    %v5816 = vmul.f32 %v5815, %v5814
    %v5817 = vmul.f32 %v5816, %v5815
    %v5818 = vmul.f32 0.5, %v5817
    %v5819 = vsub.f32 1.5, %v5818
    %v5820 = vmul.f32 %v5815, %v5819
    %vm5821 = vweird.f32 %v5814
    %vm5822 = vweird.f32 %v5815
    %vm5823 = vmor %vm5821, %vm5822
    %v5824 = vsel %vm5823, %v5815, %v5820
    %v5825 = vmul.f32 %v5796, %v5824
    %v5826 = vmul.f32 %v5797, %v5824
    %s5827 = sld [smem:[#allocation4]]
    %v5828 = vstv %s5827
    %v5829 = vmul.f32 %v5825, %v5828
    %v5830 = vmul.f32 %v5826, %v5828
    %s5831 = sld [smem:[#allocation6]]
    %v5832 = vstv %s5831
    %v5833 = vadd.f32 %v5829, %v5832
    %v5834 = vadd.f32 %v5830, %v5832
    %v5835 = vmax.f32 %v5833, 0.0
    %v5836 = vmax.f32 %v5834, 0.0
    %v5837 = vsel %vm5774, %v5732, 0.0
    %v5838 = vsel %vm5774, %v5733, 0.0
    %v5839 = vadd.f32 %v5837, %v5838
    %5840 = vadd.xlane.f32.xlu0 %v5839
    %v5841 = vpop.xlane.xlu0 %5840
    %v5842 = vrot.slane %v5841, 4
    %v5843 = vadd.f32 %v5841, %v5842
    %v5844 = vrot.slane %v5843, 2
    %v5845 = vadd.f32 %v5843, %v5844
    %v5846 = vrot.slane %v5845, 1
    %v5847 = vadd.f32 %v5845, %v5846
    %s5848 = vtos %v5847
    %v5849 = vstv %s5848
    %v5850 = vmul.f32 %v5849, %v5794
    %v5851 = vsub.f32 %v5732, %v5850
    %v5852 = vsub.f32 %v5733, %v5850
    %v5853 = vmul.f32 %v5851, %v5851
    %v5854 = vmul.f32 %v5852, %v5852
    %v5855 = vsel %vm5774, %v5853, 0.0
    %v5856 = vsel %vm5774, %v5854, 0.0
    %v5857 = vadd.f32 %v5855, %v5856
    %5858 = vadd.xlane.f32.xlu0 %v5857
    %v5859 = vpop.xlane.xlu0 %5858
    %v5860 = vrot.slane %v5859, 4
    %v5861 = vadd.f32 %v5859, %v5860
    %v5862 = vrot.slane %v5861, 2
    %v5863 = vadd.f32 %v5861, %v5862
    %v5864 = vrot.slane %v5863, 1
    %v5865 = vadd.f32 %v5863, %v5864
    %s5866 = vtos %v5865
    %v5867 = vstv %s5866
    %v5868 = vmul.f32 %v5867, %v5794
    %v5869 = vadd.f32 %v5868, 1e-05
    %v5870 = vrsqrt.pop %v5869
    %v5871 = vmul.f32 %v5870, %v5869
    %v5872 = vmul.f32 %v5871, %v5870
    %v5873 = vmul.f32 0.5, %v5872
    %v5874 = vsub.f32 1.5, %v5873
    %v5875 = vmul.f32 %v5870, %v5874
    %vm5876 = vweird.f32 %v5869
    %vm5877 = vweird.f32 %v5870
    %vm5878 = vmor %vm5876, %vm5877
    %v5879 = vsel %vm5878, %v5870, %v5875
    %v5880 = vmul.f32 %v5851, %v5879
    %v5881 = vmul.f32 %v5852, %v5879
    %s5882 = sld [smem:[#allocation4 + $0x1]]
    %v5883 = vstv %s5882
    %v5884 = vmul.f32 %v5880, %v5883
    %v5885 = vmul.f32 %v5881, %v5883
    %s5886 = sld [smem:[#allocation6 + $0x1]]
    %v5887 = vstv %s5886
    %v5888 = vadd.f32 %v5884, %v5887
    %v5889 = vadd.f32 %v5885, %v5887
    %v5890 = vmax.f32 %v5888, 0.0
    %v5891 = vmax.f32 %v5889, 0.0
    %v5892 = vsel %vm5774, %v5752, 0.0
    %v5893 = vsel %vm5774, %v5753, 0.0
    %v5894 = vadd.f32 %v5892, %v5893
    %5895 = vadd.xlane.f32.xlu0 %v5894
    %v5896 = vpop.xlane.xlu0 %5895
    %v5897 = vrot.slane %v5896, 4
    %v5898 = vadd.f32 %v5896, %v5897
    %v5899 = vrot.slane %v5898, 2
    %v5900 = vadd.f32 %v5898, %v5899
    %v5901 = vrot.slane %v5900, 1
    %v5902 = vadd.f32 %v5900, %v5901
    %s5903 = vtos %v5902
    %v5904 = vstv %s5903
    %v5905 = vmul.f32 %v5904, %v5794
    %v5906 = vsub.f32 %v5752, %v5905
    %v5907 = vsub.f32 %v5753, %v5905
    %v5908 = vmul.f32 %v5906, %v5906
    %v5909 = vmul.f32 %v5907, %v5907
    %v5910 = vsel %vm5774, %v5908, 0.0
    %v5911 = vsel %vm5774, %v5909, 0.0
    %v5912 = vadd.f32 %v5910, %v5911
    %5913 = vadd.xlane.f32.xlu0 %v5912
    %v5914 = vpop.xlane.xlu0 %5913
    %v5915 = vrot.slane %v5914, 4
    %v5916 = vadd.f32 %v5914, %v5915
    %v5917 = vrot.slane %v5916, 2
    %v5918 = vadd.f32 %v5916, %v5917
    %v5919 = vrot.slane %v5918, 1
    %v5920 = vadd.f32 %v5918, %v5919
    %s5921 = vtos %v5920
    %v5922 = vstv %s5921
    %v5923 = vmul.f32 %v5922, %v5794
    %v5924 = vadd.f32 %v5923, 1e-05
    %v5925 = vrsqrt.pop %v5924
    %v5926 = vmul.f32 %v5925, %v5924
    %v5927 = vmul.f32 %v5926, %v5925
    %v5928 = vmul.f32 0.5, %v5927
    %v5929 = vsub.f32 1.5, %v5928
    %v5930 = vmul.f32 %v5925, %v5929
    %vm5931 = vweird.f32 %v5924
    %vm5932 = vweird.f32 %v5925
    %vm5933 = vmor %vm5931, %vm5932
    %v5934 = vsel %vm5933, %v5925, %v5930
    %v5935 = vmul.f32 %v5906, %v5934
    %v5936 = vmul.f32 %v5907, %v5934
    %s5937 = sld [smem:[#allocation4 + $0x2]]
    %v5938 = vstv %s5937
    %v5939 = vmul.f32 %v5935, %v5938
    %v5940 = vmul.f32 %v5936, %v5938
    %s5941 = sld [smem:[#allocation6 + $0x2]]
    %v5942 = vstv %s5941
    %v5943 = vadd.f32 %v5939, %v5942
    %v5944 = vadd.f32 %v5940, %v5942
    %v5945 = vmax.f32 %v5943, 0.0
    %v5946 = vmax.f32 %v5944, 0.0
    %v5947 = vsel %vm5774, %v5772, 0.0
    %v5948 = vsel %vm5774, %v5773, 0.0
    %v5949 = vadd.f32 %v5947, %v5948
    %5950 = vadd.xlane.f32.xlu0 %v5949
    %v5951 = vpop.xlane.xlu0 %5950
    %v5952 = vrot.slane %v5951, 4
    %v5953 = vadd.f32 %v5951, %v5952
    %v5954 = vrot.slane %v5953, 2
    %v5955 = vadd.f32 %v5953, %v5954
    %v5956 = vrot.slane %v5955, 1
    %v5957 = vadd.f32 %v5955, %v5956
    %s5958 = vtos %v5957
    %v5959 = vstv %s5958
    %v5960 = vmul.f32 %v5959, %v5794
    %v5961 = vsub.f32 %v5772, %v5960
    %v5962 = vsub.f32 %v5773, %v5960
    %v5963 = vmul.f32 %v5961, %v5961
    %v5964 = vmul.f32 %v5962, %v5962
    %v5965 = vsel %vm5774, %v5963, 0.0
    %v5966 = vsel %vm5774, %v5964, 0.0
    %v5967 = vadd.f32 %v5965, %v5966
    %5968 = vadd.xlane.f32.xlu0 %v5967
    %v5969 = vpop.xlane.xlu0 %5968
    %v5970 = vrot.slane %v5969, 4
    %v5971 = vadd.f32 %v5969, %v5970
    %v5972 = vrot.slane %v5971, 2
    %v5973 = vadd.f32 %v5971, %v5972
    %v5974 = vrot.slane %v5973, 1
    %v5975 = vadd.f32 %v5973, %v5974
    %s5976 = vtos %v5975
    %v5977 = vstv %s5976
    %v5978 = vmul.f32 %v5977, %v5794
    %v5979 = vadd.f32 %v5978, 1e-05
    %v5980 = vrsqrt.pop %v5979
    %v5981 = vmul.f32 %v5980, %v5979
    %v5982 = vmul.f32 %v5981, %v5980
    %v5983 = vmul.f32 0.5, %v5982
    %v5984 = vsub.f32 1.5, %v5983
    %v5985 = vmul.f32 %v5980, %v5984
    %vm5986 = vweird.f32 %v5979
    %vm5987 = vweird.f32 %v5980
    %vm5988 = vmor %vm5986, %vm5987
    %v5989 = vsel %vm5988, %v5980, %v5985
    %v5990 = vmul.f32 %v5961, %v5989
    %v5991 = vmul.f32 %v5962, %v5989
    %s5992 = sld [smem:[#allocation4 + $0x3]]
    %v5993 = vstv %s5992
    %v5994 = vmul.f32 %v5990, %v5993
    %v5995 = vmul.f32 %v5991, %v5993
    %s5996 = sld [smem:[#allocation6 + $0x3]]
    %v5997 = vstv %s5996
    %v5998 = vadd.f32 %v5994, %v5997
    %v5999 = vadd.f32 %v5995, %v5997
    %v6000 = vmax.f32 %v5998, 0.0
    %v6001 = vmax.f32 %v5999, 0.0
    %6004 = vrot.lane.b32.xlu0 %v5835, 17
    %v6005 = vpop.permute.xlu0 %6004
    %6006 = vrot.lane.b32.xlu0 %v5836, 17
    %v6007 = vpop.permute.xlu0 %6006
    %v6008 = vsel %vm156, %v6005, %v6007
    %v6012 = vsel %vm156, 0.0, %v6005
    %v6013 = vsel %vm156, %v6007, 0.0
    %v6014 = vmul.f32 %v6012, %v131
    %v6015 = vmul.f32 %v6008, %v132
    %s6016 = sld [smem:[#allocation7]]
    %v6017 = vstv %s6016
    %v6018 = vmul.f32 %v6014, %v6017
    %v6019 = vmul.f32 %v6015, %v6017
    %s6020 = sld [smem:[#allocation7 + $0x80]]
    %v6021 = vstv %s6020
    %v6022 = vmul.f32 %v6014, %v6021
    %v6023 = vmul.f32 %v6015, %v6021
    %s6024 = sld [smem:[#allocation7 + $0x100]]
    %v6025 = vstv %s6024
    %v6026 = vmul.f32 %v6014, %v6025
    %v6027 = vmul.f32 %v6015, %v6025
    %s6028 = sld [smem:[#allocation7 + $0x180]]
    %v6029 = vstv %s6028
    %v6030 = vmul.f32 %v6014, %v6029
    %v6031 = vmul.f32 %v6015, %v6029
    %s6032 = sld [smem:[#allocation7 + $0x1]]
    %v6033 = vstv %s6032
    %v6034 = vmul.f32 %v6012, %v6033
    %v6035 = vmul.f32 %v6008, %v6033
    %v6036 = vmul.f32 %v6013, %v6033
    %6040 = vrot.lane.b32.xlu0 %v6034, 127
    %v6041 = vpop.permute.xlu0 %6040
    %6042 = vrot.lane.b32.xlu0 %v6035, 127
    %v6043 = vpop.permute.xlu0 %6042
    %6044 = vrot.lane.b32.xlu0 %v6036, 127
    %v6045 = vpop.permute.xlu0 %6044
    %v6046 = vsel %vm195, %v6041, %v6043
    %v6047 = vsel %vm195, %v6043, %v6045
    %v6050 = vadd.f32 %v6018, %v6046
    %v6051 = vadd.f32 %v6019, %v6047
    %s6052 = sld [smem:[#allocation7 + $0x81]]
    %v6053 = vstv %s6052
    %v6054 = vmul.f32 %v6012, %v6053
    %v6055 = vmul.f32 %v6008, %v6053
    %v6056 = vmul.f32 %v6013, %v6053
    %6060 = vrot.lane.b32.xlu0 %v6054, 127
    %v6061 = vpop.permute.xlu0 %6060
    %6062 = vrot.lane.b32.xlu0 %v6055, 127
    %v6063 = vpop.permute.xlu0 %6062
    %6064 = vrot.lane.b32.xlu0 %v6056, 127
    %v6065 = vpop.permute.xlu0 %6064
    %v6066 = vsel %vm195, %v6061, %v6063
    %v6067 = vsel %vm195, %v6063, %v6065
    %v6070 = vadd.f32 %v6022, %v6066
    %v6071 = vadd.f32 %v6023, %v6067
    %s6072 = sld [smem:[#allocation7 + $0x101]]
    %v6073 = vstv %s6072
    %v6074 = vmul.f32 %v6012, %v6073
    %v6075 = vmul.f32 %v6008, %v6073
    %v6076 = vmul.f32 %v6013, %v6073
    %6080 = vrot.lane.b32.xlu0 %v6074, 127
    %v6081 = vpop.permute.xlu0 %6080
    %6082 = vrot.lane.b32.xlu0 %v6075, 127
    %v6083 = vpop.permute.xlu0 %6082
    %6084 = vrot.lane.b32.xlu0 %v6076, 127
    %v6085 = vpop.permute.xlu0 %6084
    %v6086 = vsel %vm195, %v6081, %v6083
    %v6087 = vsel %vm195, %v6083, %v6085
    %v6090 = vadd.f32 %v6026, %v6086
    %v6091 = vadd.f32 %v6027, %v6087
    %s6092 = sld [smem:[#allocation7 + $0x181]]
    %v6093 = vstv %s6092
    %v6094 = vmul.f32 %v6012, %v6093
    %v6095 = vmul.f32 %v6008, %v6093
    %v6096 = vmul.f32 %v6013, %v6093
    %6100 = vrot.lane.b32.xlu0 %v6094, 127
    %v6101 = vpop.permute.xlu0 %6100
    %6102 = vrot.lane.b32.xlu0 %v6095, 127
    %v6103 = vpop.permute.xlu0 %6102
    %6104 = vrot.lane.b32.xlu0 %v6096, 127
    %v6105 = vpop.permute.xlu0 %6104
    %v6106 = vsel %vm195, %v6101, %v6103
    %v6107 = vsel %vm195, %v6103, %v6105
    %v6110 = vadd.f32 %v6030, %v6106
    %v6111 = vadd.f32 %v6031, %v6107
    %v6112 = vmul.f32 %v6012, %v265
    %v6113 = vmul.f32 %v6008, %v269
    %v6114 = vmul.f32 %v6013, %v267
    %s6115 = sld [smem:[#allocation7 + $0x2]]
    %v6116 = vstv %s6115
    %v6117 = vmul.f32 %v6112, %v6116
    %v6118 = vmul.f32 %v6113, %v6116
    %v6119 = vmul.f32 %v6114, %v6116
    %6123 = vrot.lane.b32.xlu0 %v6117, 126
    %v6124 = vpop.permute.xlu0 %6123
    %6125 = vrot.lane.b32.xlu0 %v6118, 126
    %v6126 = vpop.permute.xlu0 %6125
    %6127 = vrot.lane.b32.xlu0 %v6119, 126
    %v6128 = vpop.permute.xlu0 %6127
    %v6129 = vsel %vm290, %v6124, %v6126
    %v6130 = vsel %vm290, %v6126, %v6128
    %v6133 = vadd.f32 %v6050, %v6129
    %v6134 = vadd.f32 %v6051, %v6130
    %s6135 = sld [smem:[#allocation7 + $0x82]]
    %v6136 = vstv %s6135
    %v6137 = vmul.f32 %v6112, %v6136
    %v6138 = vmul.f32 %v6113, %v6136
    %v6139 = vmul.f32 %v6114, %v6136
    %6143 = vrot.lane.b32.xlu0 %v6137, 126
    %v6144 = vpop.permute.xlu0 %6143
    %6145 = vrot.lane.b32.xlu0 %v6138, 126
    %v6146 = vpop.permute.xlu0 %6145
    %6147 = vrot.lane.b32.xlu0 %v6139, 126
    %v6148 = vpop.permute.xlu0 %6147
    %v6149 = vsel %vm290, %v6144, %v6146
    %v6150 = vsel %vm290, %v6146, %v6148
    %v6153 = vadd.f32 %v6070, %v6149
    %v6154 = vadd.f32 %v6071, %v6150
    %s6155 = sld [smem:[#allocation7 + $0x102]]
    %v6156 = vstv %s6155
    %v6157 = vmul.f32 %v6112, %v6156
    %v6158 = vmul.f32 %v6113, %v6156
    %v6159 = vmul.f32 %v6114, %v6156
    %6163 = vrot.lane.b32.xlu0 %v6157, 126
    %v6164 = vpop.permute.xlu0 %6163
    %6165 = vrot.lane.b32.xlu0 %v6158, 126
    %v6166 = vpop.permute.xlu0 %6165
    %6167 = vrot.lane.b32.xlu0 %v6159, 126
    %v6168 = vpop.permute.xlu0 %6167
    %v6169 = vsel %vm290, %v6164, %v6166
    %v6170 = vsel %vm290, %v6166, %v6168
    %v6173 = vadd.f32 %v6090, %v6169
    %v6174 = vadd.f32 %v6091, %v6170
    %s6175 = sld [smem:[#allocation7 + $0x182]]
    %v6176 = vstv %s6175
    %v6177 = vmul.f32 %v6112, %v6176
    %v6178 = vmul.f32 %v6113, %v6176
    %v6179 = vmul.f32 %v6114, %v6176
    %6183 = vrot.lane.b32.xlu0 %v6177, 126
    %v6184 = vpop.permute.xlu0 %6183
    %6185 = vrot.lane.b32.xlu0 %v6178, 126
    %v6186 = vpop.permute.xlu0 %6185
    %6187 = vrot.lane.b32.xlu0 %v6179, 126
    %v6188 = vpop.permute.xlu0 %6187
    %v6189 = vsel %vm290, %v6184, %v6186
    %v6190 = vsel %vm290, %v6186, %v6188
    %v6193 = vadd.f32 %v6110, %v6189
    %v6194 = vadd.f32 %v6111, %v6190
    %v6195 = vmul.f32 %v6012, %v360
    %v6196 = vmul.f32 %v6008, %v364
    %v6197 = vmul.f32 %v6013, %v362
    %s6198 = sld [smem:[#allocation7 + $0x3]]
    %v6199 = vstv %s6198
    %v6200 = vmul.f32 %v6195, %v6199
    %v6201 = vmul.f32 %v6196, %v6199
    %v6202 = vmul.f32 %v6197, %v6199
    %6206 = vrot.lane.b32.xlu0 %v6200, 112
    %v6207 = vpop.permute.xlu0 %6206
    %6208 = vrot.lane.b32.xlu0 %v6201, 112
    %v6209 = vpop.permute.xlu0 %6208
    %6210 = vrot.lane.b32.xlu0 %v6202, 112
    %v6211 = vpop.permute.xlu0 %6210
    %v6212 = vsel %vm385, %v6207, %v6209
    %v6213 = vsel %vm385, %v6209, %v6211
    %v6216 = vadd.f32 %v6133, %v6212
    %v6217 = vadd.f32 %v6134, %v6213
    %s6218 = sld [smem:[#allocation7 + $0x83]]
    %v6219 = vstv %s6218
    %v6220 = vmul.f32 %v6195, %v6219
    %v6221 = vmul.f32 %v6196, %v6219
    %v6222 = vmul.f32 %v6197, %v6219
    %6226 = vrot.lane.b32.xlu0 %v6220, 112
    %v6227 = vpop.permute.xlu0 %6226
    %6228 = vrot.lane.b32.xlu0 %v6221, 112
    %v6229 = vpop.permute.xlu0 %6228
    %6230 = vrot.lane.b32.xlu0 %v6222, 112
    %v6231 = vpop.permute.xlu0 %6230
    %v6232 = vsel %vm385, %v6227, %v6229
    %v6233 = vsel %vm385, %v6229, %v6231
    %v6236 = vadd.f32 %v6153, %v6232
    %v6237 = vadd.f32 %v6154, %v6233
    %s6238 = sld [smem:[#allocation7 + $0x103]]
    %v6239 = vstv %s6238
    %v6240 = vmul.f32 %v6195, %v6239
    %v6241 = vmul.f32 %v6196, %v6239
    %v6242 = vmul.f32 %v6197, %v6239
    %6246 = vrot.lane.b32.xlu0 %v6240, 112
    %v6247 = vpop.permute.xlu0 %6246
    %6248 = vrot.lane.b32.xlu0 %v6241, 112
    %v6249 = vpop.permute.xlu0 %6248
    %6250 = vrot.lane.b32.xlu0 %v6242, 112
    %v6251 = vpop.permute.xlu0 %6250
    %v6252 = vsel %vm385, %v6247, %v6249
    %v6253 = vsel %vm385, %v6249, %v6251
    %v6256 = vadd.f32 %v6173, %v6252
    %v6257 = vadd.f32 %v6174, %v6253
    %s6258 = sld [smem:[#allocation7 + $0x183]]
    %v6259 = vstv %s6258
    %v6260 = vmul.f32 %v6195, %v6259
    %v6261 = vmul.f32 %v6196, %v6259
    %v6262 = vmul.f32 %v6197, %v6259
    %6266 = vrot.lane.b32.xlu0 %v6260, 112
    %v6267 = vpop.permute.xlu0 %6266
    %6268 = vrot.lane.b32.xlu0 %v6261, 112
    %v6269 = vpop.permute.xlu0 %6268
    %6270 = vrot.lane.b32.xlu0 %v6262, 112
    %v6271 = vpop.permute.xlu0 %6270
    %v6272 = vsel %vm385, %v6267, %v6269
    %v6273 = vsel %vm385, %v6269, %v6271
    %v6276 = vadd.f32 %v6193, %v6272
    %v6277 = vadd.f32 %v6194, %v6273
    %s6278 = sld [smem:[#allocation7 + $0x4]]
    %v6279 = vstv %s6278
    %v6280 = vmul.f32 %v6012, %v6279
    %v6281 = vmul.f32 %v6008, %v6279
    %v6282 = vmul.f32 %v6013, %v6279
    %6286 = vrot.lane.b32.xlu0 %v6280, 111
    %v6287 = vpop.permute.xlu0 %6286
    %6288 = vrot.lane.b32.xlu0 %v6281, 111
    %v6289 = vpop.permute.xlu0 %6288
    %6290 = vrot.lane.b32.xlu0 %v6282, 111
    %v6291 = vpop.permute.xlu0 %6290
    %v6292 = vsel %vm466, %v6287, %v6289
    %v6293 = vsel %vm466, %v6289, %v6291
    %v6296 = vadd.f32 %v6216, %v6292
    %v6297 = vadd.f32 %v6217, %v6293
    %s6298 = sld [smem:[#allocation7 + $0x84]]
    %v6299 = vstv %s6298
    %v6300 = vmul.f32 %v6012, %v6299
    %v6301 = vmul.f32 %v6008, %v6299
    %v6302 = vmul.f32 %v6013, %v6299
    %6306 = vrot.lane.b32.xlu0 %v6300, 111
    %v6307 = vpop.permute.xlu0 %6306
    %6308 = vrot.lane.b32.xlu0 %v6301, 111
    %v6309 = vpop.permute.xlu0 %6308
    %6310 = vrot.lane.b32.xlu0 %v6302, 111
    %v6311 = vpop.permute.xlu0 %6310
    %v6312 = vsel %vm466, %v6307, %v6309
    %v6313 = vsel %vm466, %v6309, %v6311
    %v6316 = vadd.f32 %v6236, %v6312
    %v6317 = vadd.f32 %v6237, %v6313
    %s6318 = sld [smem:[#allocation7 + $0x104]]
    %v6319 = vstv %s6318
    %v6320 = vmul.f32 %v6012, %v6319
    %v6321 = vmul.f32 %v6008, %v6319
    %v6322 = vmul.f32 %v6013, %v6319
    %6326 = vrot.lane.b32.xlu0 %v6320, 111
    %v6327 = vpop.permute.xlu0 %6326
    %6328 = vrot.lane.b32.xlu0 %v6321, 111
    %v6329 = vpop.permute.xlu0 %6328
    %6330 = vrot.lane.b32.xlu0 %v6322, 111
    %v6331 = vpop.permute.xlu0 %6330
    %v6332 = vsel %vm466, %v6327, %v6329
    %v6333 = vsel %vm466, %v6329, %v6331
    %v6336 = vadd.f32 %v6256, %v6332
    %v6337 = vadd.f32 %v6257, %v6333
    %s6338 = sld [smem:[#allocation7 + $0x184]]
    %v6339 = vstv %s6338
    %v6340 = vmul.f32 %v6012, %v6339
    %v6341 = vmul.f32 %v6008, %v6339
    %v6342 = vmul.f32 %v6013, %v6339
    %6346 = vrot.lane.b32.xlu0 %v6340, 111
    %v6347 = vpop.permute.xlu0 %6346
    %6348 = vrot.lane.b32.xlu0 %v6341, 111
    %v6349 = vpop.permute.xlu0 %6348
    %6350 = vrot.lane.b32.xlu0 %v6342, 111
    %v6351 = vpop.permute.xlu0 %6350
    %v6352 = vsel %vm466, %v6347, %v6349
    %v6353 = vsel %vm466, %v6349, %v6351
    %v6356 = vadd.f32 %v6276, %v6352
    %v6357 = vadd.f32 %v6277, %v6353
    %v6358 = vmul.f32 %v6012, %v534
    %v6359 = vmul.f32 %v6008, %v538
    %v6360 = vmul.f32 %v6013, %v536
    %s6361 = sld [smem:[#allocation7 + $0x5]]
    %v6362 = vstv %s6361
    %v6363 = vmul.f32 %v6358, %v6362
    %v6364 = vmul.f32 %v6359, %v6362
    %v6365 = vmul.f32 %v6360, %v6362
    %6369 = vrot.lane.b32.xlu0 %v6363, 110
    %v6370 = vpop.permute.xlu0 %6369
    %6371 = vrot.lane.b32.xlu0 %v6364, 110
    %v6372 = vpop.permute.xlu0 %6371
    %6373 = vrot.lane.b32.xlu0 %v6365, 110
    %v6374 = vpop.permute.xlu0 %6373
    %v6375 = vsel %vm559, %v6370, %v6372
    %v6376 = vsel %vm559, %v6372, %v6374
    %v6379 = vadd.f32 %v6296, %v6375
    %v6380 = vadd.f32 %v6297, %v6376
    %s6381 = sld [smem:[#allocation7 + $0x85]]
    %v6382 = vstv %s6381
    %v6383 = vmul.f32 %v6358, %v6382
    %v6384 = vmul.f32 %v6359, %v6382
    %v6385 = vmul.f32 %v6360, %v6382
    %6389 = vrot.lane.b32.xlu0 %v6383, 110
    %v6390 = vpop.permute.xlu0 %6389
    %6391 = vrot.lane.b32.xlu0 %v6384, 110
    %v6392 = vpop.permute.xlu0 %6391
    %6393 = vrot.lane.b32.xlu0 %v6385, 110
    %v6394 = vpop.permute.xlu0 %6393
    %v6395 = vsel %vm559, %v6390, %v6392
    %v6396 = vsel %vm559, %v6392, %v6394
    %v6399 = vadd.f32 %v6316, %v6395
    %v6400 = vadd.f32 %v6317, %v6396
    %s6401 = sld [smem:[#allocation7 + $0x105]]
    %v6402 = vstv %s6401
    %v6403 = vmul.f32 %v6358, %v6402
    %v6404 = vmul.f32 %v6359, %v6402
    %v6405 = vmul.f32 %v6360, %v6402
    %6409 = vrot.lane.b32.xlu0 %v6403, 110
    %v6410 = vpop.permute.xlu0 %6409
    %6411 = vrot.lane.b32.xlu0 %v6404, 110
    %v6412 = vpop.permute.xlu0 %6411
    %6413 = vrot.lane.b32.xlu0 %v6405, 110
    %v6414 = vpop.permute.xlu0 %6413
    %v6415 = vsel %vm559, %v6410, %v6412
    %v6416 = vsel %vm559, %v6412, %v6414
    %v6419 = vadd.f32 %v6336, %v6415
    %v6420 = vadd.f32 %v6337, %v6416
    %s6421 = sld [smem:[#allocation7 + $0x185]]
    %v6422 = vstv %s6421
    %v6423 = vmul.f32 %v6358, %v6422
    %v6424 = vmul.f32 %v6359, %v6422
    %v6425 = vmul.f32 %v6360, %v6422
    %6429 = vrot.lane.b32.xlu0 %v6423, 110
    %v6430 = vpop.permute.xlu0 %6429
    %6431 = vrot.lane.b32.xlu0 %v6424, 110
    %v6432 = vpop.permute.xlu0 %6431
    %6433 = vrot.lane.b32.xlu0 %v6425, 110
    %v6434 = vpop.permute.xlu0 %6433
    %v6435 = vsel %vm559, %v6430, %v6432
    %v6436 = vsel %vm559, %v6432, %v6434
    %v6439 = vadd.f32 %v6356, %v6435
    %v6440 = vadd.f32 %v6357, %v6436
    %v6441 = vmul.f32 %v6012, %v627
    %v6442 = vmul.f32 %v6008, %v631
    %v6443 = vmul.f32 %v6013, %v629
    %s6444 = sld [smem:[#allocation7 + $0x6]]
    %v6445 = vstv %s6444
    %v6446 = vmul.f32 %v6441, %v6445
    %v6447 = vmul.f32 %v6442, %v6445
    %v6448 = vmul.f32 %v6443, %v6445
    %6452 = vrot.lane.b32.xlu0 %v6446, 96
    %v6453 = vpop.permute.xlu0 %6452
    %6454 = vrot.lane.b32.xlu0 %v6447, 96
    %v6455 = vpop.permute.xlu0 %6454
    %6456 = vrot.lane.b32.xlu0 %v6448, 96
    %v6457 = vpop.permute.xlu0 %6456
    %v6458 = vsel %vm652, %v6453, %v6455
    %v6459 = vsel %vm652, %v6455, %v6457
    %v6462 = vadd.f32 %v6379, %v6458
    %v6463 = vadd.f32 %v6380, %v6459
    %s6464 = sld [smem:[#allocation7 + $0x86]]
    %v6465 = vstv %s6464
    %v6466 = vmul.f32 %v6441, %v6465
    %v6467 = vmul.f32 %v6442, %v6465
    %v6468 = vmul.f32 %v6443, %v6465
    %6472 = vrot.lane.b32.xlu0 %v6466, 96
    %v6473 = vpop.permute.xlu0 %6472
    %6474 = vrot.lane.b32.xlu0 %v6467, 96
    %v6475 = vpop.permute.xlu0 %6474
    %6476 = vrot.lane.b32.xlu0 %v6468, 96
    %v6477 = vpop.permute.xlu0 %6476
    %v6478 = vsel %vm652, %v6473, %v6475
    %v6479 = vsel %vm652, %v6475, %v6477
    %v6482 = vadd.f32 %v6399, %v6478
    %v6483 = vadd.f32 %v6400, %v6479
    %s6484 = sld [smem:[#allocation7 + $0x106]]
    %v6485 = vstv %s6484
    %v6486 = vmul.f32 %v6441, %v6485
    %v6487 = vmul.f32 %v6442, %v6485
    %v6488 = vmul.f32 %v6443, %v6485
    %6492 = vrot.lane.b32.xlu0 %v6486, 96
    %v6493 = vpop.permute.xlu0 %6492
    %6494 = vrot.lane.b32.xlu0 %v6487, 96
    %v6495 = vpop.permute.xlu0 %6494
    %6496 = vrot.lane.b32.xlu0 %v6488, 96
    %v6497 = vpop.permute.xlu0 %6496
    %v6498 = vsel %vm652, %v6493, %v6495
    %v6499 = vsel %vm652, %v6495, %v6497
    %v6502 = vadd.f32 %v6419, %v6498
    %v6503 = vadd.f32 %v6420, %v6499
    %s6504 = sld [smem:[#allocation7 + $0x186]]
    %v6505 = vstv %s6504
    %v6506 = vmul.f32 %v6441, %v6505
    %v6507 = vmul.f32 %v6442, %v6505
    %v6508 = vmul.f32 %v6443, %v6505
    %6512 = vrot.lane.b32.xlu0 %v6506, 96
    %v6513 = vpop.permute.xlu0 %6512
    %6514 = vrot.lane.b32.xlu0 %v6507, 96
    %v6515 = vpop.permute.xlu0 %6514
    %6516 = vrot.lane.b32.xlu0 %v6508, 96
    %v6517 = vpop.permute.xlu0 %6516
    %v6518 = vsel %vm652, %v6513, %v6515
    %v6519 = vsel %vm652, %v6515, %v6517
    %v6522 = vadd.f32 %v6439, %v6518
    %v6523 = vadd.f32 %v6440, %v6519
    %s6524 = sld [smem:[#allocation7 + $0x7]]
    %v6525 = vstv %s6524
    %v6526 = vmul.f32 %v6012, %v6525
    %v6527 = vmul.f32 %v6008, %v6525
    %v6528 = vmul.f32 %v6013, %v6525
    %6532 = vrot.lane.b32.xlu0 %v6526, 95
    %v6533 = vpop.permute.xlu0 %6532
    %6534 = vrot.lane.b32.xlu0 %v6527, 95
    %v6535 = vpop.permute.xlu0 %6534
    %6536 = vrot.lane.b32.xlu0 %v6528, 95
    %v6537 = vpop.permute.xlu0 %6536
    %v6538 = vsel %vm733, %v6533, %v6535
    %v6539 = vsel %vm733, %v6535, %v6537
    %v6542 = vadd.f32 %v6462, %v6538
    %v6543 = vadd.f32 %v6463, %v6539
    %s6544 = sld [smem:[#allocation7 + $0x87]]
    %v6545 = vstv %s6544
    %v6546 = vmul.f32 %v6012, %v6545
    %v6547 = vmul.f32 %v6008, %v6545
    %v6548 = vmul.f32 %v6013, %v6545
    %6552 = vrot.lane.b32.xlu0 %v6546, 95
    %v6553 = vpop.permute.xlu0 %6552
    %6554 = vrot.lane.b32.xlu0 %v6547, 95
    %v6555 = vpop.permute.xlu0 %6554
    %6556 = vrot.lane.b32.xlu0 %v6548, 95
    %v6557 = vpop.permute.xlu0 %6556
    %v6558 = vsel %vm733, %v6553, %v6555
    %v6559 = vsel %vm733, %v6555, %v6557
    %v6562 = vadd.f32 %v6482, %v6558
    %v6563 = vadd.f32 %v6483, %v6559
    %s6564 = sld [smem:[#allocation7 + $0x107]]
    %v6565 = vstv %s6564
    %v6566 = vmul.f32 %v6012, %v6565
    %v6567 = vmul.f32 %v6008, %v6565
    %v6568 = vmul.f32 %v6013, %v6565
    %6572 = vrot.lane.b32.xlu0 %v6566, 95
    %v6573 = vpop.permute.xlu0 %6572
    %6574 = vrot.lane.b32.xlu0 %v6567, 95
    %v6575 = vpop.permute.xlu0 %6574
    %6576 = vrot.lane.b32.xlu0 %v6568, 95
    %v6577 = vpop.permute.xlu0 %6576
    %v6578 = vsel %vm733, %v6573, %v6575
    %v6579 = vsel %vm733, %v6575, %v6577
    %v6582 = vadd.f32 %v6502, %v6578
    %v6583 = vadd.f32 %v6503, %v6579
    %s6584 = sld [smem:[#allocation7 + $0x187]]
    %v6585 = vstv %s6584
    %v6586 = vmul.f32 %v6012, %v6585
    %v6587 = vmul.f32 %v6008, %v6585
    %v6588 = vmul.f32 %v6013, %v6585
    %6592 = vrot.lane.b32.xlu0 %v6586, 95
    %v6593 = vpop.permute.xlu0 %6592
    %6594 = vrot.lane.b32.xlu0 %v6587, 95
    %v6595 = vpop.permute.xlu0 %6594
    %6596 = vrot.lane.b32.xlu0 %v6588, 95
    %v6597 = vpop.permute.xlu0 %6596
    %v6598 = vsel %vm733, %v6593, %v6595
    %v6599 = vsel %vm733, %v6595, %v6597
    %v6602 = vadd.f32 %v6522, %v6598
    %v6603 = vadd.f32 %v6523, %v6599
    %v6604 = vmul.f32 %v6012, %v801
    %v6605 = vmul.f32 %v6008, %v805
    %v6606 = vmul.f32 %v6013, %v803
    %s6607 = sld [smem:[#allocation7 + $0x8]]
    %v6608 = vstv %s6607
    %v6609 = vmul.f32 %v6604, %v6608
    %v6610 = vmul.f32 %v6605, %v6608
    %v6611 = vmul.f32 %v6606, %v6608
    %6615 = vrot.lane.b32.xlu0 %v6609, 94
    %v6616 = vpop.permute.xlu0 %6615
    %6617 = vrot.lane.b32.xlu0 %v6610, 94
    %v6618 = vpop.permute.xlu0 %6617
    %6619 = vrot.lane.b32.xlu0 %v6611, 94
    %v6620 = vpop.permute.xlu0 %6619
    %v6621 = vsel %vm826, %v6616, %v6618
    %v6622 = vsel %vm826, %v6618, %v6620
    %v6625 = vadd.f32 %v6542, %v6621
    %v6626 = vadd.f32 %v6543, %v6622
    %s6627 = sld [smem:[#allocation7 + $0x88]]
    %v6628 = vstv %s6627
    %v6629 = vmul.f32 %v6604, %v6628
    %v6630 = vmul.f32 %v6605, %v6628
    %v6631 = vmul.f32 %v6606, %v6628
    %6635 = vrot.lane.b32.xlu0 %v6629, 94
    %v6636 = vpop.permute.xlu0 %6635
    %6637 = vrot.lane.b32.xlu0 %v6630, 94
    %v6638 = vpop.permute.xlu0 %6637
    %6639 = vrot.lane.b32.xlu0 %v6631, 94
    %v6640 = vpop.permute.xlu0 %6639
    %v6641 = vsel %vm826, %v6636, %v6638
    %v6642 = vsel %vm826, %v6638, %v6640
    %v6645 = vadd.f32 %v6562, %v6641
    %v6646 = vadd.f32 %v6563, %v6642
    %s6647 = sld [smem:[#allocation7 + $0x108]]
    %v6648 = vstv %s6647
    %v6649 = vmul.f32 %v6604, %v6648
    %v6650 = vmul.f32 %v6605, %v6648
    %v6651 = vmul.f32 %v6606, %v6648
    %6655 = vrot.lane.b32.xlu0 %v6649, 94
    %v6656 = vpop.permute.xlu0 %6655
    %6657 = vrot.lane.b32.xlu0 %v6650, 94
    %v6658 = vpop.permute.xlu0 %6657
    %6659 = vrot.lane.b32.xlu0 %v6651, 94
    %v6660 = vpop.permute.xlu0 %6659
    %v6661 = vsel %vm826, %v6656, %v6658
    %v6662 = vsel %vm826, %v6658, %v6660
    %v6665 = vadd.f32 %v6582, %v6661
    %v6666 = vadd.f32 %v6583, %v6662
    %s6667 = sld [smem:[#allocation7 + $0x188]]
    %v6668 = vstv %s6667
    %v6669 = vmul.f32 %v6604, %v6668
    %v6670 = vmul.f32 %v6605, %v6668
    %v6671 = vmul.f32 %v6606, %v6668
    %6675 = vrot.lane.b32.xlu0 %v6669, 94
    %v6676 = vpop.permute.xlu0 %6675
    %6677 = vrot.lane.b32.xlu0 %v6670, 94
    %v6678 = vpop.permute.xlu0 %6677
    %6679 = vrot.lane.b32.xlu0 %v6671, 94
    %v6680 = vpop.permute.xlu0 %6679
    %v6681 = vsel %vm826, %v6676, %v6678
    %v6682 = vsel %vm826, %v6678, %v6680
    %v6685 = vadd.f32 %v6602, %v6681
    %v6686 = vadd.f32 %v6603, %v6682
    %6689 = vrot.lane.b32.xlu0 %v5890, 17
    %v6690 = vpop.permute.xlu0 %6689
    %6691 = vrot.lane.b32.xlu0 %v5891, 17
    %v6692 = vpop.permute.xlu0 %6691
    %v6693 = vsel %vm156, %v6690, %v6692
    %v6697 = vsel %vm156, 0.0, %v6690
    %v6698 = vsel %vm156, %v6692, 0.0
    %v6699 = vmul.f32 %v6697, %v131
    %v6700 = vmul.f32 %v6693, %v132
    %s6701 = sld [smem:[#allocation7 + $0x9]]
    %v6702 = vstv %s6701
    %v6703 = vmul.f32 %v6699, %v6702
    %v6704 = vmul.f32 %v6700, %v6702
    %v6705 = vadd.f32 %v6625, %v6703
    %v6706 = vadd.f32 %v6626, %v6704
    %s6707 = sld [smem:[#allocation7 + $0x89]]
    %v6708 = vstv %s6707
    %v6709 = vmul.f32 %v6699, %v6708
    %v6710 = vmul.f32 %v6700, %v6708
    %v6711 = vadd.f32 %v6645, %v6709
    %v6712 = vadd.f32 %v6646, %v6710
    %s6713 = sld [smem:[#allocation7 + $0x109]]
    %v6714 = vstv %s6713
    %v6715 = vmul.f32 %v6699, %v6714
    %v6716 = vmul.f32 %v6700, %v6714
    %v6717 = vadd.f32 %v6665, %v6715
    %v6718 = vadd.f32 %v6666, %v6716
    %s6719 = sld [smem:[#allocation7 + $0x189]]
    %v6720 = vstv %s6719
    %v6721 = vmul.f32 %v6699, %v6720
    %v6722 = vmul.f32 %v6700, %v6720
    %v6723 = vadd.f32 %v6685, %v6721
    %v6724 = vadd.f32 %v6686, %v6722
    %s6725 = sld [smem:[#allocation7 + $0xa]]
    %v6726 = vstv %s6725
    %v6727 = vmul.f32 %v6697, %v6726
    %v6728 = vmul.f32 %v6693, %v6726
    %v6729 = vmul.f32 %v6698, %v6726
    %6733 = vrot.lane.b32.xlu0 %v6727, 127
    %v6734 = vpop.permute.xlu0 %6733
    %6735 = vrot.lane.b32.xlu0 %v6728, 127
    %v6736 = vpop.permute.xlu0 %6735
    %6737 = vrot.lane.b32.xlu0 %v6729, 127
    %v6738 = vpop.permute.xlu0 %6737
    %v6739 = vsel %vm195, %v6734, %v6736
    %v6740 = vsel %vm195, %v6736, %v6738
    %v6743 = vadd.f32 %v6705, %v6739
    %v6744 = vadd.f32 %v6706, %v6740
    %s6745 = sld [smem:[#allocation7 + $0x8a]]
    %v6746 = vstv %s6745
    %v6747 = vmul.f32 %v6697, %v6746
    %v6748 = vmul.f32 %v6693, %v6746
    %v6749 = vmul.f32 %v6698, %v6746
    %6753 = vrot.lane.b32.xlu0 %v6747, 127
    %v6754 = vpop.permute.xlu0 %6753
    %6755 = vrot.lane.b32.xlu0 %v6748, 127
    %v6756 = vpop.permute.xlu0 %6755
    %6757 = vrot.lane.b32.xlu0 %v6749, 127
    %v6758 = vpop.permute.xlu0 %6757
    %v6759 = vsel %vm195, %v6754, %v6756
    %v6760 = vsel %vm195, %v6756, %v6758
    %v6763 = vadd.f32 %v6711, %v6759
    %v6764 = vadd.f32 %v6712, %v6760
    %s6765 = sld [smem:[#allocation7 + $0x10a]]
    %v6766 = vstv %s6765
    %v6767 = vmul.f32 %v6697, %v6766
    %v6768 = vmul.f32 %v6693, %v6766
    %v6769 = vmul.f32 %v6698, %v6766
    %6773 = vrot.lane.b32.xlu0 %v6767, 127
    %v6774 = vpop.permute.xlu0 %6773
    %6775 = vrot.lane.b32.xlu0 %v6768, 127
    %v6776 = vpop.permute.xlu0 %6775
    %6777 = vrot.lane.b32.xlu0 %v6769, 127
    %v6778 = vpop.permute.xlu0 %6777
    %v6779 = vsel %vm195, %v6774, %v6776
    %v6780 = vsel %vm195, %v6776, %v6778
    %v6783 = vadd.f32 %v6717, %v6779
    %v6784 = vadd.f32 %v6718, %v6780
    %s6785 = sld [smem:[#allocation7 + $0x18a]]
    %v6786 = vstv %s6785
    %v6787 = vmul.f32 %v6697, %v6786
    %v6788 = vmul.f32 %v6693, %v6786
    %v6789 = vmul.f32 %v6698, %v6786
    %6793 = vrot.lane.b32.xlu0 %v6787, 127
    %v6794 = vpop.permute.xlu0 %6793
    %6795 = vrot.lane.b32.xlu0 %v6788, 127
    %v6796 = vpop.permute.xlu0 %6795
    %6797 = vrot.lane.b32.xlu0 %v6789, 127
    %v6798 = vpop.permute.xlu0 %6797
    %v6799 = vsel %vm195, %v6794, %v6796
    %v6800 = vsel %vm195, %v6796, %v6798
    %v6803 = vadd.f32 %v6723, %v6799
    %v6804 = vadd.f32 %v6724, %v6800
    %v6805 = vmul.f32 %v6697, %v265
    %v6806 = vmul.f32 %v6693, %v269
    %v6807 = vmul.f32 %v6698, %v267
    %s6808 = sld [smem:[#allocation7 + $0xb]]
    %v6809 = vstv %s6808
    %v6810 = vmul.f32 %v6805, %v6809
    %v6811 = vmul.f32 %v6806, %v6809
    %v6812 = vmul.f32 %v6807, %v6809
    %6816 = vrot.lane.b32.xlu0 %v6810, 126
    %v6817 = vpop.permute.xlu0 %6816
    %6818 = vrot.lane.b32.xlu0 %v6811, 126
    %v6819 = vpop.permute.xlu0 %6818
    %6820 = vrot.lane.b32.xlu0 %v6812, 126
    %v6821 = vpop.permute.xlu0 %6820
    %v6822 = vsel %vm290, %v6817, %v6819
    %v6823 = vsel %vm290, %v6819, %v6821
    %v6826 = vadd.f32 %v6743, %v6822
    %v6827 = vadd.f32 %v6744, %v6823
    %s6828 = sld [smem:[#allocation7 + $0x8b]]
    %v6829 = vstv %s6828
    %v6830 = vmul.f32 %v6805, %v6829
    %v6831 = vmul.f32 %v6806, %v6829
    %v6832 = vmul.f32 %v6807, %v6829
    %6836 = vrot.lane.b32.xlu0 %v6830, 126
    %v6837 = vpop.permute.xlu0 %6836
    %6838 = vrot.lane.b32.xlu0 %v6831, 126
    %v6839 = vpop.permute.xlu0 %6838
    %6840 = vrot.lane.b32.xlu0 %v6832, 126
    %v6841 = vpop.permute.xlu0 %6840
    %v6842 = vsel %vm290, %v6837, %v6839
    %v6843 = vsel %vm290, %v6839, %v6841
    %v6846 = vadd.f32 %v6763, %v6842
    %v6847 = vadd.f32 %v6764, %v6843
    %s6848 = sld [smem:[#allocation7 + $0x10b]]
    %v6849 = vstv %s6848
    %v6850 = vmul.f32 %v6805, %v6849
    %v6851 = vmul.f32 %v6806, %v6849
    %v6852 = vmul.f32 %v6807, %v6849
    %6856 = vrot.lane.b32.xlu0 %v6850, 126
    %v6857 = vpop.permute.xlu0 %6856
    %6858 = vrot.lane.b32.xlu0 %v6851, 126
    %v6859 = vpop.permute.xlu0 %6858
    %6860 = vrot.lane.b32.xlu0 %v6852, 126
    %v6861 = vpop.permute.xlu0 %6860
    %v6862 = vsel %vm290, %v6857, %v6859
    %v6863 = vsel %vm290, %v6859, %v6861
    %v6866 = vadd.f32 %v6783, %v6862
    %v6867 = vadd.f32 %v6784, %v6863
    %s6868 = sld [smem:[#allocation7 + $0x18b]]
    %v6869 = vstv %s6868
    %v6870 = vmul.f32 %v6805, %v6869
    %v6871 = vmul.f32 %v6806, %v6869
    %v6872 = vmul.f32 %v6807, %v6869
    %6876 = vrot.lane.b32.xlu0 %v6870, 126
    %v6877 = vpop.permute.xlu0 %6876
    %6878 = vrot.lane.b32.xlu0 %v6871, 126
    %v6879 = vpop.permute.xlu0 %6878
    %6880 = vrot.lane.b32.xlu0 %v6872, 126
    %v6881 = vpop.permute.xlu0 %6880
    %v6882 = vsel %vm290, %v6877, %v6879
    %v6883 = vsel %vm290, %v6879, %v6881
    %v6886 = vadd.f32 %v6803, %v6882
    %v6887 = vadd.f32 %v6804, %v6883
    %v6888 = vmul.f32 %v6697, %v360
    %v6889 = vmul.f32 %v6693, %v364
    %v6890 = vmul.f32 %v6698, %v362
    %s6891 = sld [smem:[#allocation7 + $0xc]]
    %v6892 = vstv %s6891
    %v6893 = vmul.f32 %v6888, %v6892
    %v6894 = vmul.f32 %v6889, %v6892
    %v6895 = vmul.f32 %v6890, %v6892
    %6899 = vrot.lane.b32.xlu0 %v6893, 112
    %v6900 = vpop.permute.xlu0 %6899
    %6901 = vrot.lane.b32.xlu0 %v6894, 112
    %v6902 = vpop.permute.xlu0 %6901
    %6903 = vrot.lane.b32.xlu0 %v6895, 112
    %v6904 = vpop.permute.xlu0 %6903
    %v6905 = vsel %vm385, %v6900, %v6902
    %v6906 = vsel %vm385, %v6902, %v6904
    %v6909 = vadd.f32 %v6826, %v6905
    %v6910 = vadd.f32 %v6827, %v6906
    %s6911 = sld [smem:[#allocation7 + $0x8c]]
    %v6912 = vstv %s6911
    %v6913 = vmul.f32 %v6888, %v6912
    %v6914 = vmul.f32 %v6889, %v6912
    %v6915 = vmul.f32 %v6890, %v6912
    %6919 = vrot.lane.b32.xlu0 %v6913, 112
    %v6920 = vpop.permute.xlu0 %6919
    %6921 = vrot.lane.b32.xlu0 %v6914, 112
    %v6922 = vpop.permute.xlu0 %6921
    %6923 = vrot.lane.b32.xlu0 %v6915, 112
    %v6924 = vpop.permute.xlu0 %6923
    %v6925 = vsel %vm385, %v6920, %v6922
    %v6926 = vsel %vm385, %v6922, %v6924
    %v6929 = vadd.f32 %v6846, %v6925
    %v6930 = vadd.f32 %v6847, %v6926
    %s6931 = sld [smem:[#allocation7 + $0x10c]]
    %v6932 = vstv %s6931
    %v6933 = vmul.f32 %v6888, %v6932
    %v6934 = vmul.f32 %v6889, %v6932
    %v6935 = vmul.f32 %v6890, %v6932
    %6939 = vrot.lane.b32.xlu0 %v6933, 112
    %v6940 = vpop.permute.xlu0 %6939
    %6941 = vrot.lane.b32.xlu0 %v6934, 112
    %v6942 = vpop.permute.xlu0 %6941
    %6943 = vrot.lane.b32.xlu0 %v6935, 112
    %v6944 = vpop.permute.xlu0 %6943
    %v6945 = vsel %vm385, %v6940, %v6942
    %v6946 = vsel %vm385, %v6942, %v6944
    %v6949 = vadd.f32 %v6866, %v6945
    %v6950 = vadd.f32 %v6867, %v6946
    %s6951 = sld [smem:[#allocation7 + $0x18c]]
    %v6952 = vstv %s6951
    %v6953 = vmul.f32 %v6888, %v6952
    %v6954 = vmul.f32 %v6889, %v6952
    %v6955 = vmul.f32 %v6890, %v6952
    %6959 = vrot.lane.b32.xlu0 %v6953, 112
    %v6960 = vpop.permute.xlu0 %6959
    %6961 = vrot.lane.b32.xlu0 %v6954, 112
    %v6962 = vpop.permute.xlu0 %6961
    %6963 = vrot.lane.b32.xlu0 %v6955, 112
    %v6964 = vpop.permute.xlu0 %6963
    %v6965 = vsel %vm385, %v6960, %v6962
    %v6966 = vsel %vm385, %v6962, %v6964
    %v6969 = vadd.f32 %v6886, %v6965
    %v6970 = vadd.f32 %v6887, %v6966
    %s6971 = sld [smem:[#allocation7 + $0xd]]
    %v6972 = vstv %s6971
    %v6973 = vmul.f32 %v6697, %v6972
    %v6974 = vmul.f32 %v6693, %v6972
    %v6975 = vmul.f32 %v6698, %v6972
    %6979 = vrot.lane.b32.xlu0 %v6973, 111
    %v6980 = vpop.permute.xlu0 %6979
    %6981 = vrot.lane.b32.xlu0 %v6974, 111
    %v6982 = vpop.permute.xlu0 %6981
    %6983 = vrot.lane.b32.xlu0 %v6975, 111
    %v6984 = vpop.permute.xlu0 %6983
    %v6985 = vsel %vm466, %v6980, %v6982
    %v6986 = vsel %vm466, %v6982, %v6984
    %v6989 = vadd.f32 %v6909, %v6985
    %v6990 = vadd.f32 %v6910, %v6986
    %s6991 = sld [smem:[#allocation7 + $0x8d]]
    %v6992 = vstv %s6991
    %v6993 = vmul.f32 %v6697, %v6992
    %v6994 = vmul.f32 %v6693, %v6992
    %v6995 = vmul.f32 %v6698, %v6992
    %6999 = vrot.lane.b32.xlu0 %v6993, 111
    %v7000 = vpop.permute.xlu0 %6999
    %7001 = vrot.lane.b32.xlu0 %v6994, 111
    %v7002 = vpop.permute.xlu0 %7001
    %7003 = vrot.lane.b32.xlu0 %v6995, 111
    %v7004 = vpop.permute.xlu0 %7003
    %v7005 = vsel %vm466, %v7000, %v7002
    %v7006 = vsel %vm466, %v7002, %v7004
    %v7009 = vadd.f32 %v6929, %v7005
    %v7010 = vadd.f32 %v6930, %v7006
    %s7011 = sld [smem:[#allocation7 + $0x10d]]
    %v7012 = vstv %s7011
    %v7013 = vmul.f32 %v6697, %v7012
    %v7014 = vmul.f32 %v6693, %v7012
    %v7015 = vmul.f32 %v6698, %v7012
    %7019 = vrot.lane.b32.xlu0 %v7013, 111
    %v7020 = vpop.permute.xlu0 %7019
    %7021 = vrot.lane.b32.xlu0 %v7014, 111
    %v7022 = vpop.permute.xlu0 %7021
    %7023 = vrot.lane.b32.xlu0 %v7015, 111
    %v7024 = vpop.permute.xlu0 %7023
    %v7025 = vsel %vm466, %v7020, %v7022
    %v7026 = vsel %vm466, %v7022, %v7024
    %v7029 = vadd.f32 %v6949, %v7025
    %v7030 = vadd.f32 %v6950, %v7026
    %s7031 = sld [smem:[#allocation7 + $0x18d]]
    %v7032 = vstv %s7031
    %v7033 = vmul.f32 %v6697, %v7032
    %v7034 = vmul.f32 %v6693, %v7032
    %v7035 = vmul.f32 %v6698, %v7032
    %7039 = vrot.lane.b32.xlu0 %v7033, 111
    %v7040 = vpop.permute.xlu0 %7039
    %7041 = vrot.lane.b32.xlu0 %v7034, 111
    %v7042 = vpop.permute.xlu0 %7041
    %7043 = vrot.lane.b32.xlu0 %v7035, 111
    %v7044 = vpop.permute.xlu0 %7043
    %v7045 = vsel %vm466, %v7040, %v7042
    %v7046 = vsel %vm466, %v7042, %v7044
    %v7049 = vadd.f32 %v6969, %v7045
    %v7050 = vadd.f32 %v6970, %v7046
    %v7051 = vmul.f32 %v6697, %v534
    %v7052 = vmul.f32 %v6693, %v538
    %v7053 = vmul.f32 %v6698, %v536
    %s7054 = sld [smem:[#allocation7 + $0xe]]
    %v7055 = vstv %s7054
    %v7056 = vmul.f32 %v7051, %v7055
    %v7057 = vmul.f32 %v7052, %v7055
    %v7058 = vmul.f32 %v7053, %v7055
    %7062 = vrot.lane.b32.xlu0 %v7056, 110
    %v7063 = vpop.permute.xlu0 %7062
    %7064 = vrot.lane.b32.xlu0 %v7057, 110
    %v7065 = vpop.permute.xlu0 %7064
    %7066 = vrot.lane.b32.xlu0 %v7058, 110
    %v7067 = vpop.permute.xlu0 %7066
    %v7068 = vsel %vm559, %v7063, %v7065
    %v7069 = vsel %vm559, %v7065, %v7067
    %v7072 = vadd.f32 %v6989, %v7068
    %v7073 = vadd.f32 %v6990, %v7069
    %s7074 = sld [smem:[#allocation7 + $0x8e]]
    %v7075 = vstv %s7074
    %v7076 = vmul.f32 %v7051, %v7075
    %v7077 = vmul.f32 %v7052, %v7075
    %v7078 = vmul.f32 %v7053, %v7075
    %7082 = vrot.lane.b32.xlu0 %v7076, 110
    %v7083 = vpop.permute.xlu0 %7082
    %7084 = vrot.lane.b32.xlu0 %v7077, 110
    %v7085 = vpop.permute.xlu0 %7084
    %7086 = vrot.lane.b32.xlu0 %v7078, 110
    %v7087 = vpop.permute.xlu0 %7086
    %v7088 = vsel %vm559, %v7083, %v7085
    %v7089 = vsel %vm559, %v7085, %v7087
    %v7092 = vadd.f32 %v7009, %v7088
    %v7093 = vadd.f32 %v7010, %v7089
    %s7094 = sld [smem:[#allocation7 + $0x10e]]
    %v7095 = vstv %s7094
    %v7096 = vmul.f32 %v7051, %v7095
    %v7097 = vmul.f32 %v7052, %v7095
    %v7098 = vmul.f32 %v7053, %v7095
    %7102 = vrot.lane.b32.xlu0 %v7096, 110
    %v7103 = vpop.permute.xlu0 %7102
    %7104 = vrot.lane.b32.xlu0 %v7097, 110
    %v7105 = vpop.permute.xlu0 %7104
    %7106 = vrot.lane.b32.xlu0 %v7098, 110
    %v7107 = vpop.permute.xlu0 %7106
    %v7108 = vsel %vm559, %v7103, %v7105
    %v7109 = vsel %vm559, %v7105, %v7107
    %v7112 = vadd.f32 %v7029, %v7108
    %v7113 = vadd.f32 %v7030, %v7109
    %s7114 = sld [smem:[#allocation7 + $0x18e]]
    %v7115 = vstv %s7114
    %v7116 = vmul.f32 %v7051, %v7115
    %v7117 = vmul.f32 %v7052, %v7115
    %v7118 = vmul.f32 %v7053, %v7115
    %7122 = vrot.lane.b32.xlu0 %v7116, 110
    %v7123 = vpop.permute.xlu0 %7122
    %7124 = vrot.lane.b32.xlu0 %v7117, 110
    %v7125 = vpop.permute.xlu0 %7124
    %7126 = vrot.lane.b32.xlu0 %v7118, 110
    %v7127 = vpop.permute.xlu0 %7126
    %v7128 = vsel %vm559, %v7123, %v7125
    %v7129 = vsel %vm559, %v7125, %v7127
    %v7132 = vadd.f32 %v7049, %v7128
    %v7133 = vadd.f32 %v7050, %v7129
    %v7134 = vmul.f32 %v6697, %v627
    %v7135 = vmul.f32 %v6693, %v631
    %v7136 = vmul.f32 %v6698, %v629
    %s7137 = sld [smem:[#allocation7 + $0xf]]
    %v7138 = vstv %s7137
    %v7139 = vmul.f32 %v7134, %v7138
    %v7140 = vmul.f32 %v7135, %v7138
    %v7141 = vmul.f32 %v7136, %v7138
    %7145 = vrot.lane.b32.xlu0 %v7139, 96
    %v7146 = vpop.permute.xlu0 %7145
    %7147 = vrot.lane.b32.xlu0 %v7140, 96
    %v7148 = vpop.permute.xlu0 %7147
    %7149 = vrot.lane.b32.xlu0 %v7141, 96
    %v7150 = vpop.permute.xlu0 %7149
    %v7151 = vsel %vm652, %v7146, %v7148
    %v7152 = vsel %vm652, %v7148, %v7150
    %v7155 = vadd.f32 %v7072, %v7151
    %v7156 = vadd.f32 %v7073, %v7152
    %s7157 = sld [smem:[#allocation7 + $0x8f]]
    %v7158 = vstv %s7157
    %v7159 = vmul.f32 %v7134, %v7158
    %v7160 = vmul.f32 %v7135, %v7158
    %v7161 = vmul.f32 %v7136, %v7158
    %7165 = vrot.lane.b32.xlu0 %v7159, 96
    %v7166 = vpop.permute.xlu0 %7165
    %7167 = vrot.lane.b32.xlu0 %v7160, 96
    %v7168 = vpop.permute.xlu0 %7167
    %7169 = vrot.lane.b32.xlu0 %v7161, 96
    %v7170 = vpop.permute.xlu0 %7169
    %v7171 = vsel %vm652, %v7166, %v7168
    %v7172 = vsel %vm652, %v7168, %v7170
    %v7175 = vadd.f32 %v7092, %v7171
    %v7176 = vadd.f32 %v7093, %v7172
    %s7177 = sld [smem:[#allocation7 + $0x10f]]
    %v7178 = vstv %s7177
    %v7179 = vmul.f32 %v7134, %v7178
    %v7180 = vmul.f32 %v7135, %v7178
    %v7181 = vmul.f32 %v7136, %v7178
    %7185 = vrot.lane.b32.xlu0 %v7179, 96
    %v7186 = vpop.permute.xlu0 %7185
    %7187 = vrot.lane.b32.xlu0 %v7180, 96
    %v7188 = vpop.permute.xlu0 %7187
    %7189 = vrot.lane.b32.xlu0 %v7181, 96
    %v7190 = vpop.permute.xlu0 %7189
    %v7191 = vsel %vm652, %v7186, %v7188
    %v7192 = vsel %vm652, %v7188, %v7190
    %v7195 = vadd.f32 %v7112, %v7191
    %v7196 = vadd.f32 %v7113, %v7192
    %s7197 = sld [smem:[#allocation7 + $0x18f]]
    %v7198 = vstv %s7197
    %v7199 = vmul.f32 %v7134, %v7198
    %v7200 = vmul.f32 %v7135, %v7198
    %v7201 = vmul.f32 %v7136, %v7198
    %7205 = vrot.lane.b32.xlu0 %v7199, 96
    %v7206 = vpop.permute.xlu0 %7205
    %7207 = vrot.lane.b32.xlu0 %v7200, 96
    %v7208 = vpop.permute.xlu0 %7207
    %7209 = vrot.lane.b32.xlu0 %v7201, 96
    %v7210 = vpop.permute.xlu0 %7209
    %v7211 = vsel %vm652, %v7206, %v7208
    %v7212 = vsel %vm652, %v7208, %v7210
    %v7215 = vadd.f32 %v7132, %v7211
    %v7216 = vadd.f32 %v7133, %v7212
    %s7217 = sld [smem:[#allocation7 + $0x10]]
    %v7218 = vstv %s7217
    %v7219 = vmul.f32 %v6697, %v7218
    %v7220 = vmul.f32 %v6693, %v7218
    %v7221 = vmul.f32 %v6698, %v7218
    %7225 = vrot.lane.b32.xlu0 %v7219, 95
    %v7226 = vpop.permute.xlu0 %7225
    %7227 = vrot.lane.b32.xlu0 %v7220, 95
    %v7228 = vpop.permute.xlu0 %7227
    %7229 = vrot.lane.b32.xlu0 %v7221, 95
    %v7230 = vpop.permute.xlu0 %7229
    %v7231 = vsel %vm733, %v7226, %v7228
    %v7232 = vsel %vm733, %v7228, %v7230
    %v7235 = vadd.f32 %v7155, %v7231
    %v7236 = vadd.f32 %v7156, %v7232
    %s7237 = sld [smem:[#allocation7 + $0x90]]
    %v7238 = vstv %s7237
    %v7239 = vmul.f32 %v6697, %v7238
    %v7240 = vmul.f32 %v6693, %v7238
    %v7241 = vmul.f32 %v6698, %v7238
    %7245 = vrot.lane.b32.xlu0 %v7239, 95
    %v7246 = vpop.permute.xlu0 %7245
    %7247 = vrot.lane.b32.xlu0 %v7240, 95
    %v7248 = vpop.permute.xlu0 %7247
    %7249 = vrot.lane.b32.xlu0 %v7241, 95
    %v7250 = vpop.permute.xlu0 %7249
    %v7251 = vsel %vm733, %v7246, %v7248
    %v7252 = vsel %vm733, %v7248, %v7250
    %v7255 = vadd.f32 %v7175, %v7251
    %v7256 = vadd.f32 %v7176, %v7252
    %s7257 = sld [smem:[#allocation7 + $0x110]]
    %v7258 = vstv %s7257
    %v7259 = vmul.f32 %v6697, %v7258
    %v7260 = vmul.f32 %v6693, %v7258
    %v7261 = vmul.f32 %v6698, %v7258
    %7265 = vrot.lane.b32.xlu0 %v7259, 95
    %v7266 = vpop.permute.xlu0 %7265
    %7267 = vrot.lane.b32.xlu0 %v7260, 95
    %v7268 = vpop.permute.xlu0 %7267
    %7269 = vrot.lane.b32.xlu0 %v7261, 95
    %v7270 = vpop.permute.xlu0 %7269
    %v7271 = vsel %vm733, %v7266, %v7268
    %v7272 = vsel %vm733, %v7268, %v7270
    %v7275 = vadd.f32 %v7195, %v7271
    %v7276 = vadd.f32 %v7196, %v7272
    %s7277 = sld [smem:[#allocation7 + $0x190]]
    %v7278 = vstv %s7277
    %v7279 = vmul.f32 %v6697, %v7278
    %v7280 = vmul.f32 %v6693, %v7278
    %v7281 = vmul.f32 %v6698, %v7278
    %7285 = vrot.lane.b32.xlu0 %v7279, 95
    %v7286 = vpop.permute.xlu0 %7285
    %7287 = vrot.lane.b32.xlu0 %v7280, 95
    %v7288 = vpop.permute.xlu0 %7287
    %7289 = vrot.lane.b32.xlu0 %v7281, 95
    %v7290 = vpop.permute.xlu0 %7289
    %v7291 = vsel %vm733, %v7286, %v7288
    %v7292 = vsel %vm733, %v7288, %v7290
    %v7295 = vadd.f32 %v7215, %v7291
    %v7296 = vadd.f32 %v7216, %v7292
    %v7297 = vmul.f32 %v6697, %v801
    %v7298 = vmul.f32 %v6693, %v805
    %v7299 = vmul.f32 %v6698, %v803
    %s7300 = sld [smem:[#allocation7 + $0x11]]
    %v7301 = vstv %s7300
    %v7302 = vmul.f32 %v7297, %v7301
    %v7303 = vmul.f32 %v7298, %v7301
    %v7304 = vmul.f32 %v7299, %v7301
    %7308 = vrot.lane.b32.xlu0 %v7302, 94
    %v7309 = vpop.permute.xlu0 %7308
    %7310 = vrot.lane.b32.xlu0 %v7303, 94
    %v7311 = vpop.permute.xlu0 %7310
    %7312 = vrot.lane.b32.xlu0 %v7304, 94
    %v7313 = vpop.permute.xlu0 %7312
    %v7314 = vsel %vm826, %v7309, %v7311
    %v7315 = vsel %vm826, %v7311, %v7313
    %v7318 = vadd.f32 %v7235, %v7314
    %v7319 = vadd.f32 %v7236, %v7315
    %s7320 = sld [smem:[#allocation7 + $0x91]]
    %v7321 = vstv %s7320
    %v7322 = vmul.f32 %v7297, %v7321
    %v7323 = vmul.f32 %v7298, %v7321
    %v7324 = vmul.f32 %v7299, %v7321
    %7328 = vrot.lane.b32.xlu0 %v7322, 94
    %v7329 = vpop.permute.xlu0 %7328
    %7330 = vrot.lane.b32.xlu0 %v7323, 94
    %v7331 = vpop.permute.xlu0 %7330
    %7332 = vrot.lane.b32.xlu0 %v7324, 94
    %v7333 = vpop.permute.xlu0 %7332
    %v7334 = vsel %vm826, %v7329, %v7331
    %v7335 = vsel %vm826, %v7331, %v7333
    %v7338 = vadd.f32 %v7255, %v7334
    %v7339 = vadd.f32 %v7256, %v7335
    %s7340 = sld [smem:[#allocation7 + $0x111]]
    %v7341 = vstv %s7340
    %v7342 = vmul.f32 %v7297, %v7341
    %v7343 = vmul.f32 %v7298, %v7341
    %v7344 = vmul.f32 %v7299, %v7341
    %7348 = vrot.lane.b32.xlu0 %v7342, 94
    %v7349 = vpop.permute.xlu0 %7348
    %7350 = vrot.lane.b32.xlu0 %v7343, 94
    %v7351 = vpop.permute.xlu0 %7350
    %7352 = vrot.lane.b32.xlu0 %v7344, 94
    %v7353 = vpop.permute.xlu0 %7352
    %v7354 = vsel %vm826, %v7349, %v7351
    %v7355 = vsel %vm826, %v7351, %v7353
    %v7358 = vadd.f32 %v7275, %v7354
    %v7359 = vadd.f32 %v7276, %v7355
    %s7360 = sld [smem:[#allocation7 + $0x191]]
    %v7361 = vstv %s7360
    %v7362 = vmul.f32 %v7297, %v7361
    %v7363 = vmul.f32 %v7298, %v7361
    %v7364 = vmul.f32 %v7299, %v7361
    %7368 = vrot.lane.b32.xlu0 %v7362, 94
    %v7369 = vpop.permute.xlu0 %7368
    %7370 = vrot.lane.b32.xlu0 %v7363, 94
    %v7371 = vpop.permute.xlu0 %7370
    %7372 = vrot.lane.b32.xlu0 %v7364, 94
    %v7373 = vpop.permute.xlu0 %7372
    %v7374 = vsel %vm826, %v7369, %v7371
    %v7375 = vsel %vm826, %v7371, %v7373
    %v7378 = vadd.f32 %v7295, %v7374
    %v7379 = vadd.f32 %v7296, %v7375
    %7382 = vrot.lane.b32.xlu0 %v5945, 17
    %v7383 = vpop.permute.xlu0 %7382
    %7384 = vrot.lane.b32.xlu0 %v5946, 17
    %v7385 = vpop.permute.xlu0 %7384
    %v7386 = vsel %vm156, %v7383, %v7385
    %v7390 = vsel %vm156, 0.0, %v7383
    %v7391 = vsel %vm156, %v7385, 0.0
    %v7392 = vmul.f32 %v7390, %v131
    %v7393 = vmul.f32 %v7386, %v132
    %s7394 = sld [smem:[#allocation7 + $0x12]]
    %v7395 = vstv %s7394
    %v7396 = vmul.f32 %v7392, %v7395
    %v7397 = vmul.f32 %v7393, %v7395
    %v7398 = vadd.f32 %v7318, %v7396
    %v7399 = vadd.f32 %v7319, %v7397
    %s7400 = sld [smem:[#allocation7 + $0x92]]
    %v7401 = vstv %s7400
    %v7402 = vmul.f32 %v7392, %v7401
    %v7403 = vmul.f32 %v7393, %v7401
    %v7404 = vadd.f32 %v7338, %v7402
    %v7405 = vadd.f32 %v7339, %v7403
    %s7406 = sld [smem:[#allocation7 + $0x112]]
    %v7407 = vstv %s7406
    %v7408 = vmul.f32 %v7392, %v7407
    %v7409 = vmul.f32 %v7393, %v7407
    %v7410 = vadd.f32 %v7358, %v7408
    %v7411 = vadd.f32 %v7359, %v7409
    %s7412 = sld [smem:[#allocation7 + $0x192]]
    %v7413 = vstv %s7412
    %v7414 = vmul.f32 %v7392, %v7413
    %v7415 = vmul.f32 %v7393, %v7413
    %v7416 = vadd.f32 %v7378, %v7414
    %v7417 = vadd.f32 %v7379, %v7415
    %s7418 = sld [smem:[#allocation7 + $0x13]]
    %v7419 = vstv %s7418
    %v7420 = vmul.f32 %v7390, %v7419
    %v7421 = vmul.f32 %v7386, %v7419
    %v7422 = vmul.f32 %v7391, %v7419
    %7426 = vrot.lane.b32.xlu0 %v7420, 127
    %v7427 = vpop.permute.xlu0 %7426
    %7428 = vrot.lane.b32.xlu0 %v7421, 127
    %v7429 = vpop.permute.xlu0 %7428
    %7430 = vrot.lane.b32.xlu0 %v7422, 127
    %v7431 = vpop.permute.xlu0 %7430
    %v7432 = vsel %vm195, %v7427, %v7429
    %v7433 = vsel %vm195, %v7429, %v7431
    %v7436 = vadd.f32 %v7398, %v7432
    %v7437 = vadd.f32 %v7399, %v7433
    %s7438 = sld [smem:[#allocation7 + $0x93]]
    %v7439 = vstv %s7438
    %v7440 = vmul.f32 %v7390, %v7439
    %v7441 = vmul.f32 %v7386, %v7439
    %v7442 = vmul.f32 %v7391, %v7439
    %7446 = vrot.lane.b32.xlu0 %v7440, 127
    %v7447 = vpop.permute.xlu0 %7446
    %7448 = vrot.lane.b32.xlu0 %v7441, 127
    %v7449 = vpop.permute.xlu0 %7448
    %7450 = vrot.lane.b32.xlu0 %v7442, 127
    %v7451 = vpop.permute.xlu0 %7450
    %v7452 = vsel %vm195, %v7447, %v7449
    %v7453 = vsel %vm195, %v7449, %v7451
    %v7456 = vadd.f32 %v7404, %v7452
    %v7457 = vadd.f32 %v7405, %v7453
    %s7458 = sld [smem:[#allocation7 + $0x113]]
    %v7459 = vstv %s7458
    %v7460 = vmul.f32 %v7390, %v7459
    %v7461 = vmul.f32 %v7386, %v7459
    %v7462 = vmul.f32 %v7391, %v7459
    %7466 = vrot.lane.b32.xlu0 %v7460, 127
    %v7467 = vpop.permute.xlu0 %7466
    %7468 = vrot.lane.b32.xlu0 %v7461, 127
    %v7469 = vpop.permute.xlu0 %7468
    %7470 = vrot.lane.b32.xlu0 %v7462, 127
    %v7471 = vpop.permute.xlu0 %7470
    %v7472 = vsel %vm195, %v7467, %v7469
    %v7473 = vsel %vm195, %v7469, %v7471
    %v7476 = vadd.f32 %v7410, %v7472
    %v7477 = vadd.f32 %v7411, %v7473
    %s7478 = sld [smem:[#allocation7 + $0x193]]
    %v7479 = vstv %s7478
    %v7480 = vmul.f32 %v7390, %v7479
    %v7481 = vmul.f32 %v7386, %v7479
    %v7482 = vmul.f32 %v7391, %v7479
    %7486 = vrot.lane.b32.xlu0 %v7480, 127
    %v7487 = vpop.permute.xlu0 %7486
    %7488 = vrot.lane.b32.xlu0 %v7481, 127
    %v7489 = vpop.permute.xlu0 %7488
    %7490 = vrot.lane.b32.xlu0 %v7482, 127
    %v7491 = vpop.permute.xlu0 %7490
    %v7492 = vsel %vm195, %v7487, %v7489
    %v7493 = vsel %vm195, %v7489, %v7491
    %v7496 = vadd.f32 %v7416, %v7492
    %v7497 = vadd.f32 %v7417, %v7493
    %v7498 = vmul.f32 %v7390, %v265
    %v7499 = vmul.f32 %v7386, %v269
    %v7500 = vmul.f32 %v7391, %v267
    %s7501 = sld [smem:[#allocation7 + $0x14]]
    %v7502 = vstv %s7501
    %v7503 = vmul.f32 %v7498, %v7502
    %v7504 = vmul.f32 %v7499, %v7502
    %v7505 = vmul.f32 %v7500, %v7502
    %7509 = vrot.lane.b32.xlu0 %v7503, 126
    %v7510 = vpop.permute.xlu0 %7509
    %7511 = vrot.lane.b32.xlu0 %v7504, 126
    %v7512 = vpop.permute.xlu0 %7511
    %7513 = vrot.lane.b32.xlu0 %v7505, 126
    %v7514 = vpop.permute.xlu0 %7513
    %v7515 = vsel %vm290, %v7510, %v7512
    %v7516 = vsel %vm290, %v7512, %v7514
    %v7519 = vadd.f32 %v7436, %v7515
    %v7520 = vadd.f32 %v7437, %v7516
    %s7521 = sld [smem:[#allocation7 + $0x94]]
    %v7522 = vstv %s7521
    %v7523 = vmul.f32 %v7498, %v7522
    %v7524 = vmul.f32 %v7499, %v7522
    %v7525 = vmul.f32 %v7500, %v7522
    %7529 = vrot.lane.b32.xlu0 %v7523, 126
    %v7530 = vpop.permute.xlu0 %7529
    %7531 = vrot.lane.b32.xlu0 %v7524, 126
    %v7532 = vpop.permute.xlu0 %7531
    %7533 = vrot.lane.b32.xlu0 %v7525, 126
    %v7534 = vpop.permute.xlu0 %7533
    %v7535 = vsel %vm290, %v7530, %v7532
    %v7536 = vsel %vm290, %v7532, %v7534
    %v7539 = vadd.f32 %v7456, %v7535
    %v7540 = vadd.f32 %v7457, %v7536
    %s7541 = sld [smem:[#allocation7 + $0x114]]
    %v7542 = vstv %s7541
    %v7543 = vmul.f32 %v7498, %v7542
    %v7544 = vmul.f32 %v7499, %v7542
    %v7545 = vmul.f32 %v7500, %v7542
    %7549 = vrot.lane.b32.xlu0 %v7543, 126
    %v7550 = vpop.permute.xlu0 %7549
    %7551 = vrot.lane.b32.xlu0 %v7544, 126
    %v7552 = vpop.permute.xlu0 %7551
    %7553 = vrot.lane.b32.xlu0 %v7545, 126
    %v7554 = vpop.permute.xlu0 %7553
    %v7555 = vsel %vm290, %v7550, %v7552
    %v7556 = vsel %vm290, %v7552, %v7554
    %v7559 = vadd.f32 %v7476, %v7555
    %v7560 = vadd.f32 %v7477, %v7556
    %s7561 = sld [smem:[#allocation7 + $0x194]]
    %v7562 = vstv %s7561
    %v7563 = vmul.f32 %v7498, %v7562
    %v7564 = vmul.f32 %v7499, %v7562
    %v7565 = vmul.f32 %v7500, %v7562
    %7569 = vrot.lane.b32.xlu0 %v7563, 126
    %v7570 = vpop.permute.xlu0 %7569
    %7571 = vrot.lane.b32.xlu0 %v7564, 126
    %v7572 = vpop.permute.xlu0 %7571
    %7573 = vrot.lane.b32.xlu0 %v7565, 126
    %v7574 = vpop.permute.xlu0 %7573
    %v7575 = vsel %vm290, %v7570, %v7572
    %v7576 = vsel %vm290, %v7572, %v7574
    %v7579 = vadd.f32 %v7496, %v7575
    %v7580 = vadd.f32 %v7497, %v7576
    %v7581 = vmul.f32 %v7390, %v360
    %v7582 = vmul.f32 %v7386, %v364
    %v7583 = vmul.f32 %v7391, %v362
    %s7584 = sld [smem:[#allocation7 + $0x15]]
    %v7585 = vstv %s7584
    %v7586 = vmul.f32 %v7581, %v7585
    %v7587 = vmul.f32 %v7582, %v7585
    %v7588 = vmul.f32 %v7583, %v7585
    %7592 = vrot.lane.b32.xlu0 %v7586, 112
    %v7593 = vpop.permute.xlu0 %7592
    %7594 = vrot.lane.b32.xlu0 %v7587, 112
    %v7595 = vpop.permute.xlu0 %7594
    %7596 = vrot.lane.b32.xlu0 %v7588, 112
    %v7597 = vpop.permute.xlu0 %7596
    %v7598 = vsel %vm385, %v7593, %v7595
    %v7599 = vsel %vm385, %v7595, %v7597
    %v7602 = vadd.f32 %v7519, %v7598
    %v7603 = vadd.f32 %v7520, %v7599
    %s7604 = sld [smem:[#allocation7 + $0x95]]
    %v7605 = vstv %s7604
    %v7606 = vmul.f32 %v7581, %v7605
    %v7607 = vmul.f32 %v7582, %v7605
    %v7608 = vmul.f32 %v7583, %v7605
    %7612 = vrot.lane.b32.xlu0 %v7606, 112
    %v7613 = vpop.permute.xlu0 %7612
    %7614 = vrot.lane.b32.xlu0 %v7607, 112
    %v7615 = vpop.permute.xlu0 %7614
    %7616 = vrot.lane.b32.xlu0 %v7608, 112
    %v7617 = vpop.permute.xlu0 %7616
    %v7618 = vsel %vm385, %v7613, %v7615
    %v7619 = vsel %vm385, %v7615, %v7617
    %v7622 = vadd.f32 %v7539, %v7618
    %v7623 = vadd.f32 %v7540, %v7619
    %s7624 = sld [smem:[#allocation7 + $0x115]]
    %v7625 = vstv %s7624
    %v7626 = vmul.f32 %v7581, %v7625
    %v7627 = vmul.f32 %v7582, %v7625
    %v7628 = vmul.f32 %v7583, %v7625
    %7632 = vrot.lane.b32.xlu0 %v7626, 112
    %v7633 = vpop.permute.xlu0 %7632
    %7634 = vrot.lane.b32.xlu0 %v7627, 112
    %v7635 = vpop.permute.xlu0 %7634
    %7636 = vrot.lane.b32.xlu0 %v7628, 112
    %v7637 = vpop.permute.xlu0 %7636
    %v7638 = vsel %vm385, %v7633, %v7635
    %v7639 = vsel %vm385, %v7635, %v7637
    %v7642 = vadd.f32 %v7559, %v7638
    %v7643 = vadd.f32 %v7560, %v7639
    %s7644 = sld [smem:[#allocation7 + $0x195]]
    %v7645 = vstv %s7644
    %v7646 = vmul.f32 %v7581, %v7645
    %v7647 = vmul.f32 %v7582, %v7645
    %v7648 = vmul.f32 %v7583, %v7645
    %7652 = vrot.lane.b32.xlu0 %v7646, 112
    %v7653 = vpop.permute.xlu0 %7652
    %7654 = vrot.lane.b32.xlu0 %v7647, 112
    %v7655 = vpop.permute.xlu0 %7654
    %7656 = vrot.lane.b32.xlu0 %v7648, 112
    %v7657 = vpop.permute.xlu0 %7656
    %v7658 = vsel %vm385, %v7653, %v7655
    %v7659 = vsel %vm385, %v7655, %v7657
    %v7662 = vadd.f32 %v7579, %v7658
    %v7663 = vadd.f32 %v7580, %v7659
    %s7664 = sld [smem:[#allocation7 + $0x16]]
    %v7665 = vstv %s7664
    %v7666 = vmul.f32 %v7390, %v7665
    %v7667 = vmul.f32 %v7386, %v7665
    %v7668 = vmul.f32 %v7391, %v7665
    %7672 = vrot.lane.b32.xlu0 %v7666, 111
    %v7673 = vpop.permute.xlu0 %7672
    %7674 = vrot.lane.b32.xlu0 %v7667, 111
    %v7675 = vpop.permute.xlu0 %7674
    %7676 = vrot.lane.b32.xlu0 %v7668, 111
    %v7677 = vpop.permute.xlu0 %7676
    %v7678 = vsel %vm466, %v7673, %v7675
    %v7679 = vsel %vm466, %v7675, %v7677
    %v7682 = vadd.f32 %v7602, %v7678
    %v7683 = vadd.f32 %v7603, %v7679
    %s7684 = sld [smem:[#allocation7 + $0x96]]
    %v7685 = vstv %s7684
    %v7686 = vmul.f32 %v7390, %v7685
    %v7687 = vmul.f32 %v7386, %v7685
    %v7688 = vmul.f32 %v7391, %v7685
    %7692 = vrot.lane.b32.xlu0 %v7686, 111
    %v7693 = vpop.permute.xlu0 %7692
    %7694 = vrot.lane.b32.xlu0 %v7687, 111
    %v7695 = vpop.permute.xlu0 %7694
    %7696 = vrot.lane.b32.xlu0 %v7688, 111
    %v7697 = vpop.permute.xlu0 %7696
    %v7698 = vsel %vm466, %v7693, %v7695
    %v7699 = vsel %vm466, %v7695, %v7697
    %v7702 = vadd.f32 %v7622, %v7698
    %v7703 = vadd.f32 %v7623, %v7699
    %s7704 = sld [smem:[#allocation7 + $0x116]]
    %v7705 = vstv %s7704
    %v7706 = vmul.f32 %v7390, %v7705
    %v7707 = vmul.f32 %v7386, %v7705
    %v7708 = vmul.f32 %v7391, %v7705
    %7712 = vrot.lane.b32.xlu0 %v7706, 111
    %v7713 = vpop.permute.xlu0 %7712
    %7714 = vrot.lane.b32.xlu0 %v7707, 111
    %v7715 = vpop.permute.xlu0 %7714
    %7716 = vrot.lane.b32.xlu0 %v7708, 111
    %v7717 = vpop.permute.xlu0 %7716
    %v7718 = vsel %vm466, %v7713, %v7715
    %v7719 = vsel %vm466, %v7715, %v7717
    %v7722 = vadd.f32 %v7642, %v7718
    %v7723 = vadd.f32 %v7643, %v7719
    %s7724 = sld [smem:[#allocation7 + $0x196]]
    %v7725 = vstv %s7724
    %v7726 = vmul.f32 %v7390, %v7725
    %v7727 = vmul.f32 %v7386, %v7725
    %v7728 = vmul.f32 %v7391, %v7725
    %7732 = vrot.lane.b32.xlu0 %v7726, 111
    %v7733 = vpop.permute.xlu0 %7732
    %7734 = vrot.lane.b32.xlu0 %v7727, 111
    %v7735 = vpop.permute.xlu0 %7734
    %7736 = vrot.lane.b32.xlu0 %v7728, 111
    %v7737 = vpop.permute.xlu0 %7736
    %v7738 = vsel %vm466, %v7733, %v7735
    %v7739 = vsel %vm466, %v7735, %v7737
    %v7742 = vadd.f32 %v7662, %v7738
    %v7743 = vadd.f32 %v7663, %v7739
    %v7744 = vmul.f32 %v7390, %v534
    %v7745 = vmul.f32 %v7386, %v538
    %v7746 = vmul.f32 %v7391, %v536
    %s7747 = sld [smem:[#allocation7 + $0x17]]
    %v7748 = vstv %s7747
    %v7749 = vmul.f32 %v7744, %v7748
    %v7750 = vmul.f32 %v7745, %v7748
    %v7751 = vmul.f32 %v7746, %v7748
    %7755 = vrot.lane.b32.xlu0 %v7749, 110
    %v7756 = vpop.permute.xlu0 %7755
    %7757 = vrot.lane.b32.xlu0 %v7750, 110
    %v7758 = vpop.permute.xlu0 %7757
    %7759 = vrot.lane.b32.xlu0 %v7751, 110
    %v7760 = vpop.permute.xlu0 %7759
    %v7761 = vsel %vm559, %v7756, %v7758
    %v7762 = vsel %vm559, %v7758, %v7760
    %v7765 = vadd.f32 %v7682, %v7761
    %v7766 = vadd.f32 %v7683, %v7762
    %s7767 = sld [smem:[#allocation7 + $0x97]]
    %v7768 = vstv %s7767
    %v7769 = vmul.f32 %v7744, %v7768
    %v7770 = vmul.f32 %v7745, %v7768
    %v7771 = vmul.f32 %v7746, %v7768
    %7775 = vrot.lane.b32.xlu0 %v7769, 110
    %v7776 = vpop.permute.xlu0 %7775
    %7777 = vrot.lane.b32.xlu0 %v7770, 110
    %v7778 = vpop.permute.xlu0 %7777
    %7779 = vrot.lane.b32.xlu0 %v7771, 110
    %v7780 = vpop.permute.xlu0 %7779
    %v7781 = vsel %vm559, %v7776, %v7778
    %v7782 = vsel %vm559, %v7778, %v7780
    %v7785 = vadd.f32 %v7702, %v7781
    %v7786 = vadd.f32 %v7703, %v7782
    %s7787 = sld [smem:[#allocation7 + $0x117]]
    %v7788 = vstv %s7787
    %v7789 = vmul.f32 %v7744, %v7788
    %v7790 = vmul.f32 %v7745, %v7788
    %v7791 = vmul.f32 %v7746, %v7788
    %7795 = vrot.lane.b32.xlu0 %v7789, 110
    %v7796 = vpop.permute.xlu0 %7795
    %7797 = vrot.lane.b32.xlu0 %v7790, 110
    %v7798 = vpop.permute.xlu0 %7797
    %7799 = vrot.lane.b32.xlu0 %v7791, 110
    %v7800 = vpop.permute.xlu0 %7799
    %v7801 = vsel %vm559, %v7796, %v7798
    %v7802 = vsel %vm559, %v7798, %v7800
    %v7805 = vadd.f32 %v7722, %v7801
    %v7806 = vadd.f32 %v7723, %v7802
    %s7807 = sld [smem:[#allocation7 + $0x197]]
    %v7808 = vstv %s7807
    %v7809 = vmul.f32 %v7744, %v7808
    %v7810 = vmul.f32 %v7745, %v7808
    %v7811 = vmul.f32 %v7746, %v7808
    %7815 = vrot.lane.b32.xlu0 %v7809, 110
    %v7816 = vpop.permute.xlu0 %7815
    %7817 = vrot.lane.b32.xlu0 %v7810, 110
    %v7818 = vpop.permute.xlu0 %7817
    %7819 = vrot.lane.b32.xlu0 %v7811, 110
    %v7820 = vpop.permute.xlu0 %7819
    %v7821 = vsel %vm559, %v7816, %v7818
    %v7822 = vsel %vm559, %v7818, %v7820
    %v7825 = vadd.f32 %v7742, %v7821
    %v7826 = vadd.f32 %v7743, %v7822
    %v7827 = vmul.f32 %v7390, %v627
    %v7828 = vmul.f32 %v7386, %v631
    %v7829 = vmul.f32 %v7391, %v629
    %s7830 = sld [smem:[#allocation7 + $0x18]]
    %v7831 = vstv %s7830
    %v7832 = vmul.f32 %v7827, %v7831
    %v7833 = vmul.f32 %v7828, %v7831
    %v7834 = vmul.f32 %v7829, %v7831
    %7838 = vrot.lane.b32.xlu0 %v7832, 96
    %v7839 = vpop.permute.xlu0 %7838
    %7840 = vrot.lane.b32.xlu0 %v7833, 96
    %v7841 = vpop.permute.xlu0 %7840
    %7842 = vrot.lane.b32.xlu0 %v7834, 96
    %v7843 = vpop.permute.xlu0 %7842
    %v7844 = vsel %vm652, %v7839, %v7841
    %v7845 = vsel %vm652, %v7841, %v7843
    %v7848 = vadd.f32 %v7765, %v7844
    %v7849 = vadd.f32 %v7766, %v7845
    %s7850 = sld [smem:[#allocation7 + $0x98]]
    %v7851 = vstv %s7850
    %v7852 = vmul.f32 %v7827, %v7851
    %v7853 = vmul.f32 %v7828, %v7851
    %v7854 = vmul.f32 %v7829, %v7851
    %7858 = vrot.lane.b32.xlu0 %v7852, 96
    %v7859 = vpop.permute.xlu0 %7858
    %7860 = vrot.lane.b32.xlu0 %v7853, 96
    %v7861 = vpop.permute.xlu0 %7860
    %7862 = vrot.lane.b32.xlu0 %v7854, 96
    %v7863 = vpop.permute.xlu0 %7862
    %v7864 = vsel %vm652, %v7859, %v7861
    %v7865 = vsel %vm652, %v7861, %v7863
    %v7868 = vadd.f32 %v7785, %v7864
    %v7869 = vadd.f32 %v7786, %v7865
    %s7870 = sld [smem:[#allocation7 + $0x118]]
    %v7871 = vstv %s7870
    %v7872 = vmul.f32 %v7827, %v7871
    %v7873 = vmul.f32 %v7828, %v7871
    %v7874 = vmul.f32 %v7829, %v7871
    %7878 = vrot.lane.b32.xlu0 %v7872, 96
    %v7879 = vpop.permute.xlu0 %7878
    %7880 = vrot.lane.b32.xlu0 %v7873, 96
    %v7881 = vpop.permute.xlu0 %7880
    %7882 = vrot.lane.b32.xlu0 %v7874, 96
    %v7883 = vpop.permute.xlu0 %7882
    %v7884 = vsel %vm652, %v7879, %v7881
    %v7885 = vsel %vm652, %v7881, %v7883
    %v7888 = vadd.f32 %v7805, %v7884
    %v7889 = vadd.f32 %v7806, %v7885
    %s7890 = sld [smem:[#allocation7 + $0x198]]
    %v7891 = vstv %s7890
    %v7892 = vmul.f32 %v7827, %v7891
    %v7893 = vmul.f32 %v7828, %v7891
    %v7894 = vmul.f32 %v7829, %v7891
    %7898 = vrot.lane.b32.xlu0 %v7892, 96
    %v7899 = vpop.permute.xlu0 %7898
    %7900 = vrot.lane.b32.xlu0 %v7893, 96
    %v7901 = vpop.permute.xlu0 %7900
    %7902 = vrot.lane.b32.xlu0 %v7894, 96
    %v7903 = vpop.permute.xlu0 %7902
    %v7904 = vsel %vm652, %v7899, %v7901
    %v7905 = vsel %vm652, %v7901, %v7903
    %v7908 = vadd.f32 %v7825, %v7904
    %v7909 = vadd.f32 %v7826, %v7905
    %s7910 = sld [smem:[#allocation7 + $0x19]]
    %v7911 = vstv %s7910
    %v7912 = vmul.f32 %v7390, %v7911
    %v7913 = vmul.f32 %v7386, %v7911
    %v7914 = vmul.f32 %v7391, %v7911
    %7918 = vrot.lane.b32.xlu0 %v7912, 95
    %v7919 = vpop.permute.xlu0 %7918
    %7920 = vrot.lane.b32.xlu0 %v7913, 95
    %v7921 = vpop.permute.xlu0 %7920
    %7922 = vrot.lane.b32.xlu0 %v7914, 95
    %v7923 = vpop.permute.xlu0 %7922
    %v7924 = vsel %vm733, %v7919, %v7921
    %v7925 = vsel %vm733, %v7921, %v7923
    %v7928 = vadd.f32 %v7848, %v7924
    %v7929 = vadd.f32 %v7849, %v7925
    %s7930 = sld [smem:[#allocation7 + $0x99]]
    %v7931 = vstv %s7930
    %v7932 = vmul.f32 %v7390, %v7931
    %v7933 = vmul.f32 %v7386, %v7931
    %v7934 = vmul.f32 %v7391, %v7931
    %7938 = vrot.lane.b32.xlu0 %v7932, 95
    %v7939 = vpop.permute.xlu0 %7938
    %7940 = vrot.lane.b32.xlu0 %v7933, 95
    %v7941 = vpop.permute.xlu0 %7940
    %7942 = vrot.lane.b32.xlu0 %v7934, 95
    %v7943 = vpop.permute.xlu0 %7942
    %v7944 = vsel %vm733, %v7939, %v7941
    %v7945 = vsel %vm733, %v7941, %v7943
    %v7948 = vadd.f32 %v7868, %v7944
    %v7949 = vadd.f32 %v7869, %v7945
    %s7950 = sld [smem:[#allocation7 + $0x119]]
    %v7951 = vstv %s7950
    %v7952 = vmul.f32 %v7390, %v7951
    %v7953 = vmul.f32 %v7386, %v7951
    %v7954 = vmul.f32 %v7391, %v7951
    %7958 = vrot.lane.b32.xlu0 %v7952, 95
    %v7959 = vpop.permute.xlu0 %7958
    %7960 = vrot.lane.b32.xlu0 %v7953, 95
    %v7961 = vpop.permute.xlu0 %7960
    %7962 = vrot.lane.b32.xlu0 %v7954, 95
    %v7963 = vpop.permute.xlu0 %7962
    %v7964 = vsel %vm733, %v7959, %v7961
    %v7965 = vsel %vm733, %v7961, %v7963
    %v7968 = vadd.f32 %v7888, %v7964
    %v7969 = vadd.f32 %v7889, %v7965
    %s7970 = sld [smem:[#allocation7 + $0x199]]
    %v7971 = vstv %s7970
    %v7972 = vmul.f32 %v7390, %v7971
    %v7973 = vmul.f32 %v7386, %v7971
    %v7974 = vmul.f32 %v7391, %v7971
    %7978 = vrot.lane.b32.xlu0 %v7972, 95
    %v7979 = vpop.permute.xlu0 %7978
    %7980 = vrot.lane.b32.xlu0 %v7973, 95
    %v7981 = vpop.permute.xlu0 %7980
    %7982 = vrot.lane.b32.xlu0 %v7974, 95
    %v7983 = vpop.permute.xlu0 %7982
    %v7984 = vsel %vm733, %v7979, %v7981
    %v7985 = vsel %vm733, %v7981, %v7983
    %v7988 = vadd.f32 %v7908, %v7984
    %v7989 = vadd.f32 %v7909, %v7985
    %v7990 = vmul.f32 %v7390, %v801
    %v7991 = vmul.f32 %v7386, %v805
    %v7992 = vmul.f32 %v7391, %v803
    %s7993 = sld [smem:[#allocation7 + $0x1a]]
    %v7994 = vstv %s7993
    %v7995 = vmul.f32 %v7990, %v7994
    %v7996 = vmul.f32 %v7991, %v7994
    %v7997 = vmul.f32 %v7992, %v7994
    %8001 = vrot.lane.b32.xlu0 %v7995, 94
    %v8002 = vpop.permute.xlu0 %8001
    %8003 = vrot.lane.b32.xlu0 %v7996, 94
    %v8004 = vpop.permute.xlu0 %8003
    %8005 = vrot.lane.b32.xlu0 %v7997, 94
    %v8006 = vpop.permute.xlu0 %8005
    %v8007 = vsel %vm826, %v8002, %v8004
    %v8008 = vsel %vm826, %v8004, %v8006
    %v8011 = vadd.f32 %v7928, %v8007
    %v8012 = vadd.f32 %v7929, %v8008
    %s8013 = sld [smem:[#allocation7 + $0x9a]]
    %v8014 = vstv %s8013
    %v8015 = vmul.f32 %v7990, %v8014
    %v8016 = vmul.f32 %v7991, %v8014
    %v8017 = vmul.f32 %v7992, %v8014
    %8021 = vrot.lane.b32.xlu0 %v8015, 94
    %v8022 = vpop.permute.xlu0 %8021
    %8023 = vrot.lane.b32.xlu0 %v8016, 94
    %v8024 = vpop.permute.xlu0 %8023
    %8025 = vrot.lane.b32.xlu0 %v8017, 94
    %v8026 = vpop.permute.xlu0 %8025
    %v8027 = vsel %vm826, %v8022, %v8024
    %v8028 = vsel %vm826, %v8024, %v8026
    %v8031 = vadd.f32 %v7948, %v8027
    %v8032 = vadd.f32 %v7949, %v8028
    %s8033 = sld [smem:[#allocation7 + $0x11a]]
    %v8034 = vstv %s8033
    %v8035 = vmul.f32 %v7990, %v8034
    %v8036 = vmul.f32 %v7991, %v8034
    %v8037 = vmul.f32 %v7992, %v8034
    %8041 = vrot.lane.b32.xlu0 %v8035, 94
    %v8042 = vpop.permute.xlu0 %8041
    %8043 = vrot.lane.b32.xlu0 %v8036, 94
    %v8044 = vpop.permute.xlu0 %8043
    %8045 = vrot.lane.b32.xlu0 %v8037, 94
    %v8046 = vpop.permute.xlu0 %8045
    %v8047 = vsel %vm826, %v8042, %v8044
    %v8048 = vsel %vm826, %v8044, %v8046
    %v8051 = vadd.f32 %v7968, %v8047
    %v8052 = vadd.f32 %v7969, %v8048
    %s8053 = sld [smem:[#allocation7 + $0x19a]]
    %v8054 = vstv %s8053
    %v8055 = vmul.f32 %v7990, %v8054
    %v8056 = vmul.f32 %v7991, %v8054
    %v8057 = vmul.f32 %v7992, %v8054
    %8061 = vrot.lane.b32.xlu0 %v8055, 94
    %v8062 = vpop.permute.xlu0 %8061
    %8063 = vrot.lane.b32.xlu0 %v8056, 94
    %v8064 = vpop.permute.xlu0 %8063
    %8065 = vrot.lane.b32.xlu0 %v8057, 94
    %v8066 = vpop.permute.xlu0 %8065
    %v8067 = vsel %vm826, %v8062, %v8064
    %v8068 = vsel %vm826, %v8064, %v8066
    %v8071 = vadd.f32 %v7988, %v8067
    %v8072 = vadd.f32 %v7989, %v8068
    %8075 = vrot.lane.b32.xlu0 %v6000, 17
    %v8076 = vpop.permute.xlu0 %8075
    %8077 = vrot.lane.b32.xlu0 %v6001, 17
    %v8078 = vpop.permute.xlu0 %8077
    %v8079 = vsel %vm156, %v8076, %v8078
    %v8083 = vsel %vm156, 0.0, %v8076
    %v8084 = vsel %vm156, %v8078, 0.0
    %v8085 = vmul.f32 %v8083, %v131
    %v8086 = vmul.f32 %v8079, %v132
    %s8087 = sld [smem:[#allocation7 + $0x1b]]
    %v8088 = vstv %s8087
    %v8089 = vmul.f32 %v8085, %v8088
    %v8090 = vmul.f32 %v8086, %v8088
    %v8091 = vadd.f32 %v8011, %v8089
    %v8092 = vadd.f32 %v8012, %v8090
    %s8093 = sld [smem:[#allocation7 + $0x9b]]
    %v8094 = vstv %s8093
    %v8095 = vmul.f32 %v8085, %v8094
    %v8096 = vmul.f32 %v8086, %v8094
    %v8097 = vadd.f32 %v8031, %v8095
    %v8098 = vadd.f32 %v8032, %v8096
    %s8099 = sld [smem:[#allocation7 + $0x11b]]
    %v8100 = vstv %s8099
    %v8101 = vmul.f32 %v8085, %v8100
    %v8102 = vmul.f32 %v8086, %v8100
    %v8103 = vadd.f32 %v8051, %v8101
    %v8104 = vadd.f32 %v8052, %v8102
    %s8105 = sld [smem:[#allocation7 + $0x19b]]
    %v8106 = vstv %s8105
    %v8107 = vmul.f32 %v8085, %v8106
    %v8108 = vmul.f32 %v8086, %v8106
    %v8109 = vadd.f32 %v8071, %v8107
    %v8110 = vadd.f32 %v8072, %v8108
    %s8111 = sld [smem:[#allocation7 + $0x1c]]
    %v8112 = vstv %s8111
    %v8113 = vmul.f32 %v8083, %v8112
    %v8114 = vmul.f32 %v8079, %v8112
    %v8115 = vmul.f32 %v8084, %v8112
    %8119 = vrot.lane.b32.xlu0 %v8113, 127
    %v8120 = vpop.permute.xlu0 %8119
    %8121 = vrot.lane.b32.xlu0 %v8114, 127
    %v8122 = vpop.permute.xlu0 %8121
    %8123 = vrot.lane.b32.xlu0 %v8115, 127
    %v8124 = vpop.permute.xlu0 %8123
    %v8125 = vsel %vm195, %v8120, %v8122
    %v8126 = vsel %vm195, %v8122, %v8124
    %v8129 = vadd.f32 %v8091, %v8125
    %v8130 = vadd.f32 %v8092, %v8126
    %s8131 = sld [smem:[#allocation7 + $0x9c]]
    %v8132 = vstv %s8131
    %v8133 = vmul.f32 %v8083, %v8132
    %v8134 = vmul.f32 %v8079, %v8132
    %v8135 = vmul.f32 %v8084, %v8132
    %8139 = vrot.lane.b32.xlu0 %v8133, 127
    %v8140 = vpop.permute.xlu0 %8139
    %8141 = vrot.lane.b32.xlu0 %v8134, 127
    %v8142 = vpop.permute.xlu0 %8141
    %8143 = vrot.lane.b32.xlu0 %v8135, 127
    %v8144 = vpop.permute.xlu0 %8143
    %v8145 = vsel %vm195, %v8140, %v8142
    %v8146 = vsel %vm195, %v8142, %v8144
    %v8149 = vadd.f32 %v8097, %v8145
    %v8150 = vadd.f32 %v8098, %v8146
    %s8151 = sld [smem:[#allocation7 + $0x11c]]
    %v8152 = vstv %s8151
    %v8153 = vmul.f32 %v8083, %v8152
    %v8154 = vmul.f32 %v8079, %v8152
    %v8155 = vmul.f32 %v8084, %v8152
    %8159 = vrot.lane.b32.xlu0 %v8153, 127
    %v8160 = vpop.permute.xlu0 %8159
    %8161 = vrot.lane.b32.xlu0 %v8154, 127
    %v8162 = vpop.permute.xlu0 %8161
    %8163 = vrot.lane.b32.xlu0 %v8155, 127
    %v8164 = vpop.permute.xlu0 %8163
    %v8165 = vsel %vm195, %v8160, %v8162
    %v8166 = vsel %vm195, %v8162, %v8164
    %v8169 = vadd.f32 %v8103, %v8165
    %v8170 = vadd.f32 %v8104, %v8166
    %s8171 = sld [smem:[#allocation7 + $0x19c]]
    %v8172 = vstv %s8171
    %v8173 = vmul.f32 %v8083, %v8172
    %v8174 = vmul.f32 %v8079, %v8172
    %v8175 = vmul.f32 %v8084, %v8172
    %8179 = vrot.lane.b32.xlu0 %v8173, 127
    %v8180 = vpop.permute.xlu0 %8179
    %8181 = vrot.lane.b32.xlu0 %v8174, 127
    %v8182 = vpop.permute.xlu0 %8181
    %8183 = vrot.lane.b32.xlu0 %v8175, 127
    %v8184 = vpop.permute.xlu0 %8183
    %v8185 = vsel %vm195, %v8180, %v8182
    %v8186 = vsel %vm195, %v8182, %v8184
    %v8189 = vadd.f32 %v8109, %v8185
    %v8190 = vadd.f32 %v8110, %v8186
    %v8191 = vmul.f32 %v8083, %v265
    %v8192 = vmul.f32 %v8079, %v269
    %v8193 = vmul.f32 %v8084, %v267
    %s8194 = sld [smem:[#allocation7 + $0x1d]]
    %v8195 = vstv %s8194
    %v8196 = vmul.f32 %v8191, %v8195
    %v8197 = vmul.f32 %v8192, %v8195
    %v8198 = vmul.f32 %v8193, %v8195
    %8202 = vrot.lane.b32.xlu0 %v8196, 126
    %v8203 = vpop.permute.xlu0 %8202
    %8204 = vrot.lane.b32.xlu0 %v8197, 126
    %v8205 = vpop.permute.xlu0 %8204
    %8206 = vrot.lane.b32.xlu0 %v8198, 126
    %v8207 = vpop.permute.xlu0 %8206
    %v8208 = vsel %vm290, %v8203, %v8205
    %v8209 = vsel %vm290, %v8205, %v8207
    %v8212 = vadd.f32 %v8129, %v8208
    %v8213 = vadd.f32 %v8130, %v8209
    %s8214 = sld [smem:[#allocation7 + $0x9d]]
    %v8215 = vstv %s8214
    %v8216 = vmul.f32 %v8191, %v8215
    %v8217 = vmul.f32 %v8192, %v8215
    %v8218 = vmul.f32 %v8193, %v8215
    %8222 = vrot.lane.b32.xlu0 %v8216, 126
    %v8223 = vpop.permute.xlu0 %8222
    %8224 = vrot.lane.b32.xlu0 %v8217, 126
    %v8225 = vpop.permute.xlu0 %8224
    %8226 = vrot.lane.b32.xlu0 %v8218, 126
    %v8227 = vpop.permute.xlu0 %8226
    %v8228 = vsel %vm290, %v8223, %v8225
    %v8229 = vsel %vm290, %v8225, %v8227
    %v8232 = vadd.f32 %v8149, %v8228
    %v8233 = vadd.f32 %v8150, %v8229
    %s8234 = sld [smem:[#allocation7 + $0x11d]]
    %v8235 = vstv %s8234
    %v8236 = vmul.f32 %v8191, %v8235
    %v8237 = vmul.f32 %v8192, %v8235
    %v8238 = vmul.f32 %v8193, %v8235
    %8242 = vrot.lane.b32.xlu0 %v8236, 126
    %v8243 = vpop.permute.xlu0 %8242
    %8244 = vrot.lane.b32.xlu0 %v8237, 126
    %v8245 = vpop.permute.xlu0 %8244
    %8246 = vrot.lane.b32.xlu0 %v8238, 126
    %v8247 = vpop.permute.xlu0 %8246
    %v8248 = vsel %vm290, %v8243, %v8245
    %v8249 = vsel %vm290, %v8245, %v8247
    %v8252 = vadd.f32 %v8169, %v8248
    %v8253 = vadd.f32 %v8170, %v8249
    %s8254 = sld [smem:[#allocation7 + $0x19d]]
    %v8255 = vstv %s8254
    %v8256 = vmul.f32 %v8191, %v8255
    %v8257 = vmul.f32 %v8192, %v8255
    %v8258 = vmul.f32 %v8193, %v8255
    %8262 = vrot.lane.b32.xlu0 %v8256, 126
    %v8263 = vpop.permute.xlu0 %8262
    %8264 = vrot.lane.b32.xlu0 %v8257, 126
    %v8265 = vpop.permute.xlu0 %8264
    %8266 = vrot.lane.b32.xlu0 %v8258, 126
    %v8267 = vpop.permute.xlu0 %8266
    %v8268 = vsel %vm290, %v8263, %v8265
    %v8269 = vsel %vm290, %v8265, %v8267
    %v8272 = vadd.f32 %v8189, %v8268
    %v8273 = vadd.f32 %v8190, %v8269
    %v8274 = vmul.f32 %v8083, %v360
    %v8275 = vmul.f32 %v8079, %v364
    %v8276 = vmul.f32 %v8084, %v362
    %s8277 = sld [smem:[#allocation7 + $0x1e]]
    %v8278 = vstv %s8277
    %v8279 = vmul.f32 %v8274, %v8278
    %v8280 = vmul.f32 %v8275, %v8278
    %v8281 = vmul.f32 %v8276, %v8278
    %8285 = vrot.lane.b32.xlu0 %v8279, 112
    %v8286 = vpop.permute.xlu0 %8285
    %8287 = vrot.lane.b32.xlu0 %v8280, 112
    %v8288 = vpop.permute.xlu0 %8287
    %8289 = vrot.lane.b32.xlu0 %v8281, 112
    %v8290 = vpop.permute.xlu0 %8289
    %v8291 = vsel %vm385, %v8286, %v8288
    %v8292 = vsel %vm385, %v8288, %v8290
    %v8295 = vadd.f32 %v8212, %v8291
    %v8296 = vadd.f32 %v8213, %v8292
    %s8297 = sld [smem:[#allocation7 + $0x9e]]
    %v8298 = vstv %s8297
    %v8299 = vmul.f32 %v8274, %v8298
    %v8300 = vmul.f32 %v8275, %v8298
    %v8301 = vmul.f32 %v8276, %v8298
    %8305 = vrot.lane.b32.xlu0 %v8299, 112
    %v8306 = vpop.permute.xlu0 %8305
    %8307 = vrot.lane.b32.xlu0 %v8300, 112
    %v8308 = vpop.permute.xlu0 %8307
    %8309 = vrot.lane.b32.xlu0 %v8301, 112
    %v8310 = vpop.permute.xlu0 %8309
    %v8311 = vsel %vm385, %v8306, %v8308
    %v8312 = vsel %vm385, %v8308, %v8310
    %v8315 = vadd.f32 %v8232, %v8311
    %v8316 = vadd.f32 %v8233, %v8312
    %s8317 = sld [smem:[#allocation7 + $0x11e]]
    %v8318 = vstv %s8317
    %v8319 = vmul.f32 %v8274, %v8318
    %v8320 = vmul.f32 %v8275, %v8318
    %v8321 = vmul.f32 %v8276, %v8318
    %8325 = vrot.lane.b32.xlu0 %v8319, 112
    %v8326 = vpop.permute.xlu0 %8325
    %8327 = vrot.lane.b32.xlu0 %v8320, 112
    %v8328 = vpop.permute.xlu0 %8327
    %8329 = vrot.lane.b32.xlu0 %v8321, 112
    %v8330 = vpop.permute.xlu0 %8329
    %v8331 = vsel %vm385, %v8326, %v8328
    %v8332 = vsel %vm385, %v8328, %v8330
    %v8335 = vadd.f32 %v8252, %v8331
    %v8336 = vadd.f32 %v8253, %v8332
    %s8337 = sld [smem:[#allocation7 + $0x19e]]
    %v8338 = vstv %s8337
    %v8339 = vmul.f32 %v8274, %v8338
    %v8340 = vmul.f32 %v8275, %v8338
    %v8341 = vmul.f32 %v8276, %v8338
    %8345 = vrot.lane.b32.xlu0 %v8339, 112
    %v8346 = vpop.permute.xlu0 %8345
    %8347 = vrot.lane.b32.xlu0 %v8340, 112
    %v8348 = vpop.permute.xlu0 %8347
    %8349 = vrot.lane.b32.xlu0 %v8341, 112
    %v8350 = vpop.permute.xlu0 %8349
    %v8351 = vsel %vm385, %v8346, %v8348
    %v8352 = vsel %vm385, %v8348, %v8350
    %v8355 = vadd.f32 %v8272, %v8351
    %v8356 = vadd.f32 %v8273, %v8352
    %s8357 = sld [smem:[#allocation7 + $0x1f]]
    %v8358 = vstv %s8357
    %v8359 = vmul.f32 %v8083, %v8358
    %v8360 = vmul.f32 %v8079, %v8358
    %v8361 = vmul.f32 %v8084, %v8358
    %8365 = vrot.lane.b32.xlu0 %v8359, 111
    %v8366 = vpop.permute.xlu0 %8365
    %8367 = vrot.lane.b32.xlu0 %v8360, 111
    %v8368 = vpop.permute.xlu0 %8367
    %8369 = vrot.lane.b32.xlu0 %v8361, 111
    %v8370 = vpop.permute.xlu0 %8369
    %v8371 = vsel %vm466, %v8366, %v8368
    %v8372 = vsel %vm466, %v8368, %v8370
    %v8375 = vadd.f32 %v8295, %v8371
    %v8376 = vadd.f32 %v8296, %v8372
    %s8377 = sld [smem:[#allocation7 + $0x9f]]
    %v8378 = vstv %s8377
    %v8379 = vmul.f32 %v8083, %v8378
    %v8380 = vmul.f32 %v8079, %v8378
    %v8381 = vmul.f32 %v8084, %v8378
    %8385 = vrot.lane.b32.xlu0 %v8379, 111
    %v8386 = vpop.permute.xlu0 %8385
    %8387 = vrot.lane.b32.xlu0 %v8380, 111
    %v8388 = vpop.permute.xlu0 %8387
    %8389 = vrot.lane.b32.xlu0 %v8381, 111
    %v8390 = vpop.permute.xlu0 %8389
    %v8391 = vsel %vm466, %v8386, %v8388
    %v8392 = vsel %vm466, %v8388, %v8390
    %v8395 = vadd.f32 %v8315, %v8391
    %v8396 = vadd.f32 %v8316, %v8392
    %s8397 = sld [smem:[#allocation7 + $0x11f]]
    %v8398 = vstv %s8397
    %v8399 = vmul.f32 %v8083, %v8398
    %v8400 = vmul.f32 %v8079, %v8398
    %v8401 = vmul.f32 %v8084, %v8398
    %8405 = vrot.lane.b32.xlu0 %v8399, 111
    %v8406 = vpop.permute.xlu0 %8405
    %8407 = vrot.lane.b32.xlu0 %v8400, 111
    %v8408 = vpop.permute.xlu0 %8407
    %8409 = vrot.lane.b32.xlu0 %v8401, 111
    %v8410 = vpop.permute.xlu0 %8409
    %v8411 = vsel %vm466, %v8406, %v8408
    %v8412 = vsel %vm466, %v8408, %v8410
    %v8415 = vadd.f32 %v8335, %v8411
    %v8416 = vadd.f32 %v8336, %v8412
    %s8417 = sld [smem:[#allocation7 + $0x19f]]
    %v8418 = vstv %s8417
    %v8419 = vmul.f32 %v8083, %v8418
    %v8420 = vmul.f32 %v8079, %v8418
    %v8421 = vmul.f32 %v8084, %v8418
    %8425 = vrot.lane.b32.xlu0 %v8419, 111
    %v8426 = vpop.permute.xlu0 %8425
    %8427 = vrot.lane.b32.xlu0 %v8420, 111
    %v8428 = vpop.permute.xlu0 %8427
    %8429 = vrot.lane.b32.xlu0 %v8421, 111
    %v8430 = vpop.permute.xlu0 %8429
    %v8431 = vsel %vm466, %v8426, %v8428
    %v8432 = vsel %vm466, %v8428, %v8430
    %v8435 = vadd.f32 %v8355, %v8431
    %v8436 = vadd.f32 %v8356, %v8432
    %v8437 = vmul.f32 %v8083, %v534
    %v8438 = vmul.f32 %v8079, %v538
    %v8439 = vmul.f32 %v8084, %v536
    %s8440 = sld [smem:[#allocation7 + $0x20]]
    %v8441 = vstv %s8440
    %v8442 = vmul.f32 %v8437, %v8441
    %v8443 = vmul.f32 %v8438, %v8441
    %v8444 = vmul.f32 %v8439, %v8441
    %8448 = vrot.lane.b32.xlu0 %v8442, 110
    %v8449 = vpop.permute.xlu0 %8448
    %8450 = vrot.lane.b32.xlu0 %v8443, 110
    %v8451 = vpop.permute.xlu0 %8450
    %8452 = vrot.lane.b32.xlu0 %v8444, 110
    %v8453 = vpop.permute.xlu0 %8452
    %v8454 = vsel %vm559, %v8449, %v8451
    %v8455 = vsel %vm559, %v8451, %v8453
    %v8458 = vadd.f32 %v8375, %v8454
    %v8459 = vadd.f32 %v8376, %v8455
    %s8460 = sld [smem:[#allocation7 + $0xa0]]
    %v8461 = vstv %s8460
    %v8462 = vmul.f32 %v8437, %v8461
    %v8463 = vmul.f32 %v8438, %v8461
    %v8464 = vmul.f32 %v8439, %v8461
    %8468 = vrot.lane.b32.xlu0 %v8462, 110
    %v8469 = vpop.permute.xlu0 %8468
    %8470 = vrot.lane.b32.xlu0 %v8463, 110
    %v8471 = vpop.permute.xlu0 %8470
    %8472 = vrot.lane.b32.xlu0 %v8464, 110
    %v8473 = vpop.permute.xlu0 %8472
    %v8474 = vsel %vm559, %v8469, %v8471
    %v8475 = vsel %vm559, %v8471, %v8473
    %v8478 = vadd.f32 %v8395, %v8474
    %v8479 = vadd.f32 %v8396, %v8475
    %s8480 = sld [smem:[#allocation7 + $0x120]]
    %v8481 = vstv %s8480
    %v8482 = vmul.f32 %v8437, %v8481
    %v8483 = vmul.f32 %v8438, %v8481
    %v8484 = vmul.f32 %v8439, %v8481
    %8488 = vrot.lane.b32.xlu0 %v8482, 110
    %v8489 = vpop.permute.xlu0 %8488
    %8490 = vrot.lane.b32.xlu0 %v8483, 110
    %v8491 = vpop.permute.xlu0 %8490
    %8492 = vrot.lane.b32.xlu0 %v8484, 110
    %v8493 = vpop.permute.xlu0 %8492
    %v8494 = vsel %vm559, %v8489, %v8491
    %v8495 = vsel %vm559, %v8491, %v8493
    %v8498 = vadd.f32 %v8415, %v8494
    %v8499 = vadd.f32 %v8416, %v8495
    %s8500 = sld [smem:[#allocation7 + $0x1a0]]
    %v8501 = vstv %s8500
    %v8502 = vmul.f32 %v8437, %v8501
    %v8503 = vmul.f32 %v8438, %v8501
    %v8504 = vmul.f32 %v8439, %v8501
    %8508 = vrot.lane.b32.xlu0 %v8502, 110
    %v8509 = vpop.permute.xlu0 %8508
    %8510 = vrot.lane.b32.xlu0 %v8503, 110
    %v8511 = vpop.permute.xlu0 %8510
    %8512 = vrot.lane.b32.xlu0 %v8504, 110
    %v8513 = vpop.permute.xlu0 %8512
    %v8514 = vsel %vm559, %v8509, %v8511
    %v8515 = vsel %vm559, %v8511, %v8513
    %v8518 = vadd.f32 %v8435, %v8514
    %v8519 = vadd.f32 %v8436, %v8515
    %v8520 = vmul.f32 %v8083, %v627
    %v8521 = vmul.f32 %v8079, %v631
    %v8522 = vmul.f32 %v8084, %v629
    %s8523 = sld [smem:[#allocation7 + $0x21]]
    %v8524 = vstv %s8523
    %v8525 = vmul.f32 %v8520, %v8524
    %v8526 = vmul.f32 %v8521, %v8524
    %v8527 = vmul.f32 %v8522, %v8524
    %8531 = vrot.lane.b32.xlu0 %v8525, 96
    %v8532 = vpop.permute.xlu0 %8531
    %8533 = vrot.lane.b32.xlu0 %v8526, 96
    %v8534 = vpop.permute.xlu0 %8533
    %8535 = vrot.lane.b32.xlu0 %v8527, 96
    %v8536 = vpop.permute.xlu0 %8535
    %v8537 = vsel %vm652, %v8532, %v8534
    %v8538 = vsel %vm652, %v8534, %v8536
    %v8541 = vadd.f32 %v8458, %v8537
    %v8542 = vadd.f32 %v8459, %v8538
    %s8543 = sld [smem:[#allocation7 + $0xa1]]
    %v8544 = vstv %s8543
    %v8545 = vmul.f32 %v8520, %v8544
    %v8546 = vmul.f32 %v8521, %v8544
    %v8547 = vmul.f32 %v8522, %v8544
    %8551 = vrot.lane.b32.xlu0 %v8545, 96
    %v8552 = vpop.permute.xlu0 %8551
    %8553 = vrot.lane.b32.xlu0 %v8546, 96
    %v8554 = vpop.permute.xlu0 %8553
    %8555 = vrot.lane.b32.xlu0 %v8547, 96
    %v8556 = vpop.permute.xlu0 %8555
    %v8557 = vsel %vm652, %v8552, %v8554
    %v8558 = vsel %vm652, %v8554, %v8556
    %v8561 = vadd.f32 %v8478, %v8557
    %v8562 = vadd.f32 %v8479, %v8558
    %s8563 = sld [smem:[#allocation7 + $0x121]]
    %v8564 = vstv %s8563
    %v8565 = vmul.f32 %v8520, %v8564
    %v8566 = vmul.f32 %v8521, %v8564
    %v8567 = vmul.f32 %v8522, %v8564
    %8571 = vrot.lane.b32.xlu0 %v8565, 96
    %v8572 = vpop.permute.xlu0 %8571
    %8573 = vrot.lane.b32.xlu0 %v8566, 96
    %v8574 = vpop.permute.xlu0 %8573
    %8575 = vrot.lane.b32.xlu0 %v8567, 96
    %v8576 = vpop.permute.xlu0 %8575
    %v8577 = vsel %vm652, %v8572, %v8574
    %v8578 = vsel %vm652, %v8574, %v8576
    %v8581 = vadd.f32 %v8498, %v8577
    %v8582 = vadd.f32 %v8499, %v8578
    %s8583 = sld [smem:[#allocation7 + $0x1a1]]
    %v8584 = vstv %s8583
    %v8585 = vmul.f32 %v8520, %v8584
    %v8586 = vmul.f32 %v8521, %v8584
    %v8587 = vmul.f32 %v8522, %v8584
    %8591 = vrot.lane.b32.xlu0 %v8585, 96
    %v8592 = vpop.permute.xlu0 %8591
    %8593 = vrot.lane.b32.xlu0 %v8586, 96
    %v8594 = vpop.permute.xlu0 %8593
    %8595 = vrot.lane.b32.xlu0 %v8587, 96
    %v8596 = vpop.permute.xlu0 %8595
    %v8597 = vsel %vm652, %v8592, %v8594
    %v8598 = vsel %vm652, %v8594, %v8596
    %v8601 = vadd.f32 %v8518, %v8597
    %v8602 = vadd.f32 %v8519, %v8598
    %s8603 = sld [smem:[#allocation7 + $0x22]]
    %v8604 = vstv %s8603
    %v8605 = vmul.f32 %v8083, %v8604
    %v8606 = vmul.f32 %v8079, %v8604
    %v8607 = vmul.f32 %v8084, %v8604
    %8611 = vrot.lane.b32.xlu0 %v8605, 95
    %v8612 = vpop.permute.xlu0 %8611
    %8613 = vrot.lane.b32.xlu0 %v8606, 95
    %v8614 = vpop.permute.xlu0 %8613
    %8615 = vrot.lane.b32.xlu0 %v8607, 95
    %v8616 = vpop.permute.xlu0 %8615
    %v8617 = vsel %vm733, %v8612, %v8614
    %v8618 = vsel %vm733, %v8614, %v8616
    %v8621 = vadd.f32 %v8541, %v8617
    %v8622 = vadd.f32 %v8542, %v8618
    %s8623 = sld [smem:[#allocation7 + $0xa2]]
    %v8624 = vstv %s8623
    %v8625 = vmul.f32 %v8083, %v8624
    %v8626 = vmul.f32 %v8079, %v8624
    %v8627 = vmul.f32 %v8084, %v8624
    %8631 = vrot.lane.b32.xlu0 %v8625, 95
    %v8632 = vpop.permute.xlu0 %8631
    %8633 = vrot.lane.b32.xlu0 %v8626, 95
    %v8634 = vpop.permute.xlu0 %8633
    %8635 = vrot.lane.b32.xlu0 %v8627, 95
    %v8636 = vpop.permute.xlu0 %8635
    %v8637 = vsel %vm733, %v8632, %v8634
    %v8638 = vsel %vm733, %v8634, %v8636
    %v8641 = vadd.f32 %v8561, %v8637
    %v8642 = vadd.f32 %v8562, %v8638
    %s8643 = sld [smem:[#allocation7 + $0x122]]
    %v8644 = vstv %s8643
    %v8645 = vmul.f32 %v8083, %v8644
    %v8646 = vmul.f32 %v8079, %v8644
    %v8647 = vmul.f32 %v8084, %v8644
    %8651 = vrot.lane.b32.xlu0 %v8645, 95
    %v8652 = vpop.permute.xlu0 %8651
    %8653 = vrot.lane.b32.xlu0 %v8646, 95
    %v8654 = vpop.permute.xlu0 %8653
    %8655 = vrot.lane.b32.xlu0 %v8647, 95
    %v8656 = vpop.permute.xlu0 %8655
    %v8657 = vsel %vm733, %v8652, %v8654
    %v8658 = vsel %vm733, %v8654, %v8656
    %v8661 = vadd.f32 %v8581, %v8657
    %v8662 = vadd.f32 %v8582, %v8658
    %s8663 = sld [smem:[#allocation7 + $0x1a2]]
    %v8664 = vstv %s8663
    %v8665 = vmul.f32 %v8083, %v8664
    %v8666 = vmul.f32 %v8079, %v8664
    %v8667 = vmul.f32 %v8084, %v8664
    %8671 = vrot.lane.b32.xlu0 %v8665, 95
    %v8672 = vpop.permute.xlu0 %8671
    %8673 = vrot.lane.b32.xlu0 %v8666, 95
    %v8674 = vpop.permute.xlu0 %8673
    %8675 = vrot.lane.b32.xlu0 %v8667, 95
    %v8676 = vpop.permute.xlu0 %8675
    %v8677 = vsel %vm733, %v8672, %v8674
    %v8678 = vsel %vm733, %v8674, %v8676
    %v8681 = vadd.f32 %v8601, %v8677
    %v8682 = vadd.f32 %v8602, %v8678
    %v8683 = vmul.f32 %v8083, %v801
    %v8684 = vmul.f32 %v8079, %v805
    %v8685 = vmul.f32 %v8084, %v803
    %s8686 = sld [smem:[#allocation7 + $0x23]]
    %v8687 = vstv %s8686
    %v8688 = vmul.f32 %v8683, %v8687
    %v8689 = vmul.f32 %v8684, %v8687
    %v8690 = vmul.f32 %v8685, %v8687
    %8694 = vrot.lane.b32.xlu0 %v8688, 94
    %v8695 = vpop.permute.xlu0 %8694
    %8696 = vrot.lane.b32.xlu0 %v8689, 94
    %v8697 = vpop.permute.xlu0 %8696
    %8698 = vrot.lane.b32.xlu0 %v8690, 94
    %v8699 = vpop.permute.xlu0 %8698
    %v8700 = vsel %vm826, %v8695, %v8697
    %v8701 = vsel %vm826, %v8697, %v8699
    %v8704 = vadd.f32 %v8621, %v8700
    %v8705 = vadd.f32 %v8622, %v8701
    %s8706 = sld [smem:[#allocation7 + $0xa3]]
    %v8707 = vstv %s8706
    %v8708 = vmul.f32 %v8683, %v8707
    %v8709 = vmul.f32 %v8684, %v8707
    %v8710 = vmul.f32 %v8685, %v8707
    %8714 = vrot.lane.b32.xlu0 %v8708, 94
    %v8715 = vpop.permute.xlu0 %8714
    %8716 = vrot.lane.b32.xlu0 %v8709, 94
    %v8717 = vpop.permute.xlu0 %8716
    %8718 = vrot.lane.b32.xlu0 %v8710, 94
    %v8719 = vpop.permute.xlu0 %8718
    %v8720 = vsel %vm826, %v8715, %v8717
    %v8721 = vsel %vm826, %v8717, %v8719
    %v8724 = vadd.f32 %v8641, %v8720
    %v8725 = vadd.f32 %v8642, %v8721
    %s8726 = sld [smem:[#allocation7 + $0x123]]
    %v8727 = vstv %s8726
    %v8728 = vmul.f32 %v8683, %v8727
    %v8729 = vmul.f32 %v8684, %v8727
    %v8730 = vmul.f32 %v8685, %v8727
    %8734 = vrot.lane.b32.xlu0 %v8728, 94
    %v8735 = vpop.permute.xlu0 %8734
    %8736 = vrot.lane.b32.xlu0 %v8729, 94
    %v8737 = vpop.permute.xlu0 %8736
    %8738 = vrot.lane.b32.xlu0 %v8730, 94
    %v8739 = vpop.permute.xlu0 %8738
    %v8740 = vsel %vm826, %v8735, %v8737
    %v8741 = vsel %vm826, %v8737, %v8739
    %v8744 = vadd.f32 %v8661, %v8740
    %v8745 = vadd.f32 %v8662, %v8741
    %s8746 = sld [smem:[#allocation7 + $0x1a3]]
    %v8747 = vstv %s8746
    %v8748 = vmul.f32 %v8683, %v8747
    %v8749 = vmul.f32 %v8684, %v8747
    %v8750 = vmul.f32 %v8685, %v8747
    %8754 = vrot.lane.b32.xlu0 %v8748, 94
    %v8755 = vpop.permute.xlu0 %8754
    %8756 = vrot.lane.b32.xlu0 %v8749, 94
    %v8757 = vpop.permute.xlu0 %8756
    %8758 = vrot.lane.b32.xlu0 %v8750, 94
    %v8759 = vpop.permute.xlu0 %8758
    %v8760 = vsel %vm826, %v8755, %v8757
    %v8761 = vsel %vm826, %v8757, %v8759
    %v8764 = vadd.f32 %v8681, %v8760
    %v8765 = vadd.f32 %v8682, %v8761
    %v8766 = vsel %vm5774, %v8704, 0.0
    %v8767 = vsel %vm5774, %v8705, 0.0
    %v8768 = vadd.f32 %v8766, %v8767
    %8769 = vadd.xlane.f32.xlu0 %v8768
    %v8770 = vpop.xlane.xlu0 %8769
    %v8771 = vrot.slane %v8770, 4
    %v8772 = vadd.f32 %v8770, %v8771
    %v8773 = vrot.slane %v8772, 2
    %v8774 = vadd.f32 %v8772, %v8773
    %v8775 = vrot.slane %v8774, 1
    %v8776 = vadd.f32 %v8774, %v8775
    %s8777 = vtos %v8776
    %v8778 = vstv %s8777
    %v8779 = vmul.f32 %v8778, %v5794
    %v8780 = vsub.f32 %v8704, %v8779
    %v8781 = vsub.f32 %v8705, %v8779
    %v8782 = vmul.f32 %v8780, %v8780
    %v8783 = vmul.f32 %v8781, %v8781
    %v8784 = vsel %vm5774, %v8782, 0.0
    %v8785 = vsel %vm5774, %v8783, 0.0
    %v8786 = vadd.f32 %v8784, %v8785
    %8787 = vadd.xlane.f32.xlu0 %v8786
    %v8788 = vpop.xlane.xlu0 %8787
    %v8789 = vrot.slane %v8788, 4
    %v8790 = vadd.f32 %v8788, %v8789
    %v8791 = vrot.slane %v8790, 2
    %v8792 = vadd.f32 %v8790, %v8791
    %v8793 = vrot.slane %v8792, 1
    %v8794 = vadd.f32 %v8792, %v8793
    %s8795 = vtos %v8794
    %v8796 = vstv %s8795
    %v8797 = vmul.f32 %v8796, %v5794
    %v8798 = vadd.f32 %v8797, 1e-05
    %v8799 = vrsqrt.pop %v8798
    %v8800 = vmul.f32 %v8799, %v8798
    %v8801 = vmul.f32 %v8800, %v8799
    %v8802 = vmul.f32 0.5, %v8801
    %v8803 = vsub.f32 1.5, %v8802
    %v8804 = vmul.f32 %v8799, %v8803
    %vm8805 = vweird.f32 %v8798
    %vm8806 = vweird.f32 %v8799
    %vm8807 = vmor %vm8805, %vm8806
    %v8808 = vsel %vm8807, %v8799, %v8804
    %v8809 = vmul.f32 %v8780, %v8808
    %v8810 = vmul.f32 %v8781, %v8808
    %s8811 = sld [smem:[#allocation9]]
    %v8812 = vstv %s8811
    %v8813 = vmul.f32 %v8809, %v8812
    %v8814 = vmul.f32 %v8810, %v8812
    %s8815 = sld [smem:[#allocation10]]
    %v8816 = vstv %s8815
    %v8817 = vadd.f32 %v8813, %v8816
    %v8818 = vadd.f32 %v8814, %v8816
    %v8819 = vmax.f32 %v8817, 0.0
    %v8820 = vmax.f32 %v8818, 0.0
    %v8821 = vsel %vm5774, %v8724, 0.0
    %v8822 = vsel %vm5774, %v8725, 0.0
    %v8823 = vadd.f32 %v8821, %v8822
    %8824 = vadd.xlane.f32.xlu0 %v8823
    %v8825 = vpop.xlane.xlu0 %8824
    %v8826 = vrot.slane %v8825, 4
    %v8827 = vadd.f32 %v8825, %v8826
    %v8828 = vrot.slane %v8827, 2
    %v8829 = vadd.f32 %v8827, %v8828
    %v8830 = vrot.slane %v8829, 1
    %v8831 = vadd.f32 %v8829, %v8830
    %s8832 = vtos %v8831
    %v8833 = vstv %s8832
    %v8834 = vmul.f32 %v8833, %v5794
    %v8835 = vsub.f32 %v8724, %v8834
    %v8836 = vsub.f32 %v8725, %v8834
    %v8837 = vmul.f32 %v8835, %v8835
    %v8838 = vmul.f32 %v8836, %v8836
    %v8839 = vsel %vm5774, %v8837, 0.0
    %v8840 = vsel %vm5774, %v8838, 0.0
    %v8841 = vadd.f32 %v8839, %v8840
    %8842 = vadd.xlane.f32.xlu0 %v8841
    %v8843 = vpop.xlane.xlu0 %8842
    %v8844 = vrot.slane %v8843, 4
    %v8845 = vadd.f32 %v8843, %v8844
    %v8846 = vrot.slane %v8845, 2
    %v8847 = vadd.f32 %v8845, %v8846
    %v8848 = vrot.slane %v8847, 1
    %v8849 = vadd.f32 %v8847, %v8848
    %s8850 = vtos %v8849
    %v8851 = vstv %s8850
    %v8852 = vmul.f32 %v8851, %v5794
    %v8853 = vadd.f32 %v8852, 1e-05
    %v8854 = vrsqrt.pop %v8853
    %v8855 = vmul.f32 %v8854, %v8853
    %v8856 = vmul.f32 %v8855, %v8854
    %v8857 = vmul.f32 0.5, %v8856
    %v8858 = vsub.f32 1.5, %v8857
    %v8859 = vmul.f32 %v8854, %v8858
    %vm8860 = vweird.f32 %v8853
    %vm8861 = vweird.f32 %v8854
    %vm8862 = vmor %vm8860, %vm8861
    %v8863 = vsel %vm8862, %v8854, %v8859
    %v8864 = vmul.f32 %v8835, %v8863
    %v8865 = vmul.f32 %v8836, %v8863
    %s8866 = sld [smem:[#allocation9 + $0x1]]
    %v8867 = vstv %s8866
    %v8868 = vmul.f32 %v8864, %v8867
    %v8869 = vmul.f32 %v8865, %v8867
    %s8870 = sld [smem:[#allocation10 + $0x1]]
    %v8871 = vstv %s8870
    %v8872 = vadd.f32 %v8868, %v8871
    %v8873 = vadd.f32 %v8869, %v8871
    %v8874 = vmax.f32 %v8872, 0.0
    %v8875 = vmax.f32 %v8873, 0.0
    %v8876 = vsel %vm5774, %v8744, 0.0
    %v8877 = vsel %vm5774, %v8745, 0.0
    %v8878 = vadd.f32 %v8876, %v8877
    %8879 = vadd.xlane.f32.xlu0 %v8878
    %v8880 = vpop.xlane.xlu0 %8879
    %v8881 = vrot.slane %v8880, 4
    %v8882 = vadd.f32 %v8880, %v8881
    %v8883 = vrot.slane %v8882, 2
    %v8884 = vadd.f32 %v8882, %v8883
    %v8885 = vrot.slane %v8884, 1
    %v8886 = vadd.f32 %v8884, %v8885
    %s8887 = vtos %v8886
    %v8888 = vstv %s8887
    %v8889 = vmul.f32 %v8888, %v5794
    %v8890 = vsub.f32 %v8744, %v8889
    %v8891 = vsub.f32 %v8745, %v8889
    %v8892 = vmul.f32 %v8890, %v8890
    %v8893 = vmul.f32 %v8891, %v8891
    %v8894 = vsel %vm5774, %v8892, 0.0
    %v8895 = vsel %vm5774, %v8893, 0.0
    %v8896 = vadd.f32 %v8894, %v8895
    %8897 = vadd.xlane.f32.xlu0 %v8896
    %v8898 = vpop.xlane.xlu0 %8897
    %v8899 = vrot.slane %v8898, 4
    %v8900 = vadd.f32 %v8898, %v8899
    %v8901 = vrot.slane %v8900, 2
    %v8902 = vadd.f32 %v8900, %v8901
    %v8903 = vrot.slane %v8902, 1
    %v8904 = vadd.f32 %v8902, %v8903
    %s8905 = vtos %v8904
    %v8906 = vstv %s8905
    %v8907 = vmul.f32 %v8906, %v5794
    %v8908 = vadd.f32 %v8907, 1e-05
    %v8909 = vrsqrt.pop %v8908
    %v8910 = vmul.f32 %v8909, %v8908
    %v8911 = vmul.f32 %v8910, %v8909
    %v8912 = vmul.f32 0.5, %v8911
    %v8913 = vsub.f32 1.5, %v8912
    %v8914 = vmul.f32 %v8909, %v8913
    %vm8915 = vweird.f32 %v8908
    %vm8916 = vweird.f32 %v8909
    %vm8917 = vmor %vm8915, %vm8916
    %v8918 = vsel %vm8917, %v8909, %v8914
    %v8919 = vmul.f32 %v8890, %v8918
    %v8920 = vmul.f32 %v8891, %v8918
    %s8921 = sld [smem:[#allocation9 + $0x2]]
    %v8922 = vstv %s8921
    %v8923 = vmul.f32 %v8919, %v8922
    %v8924 = vmul.f32 %v8920, %v8922
    %s8925 = sld [smem:[#allocation10 + $0x2]]
    %v8926 = vstv %s8925
    %v8927 = vadd.f32 %v8923, %v8926
    %v8928 = vadd.f32 %v8924, %v8926
    %v8929 = vmax.f32 %v8927, 0.0
    %v8930 = vmax.f32 %v8928, 0.0
    %v8931 = vsel %vm5774, %v8764, 0.0
    %v8932 = vsel %vm5774, %v8765, 0.0
    %v8933 = vadd.f32 %v8931, %v8932
    %8934 = vadd.xlane.f32.xlu0 %v8933
    %v8935 = vpop.xlane.xlu0 %8934
    %v8936 = vrot.slane %v8935, 4
    %v8937 = vadd.f32 %v8935, %v8936
    %v8938 = vrot.slane %v8937, 2
    %v8939 = vadd.f32 %v8937, %v8938
    %v8940 = vrot.slane %v8939, 1
    %v8941 = vadd.f32 %v8939, %v8940
    %s8942 = vtos %v8941
    %v8943 = vstv %s8942
    %v8944 = vmul.f32 %v8943, %v5794
    %v8945 = vsub.f32 %v8764, %v8944
    %v8946 = vsub.f32 %v8765, %v8944
    %v8947 = vmul.f32 %v8945, %v8945
    %v8948 = vmul.f32 %v8946, %v8946
    %v8949 = vsel %vm5774, %v8947, 0.0
    %v8950 = vsel %vm5774, %v8948, 0.0
    %v8951 = vadd.f32 %v8949, %v8950
    %8952 = vadd.xlane.f32.xlu0 %v8951
    %v8953 = vpop.xlane.xlu0 %8952
    %v8954 = vrot.slane %v8953, 4
    %v8955 = vadd.f32 %v8953, %v8954
    %v8956 = vrot.slane %v8955, 2
    %v8957 = vadd.f32 %v8955, %v8956
    %v8958 = vrot.slane %v8957, 1
    %v8959 = vadd.f32 %v8957, %v8958
    %s8960 = vtos %v8959
    %v8961 = vstv %s8960
    %v8962 = vmul.f32 %v8961, %v5794
    %v8963 = vadd.f32 %v8962, 1e-05
    %v8964 = vrsqrt.pop %v8963
    %v8965 = vmul.f32 %v8964, %v8963
    %v8966 = vmul.f32 %v8965, %v8964
    %v8967 = vmul.f32 0.5, %v8966
    %v8968 = vsub.f32 1.5, %v8967
    %v8969 = vmul.f32 %v8964, %v8968
    %vm8970 = vweird.f32 %v8963
    %vm8971 = vweird.f32 %v8964
    %vm8972 = vmor %vm8970, %vm8971
    %v8973 = vsel %vm8972, %v8964, %v8969
    %v8974 = vmul.f32 %v8945, %v8973
    %v8975 = vmul.f32 %v8946, %v8973
    %s8976 = sld [smem:[#allocation9 + $0x3]]
    %v8977 = vstv %s8976
    %v8978 = vmul.f32 %v8974, %v8977
    %v8979 = vmul.f32 %v8975, %v8977
    %s8980 = sld [smem:[#allocation10 + $0x3]]
    %v8981 = vstv %s8980
    %v8982 = vadd.f32 %v8978, %v8981
    %v8983 = vadd.f32 %v8979, %v8981
    %v8984 = vmax.f32 %v8982, 0.0
    %v8985 = vmax.f32 %v8983, 0.0
    %v8988 = vrot.slane %v8820, 7
    %vm8989 = vcmask 1040384
    %v8990 = vsel %vm8989, %v8819, %v8988
    %v8991 = vsel %vm149, %v8819, %v8988
    %v8992 = vrot.slane %v8991, 1
    %v8995 = vrot.slane %v8875, 7
    %v8996 = vsel %vm8989, %v8874, %v8995
    %v8997 = vsel %vm149, %v8874, %v8995
    %v8998 = vrot.slane %v8997, 1
    %v9001 = vrot.slane %v8930, 7
    %v9002 = vsel %vm8989, %v8929, %v9001
    %v9003 = vsel %vm149, %v8929, %v9001
    %v9004 = vrot.slane %v9003, 1
    %v9007 = vrot.slane %v8985, 7
    %v9008 = vsel %vm8989, %v8984, %v9007
    %v9009 = vsel %vm149, %v8984, %v9007
    %v9010 = vrot.slane %v9009, 1
    %v9011 = vperm.slane %v8990, 0
    %v9012 = vperm.slane %v8990, 1
    %v9013 = vperm.slane %v8992, 0
    %v9014 = vperm.slane %v8992, 1
    %v9019 = vperm.slane %v8996, 0
    %v9020 = vperm.slane %v8996, 1
    %v9021 = vperm.slane %v8998, 0
    %v9022 = vperm.slane %v8998, 1
    %v9027 = vperm.slane %v9002, 0
    %v9028 = vperm.slane %v9002, 1
    %v9029 = vperm.slane %v9004, 0
    %v9030 = vperm.slane %v9004, 1
    %v9035 = vperm.slane %v9008, 0
    %v9036 = vperm.slane %v9008, 1
    %v9037 = vperm.slane %v9010, 0
    %v9038 = vperm.slane %v9010, 1
    %v9043 = vsel %vm8989, %v9011, %v9019
    %v9044 = vsel %vm8989, %v9012, %v9020
    %v9045 = vsel %vm8989, %v9013, %v9021
    %v9046 = vsel %vm8989, %v9014, %v9022
    %v9047 = vsel %vm5774, %v9043, %v9027
    %v9048 = vsel %vm5774, %v9044, %v9028
    %v9049 = vsel %vm5774, %v9045, %v9029
    %v9050 = vsel %vm5774, %v9046, %v9030
    %vm9051 = vcmask 1042432
    %v9052 = vsel %vm9051, %v9047, %v9035
    %v9053 = vsel %vm9051, %v9048, %v9036
    %v9054 = vsel %vm9051, %v9049, %v9037
    %v9055 = vsel %vm9051, %v9050, %v9038
    %v9060 = vrot.slane %v9053, 4
    %v9061 = vrot.slane %v9055, 4
    %vm9062 = vcmask 1043456
    %v9063 = vsel %vm9062, %v9052, %v9060
    %v9064 = vsel %vm9062, %v9054, %v9061
    %9067 = vst [vmem:[%s8] sm:$0xff] %v9063
    %9068 = vst [vmem:[%s8 + $0x8] sm:$0xff] %v9064
    // Predicated region
    $region58: #{up_forward.1} parent=1 // pred_check
      _
    $region59: #{up_forward.1} parent=1 // pred_check_branch
      %9070 = sbr.rel (0) target = $region61
    $region60: #{up_forward.1} parent=1 // pred_region
      _
    $region61: #{up_forward.1} parent=1 // pred_fallthru
      _
    // Predicated region
    $region62: #{up_forward.1} parent=1 // pred_check
      _
    $region63: #{up_forward.1} parent=1 // pred_check_branch
      %9072 = sbr.rel (0) target = $region65
    $region64: #{up_forward.1} parent=1 // pred_region
      _
    $region65: #{up_forward.1} parent=1 // pred_fallthru
      _
    %9073 = vsyncpa [#allocation3], 1
    %9074 = vsyncpa [#allocation5], 1
    %9075 = vsyncpa [#allocation8], 1
    %9076 = vsyncpa [#allocation11], 1

</llo_original>
